<compile_context>
chip_gen: v7x
topology: tpu7x:2x2x1
jax: 0.10.0
libtpu: 0.0.40
codegen_flags: <defaults>
</compile_context>

<pallas_src>
import functools

import jax
import jax.numpy as jnp
from jax.experimental import pallas as pl
from jax.experimental.pallas import tpu as pltpu

NUM_CLASSES = 16
BN_EPS = 1e-5
LANE = 128
VMEM_LIMIT = 32 * 1024 * 1024


# ----------------------------------------------------------------------------
# Tile helpers
# ----------------------------------------------------------------------------
def _ceil_to(x, m):
    return ((x + m - 1) // m) * m


def _tile_m(m):
    """Largest 128-aligned tile dividing m, preferring >=2 grid steps so the
    second TensorCore on v7x gets work; small m (multiple of 8) used as-is."""
    for t in (512, 256, 128):
        if m % t == 0 and m // t >= 2:
            return t
    for t in (512, 256, 128):
        if m % t == 0:
            return t
    return m


def _tile_n(n):
    for t in (512, 256, 128):
        if n % t == 0 and n // t >= 2:
            return t
    return min(n, LANE) if n % LANE == 0 else n


# ----------------------------------------------------------------------------
# Pallas kernel 1: full-K matmul with fused bias / residual / ReLU epilogue
# ----------------------------------------------------------------------------
def _mm_kernel(a_ref, b_ref, c_ref, *rest, relu, has_residual):
    if has_residual:
        r_ref, o_ref = rest
    else:
        (o_ref,) = rest
    y = jnp.dot(a_ref[...], b_ref[...], preferred_element_type=jnp.float32)
    y = y + c_ref[...]
    if has_residual:
        y = y + r_ref[...].astype(jnp.float32)
    if relu:
        y = jnp.maximum(y, 0.0)
    o_ref[...] = y.astype(o_ref.dtype)


def pallas_matmul(a, b, bias=None, residual=None, relu=False,
                  out_dtype=jnp.bfloat16):
    """(M, Ka) @ (Kb, N) with Ka <= Kb (A zero-padded up to Kb; B's extra rows
    are zero), bf16 MXU operands, f32 accumulation, fused per-output-column
    bias + optional residual add + optional ReLU.  Single full-K block."""
    M, Ka = a.shape
    Kb, Np = b.shape
    assert Ka <= Kb and Np % LANE == 0, (a.shape, b.shape)

    Mp = _ceil_to(M, 8)
    a = a.astype(jnp.bfloat16)
    if (Mp != M) or (Ka != Kb):
        a = jnp.pad(a, ((0, Mp - M), (0, Kb - Ka)))   # fuses with im2col gather

    tm, tn = _tile_m(Mp), _tile_n(Np)
    if bias is None:
        bias = jnp.zeros((1, Np), jnp.float32)

    has_residual = residual is not None
    in_specs = [
        pl.BlockSpec((tm, Kb), lambda i, j: (i, 0)),
        pl.BlockSpec((Kb, tn), lambda i, j: (0, j)),
        pl.BlockSpec((1, tn), lambda i, j: (0, j)),
    ]
    operands = [a, b.astype(jnp.bfloat16), bias.astype(jnp.float32)]
    if has_residual:
        r = residual.astype(jnp.bfloat16)
        if r.shape != (Mp, Np):
            r = jnp.pad(r, ((0, Mp - r.shape[0]), (0, Np - r.shape[1])))
        in_specs.append(pl.BlockSpec((tm, tn), lambda i, j: (i, j)))
        operands.append(r)

    out = pl.pallas_call(
        functools.partial(_mm_kernel, relu=relu, has_residual=has_residual),
        out_shape=jax.ShapeDtypeStruct((Mp, Np), out_dtype),
        grid_spec=pltpu.PrefetchScalarGridSpec(
            num_scalar_prefetch=0,
            grid=(Mp // tm, Np // tn),
            in_specs=in_specs,
            out_specs=pl.BlockSpec((tm, tn), lambda i, j: (i, j)),
        ),
        compiler_params=pltpu.CompilerParams(
            dimension_semantics=("parallel", "parallel"),
            vmem_limit_bytes=VMEM_LIMIT),
    )(*operands)
    return out[:M] if Mp != M else out


# ----------------------------------------------------------------------------
# Pallas kernel 2: fused chain of matmuls (x@W0+b0 -> relu? -> @W1+b1 -> ...)
# ----------------------------------------------------------------------------
def _chain_kernel(*refs, relus):
    a_ref, o_ref = refs[0], refs[-1]
    h = a_ref[...]
    n = len(relus)
    for layer in range(n):
        w_ref, b_ref = refs[1 + 2 * layer], refs[2 + 2 * layer]
        y = jnp.dot(h, w_ref[...], preferred_element_type=jnp.float32)
        y = y + b_ref[...]
        if relus[layer]:
            y = jnp.maximum(y, 0.0)
        h = y.astype(jnp.bfloat16) if layer + 1 < n else y
    o_ref[...] = h.astype(o_ref.dtype)


def pallas_chain(a, layers, out_dtype=jnp.float32):
    """layers = [(W, b, relu), ...].  One pallas_call: every weight stays
    resident in VMEM, the intermediates never round-trip through HBM."""
    M, Ka = a.shape
    Kb = layers[0][0].shape[0]
    assert Ka <= Kb, (a.shape, layers[0][0].shape)
    Mp = _ceil_to(M, 8)
    a = a.astype(jnp.bfloat16)
    if (Mp != M) or (Ka != Kb):
        a = jnp.pad(a, ((0, Mp - M), (0, Kb - Ka)))

    operands = [a]
    in_specs = [pl.BlockSpec((Mp, Kb), lambda i: (0, 0))]
    relus = []
    for w, b, relu in layers:
        b2 = jnp.asarray(b, jnp.float32).reshape(1, -1)
        operands += [w.astype(jnp.bfloat16), b2]
        in_specs += [pl.BlockSpec(w.shape, lambda i: (0, 0)),
                     pl.BlockSpec(b2.shape, lambda i: (0, 0))]
        relus.append(bool(relu))
    n_out = layers[-1][0].shape[1]

    out = pl.pallas_call(
        functools.partial(_chain_kernel, relus=tuple(relus)),
        out_shape=jax.ShapeDtypeStruct((Mp, n_out), out_dtype),
        grid_spec=pltpu.PrefetchScalarGridSpec(
            num_scalar_prefetch=0,
            grid=(1,),
            in_specs=in_specs,
            out_specs=pl.BlockSpec((Mp, n_out), lambda i: (0, 0)),
        ),
        compiler_params=pltpu.CompilerParams(
            dimension_semantics=("arbitrary",),
            vmem_limit_bytes=VMEM_LIMIT),
    )(*operands)
    return out[:M] if Mp != M else out


# ----------------------------------------------------------------------------
# Layer wrappers (im2col / pooling glue in XLA, heavy compute in Pallas)
# ----------------------------------------------------------------------------
def _im2col(x, kh, kw, cin, stride, padding):
    """NHWC im2col.  Channel-padded activations are sliced back to the real
    `cin` here so the slice fuses into the same XLA gather as the patch
    extraction (no standalone trim kernel / HBM round trip)."""
    N = x.shape[0]
    if x.shape[-1] != cin:
        x = x[..., :cin]
    if padding:
        x = jnp.pad(x, ((0, 0), (padding, padding), (padding, padding), (0, 0)))
    Hp, Wp = x.shape[1], x.shape[2]
    oh = (Hp - kh) // stride + 1
    ow = (Wp - kw) // stride + 1
    if kh == 1 and kw == 1:
        a = x[:, 0:stride * oh:stride, 0:stride * ow:stride, :]
        a = a.reshape(N * oh * ow, cin)
    else:
        # TODO(synk): im2col still materializes kh*kw shifted copies in XLA
        # (bf16); an in-kernel K-offset reduction would remove this expansion.
        cols = [x[:, i:i + stride * oh:stride, j:j + stride * ow:stride, :]
                for i in range(kh) for j in range(kw)]
        a = jnp.stack(cols, axis=3).reshape(N * oh * ow, kh * kw * cin)
    return a, oh, ow


def conv2d(x, fc, stride=1, padding=0, relu=False, residual=None,
           out_dtype=jnp.bfloat16):
    """Conv (+ folded BN) (+ residual) (+ ReLU) as a single Pallas matmul.
    Output keeps its channel dim padded to a lane-dense multiple of 128."""
    N = x.shape[0]
    a, oh, ow = _im2col(x, fc["kh"], fc["kw"], fc["cin"], stride, padding)
    y = pallas_matmul(a, fc["w"], bias=fc["b"], residual=residual, relu=relu,
                      out_dtype=out_dtype)
    return y.reshape(N, oh, ow, fc["w"].shape[1])


def maxpool_3x3_s2_p1(x):
    """3x3 / stride-2 / pad-1 max pool as a fused XLA maximum chain (tensor is
    tiny; avoids a 9x materialized stack and an extra kernel launch)."""
    xp = jnp.pad(x, ((0, 0), (1, 1), (1, 1), (0, 0)), constant_values=-jnp.inf)
    Hp, Wp = xp.shape[1], xp.shape[2]
    oh = (Hp - 3) // 2 + 1
    ow = (Wp - 3) // 2 + 1
    out = None
    for i in range(3):
        for j in range(3):
            win = xp[:, i:i + 2 * oh:2, j:j + 2 * ow:2, :]
            out = win if out is None else jnp.maximum(out, win)
    return out


def bilinear_matrix(in_size, out_size):
    """Row weights of F.interpolate(mode='bilinear', align_corners=False)."""
    scale = in_size / out_size
    rows = jnp.arange(out_size)
    src = (rows.astype(jnp.float32) + 0.5) * scale - 0.5
    src = jnp.maximum(src, 0.0)
    i0 = jnp.minimum(jnp.floor(src).astype(jnp.int32), in_size - 1)
    i1 = jnp.minimum(i0 + 1, in_size - 1)
    l1 = src - i0.astype(jnp.float32)
    Wm = jnp.zeros((out_size, in_size), jnp.float32)
    Wm = Wm.at[rows, i0].add(1.0 - l1)
    Wm = Wm.at[rows, i1].add(l1)
    return Wm


def bilinear_resize_to_nchw(x, nc, out_h, out_w):
    """x: (N,h,w,Cpad) NHWC (real channels = nc) -> (N,nc,out_h,out_w) NCHW
    bilinear upsample as ONE lane-dense matmul against kron(Wh, Ww).
    K = h*w is tiny and equals the full array dim, so it is NOT padded to 128
    (avoids a mostly-zero (128, out_h*out_w) operand).
    # TODO(synk): interpolation runs in bf16 like the rest of the net; keep it
    # f32 if strict parity with PyTorch's f32 F.interpolate is required."""
    N, h, w, _ = x.shape
    Wh = bilinear_matrix(h, out_h)                        # (out_h, h)
    Ww = bilinear_matrix(w, out_w)                        # (out_w, w)
    Wc = jnp.kron(Wh, Ww)                                 # (out_h*out_w, h*w)
    a = jnp.transpose(x[..., :nc], (0, 3, 1, 2)).reshape(N * nc, h * w)
    y = pallas_matmul(a, Wc.T, out_dtype=jnp.float32)     # (N*nc, out_h*out_w)
    return y.reshape(N, nc, out_h, out_w)


# ----------------------------------------------------------------------------
# Deterministic parameter init (synthetic, PyTorch-shaped) + inference folding
# ----------------------------------------------------------------------------
def init_params(key, num_classes=NUM_CLASSES):
    keys = iter(jax.random.split(key, 256))
    nk = lambda: next(keys)

    def conv_w(cout, cin, kh, kw):
        fan_in = cin * kh * kw
        return jax.random.normal(nk(), (cout, cin, kh, kw), jnp.float32) * (2.0 / fan_in) ** 0.5

    def bn(c):
        gamma = 1.0 + 0.1 * jax.random.normal(nk(), (c,), jnp.float32)
        beta = 0.1 * jax.random.normal(nk(), (c,), jnp.float32)
        mean = 0.1 * jax.random.normal(nk(), (c,), jnp.float32)
        var = jnp.abs(1.0 + 0.1 * jax.random.normal(nk(), (c,), jnp.float32))
        return (gamma, beta, mean, var)

    def linear(cin, cout):
        w = jax.random.normal(nk(), (cout, cin), jnp.float32) * (1.0 / cin) ** 0.5
        b = 0.01 * jax.random.normal(nk(), (cout,), jnp.float32)
        return (w, b)

    widths = [8, 16, 32, 64]
    params = {
        "conv1": conv_w(widths[0], 4, 7, 7),   # _reset_conv1: 4 input channels
        "bn1": bn(widths[0]),
        "layers": [],
    }
    cin = widths[0]
    for li, cout in enumerate(widths):
        stride = 1 if li == 0 else 2
        block = {
            "conv1": conv_w(cout, cin, 3, 3), "bn1": bn(cout),
            "conv2": conv_w(cout, cout, 3, 3), "bn2": bn(cout),
        }
        if stride != 1 or cin != cout:
            block["downsample_conv"] = conv_w(cout, cin, 1, 1)
            block["downsample_bn"] = bn(cout)
        params["layers"].append({"block": block, "stride": stride})
        cin = cout

    in_features = widths[-1]                    # resnet.fc.in_features
    inter = in_features // 4                    # FCNHead inter channels
    params["fcn_conv1"] = conv_w(inter, in_features, 3, 3)
    params["fcn_bn"] = bn(inter)
    params["fcn_conv2_w"] = conv_w(num_classes, inter, 1, 1)
    params["fcn_conv2_b"] = 0.01 * jax.random.normal(nk(), (num_classes,), jnp.float32)

    params["fc"] = linear(in_features, 512)
    params["fc1"] = linear(512, 256)
    params["fc2"] = linear(256, num_classes)
    params["fr1"] = linear(256, 4)
    return params


def fold_params(params, num_classes=NUM_CLASSES):
    """Offline, once: fold the eval-mode BN scale INTO the weight columns (in
    f32, then cast bf16), keep only the bias for the kernel epilogue, reshape
    conv weights to (kh*kw*Cin, Cout), pad K rows and Cout columns to
    lane-friendly multiples of 128, and merge / pre-pad the head weights."""
    # TODO(synk): BatchNorm uses eval-mode running-stat semantics (folded affine).

    def fold_conv(w, bn=None, conv_bias=None):
        cout, cin, kh, kw = w.shape
        w2 = jnp.transpose(w, (2, 3, 1, 0)).reshape(kh * kw * cin, cout)
        if bn is not None:
            gamma, beta, mean, var = bn
            s = gamma / jnp.sqrt(var + BN_EPS)
            b = beta - mean * s
        else:
            s = jnp.ones((cout,), jnp.float32)
            b = conv_bias if conv_bias is not None else jnp.zeros((cout,), jnp.float32)
        w2 = w2 * s[None, :]                       # fold BN scale in f32
        kp = (-w2.shape[0]) % LANE                 # pad K rows (full-K blocks)
        npad = (-cout) % LANE                      # pad Cout to lane-dense 128
        w2 = jnp.pad(w2, ((0, kp), (0, npad)))
        b = jnp.pad(b, (0, npad))[None, :]
        return {"w": w2.astype(jnp.bfloat16), "b": b.astype(jnp.float32),
                "kh": kh, "kw": kw, "cin": cin, "cout": cout}

    fp = {"stem": fold_conv(params["conv1"], params["bn1"]),
          "layers": [], "num_classes": num_classes}
    for layer in params["layers"]:
        blk = layer["block"]
        fblk = {"c1": fold_conv(blk["conv1"], blk["bn1"]),
                "c2": fold_conv(blk["conv2"], blk["bn2"])}
        if "downsample_conv" in blk:
            fblk["down"] = fold_conv(blk["downsample_conv"], blk["downsample_bn"])
        fp["layers"].append((fblk, layer["stride"]))

    fcn1 = fold_conv(params["fcn_conv1"], params["fcn_bn"])
    fcn2 = fold_conv(params["fcn_conv2_w"], None, params["fcn_conv2_b"])
    # fcn2's K rows are already zero-padded to 128 == fcn1's padded output
    # width, so both FCN convs chain inside ONE kernel (padded cols are 0).
    fp["fcn1"] = fcn1
    fp["fcn_chain"] = [(fcn1["w"], fcn1["b"], True), (fcn2["w"], fcn2["b"], False)]

    fp["fc_w"] = params["fc"][0].T                       # (in_features, 512) f32
    fp["fc_b"] = params["fc"][1]
    fp["fc1_w"] = params["fc1"][0].T                     # (512, 256)
    fp["fc1_b"] = params["fc1"][1]
    # Merged fc2 (num_classes) + fr1 (4) head, padded to 128 lane-dense cols.
    hw_ = jnp.concatenate([params["fc2"][0].T, params["fr1"][0].T], axis=1)
    hb_ = jnp.concatenate([params["fc2"][1], params["fr1"][1]])
    pad = (-hw_.shape[1]) % LANE
    fp["heads_w"] = jnp.pad(hw_, ((0, 0), (0, pad)))
    fp["heads_b"] = jnp.pad(hb_, (0, pad))
    return fp


# ----------------------------------------------------------------------------
# Forward pass (mirrors ConvNet.forward)
# ----------------------------------------------------------------------------
def basic_block(x, blk, stride):
    out = conv2d(x, blk["c1"], stride=stride, padding=1, relu=True)
    if "down" in blk:
        identity = conv2d(x, blk["down"], stride=stride, padding=0, relu=False)
    else:
        identity = x
    n, hh, ww, c = identity.shape
    # Residual add + ReLU fused into the conv2 matmul epilogue.
    return conv2d(out, blk["c2"], stride=1, padding=1, relu=True,
                  residual=identity.reshape(n * hh * ww, c))


def convnet_forward(fp, x, y):
    # x: (N,3,H,W), y: (N,1,H,W)  (NCHW, like the PyTorch module)
    inp = jnp.concatenate([x, y], axis=1)                 # cat -> 4 channels
    H, W = inp.shape[-2], inp.shape[-1]
    h = jnp.transpose(inp, (0, 2, 3, 1)).astype(jnp.bfloat16)   # NHWC, bf16

    # ResNet stem + maxpool
    h = conv2d(h, fp["stem"], stride=2, padding=3, relu=True)
    h = maxpool_3x3_s2_p1(h)
    # layer1..layer4 (IntermediateLayerGetter -> layer4 output)
    for blk, stride in fp["layers"]:
        h = basic_block(h, blk, stride)
    feat = h                                   # (N, H/32, W/32, 128) real C=64

    # segmentation = FCNHead(3x3 conv+BN+ReLU, Dropout(eval)=identity, 1x1
    # conv), both convs fused into ONE pallas_call, then a single lane-dense
    # bilinear-upsample matmul.
    # TODO(synk): Dropout(0.1) applied as identity (eval-mode semantics).
    N, fh, fw, Cp = feat.shape
    fcn1 = fp["fcn1"]
    a_fcn, oh, ow = _im2col(feat, fcn1["kh"], fcn1["kw"], fcn1["cin"], 1, 1)
    seg = pallas_chain(a_fcn, fp["fcn_chain"], out_dtype=jnp.bfloat16)
    seg = seg.reshape(N, oh, ow, seg.shape[1])
    seg = bilinear_resize_to_nchw(seg, fp["num_classes"], H, W)

    # classification / bbox heads: global avg-pool folded into the fc weight
    # (tiled over the channel-padded spatial positions, scaled by 1/HW), then
    # fc -> ReLU -> fc1 -> ReLU -> merged (fc2|fr1) fused into ONE pallas_call.
    hw = fh * fw
    a_head = feat.reshape(N, hw * Cp)
    w_fc = jnp.pad(fp["fc_w"], ((0, Cp - fp["fc_w"].shape[0]), (0, 0)))
    w_fc = jnp.tile(w_fc, (hw, 1)) * (1.0 / hw)    # constant-folded under jit
    heads = pallas_chain(
        a_head,
        [(w_fc, fp["fc_b"], True),
         (fp["fc1_w"], fp["fc1_b"], True),
         (fp["heads_w"], fp["heads_b"], False)],
        out_dtype=jnp.float32)
    nc = fp["num_classes"]
    cl = heads[:, :nc]
    bb = heads[:, nc:nc + 4]
    return cl, bb, seg


# ----------------------------------------------------------------------------
if __name__ == "__main__":
    key = jax.random.PRNGKey(0)
    kp, kx, ky = jax.random.split(key, 3)
    params = init_params(kp)
    fparams = fold_params(params)

    x = jax.random.normal(kx, (2, 3, 64, 64), jnp.float32)   # RGB
    y = jax.random.normal(ky, (2, 1, 64, 64), jnp.float32)   # depth

    fwd = jax.jit(lambda xx, yy: convnet_forward(fparams, xx, yy))
    cl, bb, seg = fwd(x, y)
    jax.block_until_ready((cl, bb, seg))

    assert cl.shape == (2, NUM_CLASSES), cl.shape
    assert bb.shape == (2, 4), bb.shape
    assert seg.shape == (2, NUM_CLASSES, 64, 64), seg.shape
    assert all(bool(jnp.all(jnp.isfinite(t))) for t in (cl, bb, seg))
    print("KERNEL_OK")
</pallas_src>

<mosaic_0001>
module attributes {stable_mosaic.version = 11 : i64} {
  func.func private @main(%arg0: i32) attributes {dimension_semantics = [#tpu.dimension_semantics<core_parallel>], iteration_bounds = array<i64: 2>, tpu.core_type = #tpu.core_type<sc_scalar_subcore>, window_params = []} {
    return
  }
}

module attributes {stable_mosaic.version = 11 : i64} {
  func.func private @main(%arg0: i32) attributes {dimension_semantics = [#tpu.dimension_semantics<core_parallel>], iteration_bounds = array<i64: 2>, tpu.core_type = #tpu.core_type<sc_scalar_subcore>, window_params = []} {
    return
  }
}

module attributes {stable_mosaic.version = 11 : i64} {
  func.func @_mm_kernel(%arg0: i32, %arg1: i32, %arg2: memref<512x256xbf16, #tpu.memory_space<vmem>>, %arg3: memref<256x128xbf16, #tpu.memory_space<vmem>>, %arg4: memref<1x128xf32, #tpu.memory_space<vmem>>, %arg5: memref<512x128xbf16, #tpu.memory_space<vmem>>) attributes {dimension_semantics = [#tpu.dimension_semantics<parallel>, #tpu.dimension_semantics<parallel>], iteration_bounds = array<i64: 4, 1>, scalar_prefetch = 0 : i64, scratch_operands = 0 : i64, tpu.core_type = #tpu.core_type<tc>, window_params = [{transform_indices = @transform_0, window_bounds = array<i64: 512, 256>}, {transform_indices = @transform_1, window_bounds = array<i64: 256, 128>}, {transform_indices = @transform_2, window_bounds = array<i64: 1, 128>}, {transform_indices = @transform_3, window_bounds = array<i64: 512, 128>}]} {
    %c0 = arith.constant 0 : index
    %c0_0 = arith.constant 0 : index
    %0 = vector.load %arg2[%c0, %c0_0] : memref<512x256xbf16, #tpu.memory_space<vmem>>, vector<512x256xbf16>
    %c0_1 = arith.constant 0 : index
    %c0_2 = arith.constant 0 : index
    %1 = vector.load %arg3[%c0_1, %c0_2] : memref<256x128xbf16, #tpu.memory_space<vmem>>, vector<256x128xbf16>
    %cst = arith.constant dense<0.000000e+00> : vector<512x128xf32>
    %2 = tpu.matmul %0, %1, %cst {dimension_numbers = #tpu.dot_dimension_numbers<[1], [0], [0], [1], [0, 0, 1, 1], [], []>} : vector<512x256xbf16>, vector<256x128xbf16>, vector<512x128xf32> -> vector<512x128xf32>
    %c0_3 = arith.constant 0 : index
    %c0_4 = arith.constant 0 : index
    %3 = vector.load %arg4[%c0_3, %c0_4] : memref<1x128xf32, #tpu.memory_space<vmem>>, vector<1x128xf32>
    %4 = vector.broadcast %3 : vector<1x128xf32> to vector<512x128xf32>
    %5 = arith.addf %2, %4 : vector<512x128xf32>
    %cst_5 = arith.constant 0.000000e+00 : f32
    %6 = vector.broadcast %cst_5 : f32 to vector<512x128xf32>
    %7 = arith.maximumf %5, %6 : vector<512x128xf32>
    %8 = arith.truncf %7 : vector<512x128xf32> to vector<512x128xbf16>
    %c0_6 = arith.constant 0 : index
    %c0_7 = arith.constant 0 : index
    %9 = vector.load %arg5[%c0_6, %c0_7] : memref<512x128xbf16, #tpu.memory_space<vmem>>, vector<512x128xbf16>
    tpu.vector_store %arg5[%c0_6, %c0_7], %8 {strides = array<i32>} : memref<512x128xbf16, #tpu.memory_space<vmem>>, vector<512x128xbf16>,
    return
  }
  func.func @transform_0(%arg0: i32, %arg1: i32) -> (i32, i32) {
    %c0_i32 = arith.constant 0 : i32
    %c0_i32_0 = arith.constant 0 : i32
    return %arg0, %c0_i32 : i32, i32
  }
  func.func @transform_1(%arg0: i32, %arg1: i32) -> (i32, i32) {
    %c0_i32 = arith.constant 0 : i32
    %c0_i32_0 = arith.constant 0 : i32
    return %c0_i32, %arg1 : i32, i32
  }
  func.func @transform_2(%arg0: i32, %arg1: i32) -> (i32, i32) {
    %c0_i32 = arith.constant 0 : i32
    %c0_i32_0 = arith.constant 0 : i32
    return %c0_i32, %arg1 : i32, i32
  }
  func.func @transform_3(%arg0: i32, %arg1: i32) -> (i32, i32) {
    %c0_i32 = arith.constant 0 : i32
    return %arg0, %arg1 : i32, i32
  }
}

module attributes {stable_mosaic.version = 11 : i64} {
  func.func @_mm_kernel(%arg0: i32, %arg1: i32, %arg2: memref<256x128xbf16, #tpu.memory_space<vmem>>, %arg3: memref<128x128xbf16, #tpu.memory_space<vmem>>, %arg4: memref<1x128xf32, #tpu.memory_space<vmem>>, %arg5: memref<256x128xbf16, #tpu.memory_space<vmem>>) attributes {dimension_semantics = [#tpu.dimension_semantics<parallel>, #tpu.dimension_semantics<parallel>], iteration_bounds = array<i64: 2, 1>, scalar_prefetch = 0 : i64, scratch_operands = 0 : i64, tpu.core_type = #tpu.core_type<tc>, window_params = [{transform_indices = @transform_0, window_bounds = array<i64: 256, 128>}, {transform_indices = @transform_1, window_bounds = array<i64: 128, 128>}, {transform_indices = @transform_2, window_bounds = array<i64: 1, 128>}, {transform_indices = @transform_3, window_bounds = array<i64: 256, 128>}]} {
    %c0 = arith.constant 0 : index
    %c0_0 = arith.constant 0 : index
    %0 = vector.load %arg2[%c0, %c0_0] : memref<256x128xbf16, #tpu.memory_space<vmem>>, vector<256x128xbf16>
    %c0_1 = arith.constant 0 : index
    %c0_2 = arith.constant 0 : index
    %1 = vector.load %arg3[%c0_1, %c0_2] : memref<128x128xbf16, #tpu.memory_space<vmem>>, vector<128x128xbf16>
    %cst = arith.constant dense<0.000000e+00> : vector<256x128xf32>
    %2 = tpu.matmul %0, %1, %cst {dimension_numbers = #tpu.dot_dimension_numbers<[1], [0], [0], [1], [0, 0, 1, 1], [], []>} : vector<256x128xbf16>, vector<128x128xbf16>, vector<256x128xf32> -> vector<256x128xf32>
    %c0_3 = arith.constant 0 : index
    %c0_4 = arith.constant 0 : index
    %3 = vector.load %arg4[%c0_3, %c0_4] : memref<1x128xf32, #tpu.memory_space<vmem>>, vector<1x128xf32>
    %4 = vector.broadcast %3 : vector<1x128xf32> to vector<256x128xf32>
    %5 = arith.addf %2, %4 : vector<256x128xf32>
    %cst_5 = arith.constant 0.000000e+00 : f32
    %6 = vector.broadcast %cst_5 : f32 to vector<256x128xf32>
    %7 = arith.maximumf %5, %6 : vector<256x128xf32>
    %8 = arith.truncf %7 : vector<256x128xf32> to vector<256x128xbf16>
    %c0_6 = arith.constant 0 : index
    %c0_7 = arith.constant 0 : index
    %9 = vector.load %arg5[%c0_6, %c0_7] : memref<256x128xbf16, #tpu.memory_space<vmem>>, vector<256x128xbf16>
    tpu.vector_store %arg5[%c0_6, %c0_7], %8 {strides = array<i32>} : memref<256x128xbf16, #tpu.memory_space<vmem>>, vector<256x128xbf16>,
    return
  }
  func.func @transform_0(%arg0: i32, %arg1: i32) -> (i32, i32) {
    %c0_i32 = arith.constant 0 : i32
    %c0_i32_0 = arith.constant 0 : i32
    return %arg0, %c0_i32 : i32, i32
  }
  func.func @transform_1(%arg0: i32, %arg1: i32) -> (i32, i32) {
    %c0_i32 = arith.constant 0 : i32
    %c0_i32_0 = arith.constant 0 : i32
    return %c0_i32, %arg1 : i32, i32
  }
  func.func @transform_2(%arg0: i32, %arg1: i32) -> (i32, i32) {
    %c0_i32 = arith.constant 0 : i32
    %c0_i32_0 = arith.constant 0 : i32
    return %c0_i32, %arg1 : i32, i32
  }
  func.func @transform_3(%arg0: i32, %arg1: i32) -> (i32, i32) {
    %c0_i32 = arith.constant 0 : i32
    return %arg0, %arg1 : i32, i32
  }
}

module attributes {stable_mosaic.version = 11 : i64} {
  func.func @_mm_kernel(%arg0: i32, %arg1: i32, %arg2: memref<256x128xbf16, #tpu.memory_space<vmem>>, %arg3: memref<128x128xbf16, #tpu.memory_space<vmem>>, %arg4: memref<1x128xf32, #tpu.memory_space<vmem>>, %arg5: memref<256x128xbf16, #tpu.memory_space<vmem>>, %arg6: memref<256x128xbf16, #tpu.memory_space<vmem>>) attributes {dimension_semantics = [#tpu.dimension_semantics<parallel>, #tpu.dimension_semantics<parallel>], iteration_bounds = array<i64: 2, 1>, scalar_prefetch = 0 : i64, scratch_operands = 0 : i64, tpu.core_type = #tpu.core_type<tc>, window_params = [{transform_indices = @transform_0, window_bounds = array<i64: 256, 128>}, {transform_indices = @transform_1, window_bounds = array<i64: 128, 128>}, {transform_indices = @transform_2, window_bounds = array<i64: 1, 128>}, {transform_indices = @transform_3, window_bounds = array<i64: 256, 128>}, {transform_indices = @transform_4, window_bounds = array<i64: 256, 128>}]} {
    %c0 = arith.constant 0 : index
    %c0_0 = arith.constant 0 : index
    %0 = vector.load %arg2[%c0, %c0_0] : memref<256x128xbf16, #tpu.memory_space<vmem>>, vector<256x128xbf16>
    %c0_1 = arith.constant 0 : index
    %c0_2 = arith.constant 0 : index
    %1 = vector.load %arg3[%c0_1, %c0_2] : memref<128x128xbf16, #tpu.memory_space<vmem>>, vector<128x128xbf16>
    %cst = arith.constant dense<0.000000e+00> : vector<256x128xf32>
    %2 = tpu.matmul %0, %1, %cst {dimension_numbers = #tpu.dot_dimension_numbers<[1], [0], [0], [1], [0, 0, 1, 1], [], []>} : vector<256x128xbf16>, vector<128x128xbf16>, vector<256x128xf32> -> vector<256x128xf32>
    %c0_3 = arith.constant 0 : index
    %c0_4 = arith.constant 0 : index
    %3 = vector.load %arg4[%c0_3, %c0_4] : memref<1x128xf32, #tpu.memory_space<vmem>>, vector<1x128xf32>
    %4 = vector.broadcast %3 : vector<1x128xf32> to vector<256x128xf32>
    %5 = arith.addf %2, %4 : vector<256x128xf32>
    %c0_5 = arith.constant 0 : index
    %c0_6 = arith.constant 0 : index
    %6 = vector.load %arg5[%c0_5, %c0_6] : memref<256x128xbf16, #tpu.memory_space<vmem>>, vector<256x128xbf16>
    %7 = arith.extf %6 : vector<256x128xbf16> to vector<256x128xf32>
    %8 = arith.addf %5, %7 : vector<256x128xf32>
    %cst_7 = arith.constant 0.000000e+00 : f32
    %9 = vector.broadcast %cst_7 : f32 to vector<256x128xf32>
    %10 = arith.maximumf %8, %9 : vector<256x128xf32>
    %11 = arith.truncf %10 : vector<256x128xf32> to vector<256x128xbf16>
    %c0_8 = arith.constant 0 : index
    %c0_9 = arith.constant 0 : index
    %12 = vector.load %arg6[%c0_8, %c0_9] : memref<256x128xbf16, #tpu.memory_space<vmem>>, vector<256x128xbf16>
    tpu.vector_store %arg6[%c0_8, %c0_9], %11 {strides = array<i32>} : memref<256x128xbf16, #tpu.memory_space<vmem>>, vector<256x128xbf16>,
    return
  }
  func.func @transform_0(%arg0: i32, %arg1: i32) -> (i32, i32) {
    %c0_i32 = arith.constant 0 : i32
    %c0_i32_0 = arith.constant 0 : i32
    return %arg0, %c0_i32 : i32, i32
  }
  func.func @transform_1(%arg0: i32, %arg1: i32) -> (i32, i32) {
    %c0_i32 = arith.constant 0 : i32
    %c0_i32_0 = arith.constant 0 : i32
    return %c0_i32, %arg1 : i32, i32
  }
  func.func @transform_2(%arg0: i32, %arg1: i32) -> (i32, i32) {
    %c0_i32 = arith.constant 0 : i32
    %c0_i32_0 = arith.constant 0 : i32
    return %c0_i32, %arg1 : i32, i32
  }
  func.func @transform_3(%arg0: i32, %arg1: i32) -> (i32, i32) {
    %c0_i32 = arith.constant 0 : i32
    return %arg0, %arg1 : i32, i32
  }
  func.func @transform_4(%arg0: i32, %arg1: i32) -> (i32, i32) {
    %c0_i32 = arith.constant 0 : i32
    return %arg0, %arg1 : i32, i32
  }
}

module attributes {stable_mosaic.version = 11 : i64} {
  func.func @_mm_kernel(%arg0: i32, %arg1: i32, %arg2: memref<128x128xbf16, #tpu.memory_space<vmem>>, %arg3: memref<128x128xbf16, #tpu.memory_space<vmem>>, %arg4: memref<1x128xf32, #tpu.memory_space<vmem>>, %arg5: memref<128x128xbf16, #tpu.memory_space<vmem>>) attributes {dimension_semantics = [#tpu.dimension_semantics<parallel>, #tpu.dimension_semantics<parallel>], iteration_bounds = array<i64: 1, 1>, scalar_prefetch = 0 : i64, scratch_operands = 0 : i64, tpu.core_type = #tpu.core_type<tc>, window_params = [{transform_indices = @transform_0, window_bounds = array<i64: 128, 128>}, {transform_indices = @transform_1, window_bounds = array<i64: 128, 128>}, {transform_indices = @transform_2, window_bounds = array<i64: 1, 128>}, {transform_indices = @transform_3, window_bounds = array<i64: 128, 128>}]} {
    %c0 = arith.constant 0 : index
    %c0_0 = arith.constant 0 : index
    %0 = vector.load %arg2[%c0, %c0_0] : memref<128x128xbf16, #tpu.memory_space<vmem>>, vector<128x128xbf16>
    %c0_1 = arith.constant 0 : index
    %c0_2 = arith.constant 0 : index
    %1 = vector.load %arg3[%c0_1, %c0_2] : memref<128x128xbf16, #tpu.memory_space<vmem>>, vector<128x128xbf16>
    %cst = arith.constant dense<0.000000e+00> : vector<128x128xf32>
    %2 = tpu.matmul %0, %1, %cst {dimension_numbers = #tpu.dot_dimension_numbers<[1], [0], [0], [1], [0, 0, 1, 1], [], []>} : vector<128x128xbf16>, vector<128x128xbf16>, vector<128x128xf32> -> vector<128x128xf32>
    %c0_3 = arith.constant 0 : index
    %c0_4 = arith.constant 0 : index
    %3 = vector.load %arg4[%c0_3, %c0_4] : memref<1x128xf32, #tpu.memory_space<vmem>>, vector<1x128xf32>
    %4 = vector.broadcast %3 : vector<1x128xf32> to vector<128x128xf32>
    %5 = arith.addf %2, %4 : vector<128x128xf32>
    %cst_5 = arith.constant 0.000000e+00 : f32
    %6 = vector.broadcast %cst_5 : f32 to vector<128x128xf32>
    %7 = arith.maximumf %5, %6 : vector<128x128xf32>
    %8 = arith.truncf %7 : vector<128x128xf32> to vector<128x128xbf16>
    %c0_6 = arith.constant 0 : index
    %c0_7 = arith.constant 0 : index
    %9 = vector.load %arg5[%c0_6, %c0_7] : memref<128x128xbf16, #tpu.memory_space<vmem>>, vector<128x128xbf16>
    tpu.vector_store %arg5[%c0_6, %c0_7], %8 {strides = array<i32>} : memref<128x128xbf16, #tpu.memory_space<vmem>>, vector<128x128xbf16>,
    return
  }
  func.func @transform_0(%arg0: i32, %arg1: i32) -> (i32, i32) {
    %c0_i32 = arith.constant 0 : i32
    %c0_i32_0 = arith.constant 0 : i32
    return %arg0, %c0_i32 : i32, i32
  }
  func.func @transform_1(%arg0: i32, %arg1: i32) -> (i32, i32) {
    %c0_i32 = arith.constant 0 : i32
    %c0_i32_0 = arith.constant 0 : i32
    return %c0_i32, %arg1 : i32, i32
  }
  func.func @transform_2(%arg0: i32, %arg1: i32) -> (i32, i32) {
    %c0_i32 = arith.constant 0 : i32
    %c0_i32_0 = arith.constant 0 : i32
    return %c0_i32, %arg1 : i32, i32
  }
  func.func @transform_3(%arg0: i32, %arg1: i32) -> (i32, i32) {
    %c0_i32 = arith.constant 0 : i32
    return %arg0, %arg1 : i32, i32
  }
}

module attributes {stable_mosaic.version = 11 : i64} {
  func.func @_mm_kernel(%arg0: i32, %arg1: i32, %arg2: memref<128x128xbf16, #tpu.memory_space<vmem>>, %arg3: memref<128x128xbf16, #tpu.memory_space<vmem>>, %arg4: memref<1x128xf32, #tpu.memory_space<vmem>>, %arg5: memref<128x128xbf16, #tpu.memory_space<vmem>>) attributes {dimension_semantics = [#tpu.dimension_semantics<parallel>, #tpu.dimension_semantics<parallel>], iteration_bounds = array<i64: 1, 1>, scalar_prefetch = 0 : i64, scratch_operands = 0 : i64, tpu.core_type = #tpu.core_type<tc>, window_params = [{transform_indices = @transform_0, window_bounds = array<i64: 128, 128>}, {transform_indices = @transform_1, window_bounds = array<i64: 128, 128>}, {transform_indices = @transform_2, window_bounds = array<i64: 1, 128>}, {transform_indices = @transform_3, window_bounds = array<i64: 128, 128>}]} {
    %c0 = arith.constant 0 : index
    %c0_0 = arith.constant 0 : index
    %0 = vector.load %arg2[%c0, %c0_0] : memref<128x128xbf16, #tpu.memory_space<vmem>>, vector<128x128xbf16>
    %c0_1 = arith.constant 0 : index
    %c0_2 = arith.constant 0 : index
    %1 = vector.load %arg3[%c0_1, %c0_2] : memref<128x128xbf16, #tpu.memory_space<vmem>>, vector<128x128xbf16>
    %cst = arith.constant dense<0.000000e+00> : vector<128x128xf32>
    %2 = tpu.matmul %0, %1, %cst {dimension_numbers = #tpu.dot_dimension_numbers<[1], [0], [0], [1], [0, 0, 1, 1], [], []>} : vector<128x128xbf16>, vector<128x128xbf16>, vector<128x128xf32> -> vector<128x128xf32>
    %c0_3 = arith.constant 0 : index
    %c0_4 = arith.constant 0 : index
    %3 = vector.load %arg4[%c0_3, %c0_4] : memref<1x128xf32, #tpu.memory_space<vmem>>, vector<1x128xf32>
    %4 = vector.broadcast %3 : vector<1x128xf32> to vector<128x128xf32>
    %5 = arith.addf %2, %4 : vector<128x128xf32>
    %6 = arith.truncf %5 : vector<128x128xf32> to vector<128x128xbf16>
    %c0_5 = arith.constant 0 : index
    %c0_6 = arith.constant 0 : index
    %7 = vector.load %arg5[%c0_5, %c0_6] : memref<128x128xbf16, #tpu.memory_space<vmem>>, vector<128x128xbf16>
    tpu.vector_store %arg5[%c0_5, %c0_6], %6 {strides = array<i32>} : memref<128x128xbf16, #tpu.memory_space<vmem>>, vector<128x128xbf16>,
    return
  }
  func.func @transform_0(%arg0: i32, %arg1: i32) -> (i32, i32) {
    %c0_i32 = arith.constant 0 : i32
    %c0_i32_0 = arith.constant 0 : i32
    return %arg0, %c0_i32 : i32, i32
  }
  func.func @transform_1(%arg0: i32, %arg1: i32) -> (i32, i32) {
    %c0_i32 = arith.constant 0 : i32
    %c0_i32_0 = arith.constant 0 : i32
    return %c0_i32, %arg1 : i32, i32
  }
  func.func @transform_2(%arg0: i32, %arg1: i32) -> (i32, i32) {
    %c0_i32 = arith.constant 0 : i32
    %c0_i32_0 = arith.constant 0 : i32
    return %c0_i32, %arg1 : i32, i32
  }
  func.func @transform_3(%arg0: i32, %arg1: i32) -> (i32, i32) {
    %c0_i32 = arith.constant 0 : i32
    return %arg0, %arg1 : i32, i32
  }
}

module attributes {stable_mosaic.version = 11 : i64} {
  func.func @_mm_kernel(%arg0: i32, %arg1: i32, %arg2: memref<128x256xbf16, #tpu.memory_space<vmem>>, %arg3: memref<256x128xbf16, #tpu.memory_space<vmem>>, %arg4: memref<1x128xf32, #tpu.memory_space<vmem>>, %arg5: memref<128x128xbf16, #tpu.memory_space<vmem>>, %arg6: memref<128x128xbf16, #tpu.memory_space<vmem>>) attributes {dimension_semantics = [#tpu.dimension_semantics<parallel>, #tpu.dimension_semantics<parallel>], iteration_bounds = array<i64: 1, 1>, scalar_prefetch = 0 : i64, scratch_operands = 0 : i64, tpu.core_type = #tpu.core_type<tc>, window_params = [{transform_indices = @transform_0, window_bounds = array<i64: 128, 256>}, {transform_indices = @transform_1, window_bounds = array<i64: 256, 128>}, {transform_indices = @transform_2, window_bounds = array<i64: 1, 128>}, {transform_indices = @transform_3, window_bounds = array<i64: 128, 128>}, {transform_indices = @transform_4, window_bounds = array<i64: 128, 128>}]} {
    %c0 = arith.constant 0 : index
    %c0_0 = arith.constant 0 : index
    %0 = vector.load %arg2[%c0, %c0_0] : memref<128x256xbf16, #tpu.memory_space<vmem>>, vector<128x256xbf16>
    %c0_1 = arith.constant 0 : index
    %c0_2 = arith.constant 0 : index
    %1 = vector.load %arg3[%c0_1, %c0_2] : memref<256x128xbf16, #tpu.memory_space<vmem>>, vector<256x128xbf16>
    %cst = arith.constant dense<0.000000e+00> : vector<128x128xf32>
    %2 = tpu.matmul %0, %1, %cst {dimension_numbers = #tpu.dot_dimension_numbers<[1], [0], [0], [1], [0, 0, 1, 1], [], []>} : vector<128x256xbf16>, vector<256x128xbf16>, vector<128x128xf32> -> vector<128x128xf32>
    %c0_3 = arith.constant 0 : index
    %c0_4 = arith.constant 0 : index
    %3 = vector.load %arg4[%c0_3, %c0_4] : memref<1x128xf32, #tpu.memory_space<vmem>>, vector<1x128xf32>
    %4 = vector.broadcast %3 : vector<1x128xf32> to vector<128x128xf32>
    %5 = arith.addf %2, %4 : vector<128x128xf32>
    %c0_5 = arith.constant 0 : index
    %c0_6 = arith.constant 0 : index
    %6 = vector.load %arg5[%c0_5, %c0_6] : memref<128x128xbf16, #tpu.memory_space<vmem>>, vector<128x128xbf16>
    %7 = arith.extf %6 : vector<128x128xbf16> to vector<128x128xf32>
    %8 = arith.addf %5, %7 : vector<128x128xf32>
    %cst_7 = arith.constant 0.000000e+00 : f32
    %9 = vector.broadcast %cst_7 : f32 to vector<128x128xf32>
    %10 = arith.maximumf %8, %9 : vector<128x128xf32>
    %11 = arith.truncf %10 : vector<128x128xf32> to vector<128x128xbf16>
    %c0_8 = arith.constant 0 : index
    %c0_9 = arith.constant 0 : index
    %12 = vector.load %arg6[%c0_8, %c0_9] : memref<128x128xbf16, #tpu.memory_space<vmem>>, vector<128x128xbf16>
    tpu.vector_store %arg6[%c0_8, %c0_9], %11 {strides = array<i32>} : memref<128x128xbf16, #tpu.memory_space<vmem>>, vector<128x128xbf16>,
    return
  }
  func.func @transform_0(%arg0: i32, %arg1: i32) -> (i32, i32) {
    %c0_i32 = arith.constant 0 : i32
    %c0_i32_0 = arith.constant 0 : i32
    return %arg0, %c0_i32 : i32, i32
  }
  func.func @transform_1(%arg0: i32, %arg1: i32) -> (i32, i32) {
    %c0_i32 = arith.constant 0 : i32
    %c0_i32_0 = arith.constant 0 : i32
    return %c0_i32, %arg1 : i32, i32
  }
  func.func @transform_2(%arg0: i32, %arg1: i32) -> (i32, i32) {
    %c0_i32 = arith.constant 0 : i32
    %c0_i32_0 = arith.constant 0 : i32
    return %c0_i32, %arg1 : i32, i32
  }
  func.func @transform_3(%arg0: i32, %arg1: i32) -> (i32, i32) {
    %c0_i32 = arith.constant 0 : i32
    return %arg0, %arg1 : i32, i32
  }
  func.func @transform_4(%arg0: i32, %arg1: i32) -> (i32, i32) {
    %c0_i32 = arith.constant 0 : i32
    return %arg0, %arg1 : i32, i32
  }
}

module attributes {stable_mosaic.version = 11 : i64} {
  func.func @_mm_kernel(%arg0: i32, %arg1: i32, %arg2: memref<32x256xbf16, #tpu.memory_space<vmem>>, %arg3: memref<256x128xbf16, #tpu.memory_space<vmem>>, %arg4: memref<1x128xf32, #tpu.memory_space<vmem>>, %arg5: memref<32x128xbf16, #tpu.memory_space<vmem>>) attributes {dimension_semantics = [#tpu.dimension_semantics<parallel>, #tpu.dimension_semantics<parallel>], iteration_bounds = array<i64: 1, 1>, scalar_prefetch = 0 : i64, scratch_operands = 0 : i64, tpu.core_type = #tpu.core_type<tc>, window_params = [{transform_indices = @transform_0, window_bounds = array<i64: 32, 256>}, {transform_indices = @transform_1, window_bounds = array<i64: 256, 128>}, {transform_indices = @transform_2, window_bounds = array<i64: 1, 128>}, {transform_indices = @transform_3, window_bounds = array<i64: 32, 128>}]} {
    %c0 = arith.constant 0 : index
    %c0_0 = arith.constant 0 : index
    %0 = vector.load %arg2[%c0, %c0_0] : memref<32x256xbf16, #tpu.memory_space<vmem>>, vector<32x256xbf16>
    %c0_1 = arith.constant 0 : index
    %c0_2 = arith.constant 0 : index
    %1 = vector.load %arg3[%c0_1, %c0_2] : memref<256x128xbf16, #tpu.memory_space<vmem>>, vector<256x128xbf16>
    %cst = arith.constant dense<0.000000e+00> : vector<32x128xf32>
    %2 = tpu.matmul %0, %1, %cst {dimension_numbers = #tpu.dot_dimension_numbers<[1], [0], [0], [1], [0, 0, 1, 1], [], []>} : vector<32x256xbf16>, vector<256x128xbf16>, vector<32x128xf32> -> vector<32x128xf32>
    %c0_3 = arith.constant 0 : index
    %c0_4 = arith.constant 0 : index
    %3 = vector.load %arg4[%c0_3, %c0_4] : memref<1x128xf32, #tpu.memory_space<vmem>>, vector<1x128xf32>
    %4 = vector.broadcast %3 : vector<1x128xf32> to vector<32x128xf32>
    %5 = arith.addf %2, %4 : vector<32x128xf32>
    %cst_5 = arith.constant 0.000000e+00 : f32
    %6 = vector.broadcast %cst_5 : f32 to vector<32x128xf32>
    %7 = arith.maximumf %5, %6 : vector<32x128xf32>
    %8 = arith.truncf %7 : vector<32x128xf32> to vector<32x128xbf16>
    %c0_6 = arith.constant 0 : index
    %c0_7 = arith.constant 0 : index
    %9 = vector.load %arg5[%c0_6, %c0_7] : memref<32x128xbf16, #tpu.memory_space<vmem>>, vector<32x128xbf16>
    tpu.vector_store %arg5[%c0_6, %c0_7], %8 {strides = array<i32>} : memref<32x128xbf16, #tpu.memory_space<vmem>>, vector<32x128xbf16>,
    return
  }
  func.func @transform_0(%arg0: i32, %arg1: i32) -> (i32, i32) {
    %c0_i32 = arith.constant 0 : i32
    %c0_i32_0 = arith.constant 0 : i32
    return %arg0, %c0_i32 : i32, i32
  }
  func.func @transform_1(%arg0: i32, %arg1: i32) -> (i32, i32) {
    %c0_i32 = arith.constant 0 : i32
    %c0_i32_0 = arith.constant 0 : i32
    return %c0_i32, %arg1 : i32, i32
  }
  func.func @transform_2(%arg0: i32, %arg1: i32) -> (i32, i32) {
    %c0_i32 = arith.constant 0 : i32
    %c0_i32_0 = arith.constant 0 : i32
    return %c0_i32, %arg1 : i32, i32
  }
  func.func @transform_3(%arg0: i32, %arg1: i32) -> (i32, i32) {
    %c0_i32 = arith.constant 0 : i32
    return %arg0, %arg1 : i32, i32
  }
}

module attributes {stable_mosaic.version = 11 : i64} {
  func.func @_mm_kernel(%arg0: i32, %arg1: i32, %arg2: memref<32x128xbf16, #tpu.memory_space<vmem>>, %arg3: memref<128x128xbf16, #tpu.memory_space<vmem>>, %arg4: memref<1x128xf32, #tpu.memory_space<vmem>>, %arg5: memref<32x128xbf16, #tpu.memory_space<vmem>>) attributes {dimension_semantics = [#tpu.dimension_semantics<parallel>, #tpu.dimension_semantics<parallel>], iteration_bounds = array<i64: 1, 1>, scalar_prefetch = 0 : i64, scratch_operands = 0 : i64, tpu.core_type = #tpu.core_type<tc>, window_params = [{transform_indices = @transform_0, window_bounds = array<i64: 32, 128>}, {transform_indices = @transform_1, window_bounds = array<i64: 128, 128>}, {transform_indices = @transform_2, window_bounds = array<i64: 1, 128>}, {transform_indices = @transform_3, window_bounds = array<i64: 32, 128>}]} {
    %c0 = arith.constant 0 : index
    %c0_0 = arith.constant 0 : index
    %0 = vector.load %arg2[%c0, %c0_0] : memref<32x128xbf16, #tpu.memory_space<vmem>>, vector<32x128xbf16>
    %c0_1 = arith.constant 0 : index
    %c0_2 = arith.constant 0 : index
    %1 = vector.load %arg3[%c0_1, %c0_2] : memref<128x128xbf16, #tpu.memory_space<vmem>>, vector<128x128xbf16>
    %cst = arith.constant dense<0.000000e+00> : vector<32x128xf32>
    %2 = tpu.matmul %0, %1, %cst {dimension_numbers = #tpu.dot_dimension_numbers<[1], [0], [0], [1], [0, 0, 1, 1], [], []>} : vector<32x128xbf16>, vector<128x128xbf16>, vector<32x128xf32> -> vector<32x128xf32>
    %c0_3 = arith.constant 0 : index
    %c0_4 = arith.constant 0 : index
    %3 = vector.load %arg4[%c0_3, %c0_4] : memref<1x128xf32, #tpu.memory_space<vmem>>, vector<1x128xf32>
    %4 = vector.broadcast %3 : vector<1x128xf32> to vector<32x128xf32>
    %5 = arith.addf %2, %4 : vector<32x128xf32>
    %6 = arith.truncf %5 : vector<32x128xf32> to vector<32x128xbf16>
    %c0_5 = arith.constant 0 : index
    %c0_6 = arith.constant 0 : index
    %7 = vector.load %arg5[%c0_5, %c0_6] : memref<32x128xbf16, #tpu.memory_space<vmem>>, vector<32x128xbf16>
    tpu.vector_store %arg5[%c0_5, %c0_6], %6 {strides = array<i32>} : memref<32x128xbf16, #tpu.memory_space<vmem>>, vector<32x128xbf16>,
    return
  }
  func.func @transform_0(%arg0: i32, %arg1: i32) -> (i32, i32) {
    %c0_i32 = arith.constant 0 : i32
    %c0_i32_0 = arith.constant 0 : i32
    return %arg0, %c0_i32 : i32, i32
  }
  func.func @transform_1(%arg0: i32, %arg1: i32) -> (i32, i32) {
    %c0_i32 = arith.constant 0 : i32
    %c0_i32_0 = arith.constant 0 : i32
    return %c0_i32, %arg1 : i32, i32
  }
  func.func @transform_2(%arg0: i32, %arg1: i32) -> (i32, i32) {
    %c0_i32 = arith.constant 0 : i32
    %c0_i32_0 = arith.constant 0 : i32
    return %c0_i32, %arg1 : i32, i32
  }
  func.func @transform_3(%arg0: i32, %arg1: i32) -> (i32, i32) {
    %c0_i32 = arith.constant 0 : i32
    return %arg0, %arg1 : i32, i32
  }
}

module attributes {stable_mosaic.version = 11 : i64} {
  func.func @_mm_kernel(%arg0: i32, %arg1: i32, %arg2: memref<32x384xbf16, #tpu.memory_space<vmem>>, %arg3: memref<384x128xbf16, #tpu.memory_space<vmem>>, %arg4: memref<1x128xf32, #tpu.memory_space<vmem>>, %arg5: memref<32x128xbf16, #tpu.memory_space<vmem>>, %arg6: memref<32x128xbf16, #tpu.memory_space<vmem>>) attributes {dimension_semantics = [#tpu.dimension_semantics<parallel>, #tpu.dimension_semantics<parallel>], iteration_bounds = array<i64: 1, 1>, scalar_prefetch = 0 : i64, scratch_operands = 0 : i64, tpu.core_type = #tpu.core_type<tc>, window_params = [{transform_indices = @transform_0, window_bounds = array<i64: 32, 384>}, {transform_indices = @transform_1, window_bounds = array<i64: 384, 128>}, {transform_indices = @transform_2, window_bounds = array<i64: 1, 128>}, {transform_indices = @transform_3, window_bounds = array<i64: 32, 128>}, {transform_indices = @transform_4, window_bounds = array<i64: 32, 128>}]} {
    %c0 = arith.constant 0 : index
    %c0_0 = arith.constant 0 : index
    %0 = vector.load %arg2[%c0, %c0_0] : memref<32x384xbf16, #tpu.memory_space<vmem>>, vector<32x384xbf16>
    %c0_1 = arith.constant 0 : index
    %c0_2 = arith.constant 0 : index
    %1 = vector.load %arg3[%c0_1, %c0_2] : memref<384x128xbf16, #tpu.memory_space<vmem>>, vector<384x128xbf16>
    %cst = arith.constant dense<0.000000e+00> : vector<32x128xf32>
    %2 = tpu.matmul %0, %1, %cst {dimension_numbers = #tpu.dot_dimension_numbers<[1], [0], [0], [1], [0, 0, 1, 1], [], []>} : vector<32x384xbf16>, vector<384x128xbf16>, vector<32x128xf32> -> vector<32x128xf32>
    %c0_3 = arith.constant 0 : index
    %c0_4 = arith.constant 0 : index
    %3 = vector.load %arg4[%c0_3, %c0_4] : memref<1x128xf32, #tpu.memory_space<vmem>>, vector<1x128xf32>
    %4 = vector.broadcast %3 : vector<1x128xf32> to vector<32x128xf32>
    %5 = arith.addf %2, %4 : vector<32x128xf32>
    %c0_5 = arith.constant 0 : index
    %c0_6 = arith.constant 0 : index
    %6 = vector.load %arg5[%c0_5, %c0_6] : memref<32x128xbf16, #tpu.memory_space<vmem>>, vector<32x128xbf16>
    %7 = arith.extf %6 : vector<32x128xbf16> to vector<32x128xf32>
    %8 = arith.addf %5, %7 : vector<32x128xf32>
    %cst_7 = arith.constant 0.000000e+00 : f32
    %9 = vector.broadcast %cst_7 : f32 to vector<32x128xf32>
    %10 = arith.maximumf %8, %9 : vector<32x128xf32>
    %11 = arith.truncf %10 : vector<32x128xf32> to vector<32x128xbf16>
    %c0_8 = arith.constant 0 : index
    %c0_9 = arith.constant 0 : index
    %12 = vector.load %arg6[%c0_8, %c0_9] : memref<32x128xbf16, #tpu.memory_space<vmem>>, vector<32x128xbf16>
    tpu.vector_store %arg6[%c0_8, %c0_9], %11 {strides = array<i32>} : memref<32x128xbf16, #tpu.memory_space<vmem>>, vector<32x128xbf16>,
    return
  }
  func.func @transform_0(%arg0: i32, %arg1: i32) -> (i32, i32) {
    %c0_i32 = arith.constant 0 : i32
    %c0_i32_0 = arith.constant 0 : i32
    return %arg0, %c0_i32 : i32, i32
  }
  func.func @transform_1(%arg0: i32, %arg1: i32) -> (i32, i32) {
    %c0_i32 = arith.constant 0 : i32
    %c0_i32_0 = arith.constant 0 : i32
    return %c0_i32, %arg1 : i32, i32
  }
  func.func @transform_2(%arg0: i32, %arg1: i32) -> (i32, i32) {
    %c0_i32 = arith.constant 0 : i32
    %c0_i32_0 = arith.constant 0 : i32
    return %c0_i32, %arg1 : i32, i32
  }
  func.func @transform_3(%arg0: i32, %arg1: i32) -> (i32, i32) {
    %c0_i32 = arith.constant 0 : i32
    return %arg0, %arg1 : i32, i32
  }
  func.func @transform_4(%arg0: i32, %arg1: i32) -> (i32, i32) {
    %c0_i32 = arith.constant 0 : i32
    return %arg0, %arg1 : i32, i32
  }
}

module attributes {stable_mosaic.version = 11 : i64} {
  func.func @_mm_kernel(%arg0: i32, %arg1: i32, %arg2: memref<8x384xbf16, #tpu.memory_space<vmem>>, %arg3: memref<384x128xbf16, #tpu.memory_space<vmem>>, %arg4: memref<1x128xf32, #tpu.memory_space<vmem>>, %arg5: memref<8x128xbf16, #tpu.memory_space<vmem>>) attributes {dimension_semantics = [#tpu.dimension_semantics<parallel>, #tpu.dimension_semantics<parallel>], iteration_bounds = array<i64: 1, 1>, scalar_prefetch = 0 : i64, scratch_operands = 0 : i64, tpu.core_type = #tpu.core_type<tc>, window_params = [{transform_indices = @transform_0, window_bounds = array<i64: 8, 384>}, {transform_indices = @transform_1, window_bounds = array<i64: 384, 128>}, {transform_indices = @transform_2, window_bounds = array<i64: 1, 128>}, {transform_indices = @transform_3, window_bounds = array<i64: 8, 128>}]} {
    %c0 = arith.constant 0 : index
    %c0_0 = arith.constant 0 : index
    %0 = vector.load %arg2[%c0, %c0_0] : memref<8x384xbf16, #tpu.memory_space<vmem>>, vector<8x384xbf16>
    %c0_1 = arith.constant 0 : index
    %c0_2 = arith.constant 0 : index
    %1 = vector.load %arg3[%c0_1, %c0_2] : memref<384x128xbf16, #tpu.memory_space<vmem>>, vector<384x128xbf16>
    %cst = arith.constant dense<0.000000e+00> : vector<8x128xf32>
    %2 = tpu.matmul %0, %1, %cst {dimension_numbers = #tpu.dot_dimension_numbers<[1], [0], [0], [1], [0, 0, 1, 1], [], []>} : vector<8x384xbf16>, vector<384x128xbf16>, vector<8x128xf32> -> vector<8x128xf32>
    %c0_3 = arith.constant 0 : index
    %c0_4 = arith.constant 0 : index
    %3 = vector.load %arg4[%c0_3, %c0_4] : memref<1x128xf32, #tpu.memory_space<vmem>>, vector<1x128xf32>
    %4 = vector.broadcast %3 : vector<1x128xf32> to vector<8x128xf32>
    %5 = arith.addf %2, %4 : vector<8x128xf32>
    %cst_5 = arith.constant 0.000000e+00 : f32
    %6 = vector.broadcast %cst_5 : f32 to vector<8x128xf32>
    %7 = arith.maximumf %5, %6 : vector<8x128xf32>
    %8 = arith.truncf %7 : vector<8x128xf32> to vector<8x128xbf16>
    %c0_6 = arith.constant 0 : index
    %c0_7 = arith.constant 0 : index
    %9 = vector.load %arg5[%c0_6, %c0_7] : memref<8x128xbf16, #tpu.memory_space<vmem>>, vector<8x128xbf16>
    tpu.vector_store %arg5[%c0_6, %c0_7], %8 {strides = array<i32>} : memref<8x128xbf16, #tpu.memory_space<vmem>>, vector<8x128xbf16>,
    return
  }
  func.func @transform_0(%arg0: i32, %arg1: i32) -> (i32, i32) {
    %c0_i32 = arith.constant 0 : i32
    %c0_i32_0 = arith.constant 0 : i32
    return %arg0, %c0_i32 : i32, i32
  }
  func.func @transform_1(%arg0: i32, %arg1: i32) -> (i32, i32) {
    %c0_i32 = arith.constant 0 : i32
    %c0_i32_0 = arith.constant 0 : i32
    return %c0_i32, %arg1 : i32, i32
  }
  func.func @transform_2(%arg0: i32, %arg1: i32) -> (i32, i32) {
    %c0_i32 = arith.constant 0 : i32
    %c0_i32_0 = arith.constant 0 : i32
    return %c0_i32, %arg1 : i32, i32
  }
  func.func @transform_3(%arg0: i32, %arg1: i32) -> (i32, i32) {
    %c0_i32 = arith.constant 0 : i32
    return %arg0, %arg1 : i32, i32
  }
}

module attributes {stable_mosaic.version = 11 : i64} {
  func.func @_mm_kernel(%arg0: i32, %arg1: i32, %arg2: memref<8x640xbf16, #tpu.memory_space<vmem>>, %arg3: memref<640x128xbf16, #tpu.memory_space<vmem>>, %arg4: memref<1x128xf32, #tpu.memory_space<vmem>>, %arg5: memref<8x128xbf16, #tpu.memory_space<vmem>>, %arg6: memref<8x128xbf16, #tpu.memory_space<vmem>>) attributes {dimension_semantics = [#tpu.dimension_semantics<parallel>, #tpu.dimension_semantics<parallel>], iteration_bounds = array<i64: 1, 1>, scalar_prefetch = 0 : i64, scratch_operands = 0 : i64, tpu.core_type = #tpu.core_type<tc>, window_params = [{transform_indices = @transform_0, window_bounds = array<i64: 8, 640>}, {transform_indices = @transform_1, window_bounds = array<i64: 640, 128>}, {transform_indices = @transform_2, window_bounds = array<i64: 1, 128>}, {transform_indices = @transform_3, window_bounds = array<i64: 8, 128>}, {transform_indices = @transform_4, window_bounds = array<i64: 8, 128>}]} {
    %c0 = arith.constant 0 : index
    %c0_0 = arith.constant 0 : index
    %0 = vector.load %arg2[%c0, %c0_0] : memref<8x640xbf16, #tpu.memory_space<vmem>>, vector<8x640xbf16>
    %c0_1 = arith.constant 0 : index
    %c0_2 = arith.constant 0 : index
    %1 = vector.load %arg3[%c0_1, %c0_2] : memref<640x128xbf16, #tpu.memory_space<vmem>>, vector<640x128xbf16>
    %cst = arith.constant dense<0.000000e+00> : vector<8x128xf32>
    %2 = tpu.matmul %0, %1, %cst {dimension_numbers = #tpu.dot_dimension_numbers<[1], [0], [0], [1], [0, 0, 1, 1], [], []>} : vector<8x640xbf16>, vector<640x128xbf16>, vector<8x128xf32> -> vector<8x128xf32>
    %c0_3 = arith.constant 0 : index
    %c0_4 = arith.constant 0 : index
    %3 = vector.load %arg4[%c0_3, %c0_4] : memref<1x128xf32, #tpu.memory_space<vmem>>, vector<1x128xf32>
    %4 = vector.broadcast %3 : vector<1x128xf32> to vector<8x128xf32>
    %5 = arith.addf %2, %4 : vector<8x128xf32>
    %c0_5 = arith.constant 0 : index
    %c0_6 = arith.constant 0 : index
    %6 = vector.load %arg5[%c0_5, %c0_6] : memref<8x128xbf16, #tpu.memory_space<vmem>>, vector<8x128xbf16>
    %7 = arith.extf %6 : vector<8x128xbf16> to vector<8x128xf32>
    %8 = arith.addf %5, %7 : vector<8x128xf32>
    %cst_7 = arith.constant 0.000000e+00 : f32
    %9 = vector.broadcast %cst_7 : f32 to vector<8x128xf32>
    %10 = arith.maximumf %8, %9 : vector<8x128xf32>
    %11 = arith.truncf %10 : vector<8x128xf32> to vector<8x128xbf16>
    %c0_8 = arith.constant 0 : index
    %c0_9 = arith.constant 0 : index
    %12 = vector.load %arg6[%c0_8, %c0_9] : memref<8x128xbf16, #tpu.memory_space<vmem>>, vector<8x128xbf16>
    tpu.vector_store %arg6[%c0_8, %c0_9], %11 {strides = array<i32>} : memref<8x128xbf16, #tpu.memory_space<vmem>>, vector<8x128xbf16>,
    return
  }
  func.func @transform_0(%arg0: i32, %arg1: i32) -> (i32, i32) {
    %c0_i32 = arith.constant 0 : i32
    %c0_i32_0 = arith.constant 0 : i32
    return %arg0, %c0_i32 : i32, i32
  }
  func.func @transform_1(%arg0: i32, %arg1: i32) -> (i32, i32) {
    %c0_i32 = arith.constant 0 : i32
    %c0_i32_0 = arith.constant 0 : i32
    return %c0_i32, %arg1 : i32, i32
  }
  func.func @transform_2(%arg0: i32, %arg1: i32) -> (i32, i32) {
    %c0_i32 = arith.constant 0 : i32
    %c0_i32_0 = arith.constant 0 : i32
    return %c0_i32, %arg1 : i32, i32
  }
  func.func @transform_3(%arg0: i32, %arg1: i32) -> (i32, i32) {
    %c0_i32 = arith.constant 0 : i32
    return %arg0, %arg1 : i32, i32
  }
  func.func @transform_4(%arg0: i32, %arg1: i32) -> (i32, i32) {
    %c0_i32 = arith.constant 0 : i32
    return %arg0, %arg1 : i32, i32
  }
}

module attributes {stable_mosaic.version = 11 : i64} {
  func.func @_mm_kernel(%arg0: i32, %arg1: i32, %arg2: memref<8x128xbf16, #tpu.memory_space<vmem>>, %arg3: memref<128x128xbf16, #tpu.memory_space<vmem>>, %arg4: memref<1x128xf32, #tpu.memory_space<vmem>>, %arg5: memref<8x128xbf16, #tpu.memory_space<vmem>>) attributes {dimension_semantics = [#tpu.dimension_semantics<parallel>, #tpu.dimension_semantics<parallel>], iteration_bounds = array<i64: 1, 1>, scalar_prefetch = 0 : i64, scratch_operands = 0 : i64, tpu.core_type = #tpu.core_type<tc>, window_params = [{transform_indices = @transform_0, window_bounds = array<i64: 8, 128>}, {transform_indices = @transform_1, window_bounds = array<i64: 128, 128>}, {transform_indices = @transform_2, window_bounds = array<i64: 1, 128>}, {transform_indices = @transform_3, window_bounds = array<i64: 8, 128>}]} {
    %c0 = arith.constant 0 : index
    %c0_0 = arith.constant 0 : index
    %0 = vector.load %arg2[%c0, %c0_0] : memref<8x128xbf16, #tpu.memory_space<vmem>>, vector<8x128xbf16>
    %c0_1 = arith.constant 0 : index
    %c0_2 = arith.constant 0 : index
    %1 = vector.load %arg3[%c0_1, %c0_2] : memref<128x128xbf16, #tpu.memory_space<vmem>>, vector<128x128xbf16>
    %cst = arith.constant dense<0.000000e+00> : vector<8x128xf32>
    %2 = tpu.matmul %0, %1, %cst {dimension_numbers = #tpu.dot_dimension_numbers<[1], [0], [0], [1], [0, 0, 1, 1], [], []>} : vector<8x128xbf16>, vector<128x128xbf16>, vector<8x128xf32> -> vector<8x128xf32>
    %c0_3 = arith.constant 0 : index
    %c0_4 = arith.constant 0 : index
    %3 = vector.load %arg4[%c0_3, %c0_4] : memref<1x128xf32, #tpu.memory_space<vmem>>, vector<1x128xf32>
    %4 = vector.broadcast %3 : vector<1x128xf32> to vector<8x128xf32>
    %5 = arith.addf %2, %4 : vector<8x128xf32>
    %6 = arith.truncf %5 : vector<8x128xf32> to vector<8x128xbf16>
    %c0_5 = arith.constant 0 : index
    %c0_6 = arith.constant 0 : index
    %7 = vector.load %arg5[%c0_5, %c0_6] : memref<8x128xbf16, #tpu.memory_space<vmem>>, vector<8x128xbf16>
    tpu.vector_store %arg5[%c0_5, %c0_6], %6 {strides = array<i32>} : memref<8x128xbf16, #tpu.memory_space<vmem>>, vector<8x128xbf16>,
    return
  }
  func.func @transform_0(%arg0: i32, %arg1: i32) -> (i32, i32) {
    %c0_i32 = arith.constant 0 : i32
    %c0_i32_0 = arith.constant 0 : i32
    return %arg0, %c0_i32 : i32, i32
  }
  func.func @transform_1(%arg0: i32, %arg1: i32) -> (i32, i32) {
    %c0_i32 = arith.constant 0 : i32
    %c0_i32_0 = arith.constant 0 : i32
    return %c0_i32, %arg1 : i32, i32
  }
  func.func @transform_2(%arg0: i32, %arg1: i32) -> (i32, i32) {
    %c0_i32 = arith.constant 0 : i32
    %c0_i32_0 = arith.constant 0 : i32
    return %c0_i32, %arg1 : i32, i32
  }
  func.func @transform_3(%arg0: i32, %arg1: i32) -> (i32, i32) {
    %c0_i32 = arith.constant 0 : i32
    return %arg0, %arg1 : i32, i32
  }
}

module attributes {stable_mosaic.version = 11 : i64} {
  func.func @_chain_kernel(%arg0: i32, %arg1: memref<8x640xbf16, #tpu.memory_space<vmem>>, %arg2: memref<640x128xbf16, #tpu.memory_space<vmem>>, %arg3: memref<1x128xf32, #tpu.memory_space<vmem>>, %arg4: memref<128x128xbf16, #tpu.memory_space<vmem>>, %arg5: memref<1x128xf32, #tpu.memory_space<vmem>>, %arg6: memref<8x128xbf16, #tpu.memory_space<vmem>>) attributes {dimension_semantics = [#tpu.dimension_semantics<arbitrary>], iteration_bounds = array<i64: 1>, scalar_prefetch = 0 : i64, scratch_operands = 0 : i64, tpu.core_type = #tpu.core_type<tc>, window_params = [{pipeline_mode = #tpu.pipeline_mode<synchronous>, transform_indices = @transform_0, window_bounds = array<i64: 8, 640>}, {pipeline_mode = #tpu.pipeline_mode<synchronous>, transform_indices = @transform_1, window_bounds = array<i64: 640, 128>}, {pipeline_mode = #tpu.pipeline_mode<synchronous>, transform_indices = @transform_2, window_bounds = array<i64: 1, 128>}, {pipeline_mode = #tpu.pipeline_mode<synchronous>, transform_indices = @transform_3, window_bounds = array<i64: 128, 128>}, {pipeline_mode = #tpu.pipeline_mode<synchronous>, transform_indices = @transform_4, window_bounds = array<i64: 1, 128>}, {pipeline_mode = #tpu.pipeline_mode<synchronous>, transform_indices = @transform_5, window_bounds = array<i64: 8, 128>}]} {
    %c0 = arith.constant 0 : index
    %c0_0 = arith.constant 0 : index
    %0 = vector.load %arg1[%c0, %c0_0] : memref<8x640xbf16, #tpu.memory_space<vmem>>, vector<8x640xbf16>
    %c0_1 = arith.constant 0 : index
    %c0_2 = arith.constant 0 : index
    %1 = vector.load %arg2[%c0_1, %c0_2] : memref<640x128xbf16, #tpu.memory_space<vmem>>, vector<640x128xbf16>
    %cst = arith.constant dense<0.000000e+00> : vector<8x128xf32>
    %2 = tpu.matmul %0, %1, %cst {dimension_numbers = #tpu.dot_dimension_numbers<[1], [0], [0], [1], [0, 0, 1, 1], [], []>} : vector<8x640xbf16>, vector<640x128xbf16>, vector<8x128xf32> -> vector<8x128xf32>
    %c0_3 = arith.constant 0 : index
    %c0_4 = arith.constant 0 : index
    %3 = vector.load %arg3[%c0_3, %c0_4] : memref<1x128xf32, #tpu.memory_space<vmem>>, vector<1x128xf32>
    %4 = vector.broadcast %3 : vector<1x128xf32> to vector<8x128xf32>
    %5 = arith.addf %2, %4 : vector<8x128xf32>
    %cst_5 = arith.constant 0.000000e+00 : f32
    %6 = vector.broadcast %cst_5 : f32 to vector<8x128xf32>
    %7 = arith.maximumf %5, %6 : vector<8x128xf32>
    %8 = arith.truncf %7 : vector<8x128xf32> to vector<8x128xbf16>
    %c0_6 = arith.constant 0 : index
    %c0_7 = arith.constant 0 : index
    %9 = vector.load %arg4[%c0_6, %c0_7] : memref<128x128xbf16, #tpu.memory_space<vmem>>, vector<128x128xbf16>
    %cst_8 = arith.constant dense<0.000000e+00> : vector<8x128xf32>
    %10 = tpu.matmul %8, %9, %cst_8 {dimension_numbers = #tpu.dot_dimension_numbers<[1], [0], [0], [1], [0, 0, 1, 1], [], []>} : vector<8x128xbf16>, vector<128x128xbf16>, vector<8x128xf32> -> vector<8x128xf32>
    %c0_9 = arith.constant 0 : index
    %c0_10 = arith.constant 0 : index
    %11 = vector.load %arg5[%c0_9, %c0_10] : memref<1x128xf32, #tpu.memory_space<vmem>>, vector<1x128xf32>
    %12 = vector.broadcast %11 : vector<1x128xf32> to vector<8x128xf32>
    %13 = arith.addf %10, %12 : vector<8x128xf32>
    %14 = arith.truncf %13 : vector<8x128xf32> to vector<8x128xbf16>
    %c0_11 = arith.constant 0 : index
    %c0_12 = arith.constant 0 : index
    %15 = vector.load %arg6[%c0_11, %c0_12] : memref<8x128xbf16, #tpu.memory_space<vmem>>, vector<8x128xbf16>
    tpu.vector_store %arg6[%c0_11, %c0_12], %14 {strides = array<i32>} : memref<8x128xbf16, #tpu.memory_space<vmem>>, vector<8x128xbf16>,
    return
  }
  func.func @transform_0(%arg0: i32) -> (i32, i32) {
    %c0_i32 = arith.constant 0 : i32
    %c0_i32_0 = arith.constant 0 : i32
    %c0_i32_1 = arith.constant 0 : i32
    return %c0_i32, %c0_i32_0 : i32, i32
  }
  func.func @transform_1(%arg0: i32) -> (i32, i32) {
    %c0_i32 = arith.constant 0 : i32
    %c0_i32_0 = arith.constant 0 : i32
    %c0_i32_1 = arith.constant 0 : i32
    return %c0_i32, %c0_i32_0 : i32, i32
  }
  func.func @transform_2(%arg0: i32) -> (i32, i32) {
    %c0_i32 = arith.constant 0 : i32
    %c0_i32_0 = arith.constant 0 : i32
    %c0_i32_1 = arith.constant 0 : i32
    return %c0_i32, %c0_i32_0 : i32, i32
  }
  func.func @transform_3(%arg0: i32) -> (i32, i32) {
    %c0_i32 = arith.constant 0 : i32
    %c0_i32_0 = arith.constant 0 : i32
    %c0_i32_1 = arith.constant 0 : i32
    return %c0_i32, %c0_i32_0 : i32, i32
  }
  func.func @transform_4(%arg0: i32) -> (i32, i32) {
    %c0_i32 = arith.constant 0 : i32
    %c0_i32_0 = arith.constant 0 : i32
    %c0_i32_1 = arith.constant 0 : i32
    return %c0_i32, %c0_i32_0 : i32, i32
  }
  func.func @transform_5(%arg0: i32) -> (i32, i32) {
    %c0_i32 = arith.constant 0 : i32
    %c0_i32_0 = arith.constant 0 : i32
    %c0_i32_1 = arith.constant 0 : i32
    return %c0_i32, %c0_i32_0 : i32, i32
  }
}

module attributes {stable_mosaic.version = 11 : i64} {
  func.func @_chain_kernel(%arg0: i32, %arg1: memref<8x512xbf16, #tpu.memory_space<vmem>>, %arg2: memref<512x512xbf16, #tpu.memory_space<vmem>>, %arg3: memref<1x512xf32, #tpu.memory_space<vmem>>, %arg4: memref<512x256xbf16, #tpu.memory_space<vmem>>, %arg5: memref<1x256xf32, #tpu.memory_space<vmem>>, %arg6: memref<256x128xbf16, #tpu.memory_space<vmem>>, %arg7: memref<1x128xf32, #tpu.memory_space<vmem>>, %arg8: memref<8x128xf32, #tpu.memory_space<vmem>>) attributes {dimension_semantics = [#tpu.dimension_semantics<arbitrary>], iteration_bounds = array<i64: 1>, scalar_prefetch = 0 : i64, scratch_operands = 0 : i64, tpu.core_type = #tpu.core_type<tc>, window_params = [{pipeline_mode = #tpu.pipeline_mode<synchronous>, transform_indices = @transform_0, window_bounds = array<i64: 8, 512>}, {pipeline_mode = #tpu.pipeline_mode<synchronous>, transform_indices = @transform_1, window_bounds = array<i64: 512, 512>}, {pipeline_mode = #tpu.pipeline_mode<synchronous>, transform_indices = @transform_2, window_bounds = array<i64: 1, 512>}, {pipeline_mode = #tpu.pipeline_mode<synchronous>, transform_indices = @transform_3, window_bounds = array<i64: 512, 256>}, {pipeline_mode = #tpu.pipeline_mode<synchronous>, transform_indices = @transform_4, window_bounds = array<i64: 1, 256>}, {pipeline_mode = #tpu.pipeline_mode<synchronous>, transform_indices = @transform_5, window_bounds = array<i64: 256, 128>}, {pipeline_mode = #tpu.pipeline_mode<synchronous>, transform_indices = @transform_6, window_bounds = array<i64: 1, 128>}, {pipeline_mode = #tpu.pipeline_mode<synchronous>, transform_indices = @transform_7, window_bounds = array<i64: 8, 128>}]} {
    %c0 = arith.constant 0 : index
    %c0_0 = arith.constant 0 : index
    %0 = vector.load %arg1[%c0, %c0_0] : memref<8x512xbf16, #tpu.memory_space<vmem>>, vector<8x512xbf16>
    %c0_1 = arith.constant 0 : index
    %c0_2 = arith.constant 0 : index
    %1 = vector.load %arg2[%c0_1, %c0_2] : memref<512x512xbf16, #tpu.memory_space<vmem>>, vector<512x512xbf16>
    %cst = arith.constant dense<0.000000e+00> : vector<8x512xf32>
    %2 = tpu.matmul %0, %1, %cst {dimension_numbers = #tpu.dot_dimension_numbers<[1], [0], [0], [1], [0, 0, 1, 1], [], []>} : vector<8x512xbf16>, vector<512x512xbf16>, vector<8x512xf32> -> vector<8x512xf32>
    %c0_3 = arith.constant 0 : index
    %c0_4 = arith.constant 0 : index
    %3 = vector.load %arg3[%c0_3, %c0_4] : memref<1x512xf32, #tpu.memory_space<vmem>>, vector<1x512xf32>
    %4 = vector.broadcast %3 : vector<1x512xf32> to vector<8x512xf32>
    %5 = arith.addf %2, %4 : vector<8x512xf32>
    %cst_5 = arith.constant 0.000000e+00 : f32
    %6 = vector.broadcast %cst_5 : f32 to vector<8x512xf32>
    %7 = arith.maximumf %5, %6 : vector<8x512xf32>
    %8 = arith.truncf %7 : vector<8x512xf32> to vector<8x512xbf16>
    %c0_6 = arith.constant 0 : index
    %c0_7 = arith.constant 0 : index
    %9 = vector.load %arg4[%c0_6, %c0_7] : memref<512x256xbf16, #tpu.memory_space<vmem>>, vector<512x256xbf16>
    %cst_8 = arith.constant dense<0.000000e+00> : vector<8x256xf32>
    %10 = tpu.matmul %8, %9, %cst_8 {dimension_numbers = #tpu.dot_dimension_numbers<[1], [0], [0], [1], [0, 0, 1, 1], [], []>} : vector<8x512xbf16>, vector<512x256xbf16>, vector<8x256xf32> -> vector<8x256xf32>
    %c0_9 = arith.constant 0 : index
    %c0_10 = arith.constant 0 : index
    %11 = vector.load %arg5[%c0_9, %c0_10] : memref<1x256xf32, #tpu.memory_space<vmem>>, vector<1x256xf32>
    %12 = vector.broadcast %11 : vector<1x256xf32> to vector<8x256xf32>
    %13 = arith.addf %10, %12 : vector<8x256xf32>
    %cst_11 = arith.constant 0.000000e+00 : f32
    %14 = vector.broadcast %cst_11 : f32 to vector<8x256xf32>
    %15 = arith.maximumf %13, %14 : vector<8x256xf32>
    %16 = arith.truncf %15 : vector<8x256xf32> to vector<8x256xbf16>
    %c0_12 = arith.constant 0 : index
    %c0_13 = arith.constant 0 : index
    %17 = vector.load %arg6[%c0_12, %c0_13] : memref<256x128xbf16, #tpu.memory_space<vmem>>, vector<256x128xbf16>
    %cst_14 = arith.constant dense<0.000000e+00> : vector<8x128xf32>
    %18 = tpu.matmul %16, %17, %cst_14 {dimension_numbers = #tpu.dot_dimension_numbers<[1], [0], [0], [1], [0, 0, 1, 1], [], []>} : vector<8x256xbf16>, vector<256x128xbf16>, vector<8x128xf32> -> vector<8x128xf32>
    %c0_15 = arith.constant 0 : index
    %c0_16 = arith.constant 0 : index
    %19 = vector.load %arg7[%c0_15, %c0_16] : memref<1x128xf32, #tpu.memory_space<vmem>>, vector<1x128xf32>
    %20 = vector.broadcast %19 : vector<1x128xf32> to vector<8x128xf32>
    %21 = arith.addf %18, %20 : vector<8x128xf32>
    %c0_17 = arith.constant 0 : index
    %c0_18 = arith.constant 0 : index
    %22 = vector.load %arg8[%c0_17, %c0_18] : memref<8x128xf32, #tpu.memory_space<vmem>>, vector<8x128xf32>
    tpu.vector_store %arg8[%c0_17, %c0_18], %21 {strides = array<i32>} : memref<8x128xf32, #tpu.memory_space<vmem>>, vector<8x128xf32>,
    return
  }
  func.func @transform_0(%arg0: i32) -> (i32, i32) {
    %c0_i32 = arith.constant 0 : i32
    %c0_i32_0 = arith.constant 0 : i32
    %c0_i32_1 = arith.constant 0 : i32
    return %c0_i32, %c0_i32_0 : i32, i32
  }
  func.func @transform_1(%arg0: i32) -> (i32, i32) {
    %c0_i32 = arith.constant 0 : i32
    %c0_i32_0 = arith.constant 0 : i32
    %c0_i32_1 = arith.constant 0 : i32
    return %c0_i32, %c0_i32_0 : i32, i32
  }
  func.func @transform_2(%arg0: i32) -> (i32, i32) {
    %c0_i32 = arith.constant 0 : i32
    %c0_i32_0 = arith.constant 0 : i32
    %c0_i32_1 = arith.constant 0 : i32
    return %c0_i32, %c0_i32_0 : i32, i32
  }
  func.func @transform_3(%arg0: i32) -> (i32, i32) {
    %c0_i32 = arith.constant 0 : i32
    %c0_i32_0 = arith.constant 0 : i32
    %c0_i32_1 = arith.constant 0 : i32
    return %c0_i32, %c0_i32_0 : i32, i32
  }
  func.func @transform_4(%arg0: i32) -> (i32, i32) {
    %c0_i32 = arith.constant 0 : i32
    %c0_i32_0 = arith.constant 0 : i32
    %c0_i32_1 = arith.constant 0 : i32
    return %c0_i32, %c0_i32_0 : i32, i32
  }
  func.func @transform_5(%arg0: i32) -> (i32, i32) {
    %c0_i32 = arith.constant 0 : i32
    %c0_i32_0 = arith.constant 0 : i32
    %c0_i32_1 = arith.constant 0 : i32
    return %c0_i32, %c0_i32_0 : i32, i32
  }
  func.func @transform_6(%arg0: i32) -> (i32, i32) {
    %c0_i32 = arith.constant 0 : i32
    %c0_i32_0 = arith.constant 0 : i32
    %c0_i32_1 = arith.constant 0 : i32
    return %c0_i32, %c0_i32_0 : i32, i32
  }
  func.func @transform_7(%arg0: i32) -> (i32, i32) {
    %c0_i32 = arith.constant 0 : i32
    %c0_i32_0 = arith.constant 0 : i32
    %c0_i32_1 = arith.constant 0 : i32
    return %c0_i32, %c0_i32_0 : i32, i32
  }
}

module attributes {stable_mosaic.version = 11 : i64} {
  func.func @_mm_kernel(%arg0: i32, %arg1: i32, %arg2: memref<32x4xbf16, #tpu.memory_space<vmem>>, %arg3: memref<4x512xbf16, #tpu.memory_space<vmem>>, %arg4: memref<1x512xf32, #tpu.memory_space<vmem>>, %arg5: memref<32x512xf32, #tpu.memory_space<vmem>>) attributes {dimension_semantics = [#tpu.dimension_semantics<parallel>, #tpu.dimension_semantics<parallel>], iteration_bounds = array<i64: 1, 8>, scalar_prefetch = 0 : i64, scratch_operands = 0 : i64, tpu.core_type = #tpu.core_type<tc>, window_params = [{transform_indices = @transform_0, window_bounds = array<i64: 32, 4>}, {transform_indices = @transform_1, window_bounds = array<i64: 4, 512>}, {transform_indices = @transform_2, window_bounds = array<i64: 1, 512>}, {transform_indices = @transform_3, window_bounds = array<i64: 32, 512>}]} {
    %c0 = arith.constant 0 : index
    %c0_0 = arith.constant 0 : index
    %0 = vector.load %arg2[%c0, %c0_0] : memref<32x4xbf16, #tpu.memory_space<vmem>>, vector<32x4xbf16>
    %c0_1 = arith.constant 0 : index
    %c0_2 = arith.constant 0 : index
    %1 = vector.load %arg3[%c0_1, %c0_2] : memref<4x512xbf16, #tpu.memory_space<vmem>>, vector<4x512xbf16>
    %cst = arith.constant dense<0.000000e+00> : vector<32x512xf32>
    %2 = tpu.matmul %0, %1, %cst {dimension_numbers = #tpu.dot_dimension_numbers<[1], [0], [0], [1], [0, 0, 1, 1], [], []>} : vector<32x4xbf16>, vector<4x512xbf16>, vector<32x512xf32> -> vector<32x512xf32>
    %c0_3 = arith.constant 0 : index
    %c0_4 = arith.constant 0 : index
    %3 = vector.load %arg4[%c0_3, %c0_4] : memref<1x512xf32, #tpu.memory_space<vmem>>, vector<1x512xf32>
    %4 = vector.broadcast %3 : vector<1x512xf32> to vector<32x512xf32>
    %5 = arith.addf %2, %4 : vector<32x512xf32>
    %c0_5 = arith.constant 0 : index
    %c0_6 = arith.constant 0 : index
    %6 = vector.load %arg5[%c0_5, %c0_6] : memref<32x512xf32, #tpu.memory_space<vmem>>, vector<32x512xf32>
    tpu.vector_store %arg5[%c0_5, %c0_6], %5 {strides = array<i32>} : memref<32x512xf32, #tpu.memory_space<vmem>>, vector<32x512xf32>,
    return
  }
  func.func @transform_0(%arg0: i32, %arg1: i32) -> (i32, i32) {
    %c0_i32 = arith.constant 0 : i32
    %c0_i32_0 = arith.constant 0 : i32
    return %arg0, %c0_i32 : i32, i32
  }
  func.func @transform_1(%arg0: i32, %arg1: i32) -> (i32, i32) {
    %c0_i32 = arith.constant 0 : i32
    %c0_i32_0 = arith.constant 0 : i32
    return %c0_i32, %arg1 : i32, i32
  }
  func.func @transform_2(%arg0: i32, %arg1: i32) -> (i32, i32) {
    %c0_i32 = arith.constant 0 : i32
    %c0_i32_0 = arith.constant 0 : i32
    return %c0_i32, %arg1 : i32, i32
  }
  func.func @transform_3(%arg0: i32, %arg1: i32) -> (i32, i32) {
    %c0_i32 = arith.constant 0 : i32
    return %arg0, %arg1 : i32, i32
  }
}

</mosaic_0001>

<llo_original>
// kernel: _lambda_.15
$region0: #{_lambda_.15}
  #allocation0 [shape = 'u32[]', space=smem, size = 0x4, offset = 0x4, fixed_abs, tag = 'smem constant byte address 0x4 - core index']
  #allocation1 [shape = 'u32[144,128]{1,0:T(1,128)}', space=vmem, size = 0x12000, scoped, tag = 'internal scratch']
  %s0 = inlined_call_operand.vmem [shape: bf16[2048,256], index: 0, kind: input, shape index: {}]
  %s1 = inlined_call_operand.vmem [shape: bf16[256,128], index: 1, kind: input, shape index: {}]
  %s2 = inlined_call_operand.vmem [shape: f32[1,128], index: 2, kind: input, shape index: {}]
  %s3 = inlined_call_operand.vmem [shape: bf16[2048,128], index: 3, kind: output, shape index: {}]
  %s4 = sld [smem:[#allocation0]]
  $region45: #{_lambda_.15} parent=0
    _
  %s6 = ssub.s32 1, %s4
  %s7 = scalar_select 0, %s6, %s4
  loop: start=0, step=1, limit=6
  $region2: #{_lambda_.15} parent=0 // loop_pre_header
    _
  $region3: #{_lambda_.15} parent=0 // loop_header
    %s9 = sphi 0, %s13
    %p10 = scmp.ge.s32.totalorder %s9, 6
    %s16 = sphi 0, %s28
    %s17 = sphi 0, %s24
    %s18 = sphi 0, %s16
    %s19 = sphi 0, %s17
    %s20 = sphi 0, %s18
    %s21 = sphi 0, %s19
    %s31 = sphi 0, %s33
    %s34 = sphi 0, %s31
    %s35 = sphi 0, %s34
    %s51 = sphi 0, %s35
    %s57 = sphi 0, %s59
    %s60 = sphi 0, %s57
    %s61 = sphi 0, %s60
    %s77 = sphi 0, %s61
    %s83 = sphi 0, %s85
    %s86 = sphi 0, %s83
    %s87 = sphi 0, %s86
    %s103 = sphi 0, %s87
    %s111 = sphi 0, %s113
    %s114 = sphi 0, %s111
    %s115 = sphi 0, %s114
    %s131 = sphi 0, %s115
  $region4: #{_lambda_.15} parent=0 // loop_header_branch
    %12 = sbr.rel (%p10) target = $region8
  $region5: #{_lambda_.15} parent=0 // loop_body
    %s14 = ssub.s32 %s9, 1
    %s15 = ssub.s32 %s9, 2
    %s22 = sadd.s32 1, %s17
    %p23 = scmp.ge.s32.totalorder %s22, 1
    %s24 = scalar_select %p23, 0, %s22
    %s25 = sadd.s32 1, %s16
    %s26 = scalar_select %p23, %s25, %s16
    %p27 = scmp.ge.s32.totalorder %s26, 4
    %s28 = scalar_select %p27, 0, %s26
    %s29 = ssub.s32 %s16, %s28
    %p30 = scmp.eq.s32.totalorder %s29, 0
    %s32 = sadd.s32 %s31, 1
    %s33 = scalar_select %p30, %s31, %s32
    %p36 = pneg %p30
    %p37 = scmp.eq.s32.totalorder %s9, 3
    %p38 = por %p36, %p37
    %p39 = scmp.ne.s32.totalorder %s31, %s34
    %p40 = scmp.eq.s32.totalorder %s9, 0
    %p41 = por %p39, %p40
    %p42 = scmp.ne.s32.totalorder %s31, %s34
    %p43 = scmp.eq.s32.totalorder %s14, 3
    %p44 = por %p42, %p43
    %p45 = scmp.ne.s32.totalorder %s34, %s35
    %p46 = scmp.eq.s32.totalorder %s14, 0
    %p47 = por %p45, %p46
    %p48 = scmp.ne.s32.totalorder %s34, %s35
    %p49 = scmp.eq.s32.totalorder %s15, 3
    %p50 = por %p48, %p49
    %p52 = scmp.ne.s32.totalorder %s35, %s51
    %p53 = scmp.eq.s32.totalorder %s15, 0
    %p54 = por %p52, %p53
    %s55 = ssub.s32 %s17, %s24
    %p56 = scmp.eq.s32.totalorder %s55, 0
    %s58 = sadd.s32 %s57, 1
    %s59 = scalar_select %p56, %s57, %s58
    %p62 = pneg %p56
    %p63 = scmp.eq.s32.totalorder %s9, 3
    %p64 = por %p62, %p63
    %p65 = scmp.ne.s32.totalorder %s57, %s60
    %p66 = scmp.eq.s32.totalorder %s9, 0
    %p67 = por %p65, %p66
    %p68 = scmp.ne.s32.totalorder %s57, %s60
    %p69 = scmp.eq.s32.totalorder %s14, 3
    %p70 = por %p68, %p69
    %p71 = scmp.ne.s32.totalorder %s60, %s61
    %p72 = scmp.eq.s32.totalorder %s14, 0
    %p73 = por %p71, %p72
    %p74 = scmp.ne.s32.totalorder %s60, %s61
    %p75 = scmp.eq.s32.totalorder %s15, 3
    %p76 = por %p74, %p75
    %p78 = scmp.ne.s32.totalorder %s61, %s77
    %p79 = scmp.eq.s32.totalorder %s15, 0
    %p80 = por %p78, %p79
    %s81 = ssub.s32 %s17, %s24
    %p82 = scmp.eq.s32.totalorder %s81, 0
    %s84 = sadd.s32 %s83, 1
    %s85 = scalar_select %p82, %s83, %s84
    %p88 = pneg %p82
    %p89 = scmp.eq.s32.totalorder %s9, 3
    %p90 = por %p88, %p89
    %p91 = scmp.ne.s32.totalorder %s83, %s86
    %p92 = scmp.eq.s32.totalorder %s9, 0
    %p93 = por %p91, %p92
    %p94 = scmp.ne.s32.totalorder %s83, %s86
    %p95 = scmp.eq.s32.totalorder %s14, 3
    %p96 = por %p94, %p95
    %p97 = scmp.ne.s32.totalorder %s86, %s87
    %p98 = scmp.eq.s32.totalorder %s14, 0
    %p99 = por %p97, %p98
    %p100 = scmp.ne.s32.totalorder %s86, %s87
    %p101 = scmp.eq.s32.totalorder %s15, 3
    %p102 = por %p100, %p101
    %p104 = scmp.ne.s32.totalorder %s87, %s103
    %p105 = scmp.eq.s32.totalorder %s15, 0
    %p106 = por %p104, %p105
    %s107 = ssub.s32 %s16, %s28
    %s108 = ssub.s32 %s17, %s24
    %s109 = sor.u32 %s107, %s108
    %p110 = scmp.eq.s32.totalorder %s109, 0
    %s112 = sadd.s32 %s111, 1
    %s113 = scalar_select %p110, %s111, %s112
    %p116 = pneg %p110
    %p117 = scmp.eq.s32.totalorder %s9, 3
    %p118 = por %p116, %p117
    %p119 = scmp.ne.s32.totalorder %s111, %s114
    %p120 = scmp.eq.s32.totalorder %s9, 0
    %p121 = por %p119, %p120
    %p122 = scmp.ne.s32.totalorder %s111, %s114
    %p123 = scmp.eq.s32.totalorder %s14, 3
    %p124 = por %p122, %p123
    %p125 = scmp.ne.s32.totalorder %s114, %s115
    %p126 = scmp.eq.s32.totalorder %s14, 0
    %p127 = por %p125, %p126
    %p128 = scmp.ne.s32.totalorder %s114, %s115
    %p129 = scmp.eq.s32.totalorder %s15, 3
    %p130 = por %p128, %p129
    %p132 = scmp.ne.s32.totalorder %s115, %s131
    %p133 = scmp.eq.s32.totalorder %s15, 0
    %p134 = por %p132, %p133
    %p135 = scmp.le.s32.totalorder 1, %s9
    %p136 = scmp.lt.s32.totalorder %s9, 5
    %p137 = pnand %p135, %p136
    %p138 = pneg %p137
    // Predicated region
    $region9: #{_lambda_.15} parent=5 // pred_check
      _
    $region10: #{_lambda_.15} parent=5 // pred_check_branch
      %140 = sbr.rel (%p137) target = $region12
    $region11: #{_lambda_.15} parent=5 // pred_region
      %s141 = ssub.s32 %s9, 1
      // Predicated region
      $region13: #{_lambda_.15} parent=11 // pred_check
        %p142 = pneg %p73
      $region14: #{_lambda_.15} parent=11 // pred_check_branch
        %144 = sbr.rel (%p142) target = $region16
      $region15: #{_lambda_.15} parent=11 // pred_region
        %p145 = scmp.lt.s32.totalorder %s19, 0
        %s146 = scalar_select %p145, %s19, 0
        %s147 = smul.addr %s146, 4
        %s148 = scalar_lea.vmem %s1, %s147
      $region16: #{_lambda_.15} parent=11 // pred_fallthru
        _
      // Predicated region
      $region17: #{_lambda_.15} parent=11 // pred_check
        %p149 = pneg %p99
      $region18: #{_lambda_.15} parent=11 // pred_check_branch
        %151 = sbr.rel (%p149) target = $region20
      $region19: #{_lambda_.15} parent=11 // pred_region
        %p152 = scmp.lt.s32.totalorder %s19, 0
        %s153 = scalar_select %p152, %s19, 0
        %s154 = scalar_lea.vmem %s2, %s153
      $region20: #{_lambda_.15} parent=11 // pred_fallthru
        _
    $region12: #{_lambda_.15} parent=5 // pred_fallthru
      _
    %p155 = scmp.lt.s32.totalorder %s9, 4
    // Predicated region
    $region21: #{_lambda_.15} parent=5 // pred_check
      %p156 = pneg %p155
    $region22: #{_lambda_.15} parent=5 // pred_check_branch
      %158 = sbr.rel (%p156) target = $region24
    $region23: #{_lambda_.15} parent=5 // pred_region
      // Predicated region
      $region25: #{_lambda_.15} parent=23 // pred_check
        %p159 = pneg %p41
      $region26: #{_lambda_.15} parent=23 // pred_check_branch
        %161 = sbr.rel (%p159) target = $region28
      $region27: #{_lambda_.15} parent=23 // pred_region
        %s162 = smul.u32 64, %s16
        %p163 = scmp.lt.s32.totalorder %s162, 255
        %s164 = scalar_select %p163, %s162, 255
        %s165 = smul.addr %s164, 2
        %s166 = smul.addr %s165, 4
        %s167 = scalar_lea.vmem %s0, %s166
        %s168 = smul.u32 64, %s16
      $region28: #{_lambda_.15} parent=23 // pred_fallthru
        _
    $region24: #{_lambda_.15} parent=5 // pred_fallthru
      _
    %p169 = scmp.le.s32.totalorder 1, %s9
    %p170 = scmp.lt.s32.totalorder %s9, 5
    %p171 = pnand %p169, %p170
    %p172 = pneg %p171
    // Predicated region
    $region29: #{_lambda_.15} parent=5 // pred_check
      _
    $region30: #{_lambda_.15} parent=5 // pred_check_branch
      %174 = sbr.rel (%p171) target = $region32
    $region31: #{_lambda_.15} parent=5 // pred_region
      %s175 = ssub.s32 %s9, 1
      %s176 = smul.u32 64, %s18
      %p177 = scmp.lt.s32.totalorder %s176, 255
      %s178 = scalar_select %p177, %s176, 255
      %s179 = smul.addr %s178, 2
      %s180 = smul.addr %s179, 4
      %s181 = scalar_lea.vmem %s0, %s180
      %p182 = pneg %p47
      %p183 = pneg %p44
      %p184 = scmp.lt.s32.totalorder %s19, 0
      %s185 = scalar_select %p184, %s19, 0
      %s186 = smul.addr %s185, 4
      %s187 = scalar_lea.vmem %s1, %s186
      %p188 = pneg %p73
      %p189 = pneg %p70
      %p190 = scmp.lt.s32.totalorder %s19, 0
      %s191 = scalar_select %p190, %s19, 0
      %s192 = scalar_lea.vmem %s2, %s191
      %p193 = pneg %p99
      %p194 = pneg %p96
      %p195 = pneg %p127
      %p196 = pneg %p124
      %s197 = smul.u32 64, %s18
      %p198 = scmp.lt.s32.totalorder %s197, 255
      %s199 = scalar_select %p198, %s197, 255
      %p200 = scmp.lt.s32.totalorder %s19, 0
      %s201 = scalar_select %p200, %s19, 0
      %s202 = sadd.s32 %s201, %s199
      %s203 = smul.addr %s202, 4
      %s204 = scalar_lea.vmem %s3, %s203
      %s205 = smul.u32 64, %s18
      %p206 = scmp.lt.s32.totalorder %s205, 255
      %s207 = scalar_select %p206, %s205, 255
      %s208 = smul.addr %s207, 2
      %s209 = smul.addr %s208, 4
      %s210 = scalar_lea.vmem %s0, %s209
      %s211 = smul.u32 64, %s18
      %p212 = scmp.lt.s32.totalorder %s19, 0
      %s213 = scalar_select %p212, %s19, 0
      %s214 = smul.addr %s213, 4
      %s215 = scalar_lea.vmem %s1, %s214
      %p216 = scmp.lt.s32.totalorder %s19, 0
      %s217 = scalar_select %p216, %s19, 0
      %s218 = scalar_lea.vmem %s2, %s217
      %s219 = smul.u32 64, %s18
      %p220 = scmp.lt.s32.totalorder %s219, 255
      %s221 = scalar_select %p220, %s219, 255
      %p222 = scmp.lt.s32.totalorder %s19, 0
      %s223 = scalar_select %p222, %s19, 0
      %s224 = sadd.s32 %s223, %s221
      %s225 = smul.addr %s224, 4
      %s226 = scalar_lea.vmem %s3, %s225
      %s227 = smul.u32 64, %s18
      %v229 = vld [vmem:[%s210] sm:$0xff]
      %v230 = vld [vmem:[%s210 + $0x8] sm:$0xff]
      %v231 = vld [vmem:[%s210 + $0x10] sm:$0xff]
      %v232 = vld [vmem:[%s210 + $0x18] sm:$0xff]
      %v233 = vld [vmem:[%s210 + $0x20] sm:$0xff]
      %v234 = vld [vmem:[%s210 + $0x28] sm:$0xff]
      %v235 = vld [vmem:[%s210 + $0x30] sm:$0xff]
      %v236 = vld [vmem:[%s210 + $0x38] sm:$0xff]
      %v237 = vld [vmem:[%s210 + $0x40] sm:$0xff]
      %v238 = vld [vmem:[%s210 + $0x48] sm:$0xff]
      %v239 = vld [vmem:[%s210 + $0x50] sm:$0xff]
      %v240 = vld [vmem:[%s210 + $0x58] sm:$0xff]
      %v241 = vld [vmem:[%s210 + $0x60] sm:$0xff]
      %v242 = vld [vmem:[%s210 + $0x68] sm:$0xff]
      %v243 = vld [vmem:[%s210 + $0x70] sm:$0xff]
      %v244 = vld [vmem:[%s210 + $0x78] sm:$0xff]
      %v245 = vld [vmem:[%s210 + $0x80] sm:$0xff]
      %v246 = vld [vmem:[%s210 + $0x88] sm:$0xff]
      %v247 = vld [vmem:[%s210 + $0x90] sm:$0xff]
      %v248 = vld [vmem:[%s210 + $0x98] sm:$0xff]
      %v249 = vld [vmem:[%s210 + $0xa0] sm:$0xff]
      %v250 = vld [vmem:[%s210 + $0xa8] sm:$0xff]
      %v251 = vld [vmem:[%s210 + $0xb0] sm:$0xff]
      %v252 = vld [vmem:[%s210 + $0xb8] sm:$0xff]
      %v253 = vld [vmem:[%s210 + $0xc0] sm:$0xff]
      %v254 = vld [vmem:[%s210 + $0xc8] sm:$0xff]
      %v255 = vld [vmem:[%s210 + $0xd0] sm:$0xff]
      %v256 = vld [vmem:[%s210 + $0xd8] sm:$0xff]
      %v257 = vld [vmem:[%s210 + $0xe0] sm:$0xff]
      %v258 = vld [vmem:[%s210 + $0xe8] sm:$0xff]
      %v259 = vld [vmem:[%s210 + $0xf0] sm:$0xff]
      %v260 = vld [vmem:[%s210 + $0xf8] sm:$0xff]
      %v261 = vld [vmem:[%s210 + $0x100] sm:$0xff]
      %v262 = vld [vmem:[%s210 + $0x108] sm:$0xff]
      %v263 = vld [vmem:[%s210 + $0x110] sm:$0xff]
      %v264 = vld [vmem:[%s210 + $0x118] sm:$0xff]
      %v265 = vld [vmem:[%s210 + $0x120] sm:$0xff]
      %v266 = vld [vmem:[%s210 + $0x128] sm:$0xff]
      %v267 = vld [vmem:[%s210 + $0x130] sm:$0xff]
      %v268 = vld [vmem:[%s210 + $0x138] sm:$0xff]
      %v269 = vld [vmem:[%s210 + $0x140] sm:$0xff]
      %v270 = vld [vmem:[%s210 + $0x148] sm:$0xff]
      %v271 = vld [vmem:[%s210 + $0x150] sm:$0xff]
      %v272 = vld [vmem:[%s210 + $0x158] sm:$0xff]
      %v273 = vld [vmem:[%s210 + $0x160] sm:$0xff]
      %v274 = vld [vmem:[%s210 + $0x168] sm:$0xff]
      %v275 = vld [vmem:[%s210 + $0x170] sm:$0xff]
      %v276 = vld [vmem:[%s210 + $0x178] sm:$0xff]
      %v277 = vld [vmem:[%s210 + $0x180] sm:$0xff]
      %v278 = vld [vmem:[%s210 + $0x188] sm:$0xff]
      %v279 = vld [vmem:[%s210 + $0x190] sm:$0xff]
      %v280 = vld [vmem:[%s210 + $0x198] sm:$0xff]
      %v281 = vld [vmem:[%s210 + $0x1a0] sm:$0xff]
      %v282 = vld [vmem:[%s210 + $0x1a8] sm:$0xff]
      %v283 = vld [vmem:[%s210 + $0x1b0] sm:$0xff]
      %v284 = vld [vmem:[%s210 + $0x1b8] sm:$0xff]
      %v285 = vld [vmem:[%s210 + $0x1c0] sm:$0xff]
      %v286 = vld [vmem:[%s210 + $0x1c8] sm:$0xff]
      %v287 = vld [vmem:[%s210 + $0x1d0] sm:$0xff]
      %v288 = vld [vmem:[%s210 + $0x1d8] sm:$0xff]
      %v289 = vld [vmem:[%s210 + $0x1e0] sm:$0xff]
      %v290 = vld [vmem:[%s210 + $0x1e8] sm:$0xff]
      %v291 = vld [vmem:[%s210 + $0x1f0] sm:$0xff]
      %v292 = vld [vmem:[%s210 + $0x1f8] sm:$0xff]
      %v293 = vld [vmem:[%s215] sm:$0xf]
      %v294 = vld [vmem:[%s215 + $0x4] sm:$0xf]
      %v295 = vld [vmem:[%s215 + $0x8] sm:$0xf]
      %v296 = vld [vmem:[%s215 + $0xc] sm:$0xf]
      %v297 = vld [vmem:[%s215 + $0x10] sm:$0xf]
      %v298 = vld [vmem:[%s215 + $0x14] sm:$0xf]
      %v299 = vld [vmem:[%s215 + $0x18] sm:$0xf]
      %v300 = vld [vmem:[%s215 + $0x1c] sm:$0xf]
      %v301 = vld [vmem:[%s215 + $0x20] sm:$0xf]
      %v302 = vld [vmem:[%s215 + $0x24] sm:$0xf]
      %v303 = vld [vmem:[%s215 + $0x28] sm:$0xf]
      %v304 = vld [vmem:[%s215 + $0x2c] sm:$0xf]
      %v305 = vld [vmem:[%s215 + $0x30] sm:$0xf]
      %v306 = vld [vmem:[%s215 + $0x34] sm:$0xf]
      %v307 = vld [vmem:[%s215 + $0x38] sm:$0xf]
      %v308 = vld [vmem:[%s215 + $0x3c] sm:$0xf]
      %v309 = vld [vmem:[%s215 + $0x40] sm:$0xf]
      %v310 = vld [vmem:[%s215 + $0x44] sm:$0xf]
      %v311 = vld [vmem:[%s215 + $0x48] sm:$0xf]
      %v312 = vld [vmem:[%s215 + $0x4c] sm:$0xf]
      %v313 = vld [vmem:[%s215 + $0x50] sm:$0xf]
      %v314 = vld [vmem:[%s215 + $0x54] sm:$0xf]
      %v315 = vld [vmem:[%s215 + $0x58] sm:$0xf]
      %v316 = vld [vmem:[%s215 + $0x5c] sm:$0xf]
      %v317 = vld [vmem:[%s215 + $0x60] sm:$0xf]
      %v318 = vld [vmem:[%s215 + $0x64] sm:$0xf]
      %v319 = vld [vmem:[%s215 + $0x68] sm:$0xf]
      %v320 = vld [vmem:[%s215 + $0x6c] sm:$0xf]
      %v321 = vld [vmem:[%s215 + $0x70] sm:$0xf]
      %v322 = vld [vmem:[%s215 + $0x74] sm:$0xf]
      %v323 = vld [vmem:[%s215 + $0x78] sm:$0xf]
      %v324 = vld [vmem:[%s215 + $0x7c] sm:$0xf]
      %v325 = vld [vmem:[%s218] sm:$0x1]
      %v327 = vlaneseq
      %v328 = vshrl.u32 %v327, 7
      %v329 = vsub.s32 0, %v328
      %v330 = vrot.slane %v325, %v329
      %v396 = vunpack.c.l.b16 %v229
      %v397 = vunpack.c.h.b16 %v229
      %v398 = vunpack.c.l.b16 %v230
      %v399 = vunpack.c.h.b16 %v230
      %v400 = vunpack.c.l.b16 %v231
      %v401 = vunpack.c.h.b16 %v231
      %v402 = vunpack.c.l.b16 %v232
      %v403 = vunpack.c.h.b16 %v232
      %v404 = vunpack.c.l.b16 %v233
      %v405 = vunpack.c.h.b16 %v233
      %v406 = vunpack.c.l.b16 %v234
      %v407 = vunpack.c.h.b16 %v234
      %v408 = vunpack.c.l.b16 %v235
      %v409 = vunpack.c.h.b16 %v235
      %v410 = vunpack.c.l.b16 %v236
      %v411 = vunpack.c.h.b16 %v236
      %v412 = vunpack.c.l.b16 %v237
      %v413 = vunpack.c.h.b16 %v237
      %v414 = vunpack.c.l.b16 %v238
      %v415 = vunpack.c.h.b16 %v238
      %v416 = vunpack.c.l.b16 %v239
      %v417 = vunpack.c.h.b16 %v239
      %v418 = vunpack.c.l.b16 %v240
      %v419 = vunpack.c.h.b16 %v240
      %v420 = vunpack.c.l.b16 %v241
      %v421 = vunpack.c.h.b16 %v241
      %v422 = vunpack.c.l.b16 %v242
      %v423 = vunpack.c.h.b16 %v242
      %v424 = vunpack.c.l.b16 %v243
      %v425 = vunpack.c.h.b16 %v243
      %v426 = vunpack.c.l.b16 %v244
      %v427 = vunpack.c.h.b16 %v244
      %v428 = vunpack.c.l.b16 %v245
      %v429 = vunpack.c.h.b16 %v245
      %v430 = vunpack.c.l.b16 %v246
      %v431 = vunpack.c.h.b16 %v246
      %v432 = vunpack.c.l.b16 %v247
      %v433 = vunpack.c.h.b16 %v247
      %v434 = vunpack.c.l.b16 %v248
      %v435 = vunpack.c.h.b16 %v248
      %v436 = vunpack.c.l.b16 %v249
      %v437 = vunpack.c.h.b16 %v249
      %v438 = vunpack.c.l.b16 %v250
      %v439 = vunpack.c.h.b16 %v250
      %v440 = vunpack.c.l.b16 %v251
      %v441 = vunpack.c.h.b16 %v251
      %v442 = vunpack.c.l.b16 %v252
      %v443 = vunpack.c.h.b16 %v252
      %v444 = vunpack.c.l.b16 %v253
      %v445 = vunpack.c.h.b16 %v253
      %v446 = vunpack.c.l.b16 %v254
      %v447 = vunpack.c.h.b16 %v254
      %v448 = vunpack.c.l.b16 %v255
      %v449 = vunpack.c.h.b16 %v255
      %v450 = vunpack.c.l.b16 %v256
      %v451 = vunpack.c.h.b16 %v256
      %v452 = vunpack.c.l.b16 %v257
      %v453 = vunpack.c.h.b16 %v257
      %v454 = vunpack.c.l.b16 %v258
      %v455 = vunpack.c.h.b16 %v258
      %v456 = vunpack.c.l.b16 %v259
      %v457 = vunpack.c.h.b16 %v259
      %v458 = vunpack.c.l.b16 %v260
      %v459 = vunpack.c.h.b16 %v260
      %v460 = vunpack.c.l.b16 %v261
      %v461 = vunpack.c.h.b16 %v261
      %v462 = vunpack.c.l.b16 %v262
      %v463 = vunpack.c.h.b16 %v262
      %v464 = vunpack.c.l.b16 %v263
      %v465 = vunpack.c.h.b16 %v263
      %v466 = vunpack.c.l.b16 %v264
      %v467 = vunpack.c.h.b16 %v264
      %v468 = vunpack.c.l.b16 %v265
      %v469 = vunpack.c.h.b16 %v265
      %v470 = vunpack.c.l.b16 %v266
      %v471 = vunpack.c.h.b16 %v266
      %v472 = vunpack.c.l.b16 %v267
      %v473 = vunpack.c.h.b16 %v267
      %v474 = vunpack.c.l.b16 %v268
      %v475 = vunpack.c.h.b16 %v268
      %v476 = vunpack.c.l.b16 %v269
      %v477 = vunpack.c.h.b16 %v269
      %v478 = vunpack.c.l.b16 %v270
      %v479 = vunpack.c.h.b16 %v270
      %v480 = vunpack.c.l.b16 %v271
      %v481 = vunpack.c.h.b16 %v271
      %v482 = vunpack.c.l.b16 %v272
      %v483 = vunpack.c.h.b16 %v272
      %v484 = vunpack.c.l.b16 %v273
      %v485 = vunpack.c.h.b16 %v273
      %v486 = vunpack.c.l.b16 %v274
      %v487 = vunpack.c.h.b16 %v274
      %v488 = vunpack.c.l.b16 %v275
      %v489 = vunpack.c.h.b16 %v275
      %v490 = vunpack.c.l.b16 %v276
      %v491 = vunpack.c.h.b16 %v276
      %v492 = vunpack.c.l.b16 %v277
      %v493 = vunpack.c.h.b16 %v277
      %v494 = vunpack.c.l.b16 %v278
      %v495 = vunpack.c.h.b16 %v278
      %v496 = vunpack.c.l.b16 %v279
      %v497 = vunpack.c.h.b16 %v279
      %v498 = vunpack.c.l.b16 %v280
      %v499 = vunpack.c.h.b16 %v280
      %v500 = vunpack.c.l.b16 %v281
      %v501 = vunpack.c.h.b16 %v281
      %v502 = vunpack.c.l.b16 %v282
      %v503 = vunpack.c.h.b16 %v282
      %v504 = vunpack.c.l.b16 %v283
      %v505 = vunpack.c.h.b16 %v283
      %v506 = vunpack.c.l.b16 %v284
      %v507 = vunpack.c.h.b16 %v284
      %v508 = vunpack.c.l.b16 %v285
      %v509 = vunpack.c.h.b16 %v285
      %v510 = vunpack.c.l.b16 %v286
      %v511 = vunpack.c.h.b16 %v286
      %v512 = vunpack.c.l.b16 %v287
      %v513 = vunpack.c.h.b16 %v287
      %v514 = vunpack.c.l.b16 %v288
      %v515 = vunpack.c.h.b16 %v288
      %v516 = vunpack.c.l.b16 %v289
      %v517 = vunpack.c.h.b16 %v289
      %v518 = vunpack.c.l.b16 %v290
      %v519 = vunpack.c.h.b16 %v290
      %v520 = vunpack.c.l.b16 %v291
      %v521 = vunpack.c.h.b16 %v291
      %v522 = vunpack.c.l.b16 %v292
      %v523 = vunpack.c.h.b16 %v292
      %v524 = vpack.c.b16 %v398, %v396
      %v525 = vpack.c.b16 %v399, %v397
      %v526 = vpack.c.b16 %v402, %v400
      %v527 = vpack.c.b16 %v403, %v401
      %v528 = vpack.c.b16 %v406, %v404
      %v529 = vpack.c.b16 %v407, %v405
      %v530 = vpack.c.b16 %v410, %v408
      %v531 = vpack.c.b16 %v411, %v409
      %v532 = vpack.c.b16 %v414, %v412
      %v533 = vpack.c.b16 %v415, %v413
      %v534 = vpack.c.b16 %v418, %v416
      %v535 = vpack.c.b16 %v419, %v417
      %v536 = vpack.c.b16 %v422, %v420
      %v537 = vpack.c.b16 %v423, %v421
      %v538 = vpack.c.b16 %v426, %v424
      %v539 = vpack.c.b16 %v427, %v425
      %v540 = vpack.c.b16 %v430, %v428
      %v541 = vpack.c.b16 %v431, %v429
      %v542 = vpack.c.b16 %v434, %v432
      %v543 = vpack.c.b16 %v435, %v433
      %v544 = vpack.c.b16 %v438, %v436
      %v545 = vpack.c.b16 %v439, %v437
      %v546 = vpack.c.b16 %v442, %v440
      %v547 = vpack.c.b16 %v443, %v441
      %v548 = vpack.c.b16 %v446, %v444
      %v549 = vpack.c.b16 %v447, %v445
      %v550 = vpack.c.b16 %v450, %v448
      %v551 = vpack.c.b16 %v451, %v449
      %v552 = vpack.c.b16 %v454, %v452
      %v553 = vpack.c.b16 %v455, %v453
      %v554 = vpack.c.b16 %v458, %v456
      %v555 = vpack.c.b16 %v459, %v457
      %v556 = vpack.c.b16 %v462, %v460
      %v557 = vpack.c.b16 %v463, %v461
      %v558 = vpack.c.b16 %v466, %v464
      %v559 = vpack.c.b16 %v467, %v465
      %v560 = vpack.c.b16 %v470, %v468
      %v561 = vpack.c.b16 %v471, %v469
      %v562 = vpack.c.b16 %v474, %v472
      %v563 = vpack.c.b16 %v475, %v473
      %v564 = vpack.c.b16 %v478, %v476
      %v565 = vpack.c.b16 %v479, %v477
      %v566 = vpack.c.b16 %v482, %v480
      %v567 = vpack.c.b16 %v483, %v481
      %v568 = vpack.c.b16 %v486, %v484
      %v569 = vpack.c.b16 %v487, %v485
      %v570 = vpack.c.b16 %v490, %v488
      %v571 = vpack.c.b16 %v491, %v489
      %v572 = vpack.c.b16 %v494, %v492
      %v573 = vpack.c.b16 %v495, %v493
      %v574 = vpack.c.b16 %v498, %v496
      %v575 = vpack.c.b16 %v499, %v497
      %v576 = vpack.c.b16 %v502, %v500
      %v577 = vpack.c.b16 %v503, %v501
      %v578 = vpack.c.b16 %v506, %v504
      %v579 = vpack.c.b16 %v507, %v505
      %v580 = vpack.c.b16 %v510, %v508
      %v581 = vpack.c.b16 %v511, %v509
      %v582 = vpack.c.b16 %v514, %v512
      %v583 = vpack.c.b16 %v515, %v513
      %v584 = vpack.c.b16 %v518, %v516
      %v585 = vpack.c.b16 %v519, %v517
      %v586 = vpack.c.b16 %v522, %v520
      %v587 = vpack.c.b16 %v523, %v521
      %v684 = vunpack.c.l.b16 %v293
      %v685 = vunpack.c.l.b16 %v294
      %v686 = vunpack.c.l.b16 %v295
      %v687 = vunpack.c.l.b16 %v296
      %v688 = vunpack.c.l.b16 %v297
      %v689 = vunpack.c.l.b16 %v298
      %v690 = vunpack.c.l.b16 %v299
      %v691 = vunpack.c.l.b16 %v300
      %v692 = vunpack.c.l.b16 %v301
      %v693 = vunpack.c.l.b16 %v302
      %v694 = vunpack.c.l.b16 %v303
      %v695 = vunpack.c.l.b16 %v304
      %v696 = vunpack.c.l.b16 %v305
      %v697 = vunpack.c.l.b16 %v306
      %v698 = vunpack.c.l.b16 %v307
      %v699 = vunpack.c.l.b16 %v308
      %v700 = vunpack.c.l.b16 %v309
      %v701 = vunpack.c.l.b16 %v310
      %v702 = vunpack.c.l.b16 %v311
      %v703 = vunpack.c.l.b16 %v312
      %v704 = vunpack.c.l.b16 %v313
      %v705 = vunpack.c.l.b16 %v314
      %v706 = vunpack.c.l.b16 %v315
      %v707 = vunpack.c.l.b16 %v316
      %v708 = vunpack.c.l.b16 %v317
      %v709 = vunpack.c.l.b16 %v318
      %v710 = vunpack.c.l.b16 %v319
      %v711 = vunpack.c.l.b16 %v320
      %v712 = vunpack.c.l.b16 %v321
      %v713 = vunpack.c.l.b16 %v322
      %v714 = vunpack.c.l.b16 %v323
      %v715 = vunpack.c.l.b16 %v324
      %v716 = vpack.c.b16 %v685, %v684
      %v717 = vpack.c.b16 %v687, %v686
      %v718 = vpack.c.b16 %v689, %v688
      %v719 = vpack.c.b16 %v691, %v690
      %v720 = vpack.c.b16 %v693, %v692
      %v721 = vpack.c.b16 %v695, %v694
      %v722 = vpack.c.b16 %v697, %v696
      %v723 = vpack.c.b16 %v699, %v698
      %v724 = vpack.c.b16 %v701, %v700
      %v725 = vpack.c.b16 %v703, %v702
      %v726 = vpack.c.b16 %v705, %v704
      %v727 = vpack.c.b16 %v707, %v706
      %v728 = vpack.c.b16 %v709, %v708
      %v729 = vpack.c.b16 %v711, %v710
      %v730 = vpack.c.b16 %v713, %v712
      %v731 = vpack.c.b16 %v715, %v714
      %748 = vmatprep.subr.bf16.mxu0 0
      %749 = vmatpush1.bf16.msra.mxu0 %v716
      %750 = vmatprep.subr.bf16.mxu0 0
      %751 = vmatpush1.bf16.msra.mxu0 %v717
      %752 = vmatprep.subr.bf16.mxu0 0
      %753 = vmatpush1.bf16.msra.mxu0 %v718
      %754 = vmatprep.subr.bf16.mxu0 0
      %755 = vmatpush1.bf16.msra.mxu0 %v719
      %756 = vmatprep.subr.bf16.mxu0 0
      %757 = vmatpush1.bf16.msra.mxu0 %v720
      %758 = vmatprep.subr.bf16.mxu0 0
      %759 = vmatpush1.bf16.msra.mxu0 %v721
      %760 = vmatprep.subr.bf16.mxu0 0
      %761 = vmatpush1.bf16.msra.mxu0 %v722
      %762 = vmatprep.subr.bf16.mxu0 0
      %763 = vmatpush1.bf16.msra.mxu0 %v723
      %764 = vmatprep.subr.bf16.mxu0 0
      %765 = vmatpush1.bf16.msra.mxu0 %v724
      %766 = vmatprep.subr.bf16.mxu0 0
      %767 = vmatpush1.bf16.msra.mxu0 %v725
      %768 = vmatprep.subr.bf16.mxu0 0
      %769 = vmatpush1.bf16.msra.mxu0 %v726
      %770 = vmatprep.subr.bf16.mxu0 0
      %771 = vmatpush1.bf16.msra.mxu0 %v727
      %772 = vmatprep.subr.bf16.mxu0 0
      %773 = vmatpush1.bf16.msra.mxu0 %v728
      %774 = vmatprep.subr.bf16.mxu0 0
      %775 = vmatpush1.bf16.msra.mxu0 %v729
      %776 = vmatprep.subr.bf16.mxu0 0
      %777 = vmatpush1.bf16.msra.mxu0 %v730
      %778 = vmatprep.subr.bf16.mxu0 0
      %779 = vmatpush1.bf16.msra.mxu0 %v731
      %780 = vmatprep.mubr.bf16.mxu0 %v525
      %781 = vmatmul.mubr.bf16.gmra.mrb[0].mxu0 %v524
      %v782 = vpop.f32.mrb[0].mxu0
      %v783 = vadd.f32 %v330, %v782
      %v784 = vpop.f32.mrb[0].mxu0
      %v785 = vpop.f32.mrb[0].mxu0
      %v786 = vadd.f32 %v330, %v785
      %v787 = vpop.f32.mrb[0].mxu0
      %788 = vmatprep.mubr.bf16.mxu0 %v527
      %789 = vmatmul.mubr.bf16.gmra.mrb[0].mxu0 %v526
      %v790 = vpop.f32.mrb[0].mxu0
      %v791 = vadd.f32 %v330, %v790
      %v792 = vpop.f32.mrb[0].mxu0
      %v793 = vpop.f32.mrb[0].mxu0
      %v794 = vadd.f32 %v330, %v793
      %v795 = vpop.f32.mrb[0].mxu0
      %796 = vmatprep.mubr.bf16.mxu0 %v529
      %797 = vmatmul.mubr.bf16.gmra.mrb[0].mxu0 %v528
      %v798 = vpop.f32.mrb[0].mxu0
      %v799 = vadd.f32 %v330, %v798
      %v800 = vpop.f32.mrb[0].mxu0
      %v801 = vpop.f32.mrb[0].mxu0
      %v802 = vadd.f32 %v330, %v801
      %v803 = vpop.f32.mrb[0].mxu0
      %804 = vmatprep.mubr.bf16.mxu0 %v531
      %805 = vmatmul.mubr.bf16.gmra.mrb[0].mxu0 %v530
      %v806 = vpop.f32.mrb[0].mxu0
      %v807 = vadd.f32 %v330, %v806
      %v808 = vpop.f32.mrb[0].mxu0
      %v809 = vpop.f32.mrb[0].mxu0
      %v810 = vadd.f32 %v330, %v809
      %v811 = vpop.f32.mrb[0].mxu0
      %812 = vmatprep.mubr.bf16.mxu0 %v533
      %813 = vmatmul.mubr.bf16.gmra.mrb[0].mxu0 %v532
      %v814 = vpop.f32.mrb[0].mxu0
      %v815 = vadd.f32 %v330, %v814
      %v816 = vpop.f32.mrb[0].mxu0
      %v817 = vpop.f32.mrb[0].mxu0
      %v818 = vadd.f32 %v330, %v817
      %v819 = vpop.f32.mrb[0].mxu0
      %820 = vmatprep.mubr.bf16.mxu0 %v535
      %821 = vmatmul.mubr.bf16.gmra.mrb[0].mxu0 %v534
      %v822 = vpop.f32.mrb[0].mxu0
      %v823 = vadd.f32 %v330, %v822
      %v824 = vpop.f32.mrb[0].mxu0
      %v825 = vpop.f32.mrb[0].mxu0
      %v826 = vadd.f32 %v330, %v825
      %v827 = vpop.f32.mrb[0].mxu0
      %828 = vmatprep.mubr.bf16.mxu0 %v537
      %829 = vmatmul.mubr.bf16.gmra.mrb[0].mxu0 %v536
      %v830 = vpop.f32.mrb[0].mxu0
      %v831 = vadd.f32 %v330, %v830
      %v832 = vpop.f32.mrb[0].mxu0
      %v833 = vpop.f32.mrb[0].mxu0
      %v834 = vadd.f32 %v330, %v833
      %v835 = vpop.f32.mrb[0].mxu0
      %836 = vmatprep.mubr.bf16.mxu0 %v539
      %837 = vmatmul.mubr.bf16.gmra.mrb[0].mxu0 %v538
      %v838 = vpop.f32.mrb[0].mxu0
      %v839 = vadd.f32 %v330, %v838
      %v840 = vpop.f32.mrb[0].mxu0
      %v841 = vpop.f32.mrb[0].mxu0
      %v842 = vadd.f32 %v330, %v841
      %v843 = vpop.f32.mrb[0].mxu0
      %844 = vmatprep.mubr.bf16.mxu0 %v541
      %845 = vmatmul.mubr.bf16.gmra.mrb[0].mxu0 %v540
      %v846 = vpop.f32.mrb[0].mxu0
      %v847 = vadd.f32 %v330, %v846
      %v848 = vpop.f32.mrb[0].mxu0
      %v849 = vpop.f32.mrb[0].mxu0
      %v850 = vadd.f32 %v330, %v849
      %v851 = vpop.f32.mrb[0].mxu0
      %852 = vmatprep.mubr.bf16.mxu0 %v543
      %853 = vmatmul.mubr.bf16.gmra.mrb[0].mxu0 %v542
      %v854 = vpop.f32.mrb[0].mxu0
      %v855 = vadd.f32 %v330, %v854
      %v856 = vpop.f32.mrb[0].mxu0
      %v857 = vpop.f32.mrb[0].mxu0
      %v858 = vadd.f32 %v330, %v857
      %v859 = vpop.f32.mrb[0].mxu0
      %860 = vmatprep.mubr.bf16.mxu0 %v545
      %861 = vmatmul.mubr.bf16.gmra.mrb[0].mxu0 %v544
      %v862 = vpop.f32.mrb[0].mxu0
      %v863 = vadd.f32 %v330, %v862
      %v864 = vpop.f32.mrb[0].mxu0
      %v865 = vpop.f32.mrb[0].mxu0
      %v866 = vadd.f32 %v330, %v865
      %v867 = vpop.f32.mrb[0].mxu0
      %868 = vmatprep.mubr.bf16.mxu0 %v547
      %869 = vmatmul.mubr.bf16.gmra.mrb[0].mxu0 %v546
      %v870 = vpop.f32.mrb[0].mxu0
      %v871 = vadd.f32 %v330, %v870
      %v872 = vpop.f32.mrb[0].mxu0
      %v873 = vpop.f32.mrb[0].mxu0
      %v874 = vadd.f32 %v330, %v873
      %v875 = vpop.f32.mrb[0].mxu0
      %876 = vmatprep.mubr.bf16.mxu0 %v549
      %877 = vmatmul.mubr.bf16.gmra.mrb[0].mxu0 %v548
      %v878 = vpop.f32.mrb[0].mxu0
      %v879 = vadd.f32 %v330, %v878
      %v880 = vpop.f32.mrb[0].mxu0
      %v881 = vpop.f32.mrb[0].mxu0
      %v882 = vadd.f32 %v330, %v881
      %v883 = vpop.f32.mrb[0].mxu0
      %884 = vmatprep.mubr.bf16.mxu0 %v551
      %885 = vmatmul.mubr.bf16.gmra.mrb[0].mxu0 %v550
      %v886 = vpop.f32.mrb[0].mxu0
      %v887 = vadd.f32 %v330, %v886
      %v888 = vpop.f32.mrb[0].mxu0
      %v889 = vpop.f32.mrb[0].mxu0
      %v890 = vadd.f32 %v330, %v889
      %v891 = vpop.f32.mrb[0].mxu0
      %892 = vmatprep.mubr.bf16.mxu0 %v553
      %893 = vmatmul.mubr.bf16.gmra.mrb[0].mxu0 %v552
      %v894 = vpop.f32.mrb[0].mxu0
      %v895 = vadd.f32 %v330, %v894
      %v896 = vpop.f32.mrb[0].mxu0
      %v897 = vpop.f32.mrb[0].mxu0
      %v898 = vadd.f32 %v330, %v897
      %v899 = vpop.f32.mrb[0].mxu0
      %900 = vmatprep.mubr.bf16.mxu0 %v555
      %901 = vmatmul.mubr.bf16.gmra.mrb[0].mxu0 %v554
      %v902 = vpop.f32.mrb[0].mxu0
      %v903 = vadd.f32 %v330, %v902
      %v904 = vpop.f32.mrb[0].mxu0
      %v905 = vpop.f32.mrb[0].mxu0
      %v906 = vadd.f32 %v330, %v905
      %v907 = vpop.f32.mrb[0].mxu0
      %908 = vmatprep.mubr.bf16.mxu0 %v557
      %909 = vmatmul.mubr.bf16.gmra.mrb[0].mxu0 %v556
      %v910 = vpop.f32.mrb[0].mxu0
      %v911 = vadd.f32 %v330, %v910
      %v912 = vpop.f32.mrb[0].mxu0
      %v913 = vpop.f32.mrb[0].mxu0
      %v914 = vadd.f32 %v330, %v913
      %v915 = vpop.f32.mrb[0].mxu0
      %916 = vmatprep.mubr.bf16.mxu0 %v559
      %917 = vmatmul.mubr.bf16.gmra.mrb[0].mxu0 %v558
      %v918 = vpop.f32.mrb[0].mxu0
      %v919 = vadd.f32 %v330, %v918
      %v920 = vpop.f32.mrb[0].mxu0
      %v921 = vpop.f32.mrb[0].mxu0
      %v922 = vadd.f32 %v330, %v921
      %v923 = vpop.f32.mrb[0].mxu0
      %924 = vmatprep.mubr.bf16.mxu0 %v561
      %925 = vmatmul.mubr.bf16.gmra.mrb[0].mxu0 %v560
      %v926 = vpop.f32.mrb[0].mxu0
      %v927 = vadd.f32 %v330, %v926
      %v928 = vpop.f32.mrb[0].mxu0
      %v929 = vpop.f32.mrb[0].mxu0
      %v930 = vadd.f32 %v330, %v929
      %v931 = vpop.f32.mrb[0].mxu0
      %932 = vmatprep.mubr.bf16.mxu0 %v563
      %933 = vmatmul.mubr.bf16.gmra.mrb[0].mxu0 %v562
      %v934 = vpop.f32.mrb[0].mxu0
      %v935 = vadd.f32 %v330, %v934
      %v936 = vpop.f32.mrb[0].mxu0
      %v937 = vpop.f32.mrb[0].mxu0
      %v938 = vadd.f32 %v330, %v937
      %v939 = vpop.f32.mrb[0].mxu0
      %940 = vmatprep.mubr.bf16.mxu0 %v565
      %941 = vmatmul.mubr.bf16.gmra.mrb[0].mxu0 %v564
      %v942 = vpop.f32.mrb[0].mxu0
      %v943 = vadd.f32 %v330, %v942
      %v944 = vpop.f32.mrb[0].mxu0
      %v945 = vpop.f32.mrb[0].mxu0
      %v946 = vadd.f32 %v330, %v945
      %v947 = vpop.f32.mrb[0].mxu0
      %948 = vmatprep.mubr.bf16.mxu0 %v567
      %949 = vmatmul.mubr.bf16.gmra.mrb[0].mxu0 %v566
      %v950 = vpop.f32.mrb[0].mxu0
      %v951 = vadd.f32 %v330, %v950
      %v952 = vpop.f32.mrb[0].mxu0
      %v953 = vpop.f32.mrb[0].mxu0
      %v954 = vadd.f32 %v330, %v953
      %v955 = vpop.f32.mrb[0].mxu0
      %956 = vmatprep.mubr.bf16.mxu0 %v569
      %957 = vmatmul.mubr.bf16.gmra.mrb[0].mxu0 %v568
      %v958 = vpop.f32.mrb[0].mxu0
      %v959 = vadd.f32 %v330, %v958
      %v960 = vpop.f32.mrb[0].mxu0
      %v961 = vpop.f32.mrb[0].mxu0
      %v962 = vadd.f32 %v330, %v961
      %v963 = vpop.f32.mrb[0].mxu0
      %964 = vmatprep.mubr.bf16.mxu0 %v571
      %965 = vmatmul.mubr.bf16.gmra.mrb[0].mxu0 %v570
      %v966 = vpop.f32.mrb[0].mxu0
      %v967 = vadd.f32 %v330, %v966
      %v968 = vpop.f32.mrb[0].mxu0
      %v969 = vpop.f32.mrb[0].mxu0
      %v970 = vadd.f32 %v330, %v969
      %v971 = vpop.f32.mrb[0].mxu0
      %972 = vmatprep.mubr.bf16.mxu0 %v573
      %973 = vmatmul.mubr.bf16.gmra.mrb[0].mxu0 %v572
      %v974 = vpop.f32.mrb[0].mxu0
      %v975 = vadd.f32 %v330, %v974
      %v976 = vpop.f32.mrb[0].mxu0
      %v977 = vpop.f32.mrb[0].mxu0
      %v978 = vadd.f32 %v330, %v977
      %v979 = vpop.f32.mrb[0].mxu0
      %980 = vmatprep.mubr.bf16.mxu0 %v575
      %981 = vmatmul.mubr.bf16.gmra.mrb[0].mxu0 %v574
      %v982 = vpop.f32.mrb[0].mxu0
      %v983 = vadd.f32 %v330, %v982
      %v984 = vpop.f32.mrb[0].mxu0
      %v985 = vpop.f32.mrb[0].mxu0
      %v986 = vadd.f32 %v330, %v985
      %v987 = vpop.f32.mrb[0].mxu0
      %988 = vmatprep.mubr.bf16.mxu0 %v577
      %989 = vmatmul.mubr.bf16.gmra.mrb[0].mxu0 %v576
      %v990 = vpop.f32.mrb[0].mxu0
      %v991 = vadd.f32 %v330, %v990
      %v992 = vpop.f32.mrb[0].mxu0
      %v993 = vpop.f32.mrb[0].mxu0
      %v994 = vadd.f32 %v330, %v993
      %v995 = vpop.f32.mrb[0].mxu0
      %996 = vmatprep.mubr.bf16.mxu0 %v579
      %997 = vmatmul.mubr.bf16.gmra.mrb[0].mxu0 %v578
      %v998 = vpop.f32.mrb[0].mxu0
      %v999 = vadd.f32 %v330, %v998
      %v1000 = vpop.f32.mrb[0].mxu0
      %v1001 = vpop.f32.mrb[0].mxu0
      %v1002 = vadd.f32 %v330, %v1001
      %v1003 = vpop.f32.mrb[0].mxu0
      %1004 = vmatprep.mubr.bf16.mxu0 %v581
      %1005 = vmatmul.mubr.bf16.gmra.mrb[0].mxu0 %v580
      %v1006 = vpop.f32.mrb[0].mxu0
      %v1007 = vadd.f32 %v330, %v1006
      %v1008 = vpop.f32.mrb[0].mxu0
      %v1009 = vpop.f32.mrb[0].mxu0
      %v1010 = vadd.f32 %v330, %v1009
      %v1011 = vpop.f32.mrb[0].mxu0
      %1012 = vmatprep.mubr.bf16.mxu0 %v583
      %1013 = vmatmul.mubr.bf16.gmra.mrb[0].mxu0 %v582
      %v1014 = vpop.f32.mrb[0].mxu0
      %v1015 = vadd.f32 %v330, %v1014
      %v1016 = vpop.f32.mrb[0].mxu0
      %v1017 = vpop.f32.mrb[0].mxu0
      %v1018 = vadd.f32 %v330, %v1017
      %v1019 = vpop.f32.mrb[0].mxu0
      %1020 = vmatprep.mubr.bf16.mxu0 %v585
      %1021 = vmatmul.mubr.bf16.gmra.mrb[0].mxu0 %v584
      %v1022 = vpop.f32.mrb[0].mxu0
      %v1023 = vadd.f32 %v330, %v1022
      %v1024 = vpop.f32.mrb[0].mxu0
      %v1025 = vpop.f32.mrb[0].mxu0
      %v1026 = vadd.f32 %v330, %v1025
      %v1027 = vpop.f32.mrb[0].mxu0
      %1028 = vmatprep.mubr.bf16.mxu0 %v587
      %1029 = vmatmul.mubr.bf16.gmra.mrb[0].mxu0 %v586
      %v1030 = vpop.f32.mrb[0].mxu0
      %v1031 = vadd.f32 %v330, %v1030
      %v1032 = vpop.f32.mrb[0].mxu0
      %v1033 = vpop.f32.mrb[0].mxu0
      %v1034 = vadd.f32 %v330, %v1033
      %v1035 = vpop.f32.mrb[0].mxu0
      %1036 = vdwg.mxu0
      %v1037 = vmax.f32 %v783, 0.0
      %v1038 = vmax.f32 %v786, 0.0
      %v1039 = vmax.f32 %v791, 0.0
      %v1040 = vmax.f32 %v794, 0.0
      %v1041 = vmax.f32 %v799, 0.0
      %v1042 = vmax.f32 %v802, 0.0
      %v1043 = vmax.f32 %v807, 0.0
      %v1044 = vmax.f32 %v810, 0.0
      %v1045 = vmax.f32 %v815, 0.0
      %v1046 = vmax.f32 %v818, 0.0
      %v1047 = vmax.f32 %v823, 0.0
      %v1048 = vmax.f32 %v826, 0.0
      %v1049 = vmax.f32 %v831, 0.0
      %v1050 = vmax.f32 %v834, 0.0
      %v1051 = vmax.f32 %v839, 0.0
      %v1052 = vmax.f32 %v842, 0.0
      %v1053 = vmax.f32 %v847, 0.0
      %v1054 = vmax.f32 %v850, 0.0
      %v1055 = vmax.f32 %v855, 0.0
      %v1056 = vmax.f32 %v858, 0.0
      %v1057 = vmax.f32 %v863, 0.0
      %v1058 = vmax.f32 %v866, 0.0
      %v1059 = vmax.f32 %v871, 0.0
      %v1060 = vmax.f32 %v874, 0.0
      %v1061 = vmax.f32 %v879, 0.0
      %v1062 = vmax.f32 %v882, 0.0
      %v1063 = vmax.f32 %v887, 0.0
      %v1064 = vmax.f32 %v890, 0.0
      %v1065 = vmax.f32 %v895, 0.0
      %v1066 = vmax.f32 %v898, 0.0
      %v1067 = vmax.f32 %v903, 0.0
      %v1068 = vmax.f32 %v906, 0.0
      %v1069 = vmax.f32 %v911, 0.0
      %v1070 = vmax.f32 %v914, 0.0
      %v1071 = vmax.f32 %v919, 0.0
      %v1072 = vmax.f32 %v922, 0.0
      %v1073 = vmax.f32 %v927, 0.0
      %v1074 = vmax.f32 %v930, 0.0
      %v1075 = vmax.f32 %v935, 0.0
      %v1076 = vmax.f32 %v938, 0.0
      %v1077 = vmax.f32 %v943, 0.0
      %v1078 = vmax.f32 %v946, 0.0
      %v1079 = vmax.f32 %v951, 0.0
      %v1080 = vmax.f32 %v954, 0.0
      %v1081 = vmax.f32 %v959, 0.0
      %v1082 = vmax.f32 %v962, 0.0
      %v1083 = vmax.f32 %v967, 0.0
      %v1084 = vmax.f32 %v970, 0.0
      %v1085 = vmax.f32 %v975, 0.0
      %v1086 = vmax.f32 %v978, 0.0
      %v1087 = vmax.f32 %v983, 0.0
      %v1088 = vmax.f32 %v986, 0.0
      %v1089 = vmax.f32 %v991, 0.0
      %v1090 = vmax.f32 %v994, 0.0
      %v1091 = vmax.f32 %v999, 0.0
      %v1092 = vmax.f32 %v1002, 0.0
      %v1093 = vmax.f32 %v1007, 0.0
      %v1094 = vmax.f32 %v1010, 0.0
      %v1095 = vmax.f32 %v1015, 0.0
      %v1096 = vmax.f32 %v1018, 0.0
      %v1097 = vmax.f32 %v1023, 0.0
      %v1098 = vmax.f32 %v1026, 0.0
      %v1099 = vmax.f32 %v1031, 0.0
      %v1100 = vmax.f32 %v1034, 0.0
      %v1101 = vpack.c.bf16 %v1038, %v1037
      %v1102 = vpack.c.bf16 %v1040, %v1039
      %v1103 = vpack.c.bf16 %v1042, %v1041
      %v1104 = vpack.c.bf16 %v1044, %v1043
      %v1105 = vpack.c.bf16 %v1046, %v1045
      %v1106 = vpack.c.bf16 %v1048, %v1047
      %v1107 = vpack.c.bf16 %v1050, %v1049
      %v1108 = vpack.c.bf16 %v1052, %v1051
      %v1109 = vpack.c.bf16 %v1054, %v1053
      %v1110 = vpack.c.bf16 %v1056, %v1055
      %v1111 = vpack.c.bf16 %v1058, %v1057
      %v1112 = vpack.c.bf16 %v1060, %v1059
      %v1113 = vpack.c.bf16 %v1062, %v1061
      %v1114 = vpack.c.bf16 %v1064, %v1063
      %v1115 = vpack.c.bf16 %v1066, %v1065
      %v1116 = vpack.c.bf16 %v1068, %v1067
      %v1117 = vpack.c.bf16 %v1070, %v1069
      %v1118 = vpack.c.bf16 %v1072, %v1071
      %v1119 = vpack.c.bf16 %v1074, %v1073
      %v1120 = vpack.c.bf16 %v1076, %v1075
      %v1121 = vpack.c.bf16 %v1078, %v1077
      %v1122 = vpack.c.bf16 %v1080, %v1079
      %v1123 = vpack.c.bf16 %v1082, %v1081
      %v1124 = vpack.c.bf16 %v1084, %v1083
      %v1125 = vpack.c.bf16 %v1086, %v1085
      %v1126 = vpack.c.bf16 %v1088, %v1087
      %v1127 = vpack.c.bf16 %v1090, %v1089
      %v1128 = vpack.c.bf16 %v1092, %v1091
      %v1129 = vpack.c.bf16 %v1094, %v1093
      %v1130 = vpack.c.bf16 %v1096, %v1095
      %v1131 = vpack.c.bf16 %v1098, %v1097
      %v1132 = vpack.c.bf16 %v1100, %v1099
      %v1165 = vunpack.c.l.b16 %v1101
      %v1166 = vunpack.c.h.b16 %v1101
      %v1167 = vunpack.c.l.b16 %v1102
      %v1168 = vunpack.c.h.b16 %v1102
      %v1169 = vunpack.c.l.b16 %v1103
      %v1170 = vunpack.c.h.b16 %v1103
      %v1171 = vunpack.c.l.b16 %v1104
      %v1172 = vunpack.c.h.b16 %v1104
      %v1173 = vunpack.c.l.b16 %v1105
      %v1174 = vunpack.c.h.b16 %v1105
      %v1175 = vunpack.c.l.b16 %v1106
      %v1176 = vunpack.c.h.b16 %v1106
      %v1177 = vunpack.c.l.b16 %v1107
      %v1178 = vunpack.c.h.b16 %v1107
      %v1179 = vunpack.c.l.b16 %v1108
      %v1180 = vunpack.c.h.b16 %v1108
      %v1181 = vunpack.c.l.b16 %v1109
      %v1182 = vunpack.c.h.b16 %v1109
      %v1183 = vunpack.c.l.b16 %v1110
      %v1184 = vunpack.c.h.b16 %v1110
      %v1185 = vunpack.c.l.b16 %v1111
      %v1186 = vunpack.c.h.b16 %v1111
      %v1187 = vunpack.c.l.b16 %v1112
      %v1188 = vunpack.c.h.b16 %v1112
      %v1189 = vunpack.c.l.b16 %v1113
      %v1190 = vunpack.c.h.b16 %v1113
      %v1191 = vunpack.c.l.b16 %v1114
      %v1192 = vunpack.c.h.b16 %v1114
      %v1193 = vunpack.c.l.b16 %v1115
      %v1194 = vunpack.c.h.b16 %v1115
      %v1195 = vunpack.c.l.b16 %v1116
      %v1196 = vunpack.c.h.b16 %v1116
      %v1197 = vunpack.c.l.b16 %v1117
      %v1198 = vunpack.c.h.b16 %v1117
      %v1199 = vunpack.c.l.b16 %v1118
      %v1200 = vunpack.c.h.b16 %v1118
      %v1201 = vunpack.c.l.b16 %v1119
      %v1202 = vunpack.c.h.b16 %v1119
      %v1203 = vunpack.c.l.b16 %v1120
      %v1204 = vunpack.c.h.b16 %v1120
      %v1205 = vunpack.c.l.b16 %v1121
      %v1206 = vunpack.c.h.b16 %v1121
      %v1207 = vunpack.c.l.b16 %v1122
      %v1208 = vunpack.c.h.b16 %v1122
      %v1209 = vunpack.c.l.b16 %v1123
      %v1210 = vunpack.c.h.b16 %v1123
      %v1211 = vunpack.c.l.b16 %v1124
      %v1212 = vunpack.c.h.b16 %v1124
      %v1213 = vunpack.c.l.b16 %v1125
      %v1214 = vunpack.c.h.b16 %v1125
      %v1215 = vunpack.c.l.b16 %v1126
      %v1216 = vunpack.c.h.b16 %v1126
      %v1217 = vunpack.c.l.b16 %v1127
      %v1218 = vunpack.c.h.b16 %v1127
      %v1219 = vunpack.c.l.b16 %v1128
      %v1220 = vunpack.c.h.b16 %v1128
      %v1221 = vunpack.c.l.b16 %v1129
      %v1222 = vunpack.c.h.b16 %v1129
      %v1223 = vunpack.c.l.b16 %v1130
      %v1224 = vunpack.c.h.b16 %v1130
      %v1225 = vunpack.c.l.b16 %v1131
      %v1226 = vunpack.c.h.b16 %v1131
      %v1227 = vunpack.c.l.b16 %v1132
      %v1228 = vunpack.c.h.b16 %v1132
      %v1229 = vpack.c.b16 %v1165, %v1165
      %v1230 = vpack.c.b16 %v1166, %v1166
      %v1231 = vpack.c.b16 %v1167, %v1167
      %v1232 = vpack.c.b16 %v1168, %v1168
      %v1233 = vpack.c.b16 %v1169, %v1169
      %v1234 = vpack.c.b16 %v1170, %v1170
      %v1235 = vpack.c.b16 %v1171, %v1171
      %v1236 = vpack.c.b16 %v1172, %v1172
      %v1237 = vpack.c.b16 %v1173, %v1173
      %v1238 = vpack.c.b16 %v1174, %v1174
      %v1239 = vpack.c.b16 %v1175, %v1175
      %v1240 = vpack.c.b16 %v1176, %v1176
      %v1241 = vpack.c.b16 %v1177, %v1177
      %v1242 = vpack.c.b16 %v1178, %v1178
      %v1243 = vpack.c.b16 %v1179, %v1179
      %v1244 = vpack.c.b16 %v1180, %v1180
      %v1245 = vpack.c.b16 %v1181, %v1181
      %v1246 = vpack.c.b16 %v1182, %v1182
      %v1247 = vpack.c.b16 %v1183, %v1183
      %v1248 = vpack.c.b16 %v1184, %v1184
      %v1249 = vpack.c.b16 %v1185, %v1185
      %v1250 = vpack.c.b16 %v1186, %v1186
      %v1251 = vpack.c.b16 %v1187, %v1187
      %v1252 = vpack.c.b16 %v1188, %v1188
      %v1253 = vpack.c.b16 %v1189, %v1189
      %v1254 = vpack.c.b16 %v1190, %v1190
      %v1255 = vpack.c.b16 %v1191, %v1191
      %v1256 = vpack.c.b16 %v1192, %v1192
      %v1257 = vpack.c.b16 %v1193, %v1193
      %v1258 = vpack.c.b16 %v1194, %v1194
      %v1259 = vpack.c.b16 %v1195, %v1195
      %v1260 = vpack.c.b16 %v1196, %v1196
      %v1261 = vpack.c.b16 %v1197, %v1197
      %v1262 = vpack.c.b16 %v1198, %v1198
      %v1263 = vpack.c.b16 %v1199, %v1199
      %v1264 = vpack.c.b16 %v1200, %v1200
      %v1265 = vpack.c.b16 %v1201, %v1201
      %v1266 = vpack.c.b16 %v1202, %v1202
      %v1267 = vpack.c.b16 %v1203, %v1203
      %v1268 = vpack.c.b16 %v1204, %v1204
      %v1269 = vpack.c.b16 %v1205, %v1205
      %v1270 = vpack.c.b16 %v1206, %v1206
      %v1271 = vpack.c.b16 %v1207, %v1207
      %v1272 = vpack.c.b16 %v1208, %v1208
      %v1273 = vpack.c.b16 %v1209, %v1209
      %v1274 = vpack.c.b16 %v1210, %v1210
      %v1275 = vpack.c.b16 %v1211, %v1211
      %v1276 = vpack.c.b16 %v1212, %v1212
      %v1277 = vpack.c.b16 %v1213, %v1213
      %v1278 = vpack.c.b16 %v1214, %v1214
      %v1279 = vpack.c.b16 %v1215, %v1215
      %v1280 = vpack.c.b16 %v1216, %v1216
      %v1281 = vpack.c.b16 %v1217, %v1217
      %v1282 = vpack.c.b16 %v1218, %v1218
      %v1283 = vpack.c.b16 %v1219, %v1219
      %v1284 = vpack.c.b16 %v1220, %v1220
      %v1285 = vpack.c.b16 %v1221, %v1221
      %v1286 = vpack.c.b16 %v1222, %v1222
      %v1287 = vpack.c.b16 %v1223, %v1223
      %v1288 = vpack.c.b16 %v1224, %v1224
      %v1289 = vpack.c.b16 %v1225, %v1225
      %v1290 = vpack.c.b16 %v1226, %v1226
      %v1291 = vpack.c.b16 %v1227, %v1227
      %v1292 = vpack.c.b16 %v1228, %v1228
      %1357 = vst [vmem:[%s226] sm:$0xf] %v1229
      %1358 = vst [vmem:[%s226 + $0x4] sm:$0xf] %v1230
      %1359 = vst [vmem:[%s226 + $0x8] sm:$0xf] %v1231
      %1360 = vst [vmem:[%s226 + $0xc] sm:$0xf] %v1232
      %1361 = vst [vmem:[%s226 + $0x10] sm:$0xf] %v1233
      %1362 = vst [vmem:[%s226 + $0x14] sm:$0xf] %v1234
      %1363 = vst [vmem:[%s226 + $0x18] sm:$0xf] %v1235
      %1364 = vst [vmem:[%s226 + $0x1c] sm:$0xf] %v1236
      %1365 = vst [vmem:[%s226 + $0x20] sm:$0xf] %v1237
      %1366 = vst [vmem:[%s226 + $0x24] sm:$0xf] %v1238
      %1367 = vst [vmem:[%s226 + $0x28] sm:$0xf] %v1239
      %1368 = vst [vmem:[%s226 + $0x2c] sm:$0xf] %v1240
      %1369 = vst [vmem:[%s226 + $0x30] sm:$0xf] %v1241
      %1370 = vst [vmem:[%s226 + $0x34] sm:$0xf] %v1242
      %1371 = vst [vmem:[%s226 + $0x38] sm:$0xf] %v1243
      %1372 = vst [vmem:[%s226 + $0x3c] sm:$0xf] %v1244
      %1373 = vst [vmem:[%s226 + $0x40] sm:$0xf] %v1245
      %1374 = vst [vmem:[%s226 + $0x44] sm:$0xf] %v1246
      %1375 = vst [vmem:[%s226 + $0x48] sm:$0xf] %v1247
      %1376 = vst [vmem:[%s226 + $0x4c] sm:$0xf] %v1248
      %1377 = vst [vmem:[%s226 + $0x50] sm:$0xf] %v1249
      %1378 = vst [vmem:[%s226 + $0x54] sm:$0xf] %v1250
      %1379 = vst [vmem:[%s226 + $0x58] sm:$0xf] %v1251
      %1380 = vst [vmem:[%s226 + $0x5c] sm:$0xf] %v1252
      %1381 = vst [vmem:[%s226 + $0x60] sm:$0xf] %v1253
      %1382 = vst [vmem:[%s226 + $0x64] sm:$0xf] %v1254
      %1383 = vst [vmem:[%s226 + $0x68] sm:$0xf] %v1255
      %1384 = vst [vmem:[%s226 + $0x6c] sm:$0xf] %v1256
      %1385 = vst [vmem:[%s226 + $0x70] sm:$0xf] %v1257
      %1386 = vst [vmem:[%s226 + $0x74] sm:$0xf] %v1258
      %1387 = vst [vmem:[%s226 + $0x78] sm:$0xf] %v1259
      %1388 = vst [vmem:[%s226 + $0x7c] sm:$0xf] %v1260
      %1389 = vst [vmem:[%s226 + $0x80] sm:$0xf] %v1261
      %1390 = vst [vmem:[%s226 + $0x84] sm:$0xf] %v1262
      %1391 = vst [vmem:[%s226 + $0x88] sm:$0xf] %v1263
      %1392 = vst [vmem:[%s226 + $0x8c] sm:$0xf] %v1264
      %1393 = vst [vmem:[%s226 + $0x90] sm:$0xf] %v1265
      %1394 = vst [vmem:[%s226 + $0x94] sm:$0xf] %v1266
      %1395 = vst [vmem:[%s226 + $0x98] sm:$0xf] %v1267
      %1396 = vst [vmem:[%s226 + $0x9c] sm:$0xf] %v1268
      %1397 = vst [vmem:[%s226 + $0xa0] sm:$0xf] %v1269
      %1398 = vst [vmem:[%s226 + $0xa4] sm:$0xf] %v1270
      %1399 = vst [vmem:[%s226 + $0xa8] sm:$0xf] %v1271
      %1400 = vst [vmem:[%s226 + $0xac] sm:$0xf] %v1272
      %1401 = vst [vmem:[%s226 + $0xb0] sm:$0xf] %v1273
      %1402 = vst [vmem:[%s226 + $0xb4] sm:$0xf] %v1274
      %1403 = vst [vmem:[%s226 + $0xb8] sm:$0xf] %v1275
      %1404 = vst [vmem:[%s226 + $0xbc] sm:$0xf] %v1276
      %1405 = vst [vmem:[%s226 + $0xc0] sm:$0xf] %v1277
      %1406 = vst [vmem:[%s226 + $0xc4] sm:$0xf] %v1278
      %1407 = vst [vmem:[%s226 + $0xc8] sm:$0xf] %v1279
      %1408 = vst [vmem:[%s226 + $0xcc] sm:$0xf] %v1280
      %1409 = vst [vmem:[%s226 + $0xd0] sm:$0xf] %v1281
      %1410 = vst [vmem:[%s226 + $0xd4] sm:$0xf] %v1282
      %1411 = vst [vmem:[%s226 + $0xd8] sm:$0xf] %v1283
      %1412 = vst [vmem:[%s226 + $0xdc] sm:$0xf] %v1284
      %1413 = vst [vmem:[%s226 + $0xe0] sm:$0xf] %v1285
      %1414 = vst [vmem:[%s226 + $0xe4] sm:$0xf] %v1286
      %1415 = vst [vmem:[%s226 + $0xe8] sm:$0xf] %v1287
      %1416 = vst [vmem:[%s226 + $0xec] sm:$0xf] %v1288
      %1417 = vst [vmem:[%s226 + $0xf0] sm:$0xf] %v1289
      %1418 = vst [vmem:[%s226 + $0xf4] sm:$0xf] %v1290
      %1419 = vst [vmem:[%s226 + $0xf8] sm:$0xf] %v1291
      %1420 = vst [vmem:[%s226 + $0xfc] sm:$0xf] %v1292
      %s1421 = smul.u32 64, %s18
      %p1422 = scmp.lt.s32.totalorder %s1421, 255
      %s1423 = scalar_select %p1422, %s1421, 255
      %p1424 = scmp.lt.s32.totalorder %s19, 0
      %s1425 = scalar_select %p1424, %s19, 0
      %s1426 = sadd.s32 %s1425, %s1423
      %s1427 = smul.addr %s1426, 4
      %s1428 = scalar_lea.vmem %s3, %s1427
      // Predicated region
      $region33: #{_lambda_.15} parent=31 // pred_check
        %p1429 = pneg %p124
      $region34: #{_lambda_.15} parent=31 // pred_check_branch
        %1431 = sbr.rel (%p1429) target = $region36
      $region35: #{_lambda_.15} parent=31 // pred_region
        %s1432 = smul.u32 64, %s18
      $region36: #{_lambda_.15} parent=31 // pred_fallthru
        _
    $region32: #{_lambda_.15} parent=5 // pred_fallthru
      _
    %p1433 = scmp.le.s32.totalorder 2, %s9
    // Predicated region
    $region37: #{_lambda_.15} parent=5 // pred_check
      %p1434 = pneg %p1433
    $region38: #{_lambda_.15} parent=5 // pred_check_branch
      %1436 = sbr.rel (%p1434) target = $region40
    $region39: #{_lambda_.15} parent=5 // pred_region
      %s1437 = ssub.s32 %s9, 2
      // Predicated region
      $region41: #{_lambda_.15} parent=39 // pred_check
        %p1438 = pneg %p130
      $region42: #{_lambda_.15} parent=39 // pred_check_branch
        %1440 = sbr.rel (%p1438) target = $region44
      $region43: #{_lambda_.15} parent=39 // pred_region
        %s1441 = smul.u32 64, %s20
        %p1442 = scmp.lt.s32.totalorder %s1441, 255
        %s1443 = scalar_select %p1442, %s1441, 255
        %p1444 = scmp.lt.s32.totalorder %s21, 0
        %s1445 = scalar_select %p1444, %s21, 0
        %s1446 = sadd.s32 %s1445, %s1443
        %s1447 = smul.addr %s1446, 4
        %s1448 = scalar_lea.vmem %s3, %s1447
      $region44: #{_lambda_.15} parent=39 // pred_fallthru
        _
    $region40: #{_lambda_.15} parent=5 // pred_fallthru
      _
  $region6: #{_lambda_.15} parent=0 // loop_footer
    %s13 = sadd.s32 1, %s9
  $region7: #{_lambda_.15} parent=0 // loop_footer_branch
    %8 = sbr.rel target = $region3
  $region8: #{_lambda_.15} parent=0 // loop_exit
    _

// kernel: _lambda_.16
$region0: #{_lambda_.16}
  #allocation0 [shape = 'u32[]', space=smem, size = 0x4, offset = 0x4, fixed_abs, tag = 'smem constant byte address 0x4 - core index']
  #allocation1 [shape = 'u32[144,128]{1,0:T(1,128)}', space=vmem, size = 0x12000, scoped, tag = 'internal scratch']
  %s0 = inlined_call_operand.vmem [shape: bf16[512,128], index: 0, kind: input, shape index: {}]
  %s1 = inlined_call_operand.vmem [shape: bf16[128,128], index: 1, kind: input, shape index: {}]
  %s2 = inlined_call_operand.vmem [shape: f32[1,128], index: 2, kind: input, shape index: {}]
  %s3 = inlined_call_operand.vmem [shape: bf16[512,128], index: 3, kind: output, shape index: {}]
  %s4 = sld [smem:[#allocation0]]
  $region45: #{_lambda_.16} parent=0
    _
  %s6 = ssub.s32 1, %s4
  %s7 = scalar_select 0, %s6, %s4
  loop: start=0, step=1, limit=4
  $region2: #{_lambda_.16} parent=0 // loop_pre_header
    _
  $region3: #{_lambda_.16} parent=0 // loop_header
    %s9 = sphi 0, %s13
    %p10 = scmp.ge.s32.totalorder %s9, 4
    %s16 = sphi 0, %s28
    %s17 = sphi 0, %s24
    %s18 = sphi 0, %s16
    %s19 = sphi 0, %s17
    %s20 = sphi 0, %s18
    %s21 = sphi 0, %s19
    %s31 = sphi 0, %s33
    %s34 = sphi 0, %s31
    %s35 = sphi 0, %s34
    %s51 = sphi 0, %s35
    %s57 = sphi 0, %s59
    %s60 = sphi 0, %s57
    %s61 = sphi 0, %s60
    %s77 = sphi 0, %s61
    %s83 = sphi 0, %s85
    %s86 = sphi 0, %s83
    %s87 = sphi 0, %s86
    %s103 = sphi 0, %s87
    %s111 = sphi 0, %s113
    %s114 = sphi 0, %s111
    %s115 = sphi 0, %s114
    %s131 = sphi 0, %s115
  $region4: #{_lambda_.16} parent=0 // loop_header_branch
    %12 = sbr.rel (%p10) target = $region8
  $region5: #{_lambda_.16} parent=0 // loop_body
    %s14 = ssub.s32 %s9, 1
    %s15 = ssub.s32 %s9, 2
    %s22 = sadd.s32 1, %s17
    %p23 = scmp.ge.s32.totalorder %s22, 1
    %s24 = scalar_select %p23, 0, %s22
    %s25 = sadd.s32 1, %s16
    %s26 = scalar_select %p23, %s25, %s16
    %p27 = scmp.ge.s32.totalorder %s26, 2
    %s28 = scalar_select %p27, 0, %s26
    %s29 = ssub.s32 %s16, %s28
    %p30 = scmp.eq.s32.totalorder %s29, 0
    %s32 = sadd.s32 %s31, 1
    %s33 = scalar_select %p30, %s31, %s32
    %p36 = pneg %p30
    %p37 = scmp.eq.s32.totalorder %s9, 1
    %p38 = por %p36, %p37
    %p39 = scmp.ne.s32.totalorder %s31, %s34
    %p40 = scmp.eq.s32.totalorder %s9, 0
    %p41 = por %p39, %p40
    %p42 = scmp.ne.s32.totalorder %s31, %s34
    %p43 = scmp.eq.s32.totalorder %s14, 1
    %p44 = por %p42, %p43
    %p45 = scmp.ne.s32.totalorder %s34, %s35
    %p46 = scmp.eq.s32.totalorder %s14, 0
    %p47 = por %p45, %p46
    %p48 = scmp.ne.s32.totalorder %s34, %s35
    %p49 = scmp.eq.s32.totalorder %s15, 1
    %p50 = por %p48, %p49
    %p52 = scmp.ne.s32.totalorder %s35, %s51
    %p53 = scmp.eq.s32.totalorder %s15, 0
    %p54 = por %p52, %p53
    %s55 = ssub.s32 %s17, %s24
    %p56 = scmp.eq.s32.totalorder %s55, 0
    %s58 = sadd.s32 %s57, 1
    %s59 = scalar_select %p56, %s57, %s58
    %p62 = pneg %p56
    %p63 = scmp.eq.s32.totalorder %s9, 1
    %p64 = por %p62, %p63
    %p65 = scmp.ne.s32.totalorder %s57, %s60
    %p66 = scmp.eq.s32.totalorder %s9, 0
    %p67 = por %p65, %p66
    %p68 = scmp.ne.s32.totalorder %s57, %s60
    %p69 = scmp.eq.s32.totalorder %s14, 1
    %p70 = por %p68, %p69
    %p71 = scmp.ne.s32.totalorder %s60, %s61
    %p72 = scmp.eq.s32.totalorder %s14, 0
    %p73 = por %p71, %p72
    %p74 = scmp.ne.s32.totalorder %s60, %s61
    %p75 = scmp.eq.s32.totalorder %s15, 1
    %p76 = por %p74, %p75
    %p78 = scmp.ne.s32.totalorder %s61, %s77
    %p79 = scmp.eq.s32.totalorder %s15, 0
    %p80 = por %p78, %p79
    %s81 = ssub.s32 %s17, %s24
    %p82 = scmp.eq.s32.totalorder %s81, 0
    %s84 = sadd.s32 %s83, 1
    %s85 = scalar_select %p82, %s83, %s84
    %p88 = pneg %p82
    %p89 = scmp.eq.s32.totalorder %s9, 1
    %p90 = por %p88, %p89
    %p91 = scmp.ne.s32.totalorder %s83, %s86
    %p92 = scmp.eq.s32.totalorder %s9, 0
    %p93 = por %p91, %p92
    %p94 = scmp.ne.s32.totalorder %s83, %s86
    %p95 = scmp.eq.s32.totalorder %s14, 1
    %p96 = por %p94, %p95
    %p97 = scmp.ne.s32.totalorder %s86, %s87
    %p98 = scmp.eq.s32.totalorder %s14, 0
    %p99 = por %p97, %p98
    %p100 = scmp.ne.s32.totalorder %s86, %s87
    %p101 = scmp.eq.s32.totalorder %s15, 1
    %p102 = por %p100, %p101
    %p104 = scmp.ne.s32.totalorder %s87, %s103
    %p105 = scmp.eq.s32.totalorder %s15, 0
    %p106 = por %p104, %p105
    %s107 = ssub.s32 %s16, %s28
    %s108 = ssub.s32 %s17, %s24
    %s109 = sor.u32 %s107, %s108
    %p110 = scmp.eq.s32.totalorder %s109, 0
    %s112 = sadd.s32 %s111, 1
    %s113 = scalar_select %p110, %s111, %s112
    %p116 = pneg %p110
    %p117 = scmp.eq.s32.totalorder %s9, 1
    %p118 = por %p116, %p117
    %p119 = scmp.ne.s32.totalorder %s111, %s114
    %p120 = scmp.eq.s32.totalorder %s9, 0
    %p121 = por %p119, %p120
    %p122 = scmp.ne.s32.totalorder %s111, %s114
    %p123 = scmp.eq.s32.totalorder %s14, 1
    %p124 = por %p122, %p123
    %p125 = scmp.ne.s32.totalorder %s114, %s115
    %p126 = scmp.eq.s32.totalorder %s14, 0
    %p127 = por %p125, %p126
    %p128 = scmp.ne.s32.totalorder %s114, %s115
    %p129 = scmp.eq.s32.totalorder %s15, 1
    %p130 = por %p128, %p129
    %p132 = scmp.ne.s32.totalorder %s115, %s131
    %p133 = scmp.eq.s32.totalorder %s15, 0
    %p134 = por %p132, %p133
    %p135 = scmp.le.s32.totalorder 1, %s9
    %p136 = scmp.lt.s32.totalorder %s9, 3
    %p137 = pnand %p135, %p136
    %p138 = pneg %p137
    // Predicated region
    $region9: #{_lambda_.16} parent=5 // pred_check
      _
    $region10: #{_lambda_.16} parent=5 // pred_check_branch
      %140 = sbr.rel (%p137) target = $region12
    $region11: #{_lambda_.16} parent=5 // pred_region
      %s141 = ssub.s32 %s9, 1
      // Predicated region
      $region13: #{_lambda_.16} parent=11 // pred_check
        %p142 = pneg %p73
      $region14: #{_lambda_.16} parent=11 // pred_check_branch
        %144 = sbr.rel (%p142) target = $region16
      $region15: #{_lambda_.16} parent=11 // pred_region
        %p145 = scmp.lt.s32.totalorder %s19, 0
        %s146 = scalar_select %p145, %s19, 0
        %s147 = smul.addr %s146, 4
        %s148 = scalar_lea.vmem %s1, %s147
      $region16: #{_lambda_.16} parent=11 // pred_fallthru
        _
      // Predicated region
      $region17: #{_lambda_.16} parent=11 // pred_check
        %p149 = pneg %p99
      $region18: #{_lambda_.16} parent=11 // pred_check_branch
        %151 = sbr.rel (%p149) target = $region20
      $region19: #{_lambda_.16} parent=11 // pred_region
        %p152 = scmp.lt.s32.totalorder %s19, 0
        %s153 = scalar_select %p152, %s19, 0
        %s154 = scalar_lea.vmem %s2, %s153
      $region20: #{_lambda_.16} parent=11 // pred_fallthru
        _
    $region12: #{_lambda_.16} parent=5 // pred_fallthru
      _
    %p155 = scmp.lt.s32.totalorder %s9, 2
    // Predicated region
    $region21: #{_lambda_.16} parent=5 // pred_check
      %p156 = pneg %p155
    $region22: #{_lambda_.16} parent=5 // pred_check_branch
      %158 = sbr.rel (%p156) target = $region24
    $region23: #{_lambda_.16} parent=5 // pred_region
      // Predicated region
      $region25: #{_lambda_.16} parent=23 // pred_check
        %p159 = pneg %p41
      $region26: #{_lambda_.16} parent=23 // pred_check_branch
        %161 = sbr.rel (%p159) target = $region28
      $region27: #{_lambda_.16} parent=23 // pred_region
        %s162 = smul.u32 32, %s16
        %p163 = scmp.lt.s32.totalorder %s162, 63
        %s164 = scalar_select %p163, %s162, 63
        %s165 = smul.addr %s164, 4
        %s166 = scalar_lea.vmem %s0, %s165
        %s167 = smul.u32 32, %s16
      $region28: #{_lambda_.16} parent=23 // pred_fallthru
        _
    $region24: #{_lambda_.16} parent=5 // pred_fallthru
      _
    %p168 = scmp.le.s32.totalorder 1, %s9
    %p169 = scmp.lt.s32.totalorder %s9, 3
    %p170 = pnand %p168, %p169
    %p171 = pneg %p170
    // Predicated region
    $region29: #{_lambda_.16} parent=5 // pred_check
      _
    $region30: #{_lambda_.16} parent=5 // pred_check_branch
      %173 = sbr.rel (%p170) target = $region32
    $region31: #{_lambda_.16} parent=5 // pred_region
      %s174 = ssub.s32 %s9, 1
      %s175 = smul.u32 32, %s18
      %p176 = scmp.lt.s32.totalorder %s175, 63
      %s177 = scalar_select %p176, %s175, 63
      %s178 = smul.addr %s177, 4
      %s179 = scalar_lea.vmem %s0, %s178
      %p180 = pneg %p47
      %p181 = pneg %p44
      %p182 = scmp.lt.s32.totalorder %s19, 0
      %s183 = scalar_select %p182, %s19, 0
      %s184 = smul.addr %s183, 4
      %s185 = scalar_lea.vmem %s1, %s184
      %p186 = pneg %p73
      %p187 = pneg %p70
      %p188 = scmp.lt.s32.totalorder %s19, 0
      %s189 = scalar_select %p188, %s19, 0
      %s190 = scalar_lea.vmem %s2, %s189
      %p191 = pneg %p99
      %p192 = pneg %p96
      %p193 = pneg %p127
      %p194 = pneg %p124
      %s195 = smul.u32 32, %s18
      %p196 = scmp.lt.s32.totalorder %s195, 63
      %s197 = scalar_select %p196, %s195, 63
      %p198 = scmp.lt.s32.totalorder %s19, 0
      %s199 = scalar_select %p198, %s19, 0
      %s200 = sadd.s32 %s199, %s197
      %s201 = smul.addr %s200, 4
      %s202 = scalar_lea.vmem %s3, %s201
      %s203 = smul.u32 32, %s18
      %p204 = scmp.lt.s32.totalorder %s203, 63
      %s205 = scalar_select %p204, %s203, 63
      %s206 = smul.addr %s205, 4
      %s207 = scalar_lea.vmem %s0, %s206
      %s208 = smul.u32 32, %s18
      %p209 = scmp.lt.s32.totalorder %s19, 0
      %s210 = scalar_select %p209, %s19, 0
      %s211 = smul.addr %s210, 4
      %s212 = scalar_lea.vmem %s1, %s211
      %p213 = scmp.lt.s32.totalorder %s19, 0
      %s214 = scalar_select %p213, %s19, 0
      %s215 = scalar_lea.vmem %s2, %s214
      %s216 = smul.u32 32, %s18
      %p217 = scmp.lt.s32.totalorder %s216, 63
      %s218 = scalar_select %p217, %s216, 63
      %p219 = scmp.lt.s32.totalorder %s19, 0
      %s220 = scalar_select %p219, %s19, 0
      %s221 = sadd.s32 %s220, %s218
      %s222 = smul.addr %s221, 4
      %s223 = scalar_lea.vmem %s3, %s222
      %s224 = smul.u32 32, %s18
      %v226 = vld [vmem:[%s207] sm:$0xf]
      %v227 = vld [vmem:[%s207 + $0x4] sm:$0xf]
      %v228 = vld [vmem:[%s207 + $0x8] sm:$0xf]
      %v229 = vld [vmem:[%s207 + $0xc] sm:$0xf]
      %v230 = vld [vmem:[%s207 + $0x10] sm:$0xf]
      %v231 = vld [vmem:[%s207 + $0x14] sm:$0xf]
      %v232 = vld [vmem:[%s207 + $0x18] sm:$0xf]
      %v233 = vld [vmem:[%s207 + $0x1c] sm:$0xf]
      %v234 = vld [vmem:[%s207 + $0x20] sm:$0xf]
      %v235 = vld [vmem:[%s207 + $0x24] sm:$0xf]
      %v236 = vld [vmem:[%s207 + $0x28] sm:$0xf]
      %v237 = vld [vmem:[%s207 + $0x2c] sm:$0xf]
      %v238 = vld [vmem:[%s207 + $0x30] sm:$0xf]
      %v239 = vld [vmem:[%s207 + $0x34] sm:$0xf]
      %v240 = vld [vmem:[%s207 + $0x38] sm:$0xf]
      %v241 = vld [vmem:[%s207 + $0x3c] sm:$0xf]
      %v242 = vld [vmem:[%s207 + $0x40] sm:$0xf]
      %v243 = vld [vmem:[%s207 + $0x44] sm:$0xf]
      %v244 = vld [vmem:[%s207 + $0x48] sm:$0xf]
      %v245 = vld [vmem:[%s207 + $0x4c] sm:$0xf]
      %v246 = vld [vmem:[%s207 + $0x50] sm:$0xf]
      %v247 = vld [vmem:[%s207 + $0x54] sm:$0xf]
      %v248 = vld [vmem:[%s207 + $0x58] sm:$0xf]
      %v249 = vld [vmem:[%s207 + $0x5c] sm:$0xf]
      %v250 = vld [vmem:[%s207 + $0x60] sm:$0xf]
      %v251 = vld [vmem:[%s207 + $0x64] sm:$0xf]
      %v252 = vld [vmem:[%s207 + $0x68] sm:$0xf]
      %v253 = vld [vmem:[%s207 + $0x6c] sm:$0xf]
      %v254 = vld [vmem:[%s207 + $0x70] sm:$0xf]
      %v255 = vld [vmem:[%s207 + $0x74] sm:$0xf]
      %v256 = vld [vmem:[%s207 + $0x78] sm:$0xf]
      %v257 = vld [vmem:[%s207 + $0x7c] sm:$0xf]
      %v258 = vld [vmem:[%s212] sm:$0xf]
      %v259 = vld [vmem:[%s212 + $0x4] sm:$0xf]
      %v260 = vld [vmem:[%s212 + $0x8] sm:$0xf]
      %v261 = vld [vmem:[%s212 + $0xc] sm:$0xf]
      %v262 = vld [vmem:[%s212 + $0x10] sm:$0xf]
      %v263 = vld [vmem:[%s212 + $0x14] sm:$0xf]
      %v264 = vld [vmem:[%s212 + $0x18] sm:$0xf]
      %v265 = vld [vmem:[%s212 + $0x1c] sm:$0xf]
      %v266 = vld [vmem:[%s212 + $0x20] sm:$0xf]
      %v267 = vld [vmem:[%s212 + $0x24] sm:$0xf]
      %v268 = vld [vmem:[%s212 + $0x28] sm:$0xf]
      %v269 = vld [vmem:[%s212 + $0x2c] sm:$0xf]
      %v270 = vld [vmem:[%s212 + $0x30] sm:$0xf]
      %v271 = vld [vmem:[%s212 + $0x34] sm:$0xf]
      %v272 = vld [vmem:[%s212 + $0x38] sm:$0xf]
      %v273 = vld [vmem:[%s212 + $0x3c] sm:$0xf]
      %v274 = vld [vmem:[%s215] sm:$0x1]
      %v276 = vlaneseq
      %v277 = vshrl.u32 %v276, 7
      %v278 = vsub.s32 0, %v277
      %v279 = vrot.slane %v274, %v278
      %v313 = vunpack.c.l.b16 %v226
      %v314 = vunpack.c.l.b16 %v227
      %v315 = vunpack.c.l.b16 %v228
      %v316 = vunpack.c.l.b16 %v229
      %v317 = vunpack.c.l.b16 %v230
      %v318 = vunpack.c.l.b16 %v231
      %v319 = vunpack.c.l.b16 %v232
      %v320 = vunpack.c.l.b16 %v233
      %v321 = vunpack.c.l.b16 %v234
      %v322 = vunpack.c.l.b16 %v235
      %v323 = vunpack.c.l.b16 %v236
      %v324 = vunpack.c.l.b16 %v237
      %v325 = vunpack.c.l.b16 %v238
      %v326 = vunpack.c.l.b16 %v239
      %v327 = vunpack.c.l.b16 %v240
      %v328 = vunpack.c.l.b16 %v241
      %v329 = vunpack.c.l.b16 %v242
      %v330 = vunpack.c.l.b16 %v243
      %v331 = vunpack.c.l.b16 %v244
      %v332 = vunpack.c.l.b16 %v245
      %v333 = vunpack.c.l.b16 %v246
      %v334 = vunpack.c.l.b16 %v247
      %v335 = vunpack.c.l.b16 %v248
      %v336 = vunpack.c.l.b16 %v249
      %v337 = vunpack.c.l.b16 %v250
      %v338 = vunpack.c.l.b16 %v251
      %v339 = vunpack.c.l.b16 %v252
      %v340 = vunpack.c.l.b16 %v253
      %v341 = vunpack.c.l.b16 %v254
      %v342 = vunpack.c.l.b16 %v255
      %v343 = vunpack.c.l.b16 %v256
      %v344 = vunpack.c.l.b16 %v257
      %v345 = vpack.c.b16 %v314, %v313
      %v346 = vpack.c.b16 %v316, %v315
      %v347 = vpack.c.b16 %v318, %v317
      %v348 = vpack.c.b16 %v320, %v319
      %v349 = vpack.c.b16 %v322, %v321
      %v350 = vpack.c.b16 %v324, %v323
      %v351 = vpack.c.b16 %v326, %v325
      %v352 = vpack.c.b16 %v328, %v327
      %v353 = vpack.c.b16 %v330, %v329
      %v354 = vpack.c.b16 %v332, %v331
      %v355 = vpack.c.b16 %v334, %v333
      %v356 = vpack.c.b16 %v336, %v335
      %v357 = vpack.c.b16 %v338, %v337
      %v358 = vpack.c.b16 %v340, %v339
      %v359 = vpack.c.b16 %v342, %v341
      %v360 = vpack.c.b16 %v344, %v343
      %v393 = vunpack.c.l.b16 %v258
      %v394 = vunpack.c.l.b16 %v259
      %v395 = vunpack.c.l.b16 %v260
      %v396 = vunpack.c.l.b16 %v261
      %v397 = vunpack.c.l.b16 %v262
      %v398 = vunpack.c.l.b16 %v263
      %v399 = vunpack.c.l.b16 %v264
      %v400 = vunpack.c.l.b16 %v265
      %v401 = vunpack.c.l.b16 %v266
      %v402 = vunpack.c.l.b16 %v267
      %v403 = vunpack.c.l.b16 %v268
      %v404 = vunpack.c.l.b16 %v269
      %v405 = vunpack.c.l.b16 %v270
      %v406 = vunpack.c.l.b16 %v271
      %v407 = vunpack.c.l.b16 %v272
      %v408 = vunpack.c.l.b16 %v273
      %v409 = vpack.c.b16 %v394, %v393
      %v410 = vpack.c.b16 %v396, %v395
      %v411 = vpack.c.b16 %v398, %v397
      %v412 = vpack.c.b16 %v400, %v399
      %v413 = vpack.c.b16 %v402, %v401
      %v414 = vpack.c.b16 %v404, %v403
      %v415 = vpack.c.b16 %v406, %v405
      %v416 = vpack.c.b16 %v408, %v407
      %425 = vmatprep.subr.bf16.mxu0 0
      %426 = vmatpush1.bf16.msra.mxu0 %v409
      %427 = vmatprep.subr.bf16.mxu0 0
      %428 = vmatpush1.bf16.msra.mxu0 %v410
      %429 = vmatprep.subr.bf16.mxu0 0
      %430 = vmatpush1.bf16.msra.mxu0 %v411
      %431 = vmatprep.subr.bf16.mxu0 0
      %432 = vmatpush1.bf16.msra.mxu0 %v412
      %433 = vmatprep.subr.bf16.mxu0 0
      %434 = vmatpush1.bf16.msra.mxu0 %v413
      %435 = vmatprep.subr.bf16.mxu0 0
      %436 = vmatpush1.bf16.msra.mxu0 %v414
      %437 = vmatprep.subr.bf16.mxu0 0
      %438 = vmatpush1.bf16.msra.mxu0 %v415
      %439 = vmatprep.subr.bf16.mxu0 0
      %440 = vmatpush1.bf16.msra.mxu0 %v416
      %441 = vmatprep.subr.bf16.mxu0 0
      %442 = vmatpush1.bf16.msra.mxu0 0
      %443 = vmatprep.subr.bf16.mxu0 0
      %444 = vmatpush1.bf16.msra.mxu0 0
      %445 = vmatprep.subr.bf16.mxu0 0
      %446 = vmatpush1.bf16.msra.mxu0 0
      %447 = vmatprep.subr.bf16.mxu0 0
      %448 = vmatpush1.bf16.msra.mxu0 0
      %449 = vmatprep.subr.bf16.mxu0 0
      %450 = vmatpush1.bf16.msra.mxu0 0
      %451 = vmatprep.subr.bf16.mxu0 0
      %452 = vmatpush1.bf16.msra.mxu0 0
      %453 = vmatprep.subr.bf16.mxu0 0
      %454 = vmatpush1.bf16.msra.mxu0 0
      %455 = vmatprep.subr.bf16.mxu0 0
      %456 = vmatpush1.bf16.msra.mxu0 0
      %457 = vmatprep.mubr.bf16.mxu0 0
      %458 = vmatmul.mubr.bf16.gmra.mrb[0].mxu0 %v345
      %v459 = vpop.f32.mrb[0].mxu0
      %v460 = vadd.f32 %v279, %v459
      %v461 = vpop.f32.mrb[0].mxu0
      %v462 = vpop.f32.mrb[0].mxu0
      %v463 = vadd.f32 %v279, %v462
      %v464 = vpop.f32.mrb[0].mxu0
      %465 = vmatprep.mubr.bf16.mxu0 0
      %466 = vmatmul.mubr.bf16.gmra.mrb[0].mxu0 %v346
      %v467 = vpop.f32.mrb[0].mxu0
      %v468 = vadd.f32 %v279, %v467
      %v469 = vpop.f32.mrb[0].mxu0
      %v470 = vpop.f32.mrb[0].mxu0
      %v471 = vadd.f32 %v279, %v470
      %v472 = vpop.f32.mrb[0].mxu0
      %473 = vmatprep.mubr.bf16.mxu0 0
      %474 = vmatmul.mubr.bf16.gmra.mrb[0].mxu0 %v347
      %v475 = vpop.f32.mrb[0].mxu0
      %v476 = vadd.f32 %v279, %v475
      %v477 = vpop.f32.mrb[0].mxu0
      %v478 = vpop.f32.mrb[0].mxu0
      %v479 = vadd.f32 %v279, %v478
      %v480 = vpop.f32.mrb[0].mxu0
      %481 = vmatprep.mubr.bf16.mxu0 0
      %482 = vmatmul.mubr.bf16.gmra.mrb[0].mxu0 %v348
      %v483 = vpop.f32.mrb[0].mxu0
      %v484 = vadd.f32 %v279, %v483
      %v485 = vpop.f32.mrb[0].mxu0
      %v486 = vpop.f32.mrb[0].mxu0
      %v487 = vadd.f32 %v279, %v486
      %v488 = vpop.f32.mrb[0].mxu0
      %489 = vmatprep.mubr.bf16.mxu0 0
      %490 = vmatmul.mubr.bf16.gmra.mrb[0].mxu0 %v349
      %v491 = vpop.f32.mrb[0].mxu0
      %v492 = vadd.f32 %v279, %v491
      %v493 = vpop.f32.mrb[0].mxu0
      %v494 = vpop.f32.mrb[0].mxu0
      %v495 = vadd.f32 %v279, %v494
      %v496 = vpop.f32.mrb[0].mxu0
      %497 = vmatprep.mubr.bf16.mxu0 0
      %498 = vmatmul.mubr.bf16.gmra.mrb[0].mxu0 %v350
      %v499 = vpop.f32.mrb[0].mxu0
      %v500 = vadd.f32 %v279, %v499
      %v501 = vpop.f32.mrb[0].mxu0
      %v502 = vpop.f32.mrb[0].mxu0
      %v503 = vadd.f32 %v279, %v502
      %v504 = vpop.f32.mrb[0].mxu0
      %505 = vmatprep.mubr.bf16.mxu0 0
      %506 = vmatmul.mubr.bf16.gmra.mrb[0].mxu0 %v351
      %v507 = vpop.f32.mrb[0].mxu0
      %v508 = vadd.f32 %v279, %v507
      %v509 = vpop.f32.mrb[0].mxu0
      %v510 = vpop.f32.mrb[0].mxu0
      %v511 = vadd.f32 %v279, %v510
      %v512 = vpop.f32.mrb[0].mxu0
      %513 = vmatprep.mubr.bf16.mxu0 0
      %514 = vmatmul.mubr.bf16.gmra.mrb[0].mxu0 %v352
      %v515 = vpop.f32.mrb[0].mxu0
      %v516 = vadd.f32 %v279, %v515
      %v517 = vpop.f32.mrb[0].mxu0
      %v518 = vpop.f32.mrb[0].mxu0
      %v519 = vadd.f32 %v279, %v518
      %v520 = vpop.f32.mrb[0].mxu0
      %521 = vmatprep.mubr.bf16.mxu0 0
      %522 = vmatmul.mubr.bf16.gmra.mrb[0].mxu0 %v353
      %v523 = vpop.f32.mrb[0].mxu0
      %v524 = vadd.f32 %v279, %v523
      %v525 = vpop.f32.mrb[0].mxu0
      %v526 = vpop.f32.mrb[0].mxu0
      %v527 = vadd.f32 %v279, %v526
      %v528 = vpop.f32.mrb[0].mxu0
      %529 = vmatprep.mubr.bf16.mxu0 0
      %530 = vmatmul.mubr.bf16.gmra.mrb[0].mxu0 %v354
      %v531 = vpop.f32.mrb[0].mxu0
      %v532 = vadd.f32 %v279, %v531
      %v533 = vpop.f32.mrb[0].mxu0
      %v534 = vpop.f32.mrb[0].mxu0
      %v535 = vadd.f32 %v279, %v534
      %v536 = vpop.f32.mrb[0].mxu0
      %537 = vmatprep.mubr.bf16.mxu0 0
      %538 = vmatmul.mubr.bf16.gmra.mrb[0].mxu0 %v355
      %v539 = vpop.f32.mrb[0].mxu0
      %v540 = vadd.f32 %v279, %v539
      %v541 = vpop.f32.mrb[0].mxu0
      %v542 = vpop.f32.mrb[0].mxu0
      %v543 = vadd.f32 %v279, %v542
      %v544 = vpop.f32.mrb[0].mxu0
      %545 = vmatprep.mubr.bf16.mxu0 0
      %546 = vmatmul.mubr.bf16.gmra.mrb[0].mxu0 %v356
      %v547 = vpop.f32.mrb[0].mxu0
      %v548 = vadd.f32 %v279, %v547
      %v549 = vpop.f32.mrb[0].mxu0
      %v550 = vpop.f32.mrb[0].mxu0
      %v551 = vadd.f32 %v279, %v550
      %v552 = vpop.f32.mrb[0].mxu0
      %553 = vmatprep.mubr.bf16.mxu0 0
      %554 = vmatmul.mubr.bf16.gmra.mrb[0].mxu0 %v357
      %v555 = vpop.f32.mrb[0].mxu0
      %v556 = vadd.f32 %v279, %v555
      %v557 = vpop.f32.mrb[0].mxu0
      %v558 = vpop.f32.mrb[0].mxu0
      %v559 = vadd.f32 %v279, %v558
      %v560 = vpop.f32.mrb[0].mxu0
      %561 = vmatprep.mubr.bf16.mxu0 0
      %562 = vmatmul.mubr.bf16.gmra.mrb[0].mxu0 %v358
      %v563 = vpop.f32.mrb[0].mxu0
      %v564 = vadd.f32 %v279, %v563
      %v565 = vpop.f32.mrb[0].mxu0
      %v566 = vpop.f32.mrb[0].mxu0
      %v567 = vadd.f32 %v279, %v566
      %v568 = vpop.f32.mrb[0].mxu0
      %569 = vmatprep.mubr.bf16.mxu0 0
      %570 = vmatmul.mubr.bf16.gmra.mrb[0].mxu0 %v359
      %v571 = vpop.f32.mrb[0].mxu0
      %v572 = vadd.f32 %v279, %v571
      %v573 = vpop.f32.mrb[0].mxu0
      %v574 = vpop.f32.mrb[0].mxu0
      %v575 = vadd.f32 %v279, %v574
      %v576 = vpop.f32.mrb[0].mxu0
      %577 = vmatprep.mubr.bf16.mxu0 0
      %578 = vmatmul.mubr.bf16.gmra.mrb[0].mxu0 %v360
      %v579 = vpop.f32.mrb[0].mxu0
      %v580 = vadd.f32 %v279, %v579
      %v581 = vpop.f32.mrb[0].mxu0
      %v582 = vpop.f32.mrb[0].mxu0
      %v583 = vadd.f32 %v279, %v582
      %v584 = vpop.f32.mrb[0].mxu0
      %585 = vdwg.mxu0
      %v586 = vmax.f32 %v460, 0.0
      %v587 = vmax.f32 %v463, 0.0
      %v588 = vmax.f32 %v468, 0.0
      %v589 = vmax.f32 %v471, 0.0
      %v590 = vmax.f32 %v476, 0.0
      %v591 = vmax.f32 %v479, 0.0
      %v592 = vmax.f32 %v484, 0.0
      %v593 = vmax.f32 %v487, 0.0
      %v594 = vmax.f32 %v492, 0.0
      %v595 = vmax.f32 %v495, 0.0
      %v596 = vmax.f32 %v500, 0.0
      %v597 = vmax.f32 %v503, 0.0
      %v598 = vmax.f32 %v508, 0.0
      %v599 = vmax.f32 %v511, 0.0
      %v600 = vmax.f32 %v516, 0.0
      %v601 = vmax.f32 %v519, 0.0
      %v602 = vmax.f32 %v524, 0.0
      %v603 = vmax.f32 %v527, 0.0
      %v604 = vmax.f32 %v532, 0.0
      %v605 = vmax.f32 %v535, 0.0
      %v606 = vmax.f32 %v540, 0.0
      %v607 = vmax.f32 %v543, 0.0
      %v608 = vmax.f32 %v548, 0.0
      %v609 = vmax.f32 %v551, 0.0
      %v610 = vmax.f32 %v556, 0.0
      %v611 = vmax.f32 %v559, 0.0
      %v612 = vmax.f32 %v564, 0.0
      %v613 = vmax.f32 %v567, 0.0
      %v614 = vmax.f32 %v572, 0.0
      %v615 = vmax.f32 %v575, 0.0
      %v616 = vmax.f32 %v580, 0.0
      %v617 = vmax.f32 %v583, 0.0
      %v618 = vpack.c.bf16 %v587, %v586
      %v619 = vpack.c.bf16 %v589, %v588
      %v620 = vpack.c.bf16 %v591, %v590
      %v621 = vpack.c.bf16 %v593, %v592
      %v622 = vpack.c.bf16 %v595, %v594
      %v623 = vpack.c.bf16 %v597, %v596
      %v624 = vpack.c.bf16 %v599, %v598
      %v625 = vpack.c.bf16 %v601, %v600
      %v626 = vpack.c.bf16 %v603, %v602
      %v627 = vpack.c.bf16 %v605, %v604
      %v628 = vpack.c.bf16 %v607, %v606
      %v629 = vpack.c.bf16 %v609, %v608
      %v630 = vpack.c.bf16 %v611, %v610
      %v631 = vpack.c.bf16 %v613, %v612
      %v632 = vpack.c.bf16 %v615, %v614
      %v633 = vpack.c.bf16 %v617, %v616
      %v650 = vunpack.c.l.b16 %v618
      %v651 = vunpack.c.h.b16 %v618
      %v652 = vunpack.c.l.b16 %v619
      %v653 = vunpack.c.h.b16 %v619
      %v654 = vunpack.c.l.b16 %v620
      %v655 = vunpack.c.h.b16 %v620
      %v656 = vunpack.c.l.b16 %v621
      %v657 = vunpack.c.h.b16 %v621
      %v658 = vunpack.c.l.b16 %v622
      %v659 = vunpack.c.h.b16 %v622
      %v660 = vunpack.c.l.b16 %v623
      %v661 = vunpack.c.h.b16 %v623
      %v662 = vunpack.c.l.b16 %v624
      %v663 = vunpack.c.h.b16 %v624
      %v664 = vunpack.c.l.b16 %v625
      %v665 = vunpack.c.h.b16 %v625
      %v666 = vunpack.c.l.b16 %v626
      %v667 = vunpack.c.h.b16 %v626
      %v668 = vunpack.c.l.b16 %v627
      %v669 = vunpack.c.h.b16 %v627
      %v670 = vunpack.c.l.b16 %v628
      %v671 = vunpack.c.h.b16 %v628
      %v672 = vunpack.c.l.b16 %v629
      %v673 = vunpack.c.h.b16 %v629
      %v674 = vunpack.c.l.b16 %v630
      %v675 = vunpack.c.h.b16 %v630
      %v676 = vunpack.c.l.b16 %v631
      %v677 = vunpack.c.h.b16 %v631
      %v678 = vunpack.c.l.b16 %v632
      %v679 = vunpack.c.h.b16 %v632
      %v680 = vunpack.c.l.b16 %v633
      %v681 = vunpack.c.h.b16 %v633
      %v682 = vpack.c.b16 %v650, %v650
      %v683 = vpack.c.b16 %v651, %v651
      %v684 = vpack.c.b16 %v652, %v652
      %v685 = vpack.c.b16 %v653, %v653
      %v686 = vpack.c.b16 %v654, %v654
      %v687 = vpack.c.b16 %v655, %v655
      %v688 = vpack.c.b16 %v656, %v656
      %v689 = vpack.c.b16 %v657, %v657
      %v690 = vpack.c.b16 %v658, %v658
      %v691 = vpack.c.b16 %v659, %v659
      %v692 = vpack.c.b16 %v660, %v660
      %v693 = vpack.c.b16 %v661, %v661
      %v694 = vpack.c.b16 %v662, %v662
      %v695 = vpack.c.b16 %v663, %v663
      %v696 = vpack.c.b16 %v664, %v664
      %v697 = vpack.c.b16 %v665, %v665
      %v698 = vpack.c.b16 %v666, %v666
      %v699 = vpack.c.b16 %v667, %v667
      %v700 = vpack.c.b16 %v668, %v668
      %v701 = vpack.c.b16 %v669, %v669
      %v702 = vpack.c.b16 %v670, %v670
      %v703 = vpack.c.b16 %v671, %v671
      %v704 = vpack.c.b16 %v672, %v672
      %v705 = vpack.c.b16 %v673, %v673
      %v706 = vpack.c.b16 %v674, %v674
      %v707 = vpack.c.b16 %v675, %v675
      %v708 = vpack.c.b16 %v676, %v676
      %v709 = vpack.c.b16 %v677, %v677
      %v710 = vpack.c.b16 %v678, %v678
      %v711 = vpack.c.b16 %v679, %v679
      %v712 = vpack.c.b16 %v680, %v680
      %v713 = vpack.c.b16 %v681, %v681
      %746 = vst [vmem:[%s223] sm:$0xf] %v682
      %747 = vst [vmem:[%s223 + $0x4] sm:$0xf] %v683
      %748 = vst [vmem:[%s223 + $0x8] sm:$0xf] %v684
      %749 = vst [vmem:[%s223 + $0xc] sm:$0xf] %v685
      %750 = vst [vmem:[%s223 + $0x10] sm:$0xf] %v686
      %751 = vst [vmem:[%s223 + $0x14] sm:$0xf] %v687
      %752 = vst [vmem:[%s223 + $0x18] sm:$0xf] %v688
      %753 = vst [vmem:[%s223 + $0x1c] sm:$0xf] %v689
      %754 = vst [vmem:[%s223 + $0x20] sm:$0xf] %v690
      %755 = vst [vmem:[%s223 + $0x24] sm:$0xf] %v691
      %756 = vst [vmem:[%s223 + $0x28] sm:$0xf] %v692
      %757 = vst [vmem:[%s223 + $0x2c] sm:$0xf] %v693
      %758 = vst [vmem:[%s223 + $0x30] sm:$0xf] %v694
      %759 = vst [vmem:[%s223 + $0x34] sm:$0xf] %v695
      %760 = vst [vmem:[%s223 + $0x38] sm:$0xf] %v696
      %761 = vst [vmem:[%s223 + $0x3c] sm:$0xf] %v697
      %762 = vst [vmem:[%s223 + $0x40] sm:$0xf] %v698
      %763 = vst [vmem:[%s223 + $0x44] sm:$0xf] %v699
      %764 = vst [vmem:[%s223 + $0x48] sm:$0xf] %v700
      %765 = vst [vmem:[%s223 + $0x4c] sm:$0xf] %v701
      %766 = vst [vmem:[%s223 + $0x50] sm:$0xf] %v702
      %767 = vst [vmem:[%s223 + $0x54] sm:$0xf] %v703
      %768 = vst [vmem:[%s223 + $0x58] sm:$0xf] %v704
      %769 = vst [vmem:[%s223 + $0x5c] sm:$0xf] %v705
      %770 = vst [vmem:[%s223 + $0x60] sm:$0xf] %v706
      %771 = vst [vmem:[%s223 + $0x64] sm:$0xf] %v707
      %772 = vst [vmem:[%s223 + $0x68] sm:$0xf] %v708
      %773 = vst [vmem:[%s223 + $0x6c] sm:$0xf] %v709
      %774 = vst [vmem:[%s223 + $0x70] sm:$0xf] %v710
      %775 = vst [vmem:[%s223 + $0x74] sm:$0xf] %v711
      %776 = vst [vmem:[%s223 + $0x78] sm:$0xf] %v712
      %777 = vst [vmem:[%s223 + $0x7c] sm:$0xf] %v713
      %s778 = smul.u32 32, %s18
      %p779 = scmp.lt.s32.totalorder %s778, 63
      %s780 = scalar_select %p779, %s778, 63
      %p781 = scmp.lt.s32.totalorder %s19, 0
      %s782 = scalar_select %p781, %s19, 0
      %s783 = sadd.s32 %s782, %s780
      %s784 = smul.addr %s783, 4
      %s785 = scalar_lea.vmem %s3, %s784
      // Predicated region
      $region33: #{_lambda_.16} parent=31 // pred_check
        %p786 = pneg %p124
      $region34: #{_lambda_.16} parent=31 // pred_check_branch
        %788 = sbr.rel (%p786) target = $region36
      $region35: #{_lambda_.16} parent=31 // pred_region
        %s789 = smul.u32 32, %s18
      $region36: #{_lambda_.16} parent=31 // pred_fallthru
        _
    $region32: #{_lambda_.16} parent=5 // pred_fallthru
      _
    %p790 = scmp.le.s32.totalorder 2, %s9
    // Predicated region
    $region37: #{_lambda_.16} parent=5 // pred_check
      %p791 = pneg %p790
    $region38: #{_lambda_.16} parent=5 // pred_check_branch
      %793 = sbr.rel (%p791) target = $region40
    $region39: #{_lambda_.16} parent=5 // pred_region
      %s794 = ssub.s32 %s9, 2
      // Predicated region
      $region41: #{_lambda_.16} parent=39 // pred_check
        %p795 = pneg %p130
      $region42: #{_lambda_.16} parent=39 // pred_check_branch
        %797 = sbr.rel (%p795) target = $region44
      $region43: #{_lambda_.16} parent=39 // pred_region
        %s798 = smul.u32 32, %s20
        %p799 = scmp.lt.s32.totalorder %s798, 63
        %s800 = scalar_select %p799, %s798, 63
        %p801 = scmp.lt.s32.totalorder %s21, 0
        %s802 = scalar_select %p801, %s21, 0
        %s803 = sadd.s32 %s802, %s800
        %s804 = smul.addr %s803, 4
        %s805 = scalar_lea.vmem %s3, %s804
      $region44: #{_lambda_.16} parent=39 // pred_fallthru
        _
    $region40: #{_lambda_.16} parent=5 // pred_fallthru
      _
  $region6: #{_lambda_.16} parent=0 // loop_footer
    %s13 = sadd.s32 1, %s9
  $region7: #{_lambda_.16} parent=0 // loop_footer_branch
    %8 = sbr.rel target = $region3
  $region8: #{_lambda_.16} parent=0 // loop_exit
    _

// kernel: _lambda_.17
$region0: #{_lambda_.17}
  #allocation0 [shape = 'u32[]', space=smem, size = 0x4, offset = 0x4, fixed_abs, tag = 'smem constant byte address 0x4 - core index']
  #allocation1 [shape = 'u32[144,128]{1,0:T(1,128)}', space=vmem, size = 0x12000, scoped, tag = 'internal scratch']
  %s0 = inlined_call_operand.vmem [shape: bf16[512,128], index: 0, kind: input, shape index: {}]
  %s1 = inlined_call_operand.vmem [shape: bf16[128,128], index: 1, kind: input, shape index: {}]
  %s2 = inlined_call_operand.vmem [shape: f32[1,128], index: 2, kind: input, shape index: {}]
  %s3 = inlined_call_operand.vmem [shape: bf16[512,128], index: 3, kind: input, shape index: {}]
  %s4 = inlined_call_operand.vmem [shape: bf16[512,128], index: 4, kind: output, shape index: {}]
  %s5 = sld [smem:[#allocation0]]
  $region49: #{_lambda_.17} parent=0
    _
  %s7 = ssub.s32 1, %s5
  %s8 = scalar_select 0, %s7, %s5
  loop: start=0, step=1, limit=4
  $region2: #{_lambda_.17} parent=0 // loop_pre_header
    _
  $region3: #{_lambda_.17} parent=0 // loop_header
    %s10 = sphi 0, %s14
    %p11 = scmp.ge.s32.totalorder %s10, 4
    %s17 = sphi 0, %s29
    %s18 = sphi 0, %s25
    %s19 = sphi 0, %s17
    %s20 = sphi 0, %s18
    %s21 = sphi 0, %s19
    %s22 = sphi 0, %s20
    %s32 = sphi 0, %s34
    %s35 = sphi 0, %s32
    %s36 = sphi 0, %s35
    %s52 = sphi 0, %s36
    %s58 = sphi 0, %s60
    %s61 = sphi 0, %s58
    %s62 = sphi 0, %s61
    %s78 = sphi 0, %s62
    %s84 = sphi 0, %s86
    %s87 = sphi 0, %s84
    %s88 = sphi 0, %s87
    %s104 = sphi 0, %s88
    %s112 = sphi 0, %s114
    %s115 = sphi 0, %s112
    %s116 = sphi 0, %s115
    %s132 = sphi 0, %s116
    %s140 = sphi 0, %s142
    %s143 = sphi 0, %s140
    %s144 = sphi 0, %s143
    %s160 = sphi 0, %s144
  $region4: #{_lambda_.17} parent=0 // loop_header_branch
    %13 = sbr.rel (%p11) target = $region8
  $region5: #{_lambda_.17} parent=0 // loop_body
    %s15 = ssub.s32 %s10, 1
    %s16 = ssub.s32 %s10, 2
    %s23 = sadd.s32 1, %s18
    %p24 = scmp.ge.s32.totalorder %s23, 1
    %s25 = scalar_select %p24, 0, %s23
    %s26 = sadd.s32 1, %s17
    %s27 = scalar_select %p24, %s26, %s17
    %p28 = scmp.ge.s32.totalorder %s27, 2
    %s29 = scalar_select %p28, 0, %s27
    %s30 = ssub.s32 %s17, %s29
    %p31 = scmp.eq.s32.totalorder %s30, 0
    %s33 = sadd.s32 %s32, 1
    %s34 = scalar_select %p31, %s32, %s33
    %p37 = pneg %p31
    %p38 = scmp.eq.s32.totalorder %s10, 1
    %p39 = por %p37, %p38
    %p40 = scmp.ne.s32.totalorder %s32, %s35
    %p41 = scmp.eq.s32.totalorder %s10, 0
    %p42 = por %p40, %p41
    %p43 = scmp.ne.s32.totalorder %s32, %s35
    %p44 = scmp.eq.s32.totalorder %s15, 1
    %p45 = por %p43, %p44
    %p46 = scmp.ne.s32.totalorder %s35, %s36
    %p47 = scmp.eq.s32.totalorder %s15, 0
    %p48 = por %p46, %p47
    %p49 = scmp.ne.s32.totalorder %s35, %s36
    %p50 = scmp.eq.s32.totalorder %s16, 1
    %p51 = por %p49, %p50
    %p53 = scmp.ne.s32.totalorder %s36, %s52
    %p54 = scmp.eq.s32.totalorder %s16, 0
    %p55 = por %p53, %p54
    %s56 = ssub.s32 %s18, %s25
    %p57 = scmp.eq.s32.totalorder %s56, 0
    %s59 = sadd.s32 %s58, 1
    %s60 = scalar_select %p57, %s58, %s59
    %p63 = pneg %p57
    %p64 = scmp.eq.s32.totalorder %s10, 1
    %p65 = por %p63, %p64
    %p66 = scmp.ne.s32.totalorder %s58, %s61
    %p67 = scmp.eq.s32.totalorder %s10, 0
    %p68 = por %p66, %p67
    %p69 = scmp.ne.s32.totalorder %s58, %s61
    %p70 = scmp.eq.s32.totalorder %s15, 1
    %p71 = por %p69, %p70
    %p72 = scmp.ne.s32.totalorder %s61, %s62
    %p73 = scmp.eq.s32.totalorder %s15, 0
    %p74 = por %p72, %p73
    %p75 = scmp.ne.s32.totalorder %s61, %s62
    %p76 = scmp.eq.s32.totalorder %s16, 1
    %p77 = por %p75, %p76
    %p79 = scmp.ne.s32.totalorder %s62, %s78
    %p80 = scmp.eq.s32.totalorder %s16, 0
    %p81 = por %p79, %p80
    %s82 = ssub.s32 %s18, %s25
    %p83 = scmp.eq.s32.totalorder %s82, 0
    %s85 = sadd.s32 %s84, 1
    %s86 = scalar_select %p83, %s84, %s85
    %p89 = pneg %p83
    %p90 = scmp.eq.s32.totalorder %s10, 1
    %p91 = por %p89, %p90
    %p92 = scmp.ne.s32.totalorder %s84, %s87
    %p93 = scmp.eq.s32.totalorder %s10, 0
    %p94 = por %p92, %p93
    %p95 = scmp.ne.s32.totalorder %s84, %s87
    %p96 = scmp.eq.s32.totalorder %s15, 1
    %p97 = por %p95, %p96
    %p98 = scmp.ne.s32.totalorder %s87, %s88
    %p99 = scmp.eq.s32.totalorder %s15, 0
    %p100 = por %p98, %p99
    %p101 = scmp.ne.s32.totalorder %s87, %s88
    %p102 = scmp.eq.s32.totalorder %s16, 1
    %p103 = por %p101, %p102
    %p105 = scmp.ne.s32.totalorder %s88, %s104
    %p106 = scmp.eq.s32.totalorder %s16, 0
    %p107 = por %p105, %p106
    %s108 = ssub.s32 %s17, %s29
    %s109 = ssub.s32 %s18, %s25
    %s110 = sor.u32 %s108, %s109
    %p111 = scmp.eq.s32.totalorder %s110, 0
    %s113 = sadd.s32 %s112, 1
    %s114 = scalar_select %p111, %s112, %s113
    %p117 = pneg %p111
    %p118 = scmp.eq.s32.totalorder %s10, 1
    %p119 = por %p117, %p118
    %p120 = scmp.ne.s32.totalorder %s112, %s115
    %p121 = scmp.eq.s32.totalorder %s10, 0
    %p122 = por %p120, %p121
    %p123 = scmp.ne.s32.totalorder %s112, %s115
    %p124 = scmp.eq.s32.totalorder %s15, 1
    %p125 = por %p123, %p124
    %p126 = scmp.ne.s32.totalorder %s115, %s116
    %p127 = scmp.eq.s32.totalorder %s15, 0
    %p128 = por %p126, %p127
    %p129 = scmp.ne.s32.totalorder %s115, %s116
    %p130 = scmp.eq.s32.totalorder %s16, 1
    %p131 = por %p129, %p130
    %p133 = scmp.ne.s32.totalorder %s116, %s132
    %p134 = scmp.eq.s32.totalorder %s16, 0
    %p135 = por %p133, %p134
    %s136 = ssub.s32 %s17, %s29
    %s137 = ssub.s32 %s18, %s25
    %s138 = sor.u32 %s136, %s137
    %p139 = scmp.eq.s32.totalorder %s138, 0
    %s141 = sadd.s32 %s140, 1
    %s142 = scalar_select %p139, %s140, %s141
    %p145 = pneg %p139
    %p146 = scmp.eq.s32.totalorder %s10, 1
    %p147 = por %p145, %p146
    %p148 = scmp.ne.s32.totalorder %s140, %s143
    %p149 = scmp.eq.s32.totalorder %s10, 0
    %p150 = por %p148, %p149
    %p151 = scmp.ne.s32.totalorder %s140, %s143
    %p152 = scmp.eq.s32.totalorder %s15, 1
    %p153 = por %p151, %p152
    %p154 = scmp.ne.s32.totalorder %s143, %s144
    %p155 = scmp.eq.s32.totalorder %s15, 0
    %p156 = por %p154, %p155
    %p157 = scmp.ne.s32.totalorder %s143, %s144
    %p158 = scmp.eq.s32.totalorder %s16, 1
    %p159 = por %p157, %p158
    %p161 = scmp.ne.s32.totalorder %s144, %s160
    %p162 = scmp.eq.s32.totalorder %s16, 0
    %p163 = por %p161, %p162
    %p164 = scmp.le.s32.totalorder 1, %s10
    %p165 = scmp.lt.s32.totalorder %s10, 3
    %p166 = pnand %p164, %p165
    %p167 = pneg %p166
    // Predicated region
    $region9: #{_lambda_.17} parent=5 // pred_check
      _
    $region10: #{_lambda_.17} parent=5 // pred_check_branch
      %169 = sbr.rel (%p166) target = $region12
    $region11: #{_lambda_.17} parent=5 // pred_region
      %s170 = ssub.s32 %s10, 1
      // Predicated region
      $region13: #{_lambda_.17} parent=11 // pred_check
        %p171 = pneg %p74
      $region14: #{_lambda_.17} parent=11 // pred_check_branch
        %173 = sbr.rel (%p171) target = $region16
      $region15: #{_lambda_.17} parent=11 // pred_region
        %p174 = scmp.lt.s32.totalorder %s20, 0
        %s175 = scalar_select %p174, %s20, 0
        %s176 = smul.addr %s175, 4
        %s177 = scalar_lea.vmem %s1, %s176
      $region16: #{_lambda_.17} parent=11 // pred_fallthru
        _
      // Predicated region
      $region17: #{_lambda_.17} parent=11 // pred_check
        %p178 = pneg %p100
      $region18: #{_lambda_.17} parent=11 // pred_check_branch
        %180 = sbr.rel (%p178) target = $region20
      $region19: #{_lambda_.17} parent=11 // pred_region
        %p181 = scmp.lt.s32.totalorder %s20, 0
        %s182 = scalar_select %p181, %s20, 0
        %s183 = scalar_lea.vmem %s2, %s182
      $region20: #{_lambda_.17} parent=11 // pred_fallthru
        _
    $region12: #{_lambda_.17} parent=5 // pred_fallthru
      _
    %p184 = scmp.lt.s32.totalorder %s10, 2
    // Predicated region
    $region21: #{_lambda_.17} parent=5 // pred_check
      %p185 = pneg %p184
    $region22: #{_lambda_.17} parent=5 // pred_check_branch
      %187 = sbr.rel (%p185) target = $region24
    $region23: #{_lambda_.17} parent=5 // pred_region
      // Predicated region
      $region25: #{_lambda_.17} parent=23 // pred_check
        %p188 = pneg %p42
      $region26: #{_lambda_.17} parent=23 // pred_check_branch
        %190 = sbr.rel (%p188) target = $region28
      $region27: #{_lambda_.17} parent=23 // pred_region
        %s191 = smul.u32 32, %s17
        %p192 = scmp.lt.s32.totalorder %s191, 63
        %s193 = scalar_select %p192, %s191, 63
        %s194 = smul.addr %s193, 4
        %s195 = scalar_lea.vmem %s0, %s194
        %s196 = smul.u32 32, %s17
      $region28: #{_lambda_.17} parent=23 // pred_fallthru
        _
      // Predicated region
      $region29: #{_lambda_.17} parent=23 // pred_check
        %p197 = pneg %p122
      $region30: #{_lambda_.17} parent=23 // pred_check_branch
        %199 = sbr.rel (%p197) target = $region32
      $region31: #{_lambda_.17} parent=23 // pred_region
        %s200 = smul.u32 32, %s17
        %p201 = scmp.lt.s32.totalorder %s200, 63
        %s202 = scalar_select %p201, %s200, 63
        %p203 = scmp.lt.s32.totalorder %s18, 0
        %s204 = scalar_select %p203, %s18, 0
        %s205 = sadd.s32 %s204, %s202
        %s206 = smul.addr %s205, 4
        %s207 = scalar_lea.vmem %s3, %s206
        %s208 = smul.u32 32, %s17
      $region32: #{_lambda_.17} parent=23 // pred_fallthru
        _
    $region24: #{_lambda_.17} parent=5 // pred_fallthru
      _
    %p209 = scmp.le.s32.totalorder 1, %s10
    %p210 = scmp.lt.s32.totalorder %s10, 3
    %p211 = pnand %p209, %p210
    %p212 = pneg %p211
    // Predicated region
    $region33: #{_lambda_.17} parent=5 // pred_check
      _
    $region34: #{_lambda_.17} parent=5 // pred_check_branch
      %214 = sbr.rel (%p211) target = $region36
    $region35: #{_lambda_.17} parent=5 // pred_region
      %s215 = ssub.s32 %s10, 1
      %s216 = smul.u32 32, %s19
      %p217 = scmp.lt.s32.totalorder %s216, 63
      %s218 = scalar_select %p217, %s216, 63
      %s219 = smul.addr %s218, 4
      %s220 = scalar_lea.vmem %s0, %s219
      %p221 = pneg %p48
      %p222 = pneg %p45
      %p223 = scmp.lt.s32.totalorder %s20, 0
      %s224 = scalar_select %p223, %s20, 0
      %s225 = smul.addr %s224, 4
      %s226 = scalar_lea.vmem %s1, %s225
      %p227 = pneg %p74
      %p228 = pneg %p71
      %p229 = scmp.lt.s32.totalorder %s20, 0
      %s230 = scalar_select %p229, %s20, 0
      %s231 = scalar_lea.vmem %s2, %s230
      %p232 = pneg %p100
      %p233 = pneg %p97
      %s234 = smul.u32 32, %s19
      %p235 = scmp.lt.s32.totalorder %s234, 63
      %s236 = scalar_select %p235, %s234, 63
      %p237 = scmp.lt.s32.totalorder %s20, 0
      %s238 = scalar_select %p237, %s20, 0
      %s239 = sadd.s32 %s238, %s236
      %s240 = smul.addr %s239, 4
      %s241 = scalar_lea.vmem %s3, %s240
      %p242 = pneg %p128
      %p243 = pneg %p125
      %p244 = pneg %p156
      %p245 = pneg %p153
      %s246 = smul.u32 32, %s19
      %p247 = scmp.lt.s32.totalorder %s246, 63
      %s248 = scalar_select %p247, %s246, 63
      %p249 = scmp.lt.s32.totalorder %s20, 0
      %s250 = scalar_select %p249, %s20, 0
      %s251 = sadd.s32 %s250, %s248
      %s252 = smul.addr %s251, 4
      %s253 = scalar_lea.vmem %s4, %s252
      %s254 = smul.u32 32, %s19
      %p255 = scmp.lt.s32.totalorder %s254, 63
      %s256 = scalar_select %p255, %s254, 63
      %s257 = smul.addr %s256, 4
      %s258 = scalar_lea.vmem %s0, %s257
      %s259 = smul.u32 32, %s19
      %p260 = scmp.lt.s32.totalorder %s20, 0
      %s261 = scalar_select %p260, %s20, 0
      %s262 = smul.addr %s261, 4
      %s263 = scalar_lea.vmem %s1, %s262
      %p264 = scmp.lt.s32.totalorder %s20, 0
      %s265 = scalar_select %p264, %s20, 0
      %s266 = scalar_lea.vmem %s2, %s265
      %s267 = smul.u32 32, %s19
      %p268 = scmp.lt.s32.totalorder %s267, 63
      %s269 = scalar_select %p268, %s267, 63
      %p270 = scmp.lt.s32.totalorder %s20, 0
      %s271 = scalar_select %p270, %s20, 0
      %s272 = sadd.s32 %s271, %s269
      %s273 = smul.addr %s272, 4
      %s274 = scalar_lea.vmem %s3, %s273
      %s275 = smul.u32 32, %s19
      %s276 = smul.u32 32, %s19
      %p277 = scmp.lt.s32.totalorder %s276, 63
      %s278 = scalar_select %p277, %s276, 63
      %p279 = scmp.lt.s32.totalorder %s20, 0
      %s280 = scalar_select %p279, %s20, 0
      %s281 = sadd.s32 %s280, %s278
      %s282 = smul.addr %s281, 4
      %s283 = scalar_lea.vmem %s4, %s282
      %s284 = smul.u32 32, %s19
      %v286 = vld [vmem:[%s258] sm:$0xf]
      %v287 = vld [vmem:[%s258 + $0x4] sm:$0xf]
      %v288 = vld [vmem:[%s258 + $0x8] sm:$0xf]
      %v289 = vld [vmem:[%s258 + $0xc] sm:$0xf]
      %v290 = vld [vmem:[%s258 + $0x10] sm:$0xf]
      %v291 = vld [vmem:[%s258 + $0x14] sm:$0xf]
      %v292 = vld [vmem:[%s258 + $0x18] sm:$0xf]
      %v293 = vld [vmem:[%s258 + $0x1c] sm:$0xf]
      %v294 = vld [vmem:[%s258 + $0x20] sm:$0xf]
      %v295 = vld [vmem:[%s258 + $0x24] sm:$0xf]
      %v296 = vld [vmem:[%s258 + $0x28] sm:$0xf]
      %v297 = vld [vmem:[%s258 + $0x2c] sm:$0xf]
      %v298 = vld [vmem:[%s258 + $0x30] sm:$0xf]
      %v299 = vld [vmem:[%s258 + $0x34] sm:$0xf]
      %v300 = vld [vmem:[%s258 + $0x38] sm:$0xf]
      %v301 = vld [vmem:[%s258 + $0x3c] sm:$0xf]
      %v302 = vld [vmem:[%s258 + $0x40] sm:$0xf]
      %v303 = vld [vmem:[%s258 + $0x44] sm:$0xf]
      %v304 = vld [vmem:[%s258 + $0x48] sm:$0xf]
      %v305 = vld [vmem:[%s258 + $0x4c] sm:$0xf]
      %v306 = vld [vmem:[%s258 + $0x50] sm:$0xf]
      %v307 = vld [vmem:[%s258 + $0x54] sm:$0xf]
      %v308 = vld [vmem:[%s258 + $0x58] sm:$0xf]
      %v309 = vld [vmem:[%s258 + $0x5c] sm:$0xf]
      %v310 = vld [vmem:[%s258 + $0x60] sm:$0xf]
      %v311 = vld [vmem:[%s258 + $0x64] sm:$0xf]
      %v312 = vld [vmem:[%s258 + $0x68] sm:$0xf]
      %v313 = vld [vmem:[%s258 + $0x6c] sm:$0xf]
      %v314 = vld [vmem:[%s258 + $0x70] sm:$0xf]
      %v315 = vld [vmem:[%s258 + $0x74] sm:$0xf]
      %v316 = vld [vmem:[%s258 + $0x78] sm:$0xf]
      %v317 = vld [vmem:[%s258 + $0x7c] sm:$0xf]
      %v318 = vld [vmem:[%s263] sm:$0xf]
      %v319 = vld [vmem:[%s263 + $0x4] sm:$0xf]
      %v320 = vld [vmem:[%s263 + $0x8] sm:$0xf]
      %v321 = vld [vmem:[%s263 + $0xc] sm:$0xf]
      %v322 = vld [vmem:[%s263 + $0x10] sm:$0xf]
      %v323 = vld [vmem:[%s263 + $0x14] sm:$0xf]
      %v324 = vld [vmem:[%s263 + $0x18] sm:$0xf]
      %v325 = vld [vmem:[%s263 + $0x1c] sm:$0xf]
      %v326 = vld [vmem:[%s263 + $0x20] sm:$0xf]
      %v327 = vld [vmem:[%s263 + $0x24] sm:$0xf]
      %v328 = vld [vmem:[%s263 + $0x28] sm:$0xf]
      %v329 = vld [vmem:[%s263 + $0x2c] sm:$0xf]
      %v330 = vld [vmem:[%s263 + $0x30] sm:$0xf]
      %v331 = vld [vmem:[%s263 + $0x34] sm:$0xf]
      %v332 = vld [vmem:[%s263 + $0x38] sm:$0xf]
      %v333 = vld [vmem:[%s263 + $0x3c] sm:$0xf]
      %v334 = vld [vmem:[%s266] sm:$0x1]
      %v336 = vlaneseq
      %v337 = vshrl.u32 %v336, 7
      %v338 = vsub.s32 0, %v337
      %v339 = vrot.slane %v334, %v338
      %v373 = vunpack.c.l.b16 %v286
      %v374 = vunpack.c.l.b16 %v287
      %v375 = vunpack.c.l.b16 %v288
      %v376 = vunpack.c.l.b16 %v289
      %v377 = vunpack.c.l.b16 %v290
      %v378 = vunpack.c.l.b16 %v291
      %v379 = vunpack.c.l.b16 %v292
      %v380 = vunpack.c.l.b16 %v293
      %v381 = vunpack.c.l.b16 %v294
      %v382 = vunpack.c.l.b16 %v295
      %v383 = vunpack.c.l.b16 %v296
      %v384 = vunpack.c.l.b16 %v297
      %v385 = vunpack.c.l.b16 %v298
      %v386 = vunpack.c.l.b16 %v299
      %v387 = vunpack.c.l.b16 %v300
      %v388 = vunpack.c.l.b16 %v301
      %v389 = vunpack.c.l.b16 %v302
      %v390 = vunpack.c.l.b16 %v303
      %v391 = vunpack.c.l.b16 %v304
      %v392 = vunpack.c.l.b16 %v305
      %v393 = vunpack.c.l.b16 %v306
      %v394 = vunpack.c.l.b16 %v307
      %v395 = vunpack.c.l.b16 %v308
      %v396 = vunpack.c.l.b16 %v309
      %v397 = vunpack.c.l.b16 %v310
      %v398 = vunpack.c.l.b16 %v311
      %v399 = vunpack.c.l.b16 %v312
      %v400 = vunpack.c.l.b16 %v313
      %v401 = vunpack.c.l.b16 %v314
      %v402 = vunpack.c.l.b16 %v315
      %v403 = vunpack.c.l.b16 %v316
      %v404 = vunpack.c.l.b16 %v317
      %v405 = vpack.c.b16 %v374, %v373
      %v406 = vpack.c.b16 %v376, %v375
      %v407 = vpack.c.b16 %v378, %v377
      %v408 = vpack.c.b16 %v380, %v379
      %v409 = vpack.c.b16 %v382, %v381
      %v410 = vpack.c.b16 %v384, %v383
      %v411 = vpack.c.b16 %v386, %v385
      %v412 = vpack.c.b16 %v388, %v387
      %v413 = vpack.c.b16 %v390, %v389
      %v414 = vpack.c.b16 %v392, %v391
      %v415 = vpack.c.b16 %v394, %v393
      %v416 = vpack.c.b16 %v396, %v395
      %v417 = vpack.c.b16 %v398, %v397
      %v418 = vpack.c.b16 %v400, %v399
      %v419 = vpack.c.b16 %v402, %v401
      %v420 = vpack.c.b16 %v404, %v403
      %v453 = vunpack.c.l.b16 %v318
      %v454 = vunpack.c.l.b16 %v319
      %v455 = vunpack.c.l.b16 %v320
      %v456 = vunpack.c.l.b16 %v321
      %v457 = vunpack.c.l.b16 %v322
      %v458 = vunpack.c.l.b16 %v323
      %v459 = vunpack.c.l.b16 %v324
      %v460 = vunpack.c.l.b16 %v325
      %v461 = vunpack.c.l.b16 %v326
      %v462 = vunpack.c.l.b16 %v327
      %v463 = vunpack.c.l.b16 %v328
      %v464 = vunpack.c.l.b16 %v329
      %v465 = vunpack.c.l.b16 %v330
      %v466 = vunpack.c.l.b16 %v331
      %v467 = vunpack.c.l.b16 %v332
      %v468 = vunpack.c.l.b16 %v333
      %v469 = vpack.c.b16 %v454, %v453
      %v470 = vpack.c.b16 %v456, %v455
      %v471 = vpack.c.b16 %v458, %v457
      %v472 = vpack.c.b16 %v460, %v459
      %v473 = vpack.c.b16 %v462, %v461
      %v474 = vpack.c.b16 %v464, %v463
      %v475 = vpack.c.b16 %v466, %v465
      %v476 = vpack.c.b16 %v468, %v467
      %485 = vmatprep.subr.bf16.mxu0 0
      %486 = vmatpush1.bf16.msra.mxu0 %v469
      %487 = vmatprep.subr.bf16.mxu0 0
      %488 = vmatpush1.bf16.msra.mxu0 %v470
      %489 = vmatprep.subr.bf16.mxu0 0
      %490 = vmatpush1.bf16.msra.mxu0 %v471
      %491 = vmatprep.subr.bf16.mxu0 0
      %492 = vmatpush1.bf16.msra.mxu0 %v472
      %493 = vmatprep.subr.bf16.mxu0 0
      %494 = vmatpush1.bf16.msra.mxu0 %v473
      %495 = vmatprep.subr.bf16.mxu0 0
      %496 = vmatpush1.bf16.msra.mxu0 %v474
      %497 = vmatprep.subr.bf16.mxu0 0
      %498 = vmatpush1.bf16.msra.mxu0 %v475
      %499 = vmatprep.subr.bf16.mxu0 0
      %500 = vmatpush1.bf16.msra.mxu0 %v476
      %501 = vmatprep.subr.bf16.mxu0 0
      %502 = vmatpush1.bf16.msra.mxu0 0
      %503 = vmatprep.subr.bf16.mxu0 0
      %504 = vmatpush1.bf16.msra.mxu0 0
      %505 = vmatprep.subr.bf16.mxu0 0
      %506 = vmatpush1.bf16.msra.mxu0 0
      %507 = vmatprep.subr.bf16.mxu0 0
      %508 = vmatpush1.bf16.msra.mxu0 0
      %509 = vmatprep.subr.bf16.mxu0 0
      %510 = vmatpush1.bf16.msra.mxu0 0
      %511 = vmatprep.subr.bf16.mxu0 0
      %512 = vmatpush1.bf16.msra.mxu0 0
      %513 = vmatprep.subr.bf16.mxu0 0
      %514 = vmatpush1.bf16.msra.mxu0 0
      %515 = vmatprep.subr.bf16.mxu0 0
      %516 = vmatpush1.bf16.msra.mxu0 0
      %517 = vmatprep.mubr.bf16.mxu0 0
      %518 = vmatmul.mubr.bf16.gmra.mrb[0].mxu0 %v405
      %v519 = vpop.f32.mrb[0].mxu0
      %v520 = vadd.f32 %v339, %v519
      %v521 = vpop.f32.mrb[0].mxu0
      %v522 = vpop.f32.mrb[0].mxu0
      %v523 = vadd.f32 %v339, %v522
      %v524 = vpop.f32.mrb[0].mxu0
      %525 = vmatprep.mubr.bf16.mxu0 0
      %526 = vmatmul.mubr.bf16.gmra.mrb[0].mxu0 %v406
      %v527 = vpop.f32.mrb[0].mxu0
      %v528 = vadd.f32 %v339, %v527
      %v529 = vpop.f32.mrb[0].mxu0
      %v530 = vpop.f32.mrb[0].mxu0
      %v531 = vadd.f32 %v339, %v530
      %v532 = vpop.f32.mrb[0].mxu0
      %533 = vmatprep.mubr.bf16.mxu0 0
      %534 = vmatmul.mubr.bf16.gmra.mrb[0].mxu0 %v407
      %v535 = vpop.f32.mrb[0].mxu0
      %v536 = vadd.f32 %v339, %v535
      %v537 = vpop.f32.mrb[0].mxu0
      %v538 = vpop.f32.mrb[0].mxu0
      %v539 = vadd.f32 %v339, %v538
      %v540 = vpop.f32.mrb[0].mxu0
      %541 = vmatprep.mubr.bf16.mxu0 0
      %542 = vmatmul.mubr.bf16.gmra.mrb[0].mxu0 %v408
      %v543 = vpop.f32.mrb[0].mxu0
      %v544 = vadd.f32 %v339, %v543
      %v545 = vpop.f32.mrb[0].mxu0
      %v546 = vpop.f32.mrb[0].mxu0
      %v547 = vadd.f32 %v339, %v546
      %v548 = vpop.f32.mrb[0].mxu0
      %549 = vmatprep.mubr.bf16.mxu0 0
      %550 = vmatmul.mubr.bf16.gmra.mrb[0].mxu0 %v409
      %v551 = vpop.f32.mrb[0].mxu0
      %v552 = vadd.f32 %v339, %v551
      %v553 = vpop.f32.mrb[0].mxu0
      %v554 = vpop.f32.mrb[0].mxu0
      %v555 = vadd.f32 %v339, %v554
      %v556 = vpop.f32.mrb[0].mxu0
      %557 = vmatprep.mubr.bf16.mxu0 0
      %558 = vmatmul.mubr.bf16.gmra.mrb[0].mxu0 %v410
      %v559 = vpop.f32.mrb[0].mxu0
      %v560 = vadd.f32 %v339, %v559
      %v561 = vpop.f32.mrb[0].mxu0
      %v562 = vpop.f32.mrb[0].mxu0
      %v563 = vadd.f32 %v339, %v562
      %v564 = vpop.f32.mrb[0].mxu0
      %565 = vmatprep.mubr.bf16.mxu0 0
      %566 = vmatmul.mubr.bf16.gmra.mrb[0].mxu0 %v411
      %v567 = vpop.f32.mrb[0].mxu0
      %v568 = vadd.f32 %v339, %v567
      %v569 = vpop.f32.mrb[0].mxu0
      %v570 = vpop.f32.mrb[0].mxu0
      %v571 = vadd.f32 %v339, %v570
      %v572 = vpop.f32.mrb[0].mxu0
      %573 = vmatprep.mubr.bf16.mxu0 0
      %574 = vmatmul.mubr.bf16.gmra.mrb[0].mxu0 %v412
      %v575 = vpop.f32.mrb[0].mxu0
      %v576 = vadd.f32 %v339, %v575
      %v577 = vpop.f32.mrb[0].mxu0
      %v578 = vpop.f32.mrb[0].mxu0
      %v579 = vadd.f32 %v339, %v578
      %v580 = vpop.f32.mrb[0].mxu0
      %581 = vmatprep.mubr.bf16.mxu0 0
      %582 = vmatmul.mubr.bf16.gmra.mrb[0].mxu0 %v413
      %v583 = vpop.f32.mrb[0].mxu0
      %v584 = vadd.f32 %v339, %v583
      %v585 = vpop.f32.mrb[0].mxu0
      %v586 = vpop.f32.mrb[0].mxu0
      %v587 = vadd.f32 %v339, %v586
      %v588 = vpop.f32.mrb[0].mxu0
      %589 = vmatprep.mubr.bf16.mxu0 0
      %590 = vmatmul.mubr.bf16.gmra.mrb[0].mxu0 %v414
      %v591 = vpop.f32.mrb[0].mxu0
      %v592 = vadd.f32 %v339, %v591
      %v593 = vpop.f32.mrb[0].mxu0
      %v594 = vpop.f32.mrb[0].mxu0
      %v595 = vadd.f32 %v339, %v594
      %v596 = vpop.f32.mrb[0].mxu0
      %597 = vmatprep.mubr.bf16.mxu0 0
      %598 = vmatmul.mubr.bf16.gmra.mrb[0].mxu0 %v415
      %v599 = vpop.f32.mrb[0].mxu0
      %v600 = vadd.f32 %v339, %v599
      %v601 = vpop.f32.mrb[0].mxu0
      %v602 = vpop.f32.mrb[0].mxu0
      %v603 = vadd.f32 %v339, %v602
      %v604 = vpop.f32.mrb[0].mxu0
      %605 = vmatprep.mubr.bf16.mxu0 0
      %606 = vmatmul.mubr.bf16.gmra.mrb[0].mxu0 %v416
      %v607 = vpop.f32.mrb[0].mxu0
      %v608 = vadd.f32 %v339, %v607
      %v609 = vpop.f32.mrb[0].mxu0
      %v610 = vpop.f32.mrb[0].mxu0
      %v611 = vadd.f32 %v339, %v610
      %v612 = vpop.f32.mrb[0].mxu0
      %613 = vmatprep.mubr.bf16.mxu0 0
      %614 = vmatmul.mubr.bf16.gmra.mrb[0].mxu0 %v417
      %v615 = vpop.f32.mrb[0].mxu0
      %v616 = vadd.f32 %v339, %v615
      %v617 = vpop.f32.mrb[0].mxu0
      %v618 = vpop.f32.mrb[0].mxu0
      %v619 = vadd.f32 %v339, %v618
      %v620 = vpop.f32.mrb[0].mxu0
      %621 = vmatprep.mubr.bf16.mxu0 0
      %622 = vmatmul.mubr.bf16.gmra.mrb[0].mxu0 %v418
      %v623 = vpop.f32.mrb[0].mxu0
      %v624 = vadd.f32 %v339, %v623
      %v625 = vpop.f32.mrb[0].mxu0
      %v626 = vpop.f32.mrb[0].mxu0
      %v627 = vadd.f32 %v339, %v626
      %v628 = vpop.f32.mrb[0].mxu0
      %629 = vmatprep.mubr.bf16.mxu0 0
      %630 = vmatmul.mubr.bf16.gmra.mrb[0].mxu0 %v419
      %v631 = vpop.f32.mrb[0].mxu0
      %v632 = vadd.f32 %v339, %v631
      %v633 = vpop.f32.mrb[0].mxu0
      %v634 = vpop.f32.mrb[0].mxu0
      %v635 = vadd.f32 %v339, %v634
      %v636 = vpop.f32.mrb[0].mxu0
      %637 = vmatprep.mubr.bf16.mxu0 0
      %638 = vmatmul.mubr.bf16.gmra.mrb[0].mxu0 %v420
      %v639 = vpop.f32.mrb[0].mxu0
      %v640 = vadd.f32 %v339, %v639
      %v641 = vpop.f32.mrb[0].mxu0
      %v642 = vpop.f32.mrb[0].mxu0
      %v643 = vadd.f32 %v339, %v642
      %v644 = vpop.f32.mrb[0].mxu0
      %645 = vdwg.mxu0
      %v646 = vld [vmem:[%s274] sm:$0xf]
      %v647 = vld [vmem:[%s274 + $0x4] sm:$0xf]
      %v648 = vld [vmem:[%s274 + $0x8] sm:$0xf]
      %v649 = vld [vmem:[%s274 + $0xc] sm:$0xf]
      %v650 = vld [vmem:[%s274 + $0x10] sm:$0xf]
      %v651 = vld [vmem:[%s274 + $0x14] sm:$0xf]
      %v652 = vld [vmem:[%s274 + $0x18] sm:$0xf]
      %v653 = vld [vmem:[%s274 + $0x1c] sm:$0xf]
      %v654 = vld [vmem:[%s274 + $0x20] sm:$0xf]
      %v655 = vld [vmem:[%s274 + $0x24] sm:$0xf]
      %v656 = vld [vmem:[%s274 + $0x28] sm:$0xf]
      %v657 = vld [vmem:[%s274 + $0x2c] sm:$0xf]
      %v658 = vld [vmem:[%s274 + $0x30] sm:$0xf]
      %v659 = vld [vmem:[%s274 + $0x34] sm:$0xf]
      %v660 = vld [vmem:[%s274 + $0x38] sm:$0xf]
      %v661 = vld [vmem:[%s274 + $0x3c] sm:$0xf]
      %v662 = vld [vmem:[%s274 + $0x40] sm:$0xf]
      %v663 = vld [vmem:[%s274 + $0x44] sm:$0xf]
      %v664 = vld [vmem:[%s274 + $0x48] sm:$0xf]
      %v665 = vld [vmem:[%s274 + $0x4c] sm:$0xf]
      %v666 = vld [vmem:[%s274 + $0x50] sm:$0xf]
      %v667 = vld [vmem:[%s274 + $0x54] sm:$0xf]
      %v668 = vld [vmem:[%s274 + $0x58] sm:$0xf]
      %v669 = vld [vmem:[%s274 + $0x5c] sm:$0xf]
      %v670 = vld [vmem:[%s274 + $0x60] sm:$0xf]
      %v671 = vld [vmem:[%s274 + $0x64] sm:$0xf]
      %v672 = vld [vmem:[%s274 + $0x68] sm:$0xf]
      %v673 = vld [vmem:[%s274 + $0x6c] sm:$0xf]
      %v674 = vld [vmem:[%s274 + $0x70] sm:$0xf]
      %v675 = vld [vmem:[%s274 + $0x74] sm:$0xf]
      %v676 = vld [vmem:[%s274 + $0x78] sm:$0xf]
      %v677 = vld [vmem:[%s274 + $0x7c] sm:$0xf]
      %v678 = vunpack.c.l.bf16 %v646
      %v679 = vunpack.c.l.bf16 %v647
      %v680 = vunpack.c.l.bf16 %v648
      %v681 = vunpack.c.l.bf16 %v649
      %v682 = vunpack.c.l.bf16 %v650
      %v683 = vunpack.c.l.bf16 %v651
      %v684 = vunpack.c.l.bf16 %v652
      %v685 = vunpack.c.l.bf16 %v653
      %v686 = vunpack.c.l.bf16 %v654
      %v687 = vunpack.c.l.bf16 %v655
      %v688 = vunpack.c.l.bf16 %v656
      %v689 = vunpack.c.l.bf16 %v657
      %v690 = vunpack.c.l.bf16 %v658
      %v691 = vunpack.c.l.bf16 %v659
      %v692 = vunpack.c.l.bf16 %v660
      %v693 = vunpack.c.l.bf16 %v661
      %v694 = vunpack.c.l.bf16 %v662
      %v695 = vunpack.c.l.bf16 %v663
      %v696 = vunpack.c.l.bf16 %v664
      %v697 = vunpack.c.l.bf16 %v665
      %v698 = vunpack.c.l.bf16 %v666
      %v699 = vunpack.c.l.bf16 %v667
      %v700 = vunpack.c.l.bf16 %v668
      %v701 = vunpack.c.l.bf16 %v669
      %v702 = vunpack.c.l.bf16 %v670
      %v703 = vunpack.c.l.bf16 %v671
      %v704 = vunpack.c.l.bf16 %v672
      %v705 = vunpack.c.l.bf16 %v673
      %v706 = vunpack.c.l.bf16 %v674
      %v707 = vunpack.c.l.bf16 %v675
      %v708 = vunpack.c.l.bf16 %v676
      %v709 = vunpack.c.l.bf16 %v677
      %v710 = vadd.f32 %v520, %v678
      %v711 = vadd.f32 %v523, %v679
      %v712 = vadd.f32 %v528, %v680
      %v713 = vadd.f32 %v531, %v681
      %v714 = vadd.f32 %v536, %v682
      %v715 = vadd.f32 %v539, %v683
      %v716 = vadd.f32 %v544, %v684
      %v717 = vadd.f32 %v547, %v685
      %v718 = vadd.f32 %v552, %v686
      %v719 = vadd.f32 %v555, %v687
      %v720 = vadd.f32 %v560, %v688
      %v721 = vadd.f32 %v563, %v689
      %v722 = vadd.f32 %v568, %v690
      %v723 = vadd.f32 %v571, %v691
      %v724 = vadd.f32 %v576, %v692
      %v725 = vadd.f32 %v579, %v693
      %v726 = vadd.f32 %v584, %v694
      %v727 = vadd.f32 %v587, %v695
      %v728 = vadd.f32 %v592, %v696
      %v729 = vadd.f32 %v595, %v697
      %v730 = vadd.f32 %v600, %v698
      %v731 = vadd.f32 %v603, %v699
      %v732 = vadd.f32 %v608, %v700
      %v733 = vadd.f32 %v611, %v701
      %v734 = vadd.f32 %v616, %v702
      %v735 = vadd.f32 %v619, %v703
      %v736 = vadd.f32 %v624, %v704
      %v737 = vadd.f32 %v627, %v705
      %v738 = vadd.f32 %v632, %v706
      %v739 = vadd.f32 %v635, %v707
      %v740 = vadd.f32 %v640, %v708
      %v741 = vadd.f32 %v643, %v709
      %v742 = vmax.f32 %v710, 0.0
      %v743 = vmax.f32 %v711, 0.0
      %v744 = vmax.f32 %v712, 0.0
      %v745 = vmax.f32 %v713, 0.0
      %v746 = vmax.f32 %v714, 0.0
      %v747 = vmax.f32 %v715, 0.0
      %v748 = vmax.f32 %v716, 0.0
      %v749 = vmax.f32 %v717, 0.0
      %v750 = vmax.f32 %v718, 0.0
      %v751 = vmax.f32 %v719, 0.0
      %v752 = vmax.f32 %v720, 0.0
      %v753 = vmax.f32 %v721, 0.0
      %v754 = vmax.f32 %v722, 0.0
      %v755 = vmax.f32 %v723, 0.0
      %v756 = vmax.f32 %v724, 0.0
      %v757 = vmax.f32 %v725, 0.0
      %v758 = vmax.f32 %v726, 0.0
      %v759 = vmax.f32 %v727, 0.0
      %v760 = vmax.f32 %v728, 0.0
      %v761 = vmax.f32 %v729, 0.0
      %v762 = vmax.f32 %v730, 0.0
      %v763 = vmax.f32 %v731, 0.0
      %v764 = vmax.f32 %v732, 0.0
      %v765 = vmax.f32 %v733, 0.0
      %v766 = vmax.f32 %v734, 0.0
      %v767 = vmax.f32 %v735, 0.0
      %v768 = vmax.f32 %v736, 0.0
      %v769 = vmax.f32 %v737, 0.0
      %v770 = vmax.f32 %v738, 0.0
      %v771 = vmax.f32 %v739, 0.0
      %v772 = vmax.f32 %v740, 0.0
      %v773 = vmax.f32 %v741, 0.0
      %v774 = vpack.c.bf16 %v743, %v742
      %v775 = vpack.c.bf16 %v745, %v744
      %v776 = vpack.c.bf16 %v747, %v746
      %v777 = vpack.c.bf16 %v749, %v748
      %v778 = vpack.c.bf16 %v751, %v750
      %v779 = vpack.c.bf16 %v753, %v752
      %v780 = vpack.c.bf16 %v755, %v754
      %v781 = vpack.c.bf16 %v757, %v756
      %v782 = vpack.c.bf16 %v759, %v758
      %v783 = vpack.c.bf16 %v761, %v760
      %v784 = vpack.c.bf16 %v763, %v762
      %v785 = vpack.c.bf16 %v765, %v764
      %v786 = vpack.c.bf16 %v767, %v766
      %v787 = vpack.c.bf16 %v769, %v768
      %v788 = vpack.c.bf16 %v771, %v770
      %v789 = vpack.c.bf16 %v773, %v772
      %v806 = vunpack.c.l.b16 %v774
      %v807 = vunpack.c.h.b16 %v774
      %v808 = vunpack.c.l.b16 %v775
      %v809 = vunpack.c.h.b16 %v775
      %v810 = vunpack.c.l.b16 %v776
      %v811 = vunpack.c.h.b16 %v776
      %v812 = vunpack.c.l.b16 %v777
      %v813 = vunpack.c.h.b16 %v777
      %v814 = vunpack.c.l.b16 %v778
      %v815 = vunpack.c.h.b16 %v778
      %v816 = vunpack.c.l.b16 %v779
      %v817 = vunpack.c.h.b16 %v779
      %v818 = vunpack.c.l.b16 %v780
      %v819 = vunpack.c.h.b16 %v780
      %v820 = vunpack.c.l.b16 %v781
      %v821 = vunpack.c.h.b16 %v781
      %v822 = vunpack.c.l.b16 %v782
      %v823 = vunpack.c.h.b16 %v782
      %v824 = vunpack.c.l.b16 %v783
      %v825 = vunpack.c.h.b16 %v783
      %v826 = vunpack.c.l.b16 %v784
      %v827 = vunpack.c.h.b16 %v784
      %v828 = vunpack.c.l.b16 %v785
      %v829 = vunpack.c.h.b16 %v785
      %v830 = vunpack.c.l.b16 %v786
      %v831 = vunpack.c.h.b16 %v786
      %v832 = vunpack.c.l.b16 %v787
      %v833 = vunpack.c.h.b16 %v787
      %v834 = vunpack.c.l.b16 %v788
      %v835 = vunpack.c.h.b16 %v788
      %v836 = vunpack.c.l.b16 %v789
      %v837 = vunpack.c.h.b16 %v789
      %v838 = vpack.c.b16 %v806, %v806
      %v839 = vpack.c.b16 %v807, %v807
      %v840 = vpack.c.b16 %v808, %v808
      %v841 = vpack.c.b16 %v809, %v809
      %v842 = vpack.c.b16 %v810, %v810
      %v843 = vpack.c.b16 %v811, %v811
      %v844 = vpack.c.b16 %v812, %v812
      %v845 = vpack.c.b16 %v813, %v813
      %v846 = vpack.c.b16 %v814, %v814
      %v847 = vpack.c.b16 %v815, %v815
      %v848 = vpack.c.b16 %v816, %v816
      %v849 = vpack.c.b16 %v817, %v817
      %v850 = vpack.c.b16 %v818, %v818
      %v851 = vpack.c.b16 %v819, %v819
      %v852 = vpack.c.b16 %v820, %v820
      %v853 = vpack.c.b16 %v821, %v821
      %v854 = vpack.c.b16 %v822, %v822
      %v855 = vpack.c.b16 %v823, %v823
      %v856 = vpack.c.b16 %v824, %v824
      %v857 = vpack.c.b16 %v825, %v825
      %v858 = vpack.c.b16 %v826, %v826
      %v859 = vpack.c.b16 %v827, %v827
      %v860 = vpack.c.b16 %v828, %v828
      %v861 = vpack.c.b16 %v829, %v829
      %v862 = vpack.c.b16 %v830, %v830
      %v863 = vpack.c.b16 %v831, %v831
      %v864 = vpack.c.b16 %v832, %v832
      %v865 = vpack.c.b16 %v833, %v833
      %v866 = vpack.c.b16 %v834, %v834
      %v867 = vpack.c.b16 %v835, %v835
      %v868 = vpack.c.b16 %v836, %v836
      %v869 = vpack.c.b16 %v837, %v837
      %902 = vst [vmem:[%s283] sm:$0xf] %v838
      %903 = vst [vmem:[%s283 + $0x4] sm:$0xf] %v839
      %904 = vst [vmem:[%s283 + $0x8] sm:$0xf] %v840
      %905 = vst [vmem:[%s283 + $0xc] sm:$0xf] %v841
      %906 = vst [vmem:[%s283 + $0x10] sm:$0xf] %v842
      %907 = vst [vmem:[%s283 + $0x14] sm:$0xf] %v843
      %908 = vst [vmem:[%s283 + $0x18] sm:$0xf] %v844
      %909 = vst [vmem:[%s283 + $0x1c] sm:$0xf] %v845
      %910 = vst [vmem:[%s283 + $0x20] sm:$0xf] %v846
      %911 = vst [vmem:[%s283 + $0x24] sm:$0xf] %v847
      %912 = vst [vmem:[%s283 + $0x28] sm:$0xf] %v848
      %913 = vst [vmem:[%s283 + $0x2c] sm:$0xf] %v849
      %914 = vst [vmem:[%s283 + $0x30] sm:$0xf] %v850
      %915 = vst [vmem:[%s283 + $0x34] sm:$0xf] %v851
      %916 = vst [vmem:[%s283 + $0x38] sm:$0xf] %v852
      %917 = vst [vmem:[%s283 + $0x3c] sm:$0xf] %v853
      %918 = vst [vmem:[%s283 + $0x40] sm:$0xf] %v854
      %919 = vst [vmem:[%s283 + $0x44] sm:$0xf] %v855
      %920 = vst [vmem:[%s283 + $0x48] sm:$0xf] %v856
      %921 = vst [vmem:[%s283 + $0x4c] sm:$0xf] %v857
      %922 = vst [vmem:[%s283 + $0x50] sm:$0xf] %v858
      %923 = vst [vmem:[%s283 + $0x54] sm:$0xf] %v859
      %924 = vst [vmem:[%s283 + $0x58] sm:$0xf] %v860
      %925 = vst [vmem:[%s283 + $0x5c] sm:$0xf] %v861
      %926 = vst [vmem:[%s283 + $0x60] sm:$0xf] %v862
      %927 = vst [vmem:[%s283 + $0x64] sm:$0xf] %v863
      %928 = vst [vmem:[%s283 + $0x68] sm:$0xf] %v864
      %929 = vst [vmem:[%s283 + $0x6c] sm:$0xf] %v865
      %930 = vst [vmem:[%s283 + $0x70] sm:$0xf] %v866
      %931 = vst [vmem:[%s283 + $0x74] sm:$0xf] %v867
      %932 = vst [vmem:[%s283 + $0x78] sm:$0xf] %v868
      %933 = vst [vmem:[%s283 + $0x7c] sm:$0xf] %v869
      %s934 = smul.u32 32, %s19
      %p935 = scmp.lt.s32.totalorder %s934, 63
      %s936 = scalar_select %p935, %s934, 63
      %p937 = scmp.lt.s32.totalorder %s20, 0
      %s938 = scalar_select %p937, %s20, 0
      %s939 = sadd.s32 %s938, %s936
      %s940 = smul.addr %s939, 4
      %s941 = scalar_lea.vmem %s4, %s940
      // Predicated region
      $region37: #{_lambda_.17} parent=35 // pred_check
        %p942 = pneg %p153
      $region38: #{_lambda_.17} parent=35 // pred_check_branch
        %944 = sbr.rel (%p942) target = $region40
      $region39: #{_lambda_.17} parent=35 // pred_region
        %s945 = smul.u32 32, %s19
      $region40: #{_lambda_.17} parent=35 // pred_fallthru
        _
    $region36: #{_lambda_.17} parent=5 // pred_fallthru
      _
    %p946 = scmp.le.s32.totalorder 2, %s10
    // Predicated region
    $region41: #{_lambda_.17} parent=5 // pred_check
      %p947 = pneg %p946
    $region42: #{_lambda_.17} parent=5 // pred_check_branch
      %949 = sbr.rel (%p947) target = $region44
    $region43: #{_lambda_.17} parent=5 // pred_region
      %s950 = ssub.s32 %s10, 2
      // Predicated region
      $region45: #{_lambda_.17} parent=43 // pred_check
        %p951 = pneg %p159
      $region46: #{_lambda_.17} parent=43 // pred_check_branch
        %953 = sbr.rel (%p951) target = $region48
      $region47: #{_lambda_.17} parent=43 // pred_region
        %s954 = smul.u32 32, %s21
        %p955 = scmp.lt.s32.totalorder %s954, 63
        %s956 = scalar_select %p955, %s954, 63
        %p957 = scmp.lt.s32.totalorder %s22, 0
        %s958 = scalar_select %p957, %s22, 0
        %s959 = sadd.s32 %s958, %s956
        %s960 = smul.addr %s959, 4
        %s961 = scalar_lea.vmem %s4, %s960
      $region48: #{_lambda_.17} parent=43 // pred_fallthru
        _
    $region44: #{_lambda_.17} parent=5 // pred_fallthru
      _
  $region6: #{_lambda_.17} parent=0 // loop_footer
    %s14 = sadd.s32 1, %s10
  $region7: #{_lambda_.17} parent=0 // loop_footer_branch
    %9 = sbr.rel target = $region3
  $region8: #{_lambda_.17} parent=0 // loop_exit
    _

// kernel: _lambda_.18
$region0: #{_lambda_.18}
  #allocation0 [shape = 'u32[]', space=smem, size = 0x4, offset = 0x4, fixed_abs, tag = 'smem constant byte address 0x4 - core index']
  #allocation1 [shape = 'u32[144,128]{1,0:T(1,128)}', space=vmem, size = 0x12000, scoped, tag = 'internal scratch']
  %s0 = inlined_call_operand.vmem [shape: bf16[128,128], index: 0, kind: input, shape index: {}]
  %s1 = inlined_call_operand.vmem [shape: bf16[128,128], index: 1, kind: input, shape index: {}]
  %s2 = inlined_call_operand.vmem [shape: f32[1,128], index: 2, kind: input, shape index: {}]
  %s3 = inlined_call_operand.vmem [shape: bf16[128,128], index: 3, kind: output, shape index: {}]
  %s4 = sld [smem:[#allocation0]]
  $region22: #{_lambda_.18} parent=0
    _
  %s6 = ssub.s32 1, %s4
  %s7 = scalar_select 0, %s6, %s4
  // Predicated region
  $region2: #{_lambda_.18} parent=0 // pred_check
    _
  $region3: #{_lambda_.18} parent=0 // pred_check_branch
    %9 = sbr.rel (0) target = $region5
  $region4: #{_lambda_.18} parent=0 // pred_region
    _
  $region5: #{_lambda_.18} parent=0 // pred_fallthru
    _
  // Predicated region
  $region6: #{_lambda_.18} parent=0 // pred_check
    _
  $region7: #{_lambda_.18} parent=0 // pred_check_branch
    %11 = sbr.rel (0) target = $region9
  $region8: #{_lambda_.18} parent=0 // pred_region
    _
  $region9: #{_lambda_.18} parent=0 // pred_fallthru
    _
  // Predicated region
  $region10: #{_lambda_.18} parent=0 // pred_check
    _
  $region11: #{_lambda_.18} parent=0 // pred_check_branch
    %13 = sbr.rel (0) target = $region13
  $region12: #{_lambda_.18} parent=0 // pred_region
    _
  $region13: #{_lambda_.18} parent=0 // pred_fallthru
    _
  %v15 = vld [vmem:[%s0] sm:$0xf]
  %v16 = vld [vmem:[%s0 + $0x4] sm:$0xf]
  %v17 = vld [vmem:[%s0 + $0x8] sm:$0xf]
  %v18 = vld [vmem:[%s0 + $0xc] sm:$0xf]
  %v19 = vld [vmem:[%s0 + $0x10] sm:$0xf]
  %v20 = vld [vmem:[%s0 + $0x14] sm:$0xf]
  %v21 = vld [vmem:[%s0 + $0x18] sm:$0xf]
  %v22 = vld [vmem:[%s0 + $0x1c] sm:$0xf]
  %v23 = vld [vmem:[%s0 + $0x20] sm:$0xf]
  %v24 = vld [vmem:[%s0 + $0x24] sm:$0xf]
  %v25 = vld [vmem:[%s0 + $0x28] sm:$0xf]
  %v26 = vld [vmem:[%s0 + $0x2c] sm:$0xf]
  %v27 = vld [vmem:[%s0 + $0x30] sm:$0xf]
  %v28 = vld [vmem:[%s0 + $0x34] sm:$0xf]
  %v29 = vld [vmem:[%s0 + $0x38] sm:$0xf]
  %v30 = vld [vmem:[%s0 + $0x3c] sm:$0xf]
  %v31 = vld [vmem:[%s1] sm:$0xf]
  %v32 = vld [vmem:[%s1 + $0x4] sm:$0xf]
  %v33 = vld [vmem:[%s1 + $0x8] sm:$0xf]
  %v34 = vld [vmem:[%s1 + $0xc] sm:$0xf]
  %v35 = vld [vmem:[%s1 + $0x10] sm:$0xf]
  %v36 = vld [vmem:[%s1 + $0x14] sm:$0xf]
  %v37 = vld [vmem:[%s1 + $0x18] sm:$0xf]
  %v38 = vld [vmem:[%s1 + $0x1c] sm:$0xf]
  %v39 = vld [vmem:[%s1 + $0x20] sm:$0xf]
  %v40 = vld [vmem:[%s1 + $0x24] sm:$0xf]
  %v41 = vld [vmem:[%s1 + $0x28] sm:$0xf]
  %v42 = vld [vmem:[%s1 + $0x2c] sm:$0xf]
  %v43 = vld [vmem:[%s1 + $0x30] sm:$0xf]
  %v44 = vld [vmem:[%s1 + $0x34] sm:$0xf]
  %v45 = vld [vmem:[%s1 + $0x38] sm:$0xf]
  %v46 = vld [vmem:[%s1 + $0x3c] sm:$0xf]
  %v47 = vld [vmem:[%s2] sm:$0x1]
  %v49 = vlaneseq
  %v50 = vshrl.u32 %v49, 7
  %v51 = vsub.s32 0, %v50
  %v52 = vrot.slane %v47, %v51
  %v70 = vunpack.c.l.b16 %v15
  %v71 = vunpack.c.l.b16 %v16
  %v72 = vunpack.c.l.b16 %v17
  %v73 = vunpack.c.l.b16 %v18
  %v74 = vunpack.c.l.b16 %v19
  %v75 = vunpack.c.l.b16 %v20
  %v76 = vunpack.c.l.b16 %v21
  %v77 = vunpack.c.l.b16 %v22
  %v78 = vunpack.c.l.b16 %v23
  %v79 = vunpack.c.l.b16 %v24
  %v80 = vunpack.c.l.b16 %v25
  %v81 = vunpack.c.l.b16 %v26
  %v82 = vunpack.c.l.b16 %v27
  %v83 = vunpack.c.l.b16 %v28
  %v84 = vunpack.c.l.b16 %v29
  %v85 = vunpack.c.l.b16 %v30
  %v86 = vpack.c.b16 %v71, %v70
  %v87 = vpack.c.b16 %v73, %v72
  %v88 = vpack.c.b16 %v75, %v74
  %v89 = vpack.c.b16 %v77, %v76
  %v90 = vpack.c.b16 %v79, %v78
  %v91 = vpack.c.b16 %v81, %v80
  %v92 = vpack.c.b16 %v83, %v82
  %v93 = vpack.c.b16 %v85, %v84
  %v118 = vunpack.c.l.b16 %v31
  %v119 = vunpack.c.l.b16 %v32
  %v120 = vunpack.c.l.b16 %v33
  %v121 = vunpack.c.l.b16 %v34
  %v122 = vunpack.c.l.b16 %v35
  %v123 = vunpack.c.l.b16 %v36
  %v124 = vunpack.c.l.b16 %v37
  %v125 = vunpack.c.l.b16 %v38
  %v126 = vunpack.c.l.b16 %v39
  %v127 = vunpack.c.l.b16 %v40
  %v128 = vunpack.c.l.b16 %v41
  %v129 = vunpack.c.l.b16 %v42
  %v130 = vunpack.c.l.b16 %v43
  %v131 = vunpack.c.l.b16 %v44
  %v132 = vunpack.c.l.b16 %v45
  %v133 = vunpack.c.l.b16 %v46
  %v134 = vpack.c.b16 %v119, %v118
  %v135 = vpack.c.b16 %v121, %v120
  %v136 = vpack.c.b16 %v123, %v122
  %v137 = vpack.c.b16 %v125, %v124
  %v138 = vpack.c.b16 %v127, %v126
  %v139 = vpack.c.b16 %v129, %v128
  %v140 = vpack.c.b16 %v131, %v130
  %v141 = vpack.c.b16 %v133, %v132
  %150 = vmatprep.subr.bf16.mxu0 0
  %151 = vmatpush1.bf16.msra.mxu0 %v134
  %152 = vmatprep.subr.bf16.mxu0 0
  %153 = vmatpush1.bf16.msra.mxu0 %v135
  %154 = vmatprep.subr.bf16.mxu0 0
  %155 = vmatpush1.bf16.msra.mxu0 %v136
  %156 = vmatprep.subr.bf16.mxu0 0
  %157 = vmatpush1.bf16.msra.mxu0 %v137
  %158 = vmatprep.subr.bf16.mxu0 0
  %159 = vmatpush1.bf16.msra.mxu0 %v138
  %160 = vmatprep.subr.bf16.mxu0 0
  %161 = vmatpush1.bf16.msra.mxu0 %v139
  %162 = vmatprep.subr.bf16.mxu0 0
  %163 = vmatpush1.bf16.msra.mxu0 %v140
  %164 = vmatprep.subr.bf16.mxu0 0
  %165 = vmatpush1.bf16.msra.mxu0 %v141
  %166 = vmatprep.subr.bf16.mxu0 0
  %167 = vmatpush1.bf16.msra.mxu0 0
  %168 = vmatprep.subr.bf16.mxu0 0
  %169 = vmatpush1.bf16.msra.mxu0 0
  %170 = vmatprep.subr.bf16.mxu0 0
  %171 = vmatpush1.bf16.msra.mxu0 0
  %172 = vmatprep.subr.bf16.mxu0 0
  %173 = vmatpush1.bf16.msra.mxu0 0
  %174 = vmatprep.subr.bf16.mxu0 0
  %175 = vmatpush1.bf16.msra.mxu0 0
  %176 = vmatprep.subr.bf16.mxu0 0
  %177 = vmatpush1.bf16.msra.mxu0 0
  %178 = vmatprep.subr.bf16.mxu0 0
  %179 = vmatpush1.bf16.msra.mxu0 0
  %180 = vmatprep.subr.bf16.mxu0 0
  %181 = vmatpush1.bf16.msra.mxu0 0
  %182 = vmatprep.mubr.bf16.mxu0 0
  %183 = vmatmul.mubr.bf16.gmra.mrb[0].mxu0 %v86
  %v184 = vpop.f32.mrb[0].mxu0
  %v185 = vadd.f32 %v52, %v184
  %v186 = vpop.f32.mrb[0].mxu0
  %v187 = vpop.f32.mrb[0].mxu0
  %v188 = vadd.f32 %v52, %v187
  %v189 = vpop.f32.mrb[0].mxu0
  %190 = vmatprep.mubr.bf16.mxu0 0
  %191 = vmatmul.mubr.bf16.gmra.mrb[0].mxu0 %v87
  %v192 = vpop.f32.mrb[0].mxu0
  %v193 = vadd.f32 %v52, %v192
  %v194 = vpop.f32.mrb[0].mxu0
  %v195 = vpop.f32.mrb[0].mxu0
  %v196 = vadd.f32 %v52, %v195
  %v197 = vpop.f32.mrb[0].mxu0
  %198 = vmatprep.mubr.bf16.mxu0 0
  %199 = vmatmul.mubr.bf16.gmra.mrb[0].mxu0 %v88
  %v200 = vpop.f32.mrb[0].mxu0
  %v201 = vadd.f32 %v52, %v200
  %v202 = vpop.f32.mrb[0].mxu0
  %v203 = vpop.f32.mrb[0].mxu0
  %v204 = vadd.f32 %v52, %v203
  %v205 = vpop.f32.mrb[0].mxu0
  %206 = vmatprep.mubr.bf16.mxu0 0
  %207 = vmatmul.mubr.bf16.gmra.mrb[0].mxu0 %v89
  %v208 = vpop.f32.mrb[0].mxu0
  %v209 = vadd.f32 %v52, %v208
  %v210 = vpop.f32.mrb[0].mxu0
  %v211 = vpop.f32.mrb[0].mxu0
  %v212 = vadd.f32 %v52, %v211
  %v213 = vpop.f32.mrb[0].mxu0
  %214 = vmatprep.mubr.bf16.mxu0 0
  %215 = vmatmul.mubr.bf16.gmra.mrb[0].mxu0 %v90
  %v216 = vpop.f32.mrb[0].mxu0
  %v217 = vadd.f32 %v52, %v216
  %v218 = vpop.f32.mrb[0].mxu0
  %v219 = vpop.f32.mrb[0].mxu0
  %v220 = vadd.f32 %v52, %v219
  %v221 = vpop.f32.mrb[0].mxu0
  %222 = vmatprep.mubr.bf16.mxu0 0
  %223 = vmatmul.mubr.bf16.gmra.mrb[0].mxu0 %v91
  %v224 = vpop.f32.mrb[0].mxu0
  %v225 = vadd.f32 %v52, %v224
  %v226 = vpop.f32.mrb[0].mxu0
  %v227 = vpop.f32.mrb[0].mxu0
  %v228 = vadd.f32 %v52, %v227
  %v229 = vpop.f32.mrb[0].mxu0
  %230 = vmatprep.mubr.bf16.mxu0 0
  %231 = vmatmul.mubr.bf16.gmra.mrb[0].mxu0 %v92
  %v232 = vpop.f32.mrb[0].mxu0
  %v233 = vadd.f32 %v52, %v232
  %v234 = vpop.f32.mrb[0].mxu0
  %v235 = vpop.f32.mrb[0].mxu0
  %v236 = vadd.f32 %v52, %v235
  %v237 = vpop.f32.mrb[0].mxu0
  %238 = vmatprep.mubr.bf16.mxu0 0
  %239 = vmatmul.mubr.bf16.gmra.mrb[0].mxu0 %v93
  %v240 = vpop.f32.mrb[0].mxu0
  %v241 = vadd.f32 %v52, %v240
  %v242 = vpop.f32.mrb[0].mxu0
  %v243 = vpop.f32.mrb[0].mxu0
  %v244 = vadd.f32 %v52, %v243
  %v245 = vpop.f32.mrb[0].mxu0
  %246 = vdwg.mxu0
  %v247 = vmax.f32 %v185, 0.0
  %v248 = vmax.f32 %v188, 0.0
  %v249 = vmax.f32 %v193, 0.0
  %v250 = vmax.f32 %v196, 0.0
  %v251 = vmax.f32 %v201, 0.0
  %v252 = vmax.f32 %v204, 0.0
  %v253 = vmax.f32 %v209, 0.0
  %v254 = vmax.f32 %v212, 0.0
  %v255 = vmax.f32 %v217, 0.0
  %v256 = vmax.f32 %v220, 0.0
  %v257 = vmax.f32 %v225, 0.0
  %v258 = vmax.f32 %v228, 0.0
  %v259 = vmax.f32 %v233, 0.0
  %v260 = vmax.f32 %v236, 0.0
  %v261 = vmax.f32 %v241, 0.0
  %v262 = vmax.f32 %v244, 0.0
  %v263 = vpack.c.bf16 %v248, %v247
  %v264 = vpack.c.bf16 %v250, %v249
  %v265 = vpack.c.bf16 %v252, %v251
  %v266 = vpack.c.bf16 %v254, %v253
  %v267 = vpack.c.bf16 %v256, %v255
  %v268 = vpack.c.bf16 %v258, %v257
  %v269 = vpack.c.bf16 %v260, %v259
  %v270 = vpack.c.bf16 %v262, %v261
  %v279 = vunpack.c.l.b16 %v263
  %v280 = vunpack.c.h.b16 %v263
  %v281 = vunpack.c.l.b16 %v264
  %v282 = vunpack.c.h.b16 %v264
  %v283 = vunpack.c.l.b16 %v265
  %v284 = vunpack.c.h.b16 %v265
  %v285 = vunpack.c.l.b16 %v266
  %v286 = vunpack.c.h.b16 %v266
  %v287 = vunpack.c.l.b16 %v267
  %v288 = vunpack.c.h.b16 %v267
  %v289 = vunpack.c.l.b16 %v268
  %v290 = vunpack.c.h.b16 %v268
  %v291 = vunpack.c.l.b16 %v269
  %v292 = vunpack.c.h.b16 %v269
  %v293 = vunpack.c.l.b16 %v270
  %v294 = vunpack.c.h.b16 %v270
  %v295 = vpack.c.b16 %v279, %v279
  %v296 = vpack.c.b16 %v280, %v280
  %v297 = vpack.c.b16 %v281, %v281
  %v298 = vpack.c.b16 %v282, %v282
  %v299 = vpack.c.b16 %v283, %v283
  %v300 = vpack.c.b16 %v284, %v284
  %v301 = vpack.c.b16 %v285, %v285
  %v302 = vpack.c.b16 %v286, %v286
  %v303 = vpack.c.b16 %v287, %v287
  %v304 = vpack.c.b16 %v288, %v288
  %v305 = vpack.c.b16 %v289, %v289
  %v306 = vpack.c.b16 %v290, %v290
  %v307 = vpack.c.b16 %v291, %v291
  %v308 = vpack.c.b16 %v292, %v292
  %v309 = vpack.c.b16 %v293, %v293
  %v310 = vpack.c.b16 %v294, %v294
  %327 = vst [vmem:[%s3] sm:$0xf] %v295
  %328 = vst [vmem:[%s3 + $0x4] sm:$0xf] %v296
  %329 = vst [vmem:[%s3 + $0x8] sm:$0xf] %v297
  %330 = vst [vmem:[%s3 + $0xc] sm:$0xf] %v298
  %331 = vst [vmem:[%s3 + $0x10] sm:$0xf] %v299
  %332 = vst [vmem:[%s3 + $0x14] sm:$0xf] %v300
  %333 = vst [vmem:[%s3 + $0x18] sm:$0xf] %v301
  %334 = vst [vmem:[%s3 + $0x1c] sm:$0xf] %v302
  %335 = vst [vmem:[%s3 + $0x20] sm:$0xf] %v303
  %336 = vst [vmem:[%s3 + $0x24] sm:$0xf] %v304
  %337 = vst [vmem:[%s3 + $0x28] sm:$0xf] %v305
  %338 = vst [vmem:[%s3 + $0x2c] sm:$0xf] %v306
  %339 = vst [vmem:[%s3 + $0x30] sm:$0xf] %v307
  %340 = vst [vmem:[%s3 + $0x34] sm:$0xf] %v308
  %341 = vst [vmem:[%s3 + $0x38] sm:$0xf] %v309
  %342 = vst [vmem:[%s3 + $0x3c] sm:$0xf] %v310
  // Predicated region
  $region14: #{_lambda_.18} parent=0 // pred_check
    _
  $region15: #{_lambda_.18} parent=0 // pred_check_branch
    %344 = sbr.rel (0) target = $region17
  $region16: #{_lambda_.18} parent=0 // pred_region
    _
  $region17: #{_lambda_.18} parent=0 // pred_fallthru
    _
  // Predicated region
  $region18: #{_lambda_.18} parent=0 // pred_check
    _
  $region19: #{_lambda_.18} parent=0 // pred_check_branch
    %346 = sbr.rel (0) target = $region21
  $region20: #{_lambda_.18} parent=0 // pred_region
    _
  $region21: #{_lambda_.18} parent=0 // pred_fallthru
    _

// kernel: _lambda_.19
$region0: #{_lambda_.19}
  #allocation0 [shape = 'u32[]', space=smem, size = 0x4, offset = 0x4, fixed_abs, tag = 'smem constant byte address 0x4 - core index']
  #allocation1 [shape = 'u32[144,128]{1,0:T(1,128)}', space=vmem, size = 0x12000, scoped, tag = 'internal scratch']
  %s0 = inlined_call_operand.vmem [shape: bf16[128,128], index: 0, kind: input, shape index: {}]
  %s1 = inlined_call_operand.vmem [shape: bf16[128,128], index: 1, kind: input, shape index: {}]
  %s2 = inlined_call_operand.vmem [shape: f32[1,128], index: 2, kind: input, shape index: {}]
  %s3 = inlined_call_operand.vmem [shape: bf16[128,128], index: 3, kind: output, shape index: {}]
  %s4 = sld [smem:[#allocation0]]
  $region22: #{_lambda_.19} parent=0
    _
  %s6 = ssub.s32 1, %s4
  %s7 = scalar_select 0, %s6, %s4
  // Predicated region
  $region2: #{_lambda_.19} parent=0 // pred_check
    _
  $region3: #{_lambda_.19} parent=0 // pred_check_branch
    %9 = sbr.rel (0) target = $region5
  $region4: #{_lambda_.19} parent=0 // pred_region
    _
  $region5: #{_lambda_.19} parent=0 // pred_fallthru
    _
  // Predicated region
  $region6: #{_lambda_.19} parent=0 // pred_check
    _
  $region7: #{_lambda_.19} parent=0 // pred_check_branch
    %11 = sbr.rel (0) target = $region9
  $region8: #{_lambda_.19} parent=0 // pred_region
    _
  $region9: #{_lambda_.19} parent=0 // pred_fallthru
    _
  // Predicated region
  $region10: #{_lambda_.19} parent=0 // pred_check
    _
  $region11: #{_lambda_.19} parent=0 // pred_check_branch
    %13 = sbr.rel (0) target = $region13
  $region12: #{_lambda_.19} parent=0 // pred_region
    _
  $region13: #{_lambda_.19} parent=0 // pred_fallthru
    _
  %v15 = vld [vmem:[%s0] sm:$0xf]
  %v16 = vld [vmem:[%s0 + $0x4] sm:$0xf]
  %v17 = vld [vmem:[%s0 + $0x8] sm:$0xf]
  %v18 = vld [vmem:[%s0 + $0xc] sm:$0xf]
  %v19 = vld [vmem:[%s0 + $0x10] sm:$0xf]
  %v20 = vld [vmem:[%s0 + $0x14] sm:$0xf]
  %v21 = vld [vmem:[%s0 + $0x18] sm:$0xf]
  %v22 = vld [vmem:[%s0 + $0x1c] sm:$0xf]
  %v23 = vld [vmem:[%s0 + $0x20] sm:$0xf]
  %v24 = vld [vmem:[%s0 + $0x24] sm:$0xf]
  %v25 = vld [vmem:[%s0 + $0x28] sm:$0xf]
  %v26 = vld [vmem:[%s0 + $0x2c] sm:$0xf]
  %v27 = vld [vmem:[%s0 + $0x30] sm:$0xf]
  %v28 = vld [vmem:[%s0 + $0x34] sm:$0xf]
  %v29 = vld [vmem:[%s0 + $0x38] sm:$0xf]
  %v30 = vld [vmem:[%s0 + $0x3c] sm:$0xf]
  %v31 = vld [vmem:[%s1] sm:$0xf]
  %v32 = vld [vmem:[%s1 + $0x4] sm:$0xf]
  %v33 = vld [vmem:[%s1 + $0x8] sm:$0xf]
  %v34 = vld [vmem:[%s1 + $0xc] sm:$0xf]
  %v35 = vld [vmem:[%s1 + $0x10] sm:$0xf]
  %v36 = vld [vmem:[%s1 + $0x14] sm:$0xf]
  %v37 = vld [vmem:[%s1 + $0x18] sm:$0xf]
  %v38 = vld [vmem:[%s1 + $0x1c] sm:$0xf]
  %v39 = vld [vmem:[%s1 + $0x20] sm:$0xf]
  %v40 = vld [vmem:[%s1 + $0x24] sm:$0xf]
  %v41 = vld [vmem:[%s1 + $0x28] sm:$0xf]
  %v42 = vld [vmem:[%s1 + $0x2c] sm:$0xf]
  %v43 = vld [vmem:[%s1 + $0x30] sm:$0xf]
  %v44 = vld [vmem:[%s1 + $0x34] sm:$0xf]
  %v45 = vld [vmem:[%s1 + $0x38] sm:$0xf]
  %v46 = vld [vmem:[%s1 + $0x3c] sm:$0xf]
  %v47 = vld [vmem:[%s2] sm:$0x1]
  %v49 = vlaneseq
  %v50 = vshrl.u32 %v49, 7
  %v51 = vsub.s32 0, %v50
  %v52 = vrot.slane %v47, %v51
  %v70 = vunpack.c.l.b16 %v15
  %v71 = vunpack.c.l.b16 %v16
  %v72 = vunpack.c.l.b16 %v17
  %v73 = vunpack.c.l.b16 %v18
  %v74 = vunpack.c.l.b16 %v19
  %v75 = vunpack.c.l.b16 %v20
  %v76 = vunpack.c.l.b16 %v21
  %v77 = vunpack.c.l.b16 %v22
  %v78 = vunpack.c.l.b16 %v23
  %v79 = vunpack.c.l.b16 %v24
  %v80 = vunpack.c.l.b16 %v25
  %v81 = vunpack.c.l.b16 %v26
  %v82 = vunpack.c.l.b16 %v27
  %v83 = vunpack.c.l.b16 %v28
  %v84 = vunpack.c.l.b16 %v29
  %v85 = vunpack.c.l.b16 %v30
  %v86 = vpack.c.b16 %v71, %v70
  %v87 = vpack.c.b16 %v73, %v72
  %v88 = vpack.c.b16 %v75, %v74
  %v89 = vpack.c.b16 %v77, %v76
  %v90 = vpack.c.b16 %v79, %v78
  %v91 = vpack.c.b16 %v81, %v80
  %v92 = vpack.c.b16 %v83, %v82
  %v93 = vpack.c.b16 %v85, %v84
  %v118 = vunpack.c.l.b16 %v31
  %v119 = vunpack.c.l.b16 %v32
  %v120 = vunpack.c.l.b16 %v33
  %v121 = vunpack.c.l.b16 %v34
  %v122 = vunpack.c.l.b16 %v35
  %v123 = vunpack.c.l.b16 %v36
  %v124 = vunpack.c.l.b16 %v37
  %v125 = vunpack.c.l.b16 %v38
  %v126 = vunpack.c.l.b16 %v39
  %v127 = vunpack.c.l.b16 %v40
  %v128 = vunpack.c.l.b16 %v41
  %v129 = vunpack.c.l.b16 %v42
  %v130 = vunpack.c.l.b16 %v43
  %v131 = vunpack.c.l.b16 %v44
  %v132 = vunpack.c.l.b16 %v45
  %v133 = vunpack.c.l.b16 %v46
  %v134 = vpack.c.b16 %v119, %v118
  %v135 = vpack.c.b16 %v121, %v120
  %v136 = vpack.c.b16 %v123, %v122
  %v137 = vpack.c.b16 %v125, %v124
  %v138 = vpack.c.b16 %v127, %v126
  %v139 = vpack.c.b16 %v129, %v128
  %v140 = vpack.c.b16 %v131, %v130
  %v141 = vpack.c.b16 %v133, %v132
  %150 = vmatprep.subr.bf16.mxu0 0
  %151 = vmatpush1.bf16.msra.mxu0 %v134
  %152 = vmatprep.subr.bf16.mxu0 0
  %153 = vmatpush1.bf16.msra.mxu0 %v135
  %154 = vmatprep.subr.bf16.mxu0 0
  %155 = vmatpush1.bf16.msra.mxu0 %v136
  %156 = vmatprep.subr.bf16.mxu0 0
  %157 = vmatpush1.bf16.msra.mxu0 %v137
  %158 = vmatprep.subr.bf16.mxu0 0
  %159 = vmatpush1.bf16.msra.mxu0 %v138
  %160 = vmatprep.subr.bf16.mxu0 0
  %161 = vmatpush1.bf16.msra.mxu0 %v139
  %162 = vmatprep.subr.bf16.mxu0 0
  %163 = vmatpush1.bf16.msra.mxu0 %v140
  %164 = vmatprep.subr.bf16.mxu0 0
  %165 = vmatpush1.bf16.msra.mxu0 %v141
  %166 = vmatprep.subr.bf16.mxu0 0
  %167 = vmatpush1.bf16.msra.mxu0 0
  %168 = vmatprep.subr.bf16.mxu0 0
  %169 = vmatpush1.bf16.msra.mxu0 0
  %170 = vmatprep.subr.bf16.mxu0 0
  %171 = vmatpush1.bf16.msra.mxu0 0
  %172 = vmatprep.subr.bf16.mxu0 0
  %173 = vmatpush1.bf16.msra.mxu0 0
  %174 = vmatprep.subr.bf16.mxu0 0
  %175 = vmatpush1.bf16.msra.mxu0 0
  %176 = vmatprep.subr.bf16.mxu0 0
  %177 = vmatpush1.bf16.msra.mxu0 0
  %178 = vmatprep.subr.bf16.mxu0 0
  %179 = vmatpush1.bf16.msra.mxu0 0
  %180 = vmatprep.subr.bf16.mxu0 0
  %181 = vmatpush1.bf16.msra.mxu0 0
  %182 = vmatprep.mubr.bf16.mxu0 0
  %183 = vmatmul.mubr.bf16.gmra.mrb[0].mxu0 %v86
  %v184 = vpop.f32.mrb[0].mxu0
  %v185 = vadd.f32 %v52, %v184
  %v186 = vpop.f32.mrb[0].mxu0
  %v187 = vpop.f32.mrb[0].mxu0
  %v188 = vadd.f32 %v52, %v187
  %v189 = vpop.f32.mrb[0].mxu0
  %190 = vmatprep.mubr.bf16.mxu0 0
  %191 = vmatmul.mubr.bf16.gmra.mrb[0].mxu0 %v87
  %v192 = vpop.f32.mrb[0].mxu0
  %v193 = vadd.f32 %v52, %v192
  %v194 = vpop.f32.mrb[0].mxu0
  %v195 = vpop.f32.mrb[0].mxu0
  %v196 = vadd.f32 %v52, %v195
  %v197 = vpop.f32.mrb[0].mxu0
  %198 = vmatprep.mubr.bf16.mxu0 0
  %199 = vmatmul.mubr.bf16.gmra.mrb[0].mxu0 %v88
  %v200 = vpop.f32.mrb[0].mxu0
  %v201 = vadd.f32 %v52, %v200
  %v202 = vpop.f32.mrb[0].mxu0
  %v203 = vpop.f32.mrb[0].mxu0
  %v204 = vadd.f32 %v52, %v203
  %v205 = vpop.f32.mrb[0].mxu0
  %206 = vmatprep.mubr.bf16.mxu0 0
  %207 = vmatmul.mubr.bf16.gmra.mrb[0].mxu0 %v89
  %v208 = vpop.f32.mrb[0].mxu0
  %v209 = vadd.f32 %v52, %v208
  %v210 = vpop.f32.mrb[0].mxu0
  %v211 = vpop.f32.mrb[0].mxu0
  %v212 = vadd.f32 %v52, %v211
  %v213 = vpop.f32.mrb[0].mxu0
  %214 = vmatprep.mubr.bf16.mxu0 0
  %215 = vmatmul.mubr.bf16.gmra.mrb[0].mxu0 %v90
  %v216 = vpop.f32.mrb[0].mxu0
  %v217 = vadd.f32 %v52, %v216
  %v218 = vpop.f32.mrb[0].mxu0
  %v219 = vpop.f32.mrb[0].mxu0
  %v220 = vadd.f32 %v52, %v219
  %v221 = vpop.f32.mrb[0].mxu0
  %222 = vmatprep.mubr.bf16.mxu0 0
  %223 = vmatmul.mubr.bf16.gmra.mrb[0].mxu0 %v91
  %v224 = vpop.f32.mrb[0].mxu0
  %v225 = vadd.f32 %v52, %v224
  %v226 = vpop.f32.mrb[0].mxu0
  %v227 = vpop.f32.mrb[0].mxu0
  %v228 = vadd.f32 %v52, %v227
  %v229 = vpop.f32.mrb[0].mxu0
  %230 = vmatprep.mubr.bf16.mxu0 0
  %231 = vmatmul.mubr.bf16.gmra.mrb[0].mxu0 %v92
  %v232 = vpop.f32.mrb[0].mxu0
  %v233 = vadd.f32 %v52, %v232
  %v234 = vpop.f32.mrb[0].mxu0
  %v235 = vpop.f32.mrb[0].mxu0
  %v236 = vadd.f32 %v52, %v235
  %v237 = vpop.f32.mrb[0].mxu0
  %238 = vmatprep.mubr.bf16.mxu0 0
  %239 = vmatmul.mubr.bf16.gmra.mrb[0].mxu0 %v93
  %v240 = vpop.f32.mrb[0].mxu0
  %v241 = vadd.f32 %v52, %v240
  %v242 = vpop.f32.mrb[0].mxu0
  %v243 = vpop.f32.mrb[0].mxu0
  %v244 = vadd.f32 %v52, %v243
  %v245 = vpop.f32.mrb[0].mxu0
  %246 = vdwg.mxu0
  %v247 = vpack.c.bf16 %v188, %v185
  %v248 = vpack.c.bf16 %v196, %v193
  %v249 = vpack.c.bf16 %v204, %v201
  %v250 = vpack.c.bf16 %v212, %v209
  %v251 = vpack.c.bf16 %v220, %v217
  %v252 = vpack.c.bf16 %v228, %v225
  %v253 = vpack.c.bf16 %v236, %v233
  %v254 = vpack.c.bf16 %v244, %v241
  %v263 = vunpack.c.l.b16 %v247
  %v264 = vunpack.c.h.b16 %v247
  %v265 = vunpack.c.l.b16 %v248
  %v266 = vunpack.c.h.b16 %v248
  %v267 = vunpack.c.l.b16 %v249
  %v268 = vunpack.c.h.b16 %v249
  %v269 = vunpack.c.l.b16 %v250
  %v270 = vunpack.c.h.b16 %v250
  %v271 = vunpack.c.l.b16 %v251
  %v272 = vunpack.c.h.b16 %v251
  %v273 = vunpack.c.l.b16 %v252
  %v274 = vunpack.c.h.b16 %v252
  %v275 = vunpack.c.l.b16 %v253
  %v276 = vunpack.c.h.b16 %v253
  %v277 = vunpack.c.l.b16 %v254
  %v278 = vunpack.c.h.b16 %v254
  %v279 = vpack.c.b16 %v263, %v263
  %v280 = vpack.c.b16 %v264, %v264
  %v281 = vpack.c.b16 %v265, %v265
  %v282 = vpack.c.b16 %v266, %v266
  %v283 = vpack.c.b16 %v267, %v267
  %v284 = vpack.c.b16 %v268, %v268
  %v285 = vpack.c.b16 %v269, %v269
  %v286 = vpack.c.b16 %v270, %v270
  %v287 = vpack.c.b16 %v271, %v271
  %v288 = vpack.c.b16 %v272, %v272
  %v289 = vpack.c.b16 %v273, %v273
  %v290 = vpack.c.b16 %v274, %v274
  %v291 = vpack.c.b16 %v275, %v275
  %v292 = vpack.c.b16 %v276, %v276
  %v293 = vpack.c.b16 %v277, %v277
  %v294 = vpack.c.b16 %v278, %v278
  %311 = vst [vmem:[%s3] sm:$0xf] %v279
  %312 = vst [vmem:[%s3 + $0x4] sm:$0xf] %v280
  %313 = vst [vmem:[%s3 + $0x8] sm:$0xf] %v281
  %314 = vst [vmem:[%s3 + $0xc] sm:$0xf] %v282
  %315 = vst [vmem:[%s3 + $0x10] sm:$0xf] %v283
  %316 = vst [vmem:[%s3 + $0x14] sm:$0xf] %v284
  %317 = vst [vmem:[%s3 + $0x18] sm:$0xf] %v285
  %318 = vst [vmem:[%s3 + $0x1c] sm:$0xf] %v286
  %319 = vst [vmem:[%s3 + $0x20] sm:$0xf] %v287
  %320 = vst [vmem:[%s3 + $0x24] sm:$0xf] %v288
  %321 = vst [vmem:[%s3 + $0x28] sm:$0xf] %v289
  %322 = vst [vmem:[%s3 + $0x2c] sm:$0xf] %v290
  %323 = vst [vmem:[%s3 + $0x30] sm:$0xf] %v291
  %324 = vst [vmem:[%s3 + $0x34] sm:$0xf] %v292
  %325 = vst [vmem:[%s3 + $0x38] sm:$0xf] %v293
  %326 = vst [vmem:[%s3 + $0x3c] sm:$0xf] %v294
  // Predicated region
  $region14: #{_lambda_.19} parent=0 // pred_check
    _
  $region15: #{_lambda_.19} parent=0 // pred_check_branch
    %328 = sbr.rel (0) target = $region17
  $region16: #{_lambda_.19} parent=0 // pred_region
    _
  $region17: #{_lambda_.19} parent=0 // pred_fallthru
    _
  // Predicated region
  $region18: #{_lambda_.19} parent=0 // pred_check
    _
  $region19: #{_lambda_.19} parent=0 // pred_check_branch
    %330 = sbr.rel (0) target = $region21
  $region20: #{_lambda_.19} parent=0 // pred_region
    _
  $region21: #{_lambda_.19} parent=0 // pred_fallthru
    _

// kernel: _lambda_.20
$region0: #{_lambda_.20}
  #allocation0 [shape = 'u32[]', space=smem, size = 0x4, offset = 0x4, fixed_abs, tag = 'smem constant byte address 0x4 - core index']
  #allocation1 [shape = 'u32[144,128]{1,0:T(1,128)}', space=vmem, size = 0x12000, scoped, tag = 'internal scratch']
  %s0 = inlined_call_operand.vmem [shape: bf16[128,256], index: 0, kind: input, shape index: {}]
  %s1 = inlined_call_operand.vmem [shape: bf16[256,128], index: 1, kind: input, shape index: {}]
  %s2 = inlined_call_operand.vmem [shape: f32[1,128], index: 2, kind: input, shape index: {}]
  %s3 = inlined_call_operand.vmem [shape: bf16[128,128], index: 3, kind: input, shape index: {}]
  %s4 = inlined_call_operand.vmem [shape: bf16[128,128], index: 4, kind: output, shape index: {}]
  %s5 = sld [smem:[#allocation0]]
  $region26: #{_lambda_.20} parent=0
    _
  %s7 = ssub.s32 1, %s5
  %s8 = scalar_select 0, %s7, %s5
  // Predicated region
  $region2: #{_lambda_.20} parent=0 // pred_check
    _
  $region3: #{_lambda_.20} parent=0 // pred_check_branch
    %10 = sbr.rel (0) target = $region5
  $region4: #{_lambda_.20} parent=0 // pred_region
    _
  $region5: #{_lambda_.20} parent=0 // pred_fallthru
    _
  // Predicated region
  $region6: #{_lambda_.20} parent=0 // pred_check
    _
  $region7: #{_lambda_.20} parent=0 // pred_check_branch
    %12 = sbr.rel (0) target = $region9
  $region8: #{_lambda_.20} parent=0 // pred_region
    _
  $region9: #{_lambda_.20} parent=0 // pred_fallthru
    _
  // Predicated region
  $region10: #{_lambda_.20} parent=0 // pred_check
    _
  $region11: #{_lambda_.20} parent=0 // pred_check_branch
    %14 = sbr.rel (0) target = $region13
  $region12: #{_lambda_.20} parent=0 // pred_region
    _
  $region13: #{_lambda_.20} parent=0 // pred_fallthru
    _
  // Predicated region
  $region14: #{_lambda_.20} parent=0 // pred_check
    _
  $region15: #{_lambda_.20} parent=0 // pred_check_branch
    %16 = sbr.rel (0) target = $region17
  $region16: #{_lambda_.20} parent=0 // pred_region
    _
  $region17: #{_lambda_.20} parent=0 // pred_fallthru
    _
  %v18 = vld [vmem:[%s0] sm:$0xff]
  %v19 = vld [vmem:[%s0 + $0x8] sm:$0xff]
  %v20 = vld [vmem:[%s0 + $0x10] sm:$0xff]
  %v21 = vld [vmem:[%s0 + $0x18] sm:$0xff]
  %v22 = vld [vmem:[%s0 + $0x20] sm:$0xff]
  %v23 = vld [vmem:[%s0 + $0x28] sm:$0xff]
  %v24 = vld [vmem:[%s0 + $0x30] sm:$0xff]
  %v25 = vld [vmem:[%s0 + $0x38] sm:$0xff]
  %v26 = vld [vmem:[%s0 + $0x40] sm:$0xff]
  %v27 = vld [vmem:[%s0 + $0x48] sm:$0xff]
  %v28 = vld [vmem:[%s0 + $0x50] sm:$0xff]
  %v29 = vld [vmem:[%s0 + $0x58] sm:$0xff]
  %v30 = vld [vmem:[%s0 + $0x60] sm:$0xff]
  %v31 = vld [vmem:[%s0 + $0x68] sm:$0xff]
  %v32 = vld [vmem:[%s0 + $0x70] sm:$0xff]
  %v33 = vld [vmem:[%s0 + $0x78] sm:$0xff]
  %v34 = vld [vmem:[%s1] sm:$0xf]
  %v35 = vld [vmem:[%s1 + $0x4] sm:$0xf]
  %v36 = vld [vmem:[%s1 + $0x8] sm:$0xf]
  %v37 = vld [vmem:[%s1 + $0xc] sm:$0xf]
  %v38 = vld [vmem:[%s1 + $0x10] sm:$0xf]
  %v39 = vld [vmem:[%s1 + $0x14] sm:$0xf]
  %v40 = vld [vmem:[%s1 + $0x18] sm:$0xf]
  %v41 = vld [vmem:[%s1 + $0x1c] sm:$0xf]
  %v42 = vld [vmem:[%s1 + $0x20] sm:$0xf]
  %v43 = vld [vmem:[%s1 + $0x24] sm:$0xf]
  %v44 = vld [vmem:[%s1 + $0x28] sm:$0xf]
  %v45 = vld [vmem:[%s1 + $0x2c] sm:$0xf]
  %v46 = vld [vmem:[%s1 + $0x30] sm:$0xf]
  %v47 = vld [vmem:[%s1 + $0x34] sm:$0xf]
  %v48 = vld [vmem:[%s1 + $0x38] sm:$0xf]
  %v49 = vld [vmem:[%s1 + $0x3c] sm:$0xf]
  %v50 = vld [vmem:[%s1 + $0x40] sm:$0xf]
  %v51 = vld [vmem:[%s1 + $0x44] sm:$0xf]
  %v52 = vld [vmem:[%s1 + $0x48] sm:$0xf]
  %v53 = vld [vmem:[%s1 + $0x4c] sm:$0xf]
  %v54 = vld [vmem:[%s1 + $0x50] sm:$0xf]
  %v55 = vld [vmem:[%s1 + $0x54] sm:$0xf]
  %v56 = vld [vmem:[%s1 + $0x58] sm:$0xf]
  %v57 = vld [vmem:[%s1 + $0x5c] sm:$0xf]
  %v58 = vld [vmem:[%s1 + $0x60] sm:$0xf]
  %v59 = vld [vmem:[%s1 + $0x64] sm:$0xf]
  %v60 = vld [vmem:[%s1 + $0x68] sm:$0xf]
  %v61 = vld [vmem:[%s1 + $0x6c] sm:$0xf]
  %v62 = vld [vmem:[%s1 + $0x70] sm:$0xf]
  %v63 = vld [vmem:[%s1 + $0x74] sm:$0xf]
  %v64 = vld [vmem:[%s1 + $0x78] sm:$0xf]
  %v65 = vld [vmem:[%s1 + $0x7c] sm:$0xf]
  %v66 = vld [vmem:[%s2] sm:$0x1]
  %v68 = vlaneseq
  %v69 = vshrl.u32 %v68, 7
  %v70 = vsub.s32 0, %v69
  %v71 = vrot.slane %v66, %v70
  %v89 = vunpack.c.l.b16 %v18
  %v90 = vunpack.c.h.b16 %v18
  %v91 = vunpack.c.l.b16 %v19
  %v92 = vunpack.c.h.b16 %v19
  %v93 = vunpack.c.l.b16 %v20
  %v94 = vunpack.c.h.b16 %v20
  %v95 = vunpack.c.l.b16 %v21
  %v96 = vunpack.c.h.b16 %v21
  %v97 = vunpack.c.l.b16 %v22
  %v98 = vunpack.c.h.b16 %v22
  %v99 = vunpack.c.l.b16 %v23
  %v100 = vunpack.c.h.b16 %v23
  %v101 = vunpack.c.l.b16 %v24
  %v102 = vunpack.c.h.b16 %v24
  %v103 = vunpack.c.l.b16 %v25
  %v104 = vunpack.c.h.b16 %v25
  %v105 = vunpack.c.l.b16 %v26
  %v106 = vunpack.c.h.b16 %v26
  %v107 = vunpack.c.l.b16 %v27
  %v108 = vunpack.c.h.b16 %v27
  %v109 = vunpack.c.l.b16 %v28
  %v110 = vunpack.c.h.b16 %v28
  %v111 = vunpack.c.l.b16 %v29
  %v112 = vunpack.c.h.b16 %v29
  %v113 = vunpack.c.l.b16 %v30
  %v114 = vunpack.c.h.b16 %v30
  %v115 = vunpack.c.l.b16 %v31
  %v116 = vunpack.c.h.b16 %v31
  %v117 = vunpack.c.l.b16 %v32
  %v118 = vunpack.c.h.b16 %v32
  %v119 = vunpack.c.l.b16 %v33
  %v120 = vunpack.c.h.b16 %v33
  %v121 = vpack.c.b16 %v91, %v89
  %v122 = vpack.c.b16 %v92, %v90
  %v123 = vpack.c.b16 %v95, %v93
  %v124 = vpack.c.b16 %v96, %v94
  %v125 = vpack.c.b16 %v99, %v97
  %v126 = vpack.c.b16 %v100, %v98
  %v127 = vpack.c.b16 %v103, %v101
  %v128 = vpack.c.b16 %v104, %v102
  %v129 = vpack.c.b16 %v107, %v105
  %v130 = vpack.c.b16 %v108, %v106
  %v131 = vpack.c.b16 %v111, %v109
  %v132 = vpack.c.b16 %v112, %v110
  %v133 = vpack.c.b16 %v115, %v113
  %v134 = vpack.c.b16 %v116, %v114
  %v135 = vpack.c.b16 %v119, %v117
  %v136 = vpack.c.b16 %v120, %v118
  %v185 = vunpack.c.l.b16 %v34
  %v186 = vunpack.c.l.b16 %v35
  %v187 = vunpack.c.l.b16 %v36
  %v188 = vunpack.c.l.b16 %v37
  %v189 = vunpack.c.l.b16 %v38
  %v190 = vunpack.c.l.b16 %v39
  %v191 = vunpack.c.l.b16 %v40
  %v192 = vunpack.c.l.b16 %v41
  %v193 = vunpack.c.l.b16 %v42
  %v194 = vunpack.c.l.b16 %v43
  %v195 = vunpack.c.l.b16 %v44
  %v196 = vunpack.c.l.b16 %v45
  %v197 = vunpack.c.l.b16 %v46
  %v198 = vunpack.c.l.b16 %v47
  %v199 = vunpack.c.l.b16 %v48
  %v200 = vunpack.c.l.b16 %v49
  %v201 = vunpack.c.l.b16 %v50
  %v202 = vunpack.c.l.b16 %v51
  %v203 = vunpack.c.l.b16 %v52
  %v204 = vunpack.c.l.b16 %v53
  %v205 = vunpack.c.l.b16 %v54
  %v206 = vunpack.c.l.b16 %v55
  %v207 = vunpack.c.l.b16 %v56
  %v208 = vunpack.c.l.b16 %v57
  %v209 = vunpack.c.l.b16 %v58
  %v210 = vunpack.c.l.b16 %v59
  %v211 = vunpack.c.l.b16 %v60
  %v212 = vunpack.c.l.b16 %v61
  %v213 = vunpack.c.l.b16 %v62
  %v214 = vunpack.c.l.b16 %v63
  %v215 = vunpack.c.l.b16 %v64
  %v216 = vunpack.c.l.b16 %v65
  %v217 = vpack.c.b16 %v186, %v185
  %v218 = vpack.c.b16 %v188, %v187
  %v219 = vpack.c.b16 %v190, %v189
  %v220 = vpack.c.b16 %v192, %v191
  %v221 = vpack.c.b16 %v194, %v193
  %v222 = vpack.c.b16 %v196, %v195
  %v223 = vpack.c.b16 %v198, %v197
  %v224 = vpack.c.b16 %v200, %v199
  %v225 = vpack.c.b16 %v202, %v201
  %v226 = vpack.c.b16 %v204, %v203
  %v227 = vpack.c.b16 %v206, %v205
  %v228 = vpack.c.b16 %v208, %v207
  %v229 = vpack.c.b16 %v210, %v209
  %v230 = vpack.c.b16 %v212, %v211
  %v231 = vpack.c.b16 %v214, %v213
  %v232 = vpack.c.b16 %v216, %v215
  %249 = vmatprep.subr.bf16.mxu0 0
  %250 = vmatpush1.bf16.msra.mxu0 %v217
  %251 = vmatprep.subr.bf16.mxu0 0
  %252 = vmatpush1.bf16.msra.mxu0 %v218
  %253 = vmatprep.subr.bf16.mxu0 0
  %254 = vmatpush1.bf16.msra.mxu0 %v219
  %255 = vmatprep.subr.bf16.mxu0 0
  %256 = vmatpush1.bf16.msra.mxu0 %v220
  %257 = vmatprep.subr.bf16.mxu0 0
  %258 = vmatpush1.bf16.msra.mxu0 %v221
  %259 = vmatprep.subr.bf16.mxu0 0
  %260 = vmatpush1.bf16.msra.mxu0 %v222
  %261 = vmatprep.subr.bf16.mxu0 0
  %262 = vmatpush1.bf16.msra.mxu0 %v223
  %263 = vmatprep.subr.bf16.mxu0 0
  %264 = vmatpush1.bf16.msra.mxu0 %v224
  %265 = vmatprep.subr.bf16.mxu0 0
  %266 = vmatpush1.bf16.msra.mxu0 %v225
  %267 = vmatprep.subr.bf16.mxu0 0
  %268 = vmatpush1.bf16.msra.mxu0 %v226
  %269 = vmatprep.subr.bf16.mxu0 0
  %270 = vmatpush1.bf16.msra.mxu0 %v227
  %271 = vmatprep.subr.bf16.mxu0 0
  %272 = vmatpush1.bf16.msra.mxu0 %v228
  %273 = vmatprep.subr.bf16.mxu0 0
  %274 = vmatpush1.bf16.msra.mxu0 %v229
  %275 = vmatprep.subr.bf16.mxu0 0
  %276 = vmatpush1.bf16.msra.mxu0 %v230
  %277 = vmatprep.subr.bf16.mxu0 0
  %278 = vmatpush1.bf16.msra.mxu0 %v231
  %279 = vmatprep.subr.bf16.mxu0 0
  %280 = vmatpush1.bf16.msra.mxu0 %v232
  %281 = vmatprep.mubr.bf16.mxu0 %v122
  %282 = vmatmul.mubr.bf16.gmra.mrb[0].mxu0 %v121
  %v283 = vpop.f32.mrb[0].mxu0
  %v284 = vadd.f32 %v71, %v283
  %v285 = vpop.f32.mrb[0].mxu0
  %v286 = vpop.f32.mrb[0].mxu0
  %v287 = vadd.f32 %v71, %v286
  %v288 = vpop.f32.mrb[0].mxu0
  %289 = vmatprep.mubr.bf16.mxu0 %v124
  %290 = vmatmul.mubr.bf16.gmra.mrb[0].mxu0 %v123
  %v291 = vpop.f32.mrb[0].mxu0
  %v292 = vadd.f32 %v71, %v291
  %v293 = vpop.f32.mrb[0].mxu0
  %v294 = vpop.f32.mrb[0].mxu0
  %v295 = vadd.f32 %v71, %v294
  %v296 = vpop.f32.mrb[0].mxu0
  %297 = vmatprep.mubr.bf16.mxu0 %v126
  %298 = vmatmul.mubr.bf16.gmra.mrb[0].mxu0 %v125
  %v299 = vpop.f32.mrb[0].mxu0
  %v300 = vadd.f32 %v71, %v299
  %v301 = vpop.f32.mrb[0].mxu0
  %v302 = vpop.f32.mrb[0].mxu0
  %v303 = vadd.f32 %v71, %v302
  %v304 = vpop.f32.mrb[0].mxu0
  %305 = vmatprep.mubr.bf16.mxu0 %v128
  %306 = vmatmul.mubr.bf16.gmra.mrb[0].mxu0 %v127
  %v307 = vpop.f32.mrb[0].mxu0
  %v308 = vadd.f32 %v71, %v307
  %v309 = vpop.f32.mrb[0].mxu0
  %v310 = vpop.f32.mrb[0].mxu0
  %v311 = vadd.f32 %v71, %v310
  %v312 = vpop.f32.mrb[0].mxu0
  %313 = vmatprep.mubr.bf16.mxu0 %v130
  %314 = vmatmul.mubr.bf16.gmra.mrb[0].mxu0 %v129
  %v315 = vpop.f32.mrb[0].mxu0
  %v316 = vadd.f32 %v71, %v315
  %v317 = vpop.f32.mrb[0].mxu0
  %v318 = vpop.f32.mrb[0].mxu0
  %v319 = vadd.f32 %v71, %v318
  %v320 = vpop.f32.mrb[0].mxu0
  %321 = vmatprep.mubr.bf16.mxu0 %v132
  %322 = vmatmul.mubr.bf16.gmra.mrb[0].mxu0 %v131
  %v323 = vpop.f32.mrb[0].mxu0
  %v324 = vadd.f32 %v71, %v323
  %v325 = vpop.f32.mrb[0].mxu0
  %v326 = vpop.f32.mrb[0].mxu0
  %v327 = vadd.f32 %v71, %v326
  %v328 = vpop.f32.mrb[0].mxu0
  %329 = vmatprep.mubr.bf16.mxu0 %v134
  %330 = vmatmul.mubr.bf16.gmra.mrb[0].mxu0 %v133
  %v331 = vpop.f32.mrb[0].mxu0
  %v332 = vadd.f32 %v71, %v331
  %v333 = vpop.f32.mrb[0].mxu0
  %v334 = vpop.f32.mrb[0].mxu0
  %v335 = vadd.f32 %v71, %v334
  %v336 = vpop.f32.mrb[0].mxu0
  %337 = vmatprep.mubr.bf16.mxu0 %v136
  %338 = vmatmul.mubr.bf16.gmra.mrb[0].mxu0 %v135
  %v339 = vpop.f32.mrb[0].mxu0
  %v340 = vadd.f32 %v71, %v339
  %v341 = vpop.f32.mrb[0].mxu0
  %v342 = vpop.f32.mrb[0].mxu0
  %v343 = vadd.f32 %v71, %v342
  %v344 = vpop.f32.mrb[0].mxu0
  %345 = vdwg.mxu0
  %v346 = vld [vmem:[%s3] sm:$0xf]
  %v347 = vld [vmem:[%s3 + $0x4] sm:$0xf]
  %v348 = vld [vmem:[%s3 + $0x8] sm:$0xf]
  %v349 = vld [vmem:[%s3 + $0xc] sm:$0xf]
  %v350 = vld [vmem:[%s3 + $0x10] sm:$0xf]
  %v351 = vld [vmem:[%s3 + $0x14] sm:$0xf]
  %v352 = vld [vmem:[%s3 + $0x18] sm:$0xf]
  %v353 = vld [vmem:[%s3 + $0x1c] sm:$0xf]
  %v354 = vld [vmem:[%s3 + $0x20] sm:$0xf]
  %v355 = vld [vmem:[%s3 + $0x24] sm:$0xf]
  %v356 = vld [vmem:[%s3 + $0x28] sm:$0xf]
  %v357 = vld [vmem:[%s3 + $0x2c] sm:$0xf]
  %v358 = vld [vmem:[%s3 + $0x30] sm:$0xf]
  %v359 = vld [vmem:[%s3 + $0x34] sm:$0xf]
  %v360 = vld [vmem:[%s3 + $0x38] sm:$0xf]
  %v361 = vld [vmem:[%s3 + $0x3c] sm:$0xf]
  %v362 = vunpack.c.l.bf16 %v346
  %v363 = vunpack.c.l.bf16 %v347
  %v364 = vunpack.c.l.bf16 %v348
  %v365 = vunpack.c.l.bf16 %v349
  %v366 = vunpack.c.l.bf16 %v350
  %v367 = vunpack.c.l.bf16 %v351
  %v368 = vunpack.c.l.bf16 %v352
  %v369 = vunpack.c.l.bf16 %v353
  %v370 = vunpack.c.l.bf16 %v354
  %v371 = vunpack.c.l.bf16 %v355
  %v372 = vunpack.c.l.bf16 %v356
  %v373 = vunpack.c.l.bf16 %v357
  %v374 = vunpack.c.l.bf16 %v358
  %v375 = vunpack.c.l.bf16 %v359
  %v376 = vunpack.c.l.bf16 %v360
  %v377 = vunpack.c.l.bf16 %v361
  %v378 = vadd.f32 %v284, %v362
  %v379 = vadd.f32 %v287, %v363
  %v380 = vadd.f32 %v292, %v364
  %v381 = vadd.f32 %v295, %v365
  %v382 = vadd.f32 %v300, %v366
  %v383 = vadd.f32 %v303, %v367
  %v384 = vadd.f32 %v308, %v368
  %v385 = vadd.f32 %v311, %v369
  %v386 = vadd.f32 %v316, %v370
  %v387 = vadd.f32 %v319, %v371
  %v388 = vadd.f32 %v324, %v372
  %v389 = vadd.f32 %v327, %v373
  %v390 = vadd.f32 %v332, %v374
  %v391 = vadd.f32 %v335, %v375
  %v392 = vadd.f32 %v340, %v376
  %v393 = vadd.f32 %v343, %v377
  %v394 = vmax.f32 %v378, 0.0
  %v395 = vmax.f32 %v379, 0.0
  %v396 = vmax.f32 %v380, 0.0
  %v397 = vmax.f32 %v381, 0.0
  %v398 = vmax.f32 %v382, 0.0
  %v399 = vmax.f32 %v383, 0.0
  %v400 = vmax.f32 %v384, 0.0
  %v401 = vmax.f32 %v385, 0.0
  %v402 = vmax.f32 %v386, 0.0
  %v403 = vmax.f32 %v387, 0.0
  %v404 = vmax.f32 %v388, 0.0
  %v405 = vmax.f32 %v389, 0.0
  %v406 = vmax.f32 %v390, 0.0
  %v407 = vmax.f32 %v391, 0.0
  %v408 = vmax.f32 %v392, 0.0
  %v409 = vmax.f32 %v393, 0.0
  %v410 = vpack.c.bf16 %v395, %v394
  %v411 = vpack.c.bf16 %v397, %v396
  %v412 = vpack.c.bf16 %v399, %v398
  %v413 = vpack.c.bf16 %v401, %v400
  %v414 = vpack.c.bf16 %v403, %v402
  %v415 = vpack.c.bf16 %v405, %v404
  %v416 = vpack.c.bf16 %v407, %v406
  %v417 = vpack.c.bf16 %v409, %v408
  %v426 = vunpack.c.l.b16 %v410
  %v427 = vunpack.c.h.b16 %v410
  %v428 = vunpack.c.l.b16 %v411
  %v429 = vunpack.c.h.b16 %v411
  %v430 = vunpack.c.l.b16 %v412
  %v431 = vunpack.c.h.b16 %v412
  %v432 = vunpack.c.l.b16 %v413
  %v433 = vunpack.c.h.b16 %v413
  %v434 = vunpack.c.l.b16 %v414
  %v435 = vunpack.c.h.b16 %v414
  %v436 = vunpack.c.l.b16 %v415
  %v437 = vunpack.c.h.b16 %v415
  %v438 = vunpack.c.l.b16 %v416
  %v439 = vunpack.c.h.b16 %v416
  %v440 = vunpack.c.l.b16 %v417
  %v441 = vunpack.c.h.b16 %v417
  %v442 = vpack.c.b16 %v426, %v426
  %v443 = vpack.c.b16 %v427, %v427
  %v444 = vpack.c.b16 %v428, %v428
  %v445 = vpack.c.b16 %v429, %v429
  %v446 = vpack.c.b16 %v430, %v430
  %v447 = vpack.c.b16 %v431, %v431
  %v448 = vpack.c.b16 %v432, %v432
  %v449 = vpack.c.b16 %v433, %v433
  %v450 = vpack.c.b16 %v434, %v434
  %v451 = vpack.c.b16 %v435, %v435
  %v452 = vpack.c.b16 %v436, %v436
  %v453 = vpack.c.b16 %v437, %v437
  %v454 = vpack.c.b16 %v438, %v438
  %v455 = vpack.c.b16 %v439, %v439
  %v456 = vpack.c.b16 %v440, %v440
  %v457 = vpack.c.b16 %v441, %v441
  %474 = vst [vmem:[%s4] sm:$0xf] %v442
  %475 = vst [vmem:[%s4 + $0x4] sm:$0xf] %v443
  %476 = vst [vmem:[%s4 + $0x8] sm:$0xf] %v444
  %477 = vst [vmem:[%s4 + $0xc] sm:$0xf] %v445
  %478 = vst [vmem:[%s4 + $0x10] sm:$0xf] %v446
  %479 = vst [vmem:[%s4 + $0x14] sm:$0xf] %v447
  %480 = vst [vmem:[%s4 + $0x18] sm:$0xf] %v448
  %481 = vst [vmem:[%s4 + $0x1c] sm:$0xf] %v449
  %482 = vst [vmem:[%s4 + $0x20] sm:$0xf] %v450
  %483 = vst [vmem:[%s4 + $0x24] sm:$0xf] %v451
  %484 = vst [vmem:[%s4 + $0x28] sm:$0xf] %v452
  %485 = vst [vmem:[%s4 + $0x2c] sm:$0xf] %v453
  %486 = vst [vmem:[%s4 + $0x30] sm:$0xf] %v454
  %487 = vst [vmem:[%s4 + $0x34] sm:$0xf] %v455
  %488 = vst [vmem:[%s4 + $0x38] sm:$0xf] %v456
  %489 = vst [vmem:[%s4 + $0x3c] sm:$0xf] %v457
  // Predicated region
  $region18: #{_lambda_.20} parent=0 // pred_check
    _
  $region19: #{_lambda_.20} parent=0 // pred_check_branch
    %491 = sbr.rel (0) target = $region21
  $region20: #{_lambda_.20} parent=0 // pred_region
    _
  $region21: #{_lambda_.20} parent=0 // pred_fallthru
    _
  // Predicated region
  $region22: #{_lambda_.20} parent=0 // pred_check
    _
  $region23: #{_lambda_.20} parent=0 // pred_check_branch
    %493 = sbr.rel (0) target = $region25
  $region24: #{_lambda_.20} parent=0 // pred_region
    _
  $region25: #{_lambda_.20} parent=0 // pred_fallthru
    _

// kernel: _lambda_.21
$region0: #{_lambda_.21}
  #allocation0 [shape = 'u32[]', space=smem, size = 0x4, offset = 0x4, fixed_abs, tag = 'smem constant byte address 0x4 - core index']
  #allocation1 [shape = 'u32[144,128]{1,0:T(1,128)}', space=vmem, size = 0x12000, scoped, tag = 'internal scratch']
  %s0 = inlined_call_operand.vmem [shape: bf16[32,256], index: 0, kind: input, shape index: {}]
  %s1 = inlined_call_operand.vmem [shape: bf16[256,128], index: 1, kind: input, shape index: {}]
  %s2 = inlined_call_operand.vmem [shape: f32[1,128], index: 2, kind: input, shape index: {}]
  %s3 = inlined_call_operand.vmem [shape: bf16[32,128], index: 3, kind: output, shape index: {}]
  %s4 = sld [smem:[#allocation0]]
  $region22: #{_lambda_.21} parent=0
    _
  %s6 = ssub.s32 1, %s4
  %s7 = scalar_select 0, %s6, %s4
  // Predicated region
  $region2: #{_lambda_.21} parent=0 // pred_check
    _
  $region3: #{_lambda_.21} parent=0 // pred_check_branch
    %9 = sbr.rel (0) target = $region5
  $region4: #{_lambda_.21} parent=0 // pred_region
    _
  $region5: #{_lambda_.21} parent=0 // pred_fallthru
    _
  // Predicated region
  $region6: #{_lambda_.21} parent=0 // pred_check
    _
  $region7: #{_lambda_.21} parent=0 // pred_check_branch
    %11 = sbr.rel (0) target = $region9
  $region8: #{_lambda_.21} parent=0 // pred_region
    _
  $region9: #{_lambda_.21} parent=0 // pred_fallthru
    _
  // Predicated region
  $region10: #{_lambda_.21} parent=0 // pred_check
    _
  $region11: #{_lambda_.21} parent=0 // pred_check_branch
    %13 = sbr.rel (0) target = $region13
  $region12: #{_lambda_.21} parent=0 // pred_region
    _
  $region13: #{_lambda_.21} parent=0 // pred_fallthru
    _
  %v15 = vld [vmem:[%s0] sm:$0xff]
  %v16 = vld [vmem:[%s0 + $0x8] sm:$0xff]
  %v17 = vld [vmem:[%s0 + $0x10] sm:$0xff]
  %v18 = vld [vmem:[%s0 + $0x18] sm:$0xff]
  %v19 = vld [vmem:[%s1] sm:$0xf]
  %v20 = vld [vmem:[%s1 + $0x4] sm:$0xf]
  %v21 = vld [vmem:[%s1 + $0x8] sm:$0xf]
  %v22 = vld [vmem:[%s1 + $0xc] sm:$0xf]
  %v23 = vld [vmem:[%s1 + $0x10] sm:$0xf]
  %v24 = vld [vmem:[%s1 + $0x14] sm:$0xf]
  %v25 = vld [vmem:[%s1 + $0x18] sm:$0xf]
  %v26 = vld [vmem:[%s1 + $0x1c] sm:$0xf]
  %v27 = vld [vmem:[%s1 + $0x20] sm:$0xf]
  %v28 = vld [vmem:[%s1 + $0x24] sm:$0xf]
  %v29 = vld [vmem:[%s1 + $0x28] sm:$0xf]
  %v30 = vld [vmem:[%s1 + $0x2c] sm:$0xf]
  %v31 = vld [vmem:[%s1 + $0x30] sm:$0xf]
  %v32 = vld [vmem:[%s1 + $0x34] sm:$0xf]
  %v33 = vld [vmem:[%s1 + $0x38] sm:$0xf]
  %v34 = vld [vmem:[%s1 + $0x3c] sm:$0xf]
  %v35 = vld [vmem:[%s1 + $0x40] sm:$0xf]
  %v36 = vld [vmem:[%s1 + $0x44] sm:$0xf]
  %v37 = vld [vmem:[%s1 + $0x48] sm:$0xf]
  %v38 = vld [vmem:[%s1 + $0x4c] sm:$0xf]
  %v39 = vld [vmem:[%s1 + $0x50] sm:$0xf]
  %v40 = vld [vmem:[%s1 + $0x54] sm:$0xf]
  %v41 = vld [vmem:[%s1 + $0x58] sm:$0xf]
  %v42 = vld [vmem:[%s1 + $0x5c] sm:$0xf]
  %v43 = vld [vmem:[%s1 + $0x60] sm:$0xf]
  %v44 = vld [vmem:[%s1 + $0x64] sm:$0xf]
  %v45 = vld [vmem:[%s1 + $0x68] sm:$0xf]
  %v46 = vld [vmem:[%s1 + $0x6c] sm:$0xf]
  %v47 = vld [vmem:[%s1 + $0x70] sm:$0xf]
  %v48 = vld [vmem:[%s1 + $0x74] sm:$0xf]
  %v49 = vld [vmem:[%s1 + $0x78] sm:$0xf]
  %v50 = vld [vmem:[%s1 + $0x7c] sm:$0xf]
  %v51 = vld [vmem:[%s2] sm:$0x1]
  %v53 = vlaneseq
  %v54 = vshrl.u32 %v53, 7
  %v55 = vsub.s32 0, %v54
  %v56 = vrot.slane %v51, %v55
  %v62 = vunpack.c.l.b16 %v15
  %v63 = vunpack.c.h.b16 %v15
  %v64 = vunpack.c.l.b16 %v16
  %v65 = vunpack.c.h.b16 %v16
  %v66 = vunpack.c.l.b16 %v17
  %v67 = vunpack.c.h.b16 %v17
  %v68 = vunpack.c.l.b16 %v18
  %v69 = vunpack.c.h.b16 %v18
  %v70 = vpack.c.b16 %v64, %v62
  %v71 = vpack.c.b16 %v65, %v63
  %v72 = vpack.c.b16 %v68, %v66
  %v73 = vpack.c.b16 %v69, %v67
  %v110 = vunpack.c.l.b16 %v19
  %v111 = vunpack.c.l.b16 %v20
  %v112 = vunpack.c.l.b16 %v21
  %v113 = vunpack.c.l.b16 %v22
  %v114 = vunpack.c.l.b16 %v23
  %v115 = vunpack.c.l.b16 %v24
  %v116 = vunpack.c.l.b16 %v25
  %v117 = vunpack.c.l.b16 %v26
  %v118 = vunpack.c.l.b16 %v27
  %v119 = vunpack.c.l.b16 %v28
  %v120 = vunpack.c.l.b16 %v29
  %v121 = vunpack.c.l.b16 %v30
  %v122 = vunpack.c.l.b16 %v31
  %v123 = vunpack.c.l.b16 %v32
  %v124 = vunpack.c.l.b16 %v33
  %v125 = vunpack.c.l.b16 %v34
  %v126 = vunpack.c.l.b16 %v35
  %v127 = vunpack.c.l.b16 %v36
  %v128 = vunpack.c.l.b16 %v37
  %v129 = vunpack.c.l.b16 %v38
  %v130 = vunpack.c.l.b16 %v39
  %v131 = vunpack.c.l.b16 %v40
  %v132 = vunpack.c.l.b16 %v41
  %v133 = vunpack.c.l.b16 %v42
  %v134 = vunpack.c.l.b16 %v43
  %v135 = vunpack.c.l.b16 %v44
  %v136 = vunpack.c.l.b16 %v45
  %v137 = vunpack.c.l.b16 %v46
  %v138 = vunpack.c.l.b16 %v47
  %v139 = vunpack.c.l.b16 %v48
  %v140 = vunpack.c.l.b16 %v49
  %v141 = vunpack.c.l.b16 %v50
  %v142 = vpack.c.b16 %v111, %v110
  %v143 = vpack.c.b16 %v113, %v112
  %v144 = vpack.c.b16 %v115, %v114
  %v145 = vpack.c.b16 %v117, %v116
  %v146 = vpack.c.b16 %v119, %v118
  %v147 = vpack.c.b16 %v121, %v120
  %v148 = vpack.c.b16 %v123, %v122
  %v149 = vpack.c.b16 %v125, %v124
  %v150 = vpack.c.b16 %v127, %v126
  %v151 = vpack.c.b16 %v129, %v128
  %v152 = vpack.c.b16 %v131, %v130
  %v153 = vpack.c.b16 %v133, %v132
  %v154 = vpack.c.b16 %v135, %v134
  %v155 = vpack.c.b16 %v137, %v136
  %v156 = vpack.c.b16 %v139, %v138
  %v157 = vpack.c.b16 %v141, %v140
  %174 = vmatprep.subr.bf16.mxu0 0
  %175 = vmatpush1.bf16.msra.mxu0 %v142
  %176 = vmatprep.subr.bf16.mxu0 0
  %177 = vmatpush1.bf16.msra.mxu0 %v143
  %178 = vmatprep.subr.bf16.mxu0 0
  %179 = vmatpush1.bf16.msra.mxu0 %v144
  %180 = vmatprep.subr.bf16.mxu0 0
  %181 = vmatpush1.bf16.msra.mxu0 %v145
  %182 = vmatprep.subr.bf16.mxu0 0
  %183 = vmatpush1.bf16.msra.mxu0 %v146
  %184 = vmatprep.subr.bf16.mxu0 0
  %185 = vmatpush1.bf16.msra.mxu0 %v147
  %186 = vmatprep.subr.bf16.mxu0 0
  %187 = vmatpush1.bf16.msra.mxu0 %v148
  %188 = vmatprep.subr.bf16.mxu0 0
  %189 = vmatpush1.bf16.msra.mxu0 %v149
  %190 = vmatprep.subr.bf16.mxu0 0
  %191 = vmatpush1.bf16.msra.mxu0 %v150
  %192 = vmatprep.subr.bf16.mxu0 0
  %193 = vmatpush1.bf16.msra.mxu0 %v151
  %194 = vmatprep.subr.bf16.mxu0 0
  %195 = vmatpush1.bf16.msra.mxu0 %v152
  %196 = vmatprep.subr.bf16.mxu0 0
  %197 = vmatpush1.bf16.msra.mxu0 %v153
  %198 = vmatprep.subr.bf16.mxu0 0
  %199 = vmatpush1.bf16.msra.mxu0 %v154
  %200 = vmatprep.subr.bf16.mxu0 0
  %201 = vmatpush1.bf16.msra.mxu0 %v155
  %202 = vmatprep.subr.bf16.mxu0 0
  %203 = vmatpush1.bf16.msra.mxu0 %v156
  %204 = vmatprep.subr.bf16.mxu0 0
  %205 = vmatpush1.bf16.msra.mxu0 %v157
  %206 = vmatprep.mubr.bf16.mxu0 %v71
  %207 = vmatmul.mubr.bf16.gmra.mrb[0].mxu0 %v70
  %v208 = vpop.f32.mrb[0].mxu0
  %v209 = vadd.f32 %v56, %v208
  %v210 = vpop.f32.mrb[0].mxu0
  %v211 = vpop.f32.mrb[0].mxu0
  %v212 = vadd.f32 %v56, %v211
  %v213 = vpop.f32.mrb[0].mxu0
  %214 = vmatprep.mubr.bf16.mxu0 %v73
  %215 = vmatmul.mubr.bf16.gmra.mrb[0].mxu0 %v72
  %v216 = vpop.f32.mrb[0].mxu0
  %v217 = vadd.f32 %v56, %v216
  %v218 = vpop.f32.mrb[0].mxu0
  %v219 = vpop.f32.mrb[0].mxu0
  %v220 = vadd.f32 %v56, %v219
  %v221 = vpop.f32.mrb[0].mxu0
  %222 = vdwg.mxu0
  %v223 = vmax.f32 %v209, 0.0
  %v224 = vmax.f32 %v212, 0.0
  %v225 = vmax.f32 %v217, 0.0
  %v226 = vmax.f32 %v220, 0.0
  %v227 = vpack.c.bf16 %v224, %v223
  %v228 = vpack.c.bf16 %v226, %v225
  %v231 = vunpack.c.l.b16 %v227
  %v232 = vunpack.c.h.b16 %v227
  %v233 = vunpack.c.l.b16 %v228
  %v234 = vunpack.c.h.b16 %v228
  %v235 = vpack.c.b16 %v231, %v231
  %v236 = vpack.c.b16 %v232, %v232
  %v237 = vpack.c.b16 %v233, %v233
  %v238 = vpack.c.b16 %v234, %v234
  %243 = vst [vmem:[%s3] sm:$0xf] %v235
  %244 = vst [vmem:[%s3 + $0x4] sm:$0xf] %v236
  %245 = vst [vmem:[%s3 + $0x8] sm:$0xf] %v237
  %246 = vst [vmem:[%s3 + $0xc] sm:$0xf] %v238
  // Predicated region
  $region14: #{_lambda_.21} parent=0 // pred_check
    _
  $region15: #{_lambda_.21} parent=0 // pred_check_branch
    %248 = sbr.rel (0) target = $region17
  $region16: #{_lambda_.21} parent=0 // pred_region
    _
  $region17: #{_lambda_.21} parent=0 // pred_fallthru
    _
  // Predicated region
  $region18: #{_lambda_.21} parent=0 // pred_check
    _
  $region19: #{_lambda_.21} parent=0 // pred_check_branch
    %250 = sbr.rel (0) target = $region21
  $region20: #{_lambda_.21} parent=0 // pred_region
    _
  $region21: #{_lambda_.21} parent=0 // pred_fallthru
    _

// kernel: _lambda_.22
$region0: #{_lambda_.22}
  #allocation0 [shape = 'u32[]', space=smem, size = 0x4, offset = 0x4, fixed_abs, tag = 'smem constant byte address 0x4 - core index']
  #allocation1 [shape = 'u32[144,128]{1,0:T(1,128)}', space=vmem, size = 0x12000, scoped, tag = 'internal scratch']
  %s0 = inlined_call_operand.vmem [shape: bf16[32,128], index: 0, kind: input, shape index: {}]
  %s1 = inlined_call_operand.vmem [shape: bf16[128,128], index: 1, kind: input, shape index: {}]
  %s2 = inlined_call_operand.vmem [shape: f32[1,128], index: 2, kind: input, shape index: {}]
  %s3 = inlined_call_operand.vmem [shape: bf16[32,128], index: 3, kind: output, shape index: {}]
  %s4 = sld [smem:[#allocation0]]
  $region22: #{_lambda_.22} parent=0
    _
  %s6 = ssub.s32 1, %s4
  %s7 = scalar_select 0, %s6, %s4
  // Predicated region
  $region2: #{_lambda_.22} parent=0 // pred_check
    _
  $region3: #{_lambda_.22} parent=0 // pred_check_branch
    %9 = sbr.rel (0) target = $region5
  $region4: #{_lambda_.22} parent=0 // pred_region
    _
  $region5: #{_lambda_.22} parent=0 // pred_fallthru
    _
  // Predicated region
  $region6: #{_lambda_.22} parent=0 // pred_check
    _
  $region7: #{_lambda_.22} parent=0 // pred_check_branch
    %11 = sbr.rel (0) target = $region9
  $region8: #{_lambda_.22} parent=0 // pred_region
    _
  $region9: #{_lambda_.22} parent=0 // pred_fallthru
    _
  // Predicated region
  $region10: #{_lambda_.22} parent=0 // pred_check
    _
  $region11: #{_lambda_.22} parent=0 // pred_check_branch
    %13 = sbr.rel (0) target = $region13
  $region12: #{_lambda_.22} parent=0 // pred_region
    _
  $region13: #{_lambda_.22} parent=0 // pred_fallthru
    _
  %v15 = vld [vmem:[%s0] sm:$0xf]
  %v16 = vld [vmem:[%s0 + $0x4] sm:$0xf]
  %v17 = vld [vmem:[%s0 + $0x8] sm:$0xf]
  %v18 = vld [vmem:[%s0 + $0xc] sm:$0xf]
  %v19 = vld [vmem:[%s1] sm:$0xf]
  %v20 = vld [vmem:[%s1 + $0x4] sm:$0xf]
  %v21 = vld [vmem:[%s1 + $0x8] sm:$0xf]
  %v22 = vld [vmem:[%s1 + $0xc] sm:$0xf]
  %v23 = vld [vmem:[%s1 + $0x10] sm:$0xf]
  %v24 = vld [vmem:[%s1 + $0x14] sm:$0xf]
  %v25 = vld [vmem:[%s1 + $0x18] sm:$0xf]
  %v26 = vld [vmem:[%s1 + $0x1c] sm:$0xf]
  %v27 = vld [vmem:[%s1 + $0x20] sm:$0xf]
  %v28 = vld [vmem:[%s1 + $0x24] sm:$0xf]
  %v29 = vld [vmem:[%s1 + $0x28] sm:$0xf]
  %v30 = vld [vmem:[%s1 + $0x2c] sm:$0xf]
  %v31 = vld [vmem:[%s1 + $0x30] sm:$0xf]
  %v32 = vld [vmem:[%s1 + $0x34] sm:$0xf]
  %v33 = vld [vmem:[%s1 + $0x38] sm:$0xf]
  %v34 = vld [vmem:[%s1 + $0x3c] sm:$0xf]
  %v35 = vld [vmem:[%s2] sm:$0x1]
  %v37 = vlaneseq
  %v38 = vshrl.u32 %v37, 7
  %v39 = vsub.s32 0, %v38
  %v40 = vrot.slane %v35, %v39
  %v46 = vunpack.c.l.b16 %v15
  %v47 = vunpack.c.l.b16 %v16
  %v48 = vunpack.c.l.b16 %v17
  %v49 = vunpack.c.l.b16 %v18
  %v50 = vpack.c.b16 %v47, %v46
  %v51 = vpack.c.b16 %v49, %v48
  %v70 = vunpack.c.l.b16 %v19
  %v71 = vunpack.c.l.b16 %v20
  %v72 = vunpack.c.l.b16 %v21
  %v73 = vunpack.c.l.b16 %v22
  %v74 = vunpack.c.l.b16 %v23
  %v75 = vunpack.c.l.b16 %v24
  %v76 = vunpack.c.l.b16 %v25
  %v77 = vunpack.c.l.b16 %v26
  %v78 = vunpack.c.l.b16 %v27
  %v79 = vunpack.c.l.b16 %v28
  %v80 = vunpack.c.l.b16 %v29
  %v81 = vunpack.c.l.b16 %v30
  %v82 = vunpack.c.l.b16 %v31
  %v83 = vunpack.c.l.b16 %v32
  %v84 = vunpack.c.l.b16 %v33
  %v85 = vunpack.c.l.b16 %v34
  %v86 = vpack.c.b16 %v71, %v70
  %v87 = vpack.c.b16 %v73, %v72
  %v88 = vpack.c.b16 %v75, %v74
  %v89 = vpack.c.b16 %v77, %v76
  %v90 = vpack.c.b16 %v79, %v78
  %v91 = vpack.c.b16 %v81, %v80
  %v92 = vpack.c.b16 %v83, %v82
  %v93 = vpack.c.b16 %v85, %v84
  %102 = vmatprep.subr.bf16.mxu0 0
  %103 = vmatpush1.bf16.msra.mxu0 %v86
  %104 = vmatprep.subr.bf16.mxu0 0
  %105 = vmatpush1.bf16.msra.mxu0 %v87
  %106 = vmatprep.subr.bf16.mxu0 0
  %107 = vmatpush1.bf16.msra.mxu0 %v88
  %108 = vmatprep.subr.bf16.mxu0 0
  %109 = vmatpush1.bf16.msra.mxu0 %v89
  %110 = vmatprep.subr.bf16.mxu0 0
  %111 = vmatpush1.bf16.msra.mxu0 %v90
  %112 = vmatprep.subr.bf16.mxu0 0
  %113 = vmatpush1.bf16.msra.mxu0 %v91
  %114 = vmatprep.subr.bf16.mxu0 0
  %115 = vmatpush1.bf16.msra.mxu0 %v92
  %116 = vmatprep.subr.bf16.mxu0 0
  %117 = vmatpush1.bf16.msra.mxu0 %v93
  %118 = vmatprep.subr.bf16.mxu0 0
  %119 = vmatpush1.bf16.msra.mxu0 0
  %120 = vmatprep.subr.bf16.mxu0 0
  %121 = vmatpush1.bf16.msra.mxu0 0
  %122 = vmatprep.subr.bf16.mxu0 0
  %123 = vmatpush1.bf16.msra.mxu0 0
  %124 = vmatprep.subr.bf16.mxu0 0
  %125 = vmatpush1.bf16.msra.mxu0 0
  %126 = vmatprep.subr.bf16.mxu0 0
  %127 = vmatpush1.bf16.msra.mxu0 0
  %128 = vmatprep.subr.bf16.mxu0 0
  %129 = vmatpush1.bf16.msra.mxu0 0
  %130 = vmatprep.subr.bf16.mxu0 0
  %131 = vmatpush1.bf16.msra.mxu0 0
  %132 = vmatprep.subr.bf16.mxu0 0
  %133 = vmatpush1.bf16.msra.mxu0 0
  %134 = vmatprep.mubr.bf16.mxu0 0
  %135 = vmatmul.mubr.bf16.gmra.mrb[0].mxu0 %v50
  %v136 = vpop.f32.mrb[0].mxu0
  %v137 = vadd.f32 %v40, %v136
  %v138 = vpop.f32.mrb[0].mxu0
  %v139 = vpop.f32.mrb[0].mxu0
  %v140 = vadd.f32 %v40, %v139
  %v141 = vpop.f32.mrb[0].mxu0
  %142 = vmatprep.mubr.bf16.mxu0 0
  %143 = vmatmul.mubr.bf16.gmra.mrb[0].mxu0 %v51
  %v144 = vpop.f32.mrb[0].mxu0
  %v145 = vadd.f32 %v40, %v144
  %v146 = vpop.f32.mrb[0].mxu0
  %v147 = vpop.f32.mrb[0].mxu0
  %v148 = vadd.f32 %v40, %v147
  %v149 = vpop.f32.mrb[0].mxu0
  %150 = vdwg.mxu0
  %v151 = vpack.c.bf16 %v140, %v137
  %v152 = vpack.c.bf16 %v148, %v145
  %v155 = vunpack.c.l.b16 %v151
  %v156 = vunpack.c.h.b16 %v151
  %v157 = vunpack.c.l.b16 %v152
  %v158 = vunpack.c.h.b16 %v152
  %v159 = vpack.c.b16 %v155, %v155
  %v160 = vpack.c.b16 %v156, %v156
  %v161 = vpack.c.b16 %v157, %v157
  %v162 = vpack.c.b16 %v158, %v158
  %167 = vst [vmem:[%s3] sm:$0xf] %v159
  %168 = vst [vmem:[%s3 + $0x4] sm:$0xf] %v160
  %169 = vst [vmem:[%s3 + $0x8] sm:$0xf] %v161
  %170 = vst [vmem:[%s3 + $0xc] sm:$0xf] %v162
  // Predicated region
  $region14: #{_lambda_.22} parent=0 // pred_check
    _
  $region15: #{_lambda_.22} parent=0 // pred_check_branch
    %172 = sbr.rel (0) target = $region17
  $region16: #{_lambda_.22} parent=0 // pred_region
    _
  $region17: #{_lambda_.22} parent=0 // pred_fallthru
    _
  // Predicated region
  $region18: #{_lambda_.22} parent=0 // pred_check
    _
  $region19: #{_lambda_.22} parent=0 // pred_check_branch
    %174 = sbr.rel (0) target = $region21
  $region20: #{_lambda_.22} parent=0 // pred_region
    _
  $region21: #{_lambda_.22} parent=0 // pred_fallthru
    _

// kernel: _lambda_.23
$region0: #{_lambda_.23}
  #allocation0 [shape = 'u32[]', space=smem, size = 0x4, offset = 0x4, fixed_abs, tag = 'smem constant byte address 0x4 - core index']
  #allocation1 [shape = 'u32[144,128]{1,0:T(1,128)}', space=vmem, size = 0x12000, scoped, tag = 'internal scratch']
  %s0 = inlined_call_operand.vmem [shape: bf16[32,384], index: 0, kind: input, shape index: {}]
  %s1 = inlined_call_operand.vmem [shape: bf16[384,128], index: 1, kind: input, shape index: {}]
  %s2 = inlined_call_operand.vmem [shape: f32[1,128], index: 2, kind: input, shape index: {}]
  %s3 = inlined_call_operand.vmem [shape: bf16[32,128], index: 3, kind: input, shape index: {}]
  %s4 = inlined_call_operand.vmem [shape: bf16[32,128], index: 4, kind: output, shape index: {}]
  %s5 = sld [smem:[#allocation0]]
  $region26: #{_lambda_.23} parent=0
    _
  %s7 = ssub.s32 1, %s5
  %s8 = scalar_select 0, %s7, %s5
  // Predicated region
  $region2: #{_lambda_.23} parent=0 // pred_check
    _
  $region3: #{_lambda_.23} parent=0 // pred_check_branch
    %10 = sbr.rel (0) target = $region5
  $region4: #{_lambda_.23} parent=0 // pred_region
    _
  $region5: #{_lambda_.23} parent=0 // pred_fallthru
    _
  // Predicated region
  $region6: #{_lambda_.23} parent=0 // pred_check
    _
  $region7: #{_lambda_.23} parent=0 // pred_check_branch
    %12 = sbr.rel (0) target = $region9
  $region8: #{_lambda_.23} parent=0 // pred_region
    _
  $region9: #{_lambda_.23} parent=0 // pred_fallthru
    _
  // Predicated region
  $region10: #{_lambda_.23} parent=0 // pred_check
    _
  $region11: #{_lambda_.23} parent=0 // pred_check_branch
    %14 = sbr.rel (0) target = $region13
  $region12: #{_lambda_.23} parent=0 // pred_region
    _
  $region13: #{_lambda_.23} parent=0 // pred_fallthru
    _
  // Predicated region
  $region14: #{_lambda_.23} parent=0 // pred_check
    _
  $region15: #{_lambda_.23} parent=0 // pred_check_branch
    %16 = sbr.rel (0) target = $region17
  $region16: #{_lambda_.23} parent=0 // pred_region
    _
  $region17: #{_lambda_.23} parent=0 // pred_fallthru
    _
  %v18 = vld [vmem:[%s0] sm:$0xff]
  %v19 = vld [vmem:[%s0 + $0x8] sm:$0xf]
  %v20 = vld [vmem:[%s0 + $0xc] sm:$0xff]
  %v21 = vld [vmem:[%s0 + $0x14] sm:$0xf]
  %v22 = vld [vmem:[%s0 + $0x18] sm:$0xff]
  %v23 = vld [vmem:[%s0 + $0x20] sm:$0xf]
  %v24 = vld [vmem:[%s0 + $0x24] sm:$0xff]
  %v25 = vld [vmem:[%s0 + $0x2c] sm:$0xf]
  %v26 = vld [vmem:[%s1] sm:$0xf]
  %v27 = vld [vmem:[%s1 + $0x4] sm:$0xf]
  %v28 = vld [vmem:[%s1 + $0x8] sm:$0xf]
  %v29 = vld [vmem:[%s1 + $0xc] sm:$0xf]
  %v30 = vld [vmem:[%s1 + $0x10] sm:$0xf]
  %v31 = vld [vmem:[%s1 + $0x14] sm:$0xf]
  %v32 = vld [vmem:[%s1 + $0x18] sm:$0xf]
  %v33 = vld [vmem:[%s1 + $0x1c] sm:$0xf]
  %v34 = vld [vmem:[%s1 + $0x20] sm:$0xf]
  %v35 = vld [vmem:[%s1 + $0x24] sm:$0xf]
  %v36 = vld [vmem:[%s1 + $0x28] sm:$0xf]
  %v37 = vld [vmem:[%s1 + $0x2c] sm:$0xf]
  %v38 = vld [vmem:[%s1 + $0x30] sm:$0xf]
  %v39 = vld [vmem:[%s1 + $0x34] sm:$0xf]
  %v40 = vld [vmem:[%s1 + $0x38] sm:$0xf]
  %v41 = vld [vmem:[%s1 + $0x3c] sm:$0xf]
  %v42 = vld [vmem:[%s1 + $0x40] sm:$0xf]
  %v43 = vld [vmem:[%s1 + $0x44] sm:$0xf]
  %v44 = vld [vmem:[%s1 + $0x48] sm:$0xf]
  %v45 = vld [vmem:[%s1 + $0x4c] sm:$0xf]
  %v46 = vld [vmem:[%s1 + $0x50] sm:$0xf]
  %v47 = vld [vmem:[%s1 + $0x54] sm:$0xf]
  %v48 = vld [vmem:[%s1 + $0x58] sm:$0xf]
  %v49 = vld [vmem:[%s1 + $0x5c] sm:$0xf]
  %v50 = vld [vmem:[%s1 + $0x60] sm:$0xf]
  %v51 = vld [vmem:[%s1 + $0x64] sm:$0xf]
  %v52 = vld [vmem:[%s1 + $0x68] sm:$0xf]
  %v53 = vld [vmem:[%s1 + $0x6c] sm:$0xf]
  %v54 = vld [vmem:[%s1 + $0x70] sm:$0xf]
  %v55 = vld [vmem:[%s1 + $0x74] sm:$0xf]
  %v56 = vld [vmem:[%s1 + $0x78] sm:$0xf]
  %v57 = vld [vmem:[%s1 + $0x7c] sm:$0xf]
  %v58 = vld [vmem:[%s1 + $0x80] sm:$0xf]
  %v59 = vld [vmem:[%s1 + $0x84] sm:$0xf]
  %v60 = vld [vmem:[%s1 + $0x88] sm:$0xf]
  %v61 = vld [vmem:[%s1 + $0x8c] sm:$0xf]
  %v62 = vld [vmem:[%s1 + $0x90] sm:$0xf]
  %v63 = vld [vmem:[%s1 + $0x94] sm:$0xf]
  %v64 = vld [vmem:[%s1 + $0x98] sm:$0xf]
  %v65 = vld [vmem:[%s1 + $0x9c] sm:$0xf]
  %v66 = vld [vmem:[%s1 + $0xa0] sm:$0xf]
  %v67 = vld [vmem:[%s1 + $0xa4] sm:$0xf]
  %v68 = vld [vmem:[%s1 + $0xa8] sm:$0xf]
  %v69 = vld [vmem:[%s1 + $0xac] sm:$0xf]
  %v70 = vld [vmem:[%s1 + $0xb0] sm:$0xf]
  %v71 = vld [vmem:[%s1 + $0xb4] sm:$0xf]
  %v72 = vld [vmem:[%s1 + $0xb8] sm:$0xf]
  %v73 = vld [vmem:[%s1 + $0xbc] sm:$0xf]
  %v74 = vld [vmem:[%s2] sm:$0x1]
  %v76 = vlaneseq
  %v77 = vshrl.u32 %v76, 7
  %v78 = vsub.s32 0, %v77
  %v79 = vrot.slane %v74, %v78
  %v89 = vunpack.c.l.b16 %v18
  %v90 = vunpack.c.h.b16 %v18
  %v91 = vunpack.c.l.b16 %v19
  %v92 = vunpack.c.l.b16 %v20
  %v93 = vunpack.c.h.b16 %v20
  %v94 = vunpack.c.l.b16 %v21
  %v95 = vunpack.c.l.b16 %v22
  %v96 = vunpack.c.h.b16 %v22
  %v97 = vunpack.c.l.b16 %v23
  %v98 = vunpack.c.l.b16 %v24
  %v99 = vunpack.c.h.b16 %v24
  %v100 = vunpack.c.l.b16 %v25
  %v101 = vpack.c.b16 %v92, %v89
  %v102 = vpack.c.b16 %v93, %v90
  %v103 = vpack.c.b16 %v94, %v91
  %v104 = vpack.c.b16 %v98, %v95
  %v105 = vpack.c.b16 %v99, %v96
  %v106 = vpack.c.b16 %v100, %v97
  %v161 = vunpack.c.l.b16 %v26
  %v162 = vunpack.c.l.b16 %v27
  %v163 = vunpack.c.l.b16 %v28
  %v164 = vunpack.c.l.b16 %v29
  %v165 = vunpack.c.l.b16 %v30
  %v166 = vunpack.c.l.b16 %v31
  %v167 = vunpack.c.l.b16 %v32
  %v168 = vunpack.c.l.b16 %v33
  %v169 = vunpack.c.l.b16 %v34
  %v170 = vunpack.c.l.b16 %v35
  %v171 = vunpack.c.l.b16 %v36
  %v172 = vunpack.c.l.b16 %v37
  %v173 = vunpack.c.l.b16 %v38
  %v174 = vunpack.c.l.b16 %v39
  %v175 = vunpack.c.l.b16 %v40
  %v176 = vunpack.c.l.b16 %v41
  %v177 = vunpack.c.l.b16 %v42
  %v178 = vunpack.c.l.b16 %v43
  %v179 = vunpack.c.l.b16 %v44
  %v180 = vunpack.c.l.b16 %v45
  %v181 = vunpack.c.l.b16 %v46
  %v182 = vunpack.c.l.b16 %v47
  %v183 = vunpack.c.l.b16 %v48
  %v184 = vunpack.c.l.b16 %v49
  %v185 = vunpack.c.l.b16 %v50
  %v186 = vunpack.c.l.b16 %v51
  %v187 = vunpack.c.l.b16 %v52
  %v188 = vunpack.c.l.b16 %v53
  %v189 = vunpack.c.l.b16 %v54
  %v190 = vunpack.c.l.b16 %v55
  %v191 = vunpack.c.l.b16 %v56
  %v192 = vunpack.c.l.b16 %v57
  %v193 = vunpack.c.l.b16 %v58
  %v194 = vunpack.c.l.b16 %v59
  %v195 = vunpack.c.l.b16 %v60
  %v196 = vunpack.c.l.b16 %v61
  %v197 = vunpack.c.l.b16 %v62
  %v198 = vunpack.c.l.b16 %v63
  %v199 = vunpack.c.l.b16 %v64
  %v200 = vunpack.c.l.b16 %v65
  %v201 = vunpack.c.l.b16 %v66
  %v202 = vunpack.c.l.b16 %v67
  %v203 = vunpack.c.l.b16 %v68
  %v204 = vunpack.c.l.b16 %v69
  %v205 = vunpack.c.l.b16 %v70
  %v206 = vunpack.c.l.b16 %v71
  %v207 = vunpack.c.l.b16 %v72
  %v208 = vunpack.c.l.b16 %v73
  %v209 = vpack.c.b16 %v162, %v161
  %v210 = vpack.c.b16 %v164, %v163
  %v211 = vpack.c.b16 %v166, %v165
  %v212 = vpack.c.b16 %v168, %v167
  %v213 = vpack.c.b16 %v170, %v169
  %v214 = vpack.c.b16 %v172, %v171
  %v215 = vpack.c.b16 %v174, %v173
  %v216 = vpack.c.b16 %v176, %v175
  %v217 = vpack.c.b16 %v178, %v177
  %v218 = vpack.c.b16 %v180, %v179
  %v219 = vpack.c.b16 %v182, %v181
  %v220 = vpack.c.b16 %v184, %v183
  %v221 = vpack.c.b16 %v186, %v185
  %v222 = vpack.c.b16 %v188, %v187
  %v223 = vpack.c.b16 %v190, %v189
  %v224 = vpack.c.b16 %v192, %v191
  %v225 = vpack.c.b16 %v194, %v193
  %v226 = vpack.c.b16 %v196, %v195
  %v227 = vpack.c.b16 %v198, %v197
  %v228 = vpack.c.b16 %v200, %v199
  %v229 = vpack.c.b16 %v202, %v201
  %v230 = vpack.c.b16 %v204, %v203
  %v231 = vpack.c.b16 %v206, %v205
  %v232 = vpack.c.b16 %v208, %v207
  %257 = vmatprep.subr.bf16.mxu0 0
  %258 = vmatpush1.bf16.msra.mxu0 %v209
  %259 = vmatprep.subr.bf16.mxu0 0
  %260 = vmatpush1.bf16.msra.mxu0 %v210
  %261 = vmatprep.subr.bf16.mxu0 0
  %262 = vmatpush1.bf16.msra.mxu0 %v211
  %263 = vmatprep.subr.bf16.mxu0 0
  %264 = vmatpush1.bf16.msra.mxu0 %v212
  %265 = vmatprep.subr.bf16.mxu0 0
  %266 = vmatpush1.bf16.msra.mxu0 %v213
  %267 = vmatprep.subr.bf16.mxu0 0
  %268 = vmatpush1.bf16.msra.mxu0 %v214
  %269 = vmatprep.subr.bf16.mxu0 0
  %270 = vmatpush1.bf16.msra.mxu0 %v215
  %271 = vmatprep.subr.bf16.mxu0 0
  %272 = vmatpush1.bf16.msra.mxu0 %v216
  %273 = vmatprep.subr.bf16.mxu0 0
  %274 = vmatpush1.bf16.msra.mxu0 %v217
  %275 = vmatprep.subr.bf16.mxu0 0
  %276 = vmatpush1.bf16.msra.mxu0 %v218
  %277 = vmatprep.subr.bf16.mxu0 0
  %278 = vmatpush1.bf16.msra.mxu0 %v219
  %279 = vmatprep.subr.bf16.mxu0 0
  %280 = vmatpush1.bf16.msra.mxu0 %v220
  %281 = vmatprep.subr.bf16.mxu0 0
  %282 = vmatpush1.bf16.msra.mxu0 %v221
  %283 = vmatprep.subr.bf16.mxu0 0
  %284 = vmatpush1.bf16.msra.mxu0 %v222
  %285 = vmatprep.subr.bf16.mxu0 0
  %286 = vmatpush1.bf16.msra.mxu0 %v223
  %287 = vmatprep.subr.bf16.mxu0 0
  %288 = vmatpush1.bf16.msra.mxu0 %v224
  %289 = vmatprep.mubr.bf16.mxu0 %v102
  %290 = vmatmul.mubr.bf16.gmra.mrb[0].mxu0 %v101
  %v291 = vpop.f32.mrb[0].mxu0
  %v292 = vadd.f32 %v79, %v291
  %v293 = vpop.f32.mrb[0].mxu0
  %v294 = vpop.f32.mrb[0].mxu0
  %v295 = vadd.f32 %v79, %v294
  %v296 = vpop.f32.mrb[0].mxu0
  %297 = vmatprep.mubr.bf16.mxu0 %v105
  %298 = vmatmul.mubr.bf16.gmra.mrb[0].mxu0 %v104
  %v299 = vpop.f32.mrb[0].mxu0
  %v300 = vadd.f32 %v79, %v299
  %v301 = vpop.f32.mrb[0].mxu0
  %v302 = vpop.f32.mrb[0].mxu0
  %v303 = vadd.f32 %v79, %v302
  %v304 = vpop.f32.mrb[0].mxu0
  %305 = vdwg.mxu0
  %306 = vmatprep.subr.bf16.mxu0 0
  %307 = vmatpush1.bf16.msra.mxu0 %v225
  %308 = vmatprep.subr.bf16.mxu0 0
  %309 = vmatpush1.bf16.msra.mxu0 %v226
  %310 = vmatprep.subr.bf16.mxu0 0
  %311 = vmatpush1.bf16.msra.mxu0 %v227
  %312 = vmatprep.subr.bf16.mxu0 0
  %313 = vmatpush1.bf16.msra.mxu0 %v228
  %314 = vmatprep.subr.bf16.mxu0 0
  %315 = vmatpush1.bf16.msra.mxu0 %v229
  %316 = vmatprep.subr.bf16.mxu0 0
  %317 = vmatpush1.bf16.msra.mxu0 %v230
  %318 = vmatprep.subr.bf16.mxu0 0
  %319 = vmatpush1.bf16.msra.mxu0 %v231
  %320 = vmatprep.subr.bf16.mxu0 0
  %321 = vmatpush1.bf16.msra.mxu0 %v232
  %322 = vmatprep.subr.bf16.mxu0 0
  %323 = vmatpush1.bf16.msra.mxu0 0
  %324 = vmatprep.subr.bf16.mxu0 0
  %325 = vmatpush1.bf16.msra.mxu0 0
  %326 = vmatprep.subr.bf16.mxu0 0
  %327 = vmatpush1.bf16.msra.mxu0 0
  %328 = vmatprep.subr.bf16.mxu0 0
  %329 = vmatpush1.bf16.msra.mxu0 0
  %330 = vmatprep.subr.bf16.mxu0 0
  %331 = vmatpush1.bf16.msra.mxu0 0
  %332 = vmatprep.subr.bf16.mxu0 0
  %333 = vmatpush1.bf16.msra.mxu0 0
  %334 = vmatprep.subr.bf16.mxu0 0
  %335 = vmatpush1.bf16.msra.mxu0 0
  %336 = vmatprep.subr.bf16.mxu0 0
  %337 = vmatpush1.bf16.msra.mxu0 0
  %338 = vmatprep.mubr.bf16.mxu0 0
  %339 = vmatmul.mubr.bf16.gmra.mrb[0].mxu0 %v103
  %v340 = vpop.f32.mrb[0].mxu0
  %v341 = vadd.f32 %v292, %v340
  %v342 = vpop.f32.mrb[0].mxu0
  %v343 = vpop.f32.mrb[0].mxu0
  %v344 = vadd.f32 %v295, %v343
  %v345 = vpop.f32.mrb[0].mxu0
  %346 = vmatprep.mubr.bf16.mxu0 0
  %347 = vmatmul.mubr.bf16.gmra.mrb[0].mxu0 %v106
  %v348 = vpop.f32.mrb[0].mxu0
  %v349 = vadd.f32 %v300, %v348
  %v350 = vpop.f32.mrb[0].mxu0
  %v351 = vpop.f32.mrb[0].mxu0
  %v352 = vadd.f32 %v303, %v351
  %v353 = vpop.f32.mrb[0].mxu0
  %354 = vdwg.mxu0
  %v355 = vld [vmem:[%s3] sm:$0xf]
  %v356 = vld [vmem:[%s3 + $0x4] sm:$0xf]
  %v357 = vld [vmem:[%s3 + $0x8] sm:$0xf]
  %v358 = vld [vmem:[%s3 + $0xc] sm:$0xf]
  %v359 = vunpack.c.l.bf16 %v355
  %v360 = vunpack.c.l.bf16 %v356
  %v361 = vunpack.c.l.bf16 %v357
  %v362 = vunpack.c.l.bf16 %v358
  %v363 = vadd.f32 %v341, %v359
  %v364 = vadd.f32 %v344, %v360
  %v365 = vadd.f32 %v349, %v361
  %v366 = vadd.f32 %v352, %v362
  %v367 = vmax.f32 %v363, 0.0
  %v368 = vmax.f32 %v364, 0.0
  %v369 = vmax.f32 %v365, 0.0
  %v370 = vmax.f32 %v366, 0.0
  %v371 = vpack.c.bf16 %v368, %v367
  %v372 = vpack.c.bf16 %v370, %v369
  %v375 = vunpack.c.l.b16 %v371
  %v376 = vunpack.c.h.b16 %v371
  %v377 = vunpack.c.l.b16 %v372
  %v378 = vunpack.c.h.b16 %v372
  %v379 = vpack.c.b16 %v375, %v375
  %v380 = vpack.c.b16 %v376, %v376
  %v381 = vpack.c.b16 %v377, %v377
  %v382 = vpack.c.b16 %v378, %v378
  %387 = vst [vmem:[%s4] sm:$0xf] %v379
  %388 = vst [vmem:[%s4 + $0x4] sm:$0xf] %v380
  %389 = vst [vmem:[%s4 + $0x8] sm:$0xf] %v381
  %390 = vst [vmem:[%s4 + $0xc] sm:$0xf] %v382
  // Predicated region
  $region18: #{_lambda_.23} parent=0 // pred_check
    _
  $region19: #{_lambda_.23} parent=0 // pred_check_branch
    %392 = sbr.rel (0) target = $region21
  $region20: #{_lambda_.23} parent=0 // pred_region
    _
  $region21: #{_lambda_.23} parent=0 // pred_fallthru
    _
  // Predicated region
  $region22: #{_lambda_.23} parent=0 // pred_check
    _
  $region23: #{_lambda_.23} parent=0 // pred_check_branch
    %394 = sbr.rel (0) target = $region25
  $region24: #{_lambda_.23} parent=0 // pred_region
    _
  $region25: #{_lambda_.23} parent=0 // pred_fallthru
    _

// kernel: _lambda_.24
$region0: #{_lambda_.24}
  #allocation0 [shape = 'u32[]', space=smem, size = 0x4, offset = 0x4, fixed_abs, tag = 'smem constant byte address 0x4 - core index']
  #allocation1 [shape = 'u32[144,128]{1,0:T(1,128)}', space=vmem, size = 0x12000, scoped, tag = 'internal scratch']
  %s0 = inlined_call_operand.vmem [shape: bf16[8,384], index: 0, kind: input, shape index: {}]
  %s1 = inlined_call_operand.vmem [shape: bf16[384,128], index: 1, kind: input, shape index: {}]
  %s2 = inlined_call_operand.vmem [shape: f32[1,128], index: 2, kind: input, shape index: {}]
  %s3 = inlined_call_operand.vmem [shape: bf16[8,128], index: 3, kind: output, shape index: {}]
  %s4 = sld [smem:[#allocation0]]
  $region22: #{_lambda_.24} parent=0
    _
  %s6 = ssub.s32 1, %s4
  %s7 = scalar_select 0, %s6, %s4
  // Predicated region
  $region2: #{_lambda_.24} parent=0 // pred_check
    _
  $region3: #{_lambda_.24} parent=0 // pred_check_branch
    %9 = sbr.rel (0) target = $region5
  $region4: #{_lambda_.24} parent=0 // pred_region
    _
  $region5: #{_lambda_.24} parent=0 // pred_fallthru
    _
  // Predicated region
  $region6: #{_lambda_.24} parent=0 // pred_check
    _
  $region7: #{_lambda_.24} parent=0 // pred_check_branch
    %11 = sbr.rel (0) target = $region9
  $region8: #{_lambda_.24} parent=0 // pred_region
    _
  $region9: #{_lambda_.24} parent=0 // pred_fallthru
    _
  // Predicated region
  $region10: #{_lambda_.24} parent=0 // pred_check
    _
  $region11: #{_lambda_.24} parent=0 // pred_check_branch
    %13 = sbr.rel (0) target = $region13
  $region12: #{_lambda_.24} parent=0 // pred_region
    _
  $region13: #{_lambda_.24} parent=0 // pred_fallthru
    _
  %v15 = vld [vmem:[%s0] sm:$0xff]
  %v16 = vld [vmem:[%s0 + $0x8] sm:$0xf]
  %v17 = vld [vmem:[%s1] sm:$0xf]
  %v18 = vld [vmem:[%s1 + $0x4] sm:$0xf]
  %v19 = vld [vmem:[%s1 + $0x8] sm:$0xf]
  %v20 = vld [vmem:[%s1 + $0xc] sm:$0xf]
  %v21 = vld [vmem:[%s1 + $0x10] sm:$0xf]
  %v22 = vld [vmem:[%s1 + $0x14] sm:$0xf]
  %v23 = vld [vmem:[%s1 + $0x18] sm:$0xf]
  %v24 = vld [vmem:[%s1 + $0x1c] sm:$0xf]
  %v25 = vld [vmem:[%s1 + $0x20] sm:$0xf]
  %v26 = vld [vmem:[%s1 + $0x24] sm:$0xf]
  %v27 = vld [vmem:[%s1 + $0x28] sm:$0xf]
  %v28 = vld [vmem:[%s1 + $0x2c] sm:$0xf]
  %v29 = vld [vmem:[%s1 + $0x30] sm:$0xf]
  %v30 = vld [vmem:[%s1 + $0x34] sm:$0xf]
  %v31 = vld [vmem:[%s1 + $0x38] sm:$0xf]
  %v32 = vld [vmem:[%s1 + $0x3c] sm:$0xf]
  %v33 = vld [vmem:[%s1 + $0x40] sm:$0xf]
  %v34 = vld [vmem:[%s1 + $0x44] sm:$0xf]
  %v35 = vld [vmem:[%s1 + $0x48] sm:$0xf]
  %v36 = vld [vmem:[%s1 + $0x4c] sm:$0xf]
  %v37 = vld [vmem:[%s1 + $0x50] sm:$0xf]
  %v38 = vld [vmem:[%s1 + $0x54] sm:$0xf]
  %v39 = vld [vmem:[%s1 + $0x58] sm:$0xf]
  %v40 = vld [vmem:[%s1 + $0x5c] sm:$0xf]
  %v41 = vld [vmem:[%s1 + $0x60] sm:$0xf]
  %v42 = vld [vmem:[%s1 + $0x64] sm:$0xf]
  %v43 = vld [vmem:[%s1 + $0x68] sm:$0xf]
  %v44 = vld [vmem:[%s1 + $0x6c] sm:$0xf]
  %v45 = vld [vmem:[%s1 + $0x70] sm:$0xf]
  %v46 = vld [vmem:[%s1 + $0x74] sm:$0xf]
  %v47 = vld [vmem:[%s1 + $0x78] sm:$0xf]
  %v48 = vld [vmem:[%s1 + $0x7c] sm:$0xf]
  %v49 = vld [vmem:[%s1 + $0x80] sm:$0xf]
  %v50 = vld [vmem:[%s1 + $0x84] sm:$0xf]
  %v51 = vld [vmem:[%s1 + $0x88] sm:$0xf]
  %v52 = vld [vmem:[%s1 + $0x8c] sm:$0xf]
  %v53 = vld [vmem:[%s1 + $0x90] sm:$0xf]
  %v54 = vld [vmem:[%s1 + $0x94] sm:$0xf]
  %v55 = vld [vmem:[%s1 + $0x98] sm:$0xf]
  %v56 = vld [vmem:[%s1 + $0x9c] sm:$0xf]
  %v57 = vld [vmem:[%s1 + $0xa0] sm:$0xf]
  %v58 = vld [vmem:[%s1 + $0xa4] sm:$0xf]
  %v59 = vld [vmem:[%s1 + $0xa8] sm:$0xf]
  %v60 = vld [vmem:[%s1 + $0xac] sm:$0xf]
  %v61 = vld [vmem:[%s1 + $0xb0] sm:$0xf]
  %v62 = vld [vmem:[%s1 + $0xb4] sm:$0xf]
  %v63 = vld [vmem:[%s1 + $0xb8] sm:$0xf]
  %v64 = vld [vmem:[%s1 + $0xbc] sm:$0xf]
  %v65 = vld [vmem:[%s2] sm:$0x1]
  %v67 = vlaneseq
  %v68 = vshrl.u32 %v67, 7
  %v69 = vsub.s32 0, %v68
  %v70 = vrot.slane %v65, %v69
  %v74 = vunpack.c.l.b16 %v15
  %v75 = vunpack.c.h.b16 %v15
  %v76 = vunpack.c.l.b16 %v16
  %v77 = vpack.c.b16 %v74, %v74
  %v78 = vpack.c.b16 %v75, %v75
  %v79 = vpack.c.b16 %v76, %v76
  %v131 = vunpack.c.l.b16 %v17
  %v132 = vunpack.c.l.b16 %v18
  %v133 = vunpack.c.l.b16 %v19
  %v134 = vunpack.c.l.b16 %v20
  %v135 = vunpack.c.l.b16 %v21
  %v136 = vunpack.c.l.b16 %v22
  %v137 = vunpack.c.l.b16 %v23
  %v138 = vunpack.c.l.b16 %v24
  %v139 = vunpack.c.l.b16 %v25
  %v140 = vunpack.c.l.b16 %v26
  %v141 = vunpack.c.l.b16 %v27
  %v142 = vunpack.c.l.b16 %v28
  %v143 = vunpack.c.l.b16 %v29
  %v144 = vunpack.c.l.b16 %v30
  %v145 = vunpack.c.l.b16 %v31
  %v146 = vunpack.c.l.b16 %v32
  %v147 = vunpack.c.l.b16 %v33
  %v148 = vunpack.c.l.b16 %v34
  %v149 = vunpack.c.l.b16 %v35
  %v150 = vunpack.c.l.b16 %v36
  %v151 = vunpack.c.l.b16 %v37
  %v152 = vunpack.c.l.b16 %v38
  %v153 = vunpack.c.l.b16 %v39
  %v154 = vunpack.c.l.b16 %v40
  %v155 = vunpack.c.l.b16 %v41
  %v156 = vunpack.c.l.b16 %v42
  %v157 = vunpack.c.l.b16 %v43
  %v158 = vunpack.c.l.b16 %v44
  %v159 = vunpack.c.l.b16 %v45
  %v160 = vunpack.c.l.b16 %v46
  %v161 = vunpack.c.l.b16 %v47
  %v162 = vunpack.c.l.b16 %v48
  %v163 = vunpack.c.l.b16 %v49
  %v164 = vunpack.c.l.b16 %v50
  %v165 = vunpack.c.l.b16 %v51
  %v166 = vunpack.c.l.b16 %v52
  %v167 = vunpack.c.l.b16 %v53
  %v168 = vunpack.c.l.b16 %v54
  %v169 = vunpack.c.l.b16 %v55
  %v170 = vunpack.c.l.b16 %v56
  %v171 = vunpack.c.l.b16 %v57
  %v172 = vunpack.c.l.b16 %v58
  %v173 = vunpack.c.l.b16 %v59
  %v174 = vunpack.c.l.b16 %v60
  %v175 = vunpack.c.l.b16 %v61
  %v176 = vunpack.c.l.b16 %v62
  %v177 = vunpack.c.l.b16 %v63
  %v178 = vunpack.c.l.b16 %v64
  %v179 = vpack.c.b16 %v132, %v131
  %v180 = vpack.c.b16 %v134, %v133
  %v181 = vpack.c.b16 %v136, %v135
  %v182 = vpack.c.b16 %v138, %v137
  %v183 = vpack.c.b16 %v140, %v139
  %v184 = vpack.c.b16 %v142, %v141
  %v185 = vpack.c.b16 %v144, %v143
  %v186 = vpack.c.b16 %v146, %v145
  %v187 = vpack.c.b16 %v148, %v147
  %v188 = vpack.c.b16 %v150, %v149
  %v189 = vpack.c.b16 %v152, %v151
  %v190 = vpack.c.b16 %v154, %v153
  %v191 = vpack.c.b16 %v156, %v155
  %v192 = vpack.c.b16 %v158, %v157
  %v193 = vpack.c.b16 %v160, %v159
  %v194 = vpack.c.b16 %v162, %v161
  %v195 = vpack.c.b16 %v164, %v163
  %v196 = vpack.c.b16 %v166, %v165
  %v197 = vpack.c.b16 %v168, %v167
  %v198 = vpack.c.b16 %v170, %v169
  %v199 = vpack.c.b16 %v172, %v171
  %v200 = vpack.c.b16 %v174, %v173
  %v201 = vpack.c.b16 %v176, %v175
  %v202 = vpack.c.b16 %v178, %v177
  %227 = vmatprep.subr.bf16.mxu0 0
  %228 = vmatpush1.bf16.msra.mxu0 %v179
  %229 = vmatprep.subr.bf16.mxu0 0
  %230 = vmatpush1.bf16.msra.mxu0 %v180
  %231 = vmatprep.subr.bf16.mxu0 0
  %232 = vmatpush1.bf16.msra.mxu0 %v181
  %233 = vmatprep.subr.bf16.mxu0 0
  %234 = vmatpush1.bf16.msra.mxu0 %v182
  %235 = vmatprep.subr.bf16.mxu0 0
  %236 = vmatpush1.bf16.msra.mxu0 %v183
  %237 = vmatprep.subr.bf16.mxu0 0
  %238 = vmatpush1.bf16.msra.mxu0 %v184
  %239 = vmatprep.subr.bf16.mxu0 0
  %240 = vmatpush1.bf16.msra.mxu0 %v185
  %241 = vmatprep.subr.bf16.mxu0 0
  %242 = vmatpush1.bf16.msra.mxu0 %v186
  %243 = vmatprep.subr.bf16.mxu0 0
  %244 = vmatpush1.bf16.msra.mxu0 %v187
  %245 = vmatprep.subr.bf16.mxu0 0
  %246 = vmatpush1.bf16.msra.mxu0 %v188
  %247 = vmatprep.subr.bf16.mxu0 0
  %248 = vmatpush1.bf16.msra.mxu0 %v189
  %249 = vmatprep.subr.bf16.mxu0 0
  %250 = vmatpush1.bf16.msra.mxu0 %v190
  %251 = vmatprep.subr.bf16.mxu0 0
  %252 = vmatpush1.bf16.msra.mxu0 %v191
  %253 = vmatprep.subr.bf16.mxu0 0
  %254 = vmatpush1.bf16.msra.mxu0 %v192
  %255 = vmatprep.subr.bf16.mxu0 0
  %256 = vmatpush1.bf16.msra.mxu0 %v193
  %257 = vmatprep.subr.bf16.mxu0 0
  %258 = vmatpush1.bf16.msra.mxu0 %v194
  %259 = vmatprep.mubr.bf16.mxu0 %v78
  %260 = vmatmul.mubr.bf16.gmra.mrb[0].mxu0 %v77
  %v261 = vpop.f32.mrb[0].mxu0
  %v262 = vadd.f32 %v70, %v261
  %v263 = vpop.f32.mrb[0].mxu0
  %v264 = vpop.f32.mrb[0].mxu0
  %v265 = vpop.f32.mrb[0].mxu0
  %266 = vdwg.mxu0
  %267 = vmatprep.subr.bf16.mxu0 0
  %268 = vmatpush1.bf16.msra.mxu0 %v195
  %269 = vmatprep.subr.bf16.mxu0 0
  %270 = vmatpush1.bf16.msra.mxu0 %v196
  %271 = vmatprep.subr.bf16.mxu0 0
  %272 = vmatpush1.bf16.msra.mxu0 %v197
  %273 = vmatprep.subr.bf16.mxu0 0
  %274 = vmatpush1.bf16.msra.mxu0 %v198
  %275 = vmatprep.subr.bf16.mxu0 0
  %276 = vmatpush1.bf16.msra.mxu0 %v199
  %277 = vmatprep.subr.bf16.mxu0 0
  %278 = vmatpush1.bf16.msra.mxu0 %v200
  %279 = vmatprep.subr.bf16.mxu0 0
  %280 = vmatpush1.bf16.msra.mxu0 %v201
  %281 = vmatprep.subr.bf16.mxu0 0
  %282 = vmatpush1.bf16.msra.mxu0 %v202
  %283 = vmatprep.subr.bf16.mxu0 0
  %284 = vmatpush1.bf16.msra.mxu0 0
  %285 = vmatprep.subr.bf16.mxu0 0
  %286 = vmatpush1.bf16.msra.mxu0 0
  %287 = vmatprep.subr.bf16.mxu0 0
  %288 = vmatpush1.bf16.msra.mxu0 0
  %289 = vmatprep.subr.bf16.mxu0 0
  %290 = vmatpush1.bf16.msra.mxu0 0
  %291 = vmatprep.subr.bf16.mxu0 0
  %292 = vmatpush1.bf16.msra.mxu0 0
  %293 = vmatprep.subr.bf16.mxu0 0
  %294 = vmatpush1.bf16.msra.mxu0 0
  %295 = vmatprep.subr.bf16.mxu0 0
  %296 = vmatpush1.bf16.msra.mxu0 0
  %297 = vmatprep.subr.bf16.mxu0 0
  %298 = vmatpush1.bf16.msra.mxu0 0
  %299 = vmatprep.mubr.bf16.mxu0 0
  %300 = vmatmul.mubr.bf16.gmra.mrb[0].mxu0 %v79
  %v301 = vpop.f32.mrb[0].mxu0
  %v302 = vadd.f32 %v262, %v301
  %v303 = vpop.f32.mrb[0].mxu0
  %v304 = vpop.f32.mrb[0].mxu0
  %v305 = vpop.f32.mrb[0].mxu0
  %306 = vdwg.mxu0
  %v307 = vmax.f32 %v302, 0.0
  %v308 = vpack.c.bf16 %v307, %v307
  %309 = vst [vmem:[%s3] sm:$0xf] %v308
  // Predicated region
  $region14: #{_lambda_.24} parent=0 // pred_check
    _
  $region15: #{_lambda_.24} parent=0 // pred_check_branch
    %311 = sbr.rel (0) target = $region17
  $region16: #{_lambda_.24} parent=0 // pred_region
    _
  $region17: #{_lambda_.24} parent=0 // pred_fallthru
    _
  // Predicated region
  $region18: #{_lambda_.24} parent=0 // pred_check
    _
  $region19: #{_lambda_.24} parent=0 // pred_check_branch
    %313 = sbr.rel (0) target = $region21
  $region20: #{_lambda_.24} parent=0 // pred_region
    _
  $region21: #{_lambda_.24} parent=0 // pred_fallthru
    _

// kernel: _lambda_.26
$region0: #{_lambda_.26}
  #allocation0 [shape = 'u32[]', space=smem, size = 0x4, offset = 0x4, fixed_abs, tag = 'smem constant byte address 0x4 - core index']
  #allocation1 [shape = 'u32[144,128]{1,0:T(1,128)}', space=vmem, size = 0x12000, scoped, tag = 'internal scratch']
  %s0 = inlined_call_operand.vmem [shape: bf16[8,640], index: 0, kind: input, shape index: {}]
  %s1 = inlined_call_operand.vmem [shape: bf16[640,128], index: 1, kind: input, shape index: {}]
  %s2 = inlined_call_operand.vmem [shape: f32[1,128], index: 2, kind: input, shape index: {}]
  %s3 = inlined_call_operand.vmem [shape: bf16[8,128], index: 3, kind: input, shape index: {}]
  %s4 = inlined_call_operand.vmem [shape: bf16[8,128], index: 4, kind: output, shape index: {}]
  %s5 = sld [smem:[#allocation0]]
  $region26: #{_lambda_.26} parent=0
    _
  %s7 = ssub.s32 1, %s5
  %s8 = scalar_select 0, %s7, %s5
  // Predicated region
  $region2: #{_lambda_.26} parent=0 // pred_check
    _
  $region3: #{_lambda_.26} parent=0 // pred_check_branch
    %10 = sbr.rel (0) target = $region5
  $region4: #{_lambda_.26} parent=0 // pred_region
    _
  $region5: #{_lambda_.26} parent=0 // pred_fallthru
    _
  // Predicated region
  $region6: #{_lambda_.26} parent=0 // pred_check
    _
  $region7: #{_lambda_.26} parent=0 // pred_check_branch
    %12 = sbr.rel (0) target = $region9
  $region8: #{_lambda_.26} parent=0 // pred_region
    _
  $region9: #{_lambda_.26} parent=0 // pred_fallthru
    _
  // Predicated region
  $region10: #{_lambda_.26} parent=0 // pred_check
    _
  $region11: #{_lambda_.26} parent=0 // pred_check_branch
    %14 = sbr.rel (0) target = $region13
  $region12: #{_lambda_.26} parent=0 // pred_region
    _
  $region13: #{_lambda_.26} parent=0 // pred_fallthru
    _
  // Predicated region
  $region14: #{_lambda_.26} parent=0 // pred_check
    _
  $region15: #{_lambda_.26} parent=0 // pred_check_branch
    %16 = sbr.rel (0) target = $region17
  $region16: #{_lambda_.26} parent=0 // pred_region
    _
  $region17: #{_lambda_.26} parent=0 // pred_fallthru
    _
  %v18 = vld [vmem:[%s0] sm:$0xff]
  %v19 = vld [vmem:[%s0 + $0x8] sm:$0xff]
  %v20 = vld [vmem:[%s0 + $0x10] sm:$0xf]
  %v21 = vld [vmem:[%s1] sm:$0xf]
  %v22 = vld [vmem:[%s1 + $0x4] sm:$0xf]
  %v23 = vld [vmem:[%s1 + $0x8] sm:$0xf]
  %v24 = vld [vmem:[%s1 + $0xc] sm:$0xf]
  %v25 = vld [vmem:[%s1 + $0x10] sm:$0xf]
  %v26 = vld [vmem:[%s1 + $0x14] sm:$0xf]
  %v27 = vld [vmem:[%s1 + $0x18] sm:$0xf]
  %v28 = vld [vmem:[%s1 + $0x1c] sm:$0xf]
  %v29 = vld [vmem:[%s1 + $0x20] sm:$0xf]
  %v30 = vld [vmem:[%s1 + $0x24] sm:$0xf]
  %v31 = vld [vmem:[%s1 + $0x28] sm:$0xf]
  %v32 = vld [vmem:[%s1 + $0x2c] sm:$0xf]
  %v33 = vld [vmem:[%s1 + $0x30] sm:$0xf]
  %v34 = vld [vmem:[%s1 + $0x34] sm:$0xf]
  %v35 = vld [vmem:[%s1 + $0x38] sm:$0xf]
  %v36 = vld [vmem:[%s1 + $0x3c] sm:$0xf]
  %v37 = vld [vmem:[%s1 + $0x40] sm:$0xf]
  %v38 = vld [vmem:[%s1 + $0x44] sm:$0xf]
  %v39 = vld [vmem:[%s1 + $0x48] sm:$0xf]
  %v40 = vld [vmem:[%s1 + $0x4c] sm:$0xf]
  %v41 = vld [vmem:[%s1 + $0x50] sm:$0xf]
  %v42 = vld [vmem:[%s1 + $0x54] sm:$0xf]
  %v43 = vld [vmem:[%s1 + $0x58] sm:$0xf]
  %v44 = vld [vmem:[%s1 + $0x5c] sm:$0xf]
  %v45 = vld [vmem:[%s1 + $0x60] sm:$0xf]
  %v46 = vld [vmem:[%s1 + $0x64] sm:$0xf]
  %v47 = vld [vmem:[%s1 + $0x68] sm:$0xf]
  %v48 = vld [vmem:[%s1 + $0x6c] sm:$0xf]
  %v49 = vld [vmem:[%s1 + $0x70] sm:$0xf]
  %v50 = vld [vmem:[%s1 + $0x74] sm:$0xf]
  %v51 = vld [vmem:[%s1 + $0x78] sm:$0xf]
  %v52 = vld [vmem:[%s1 + $0x7c] sm:$0xf]
  %v53 = vld [vmem:[%s1 + $0x80] sm:$0xf]
  %v54 = vld [vmem:[%s1 + $0x84] sm:$0xf]
  %v55 = vld [vmem:[%s1 + $0x88] sm:$0xf]
  %v56 = vld [vmem:[%s1 + $0x8c] sm:$0xf]
  %v57 = vld [vmem:[%s1 + $0x90] sm:$0xf]
  %v58 = vld [vmem:[%s1 + $0x94] sm:$0xf]
  %v59 = vld [vmem:[%s1 + $0x98] sm:$0xf]
  %v60 = vld [vmem:[%s1 + $0x9c] sm:$0xf]
  %v61 = vld [vmem:[%s1 + $0xa0] sm:$0xf]
  %v62 = vld [vmem:[%s1 + $0xa4] sm:$0xf]
  %v63 = vld [vmem:[%s1 + $0xa8] sm:$0xf]
  %v64 = vld [vmem:[%s1 + $0xac] sm:$0xf]
  %v65 = vld [vmem:[%s1 + $0xb0] sm:$0xf]
  %v66 = vld [vmem:[%s1 + $0xb4] sm:$0xf]
  %v67 = vld [vmem:[%s1 + $0xb8] sm:$0xf]
  %v68 = vld [vmem:[%s1 + $0xbc] sm:$0xf]
  %v69 = vld [vmem:[%s1 + $0xc0] sm:$0xf]
  %v70 = vld [vmem:[%s1 + $0xc4] sm:$0xf]
  %v71 = vld [vmem:[%s1 + $0xc8] sm:$0xf]
  %v72 = vld [vmem:[%s1 + $0xcc] sm:$0xf]
  %v73 = vld [vmem:[%s1 + $0xd0] sm:$0xf]
  %v74 = vld [vmem:[%s1 + $0xd4] sm:$0xf]
  %v75 = vld [vmem:[%s1 + $0xd8] sm:$0xf]
  %v76 = vld [vmem:[%s1 + $0xdc] sm:$0xf]
  %v77 = vld [vmem:[%s1 + $0xe0] sm:$0xf]
  %v78 = vld [vmem:[%s1 + $0xe4] sm:$0xf]
  %v79 = vld [vmem:[%s1 + $0xe8] sm:$0xf]
  %v80 = vld [vmem:[%s1 + $0xec] sm:$0xf]
  %v81 = vld [vmem:[%s1 + $0xf0] sm:$0xf]
  %v82 = vld [vmem:[%s1 + $0xf4] sm:$0xf]
  %v83 = vld [vmem:[%s1 + $0xf8] sm:$0xf]
  %v84 = vld [vmem:[%s1 + $0xfc] sm:$0xf]
  %v85 = vld [vmem:[%s1 + $0x100] sm:$0xf]
  %v86 = vld [vmem:[%s1 + $0x104] sm:$0xf]
  %v87 = vld [vmem:[%s1 + $0x108] sm:$0xf]
  %v88 = vld [vmem:[%s1 + $0x10c] sm:$0xf]
  %v89 = vld [vmem:[%s1 + $0x110] sm:$0xf]
  %v90 = vld [vmem:[%s1 + $0x114] sm:$0xf]
  %v91 = vld [vmem:[%s1 + $0x118] sm:$0xf]
  %v92 = vld [vmem:[%s1 + $0x11c] sm:$0xf]
  %v93 = vld [vmem:[%s1 + $0x120] sm:$0xf]
  %v94 = vld [vmem:[%s1 + $0x124] sm:$0xf]
  %v95 = vld [vmem:[%s1 + $0x128] sm:$0xf]
  %v96 = vld [vmem:[%s1 + $0x12c] sm:$0xf]
  %v97 = vld [vmem:[%s1 + $0x130] sm:$0xf]
  %v98 = vld [vmem:[%s1 + $0x134] sm:$0xf]
  %v99 = vld [vmem:[%s1 + $0x138] sm:$0xf]
  %v100 = vld [vmem:[%s1 + $0x13c] sm:$0xf]
  %v101 = vld [vmem:[%s2] sm:$0x1]
  %v103 = vlaneseq
  %v104 = vshrl.u32 %v103, 7
  %v105 = vsub.s32 0, %v104
  %v106 = vrot.slane %v101, %v105
  %v111 = vunpack.c.l.b16 %v18
  %v112 = vunpack.c.h.b16 %v18
  %v113 = vunpack.c.l.b16 %v19
  %v114 = vunpack.c.h.b16 %v19
  %v115 = vunpack.c.l.b16 %v20
  %v116 = vpack.c.b16 %v111, %v111
  %v117 = vpack.c.b16 %v112, %v112
  %v118 = vpack.c.b16 %v113, %v113
  %v119 = vpack.c.b16 %v114, %v114
  %v120 = vpack.c.b16 %v115, %v115
  %v206 = vunpack.c.l.b16 %v21
  %v207 = vunpack.c.l.b16 %v22
  %v208 = vunpack.c.l.b16 %v23
  %v209 = vunpack.c.l.b16 %v24
  %v210 = vunpack.c.l.b16 %v25
  %v211 = vunpack.c.l.b16 %v26
  %v212 = vunpack.c.l.b16 %v27
  %v213 = vunpack.c.l.b16 %v28
  %v214 = vunpack.c.l.b16 %v29
  %v215 = vunpack.c.l.b16 %v30
  %v216 = vunpack.c.l.b16 %v31
  %v217 = vunpack.c.l.b16 %v32
  %v218 = vunpack.c.l.b16 %v33
  %v219 = vunpack.c.l.b16 %v34
  %v220 = vunpack.c.l.b16 %v35
  %v221 = vunpack.c.l.b16 %v36
  %v222 = vunpack.c.l.b16 %v37
  %v223 = vunpack.c.l.b16 %v38
  %v224 = vunpack.c.l.b16 %v39
  %v225 = vunpack.c.l.b16 %v40
  %v226 = vunpack.c.l.b16 %v41
  %v227 = vunpack.c.l.b16 %v42
  %v228 = vunpack.c.l.b16 %v43
  %v229 = vunpack.c.l.b16 %v44
  %v230 = vunpack.c.l.b16 %v45
  %v231 = vunpack.c.l.b16 %v46
  %v232 = vunpack.c.l.b16 %v47
  %v233 = vunpack.c.l.b16 %v48
  %v234 = vunpack.c.l.b16 %v49
  %v235 = vunpack.c.l.b16 %v50
  %v236 = vunpack.c.l.b16 %v51
  %v237 = vunpack.c.l.b16 %v52
  %v238 = vunpack.c.l.b16 %v53
  %v239 = vunpack.c.l.b16 %v54
  %v240 = vunpack.c.l.b16 %v55
  %v241 = vunpack.c.l.b16 %v56
  %v242 = vunpack.c.l.b16 %v57
  %v243 = vunpack.c.l.b16 %v58
  %v244 = vunpack.c.l.b16 %v59
  %v245 = vunpack.c.l.b16 %v60
  %v246 = vunpack.c.l.b16 %v61
  %v247 = vunpack.c.l.b16 %v62
  %v248 = vunpack.c.l.b16 %v63
  %v249 = vunpack.c.l.b16 %v64
  %v250 = vunpack.c.l.b16 %v65
  %v251 = vunpack.c.l.b16 %v66
  %v252 = vunpack.c.l.b16 %v67
  %v253 = vunpack.c.l.b16 %v68
  %v254 = vunpack.c.l.b16 %v69
  %v255 = vunpack.c.l.b16 %v70
  %v256 = vunpack.c.l.b16 %v71
  %v257 = vunpack.c.l.b16 %v72
  %v258 = vunpack.c.l.b16 %v73
  %v259 = vunpack.c.l.b16 %v74
  %v260 = vunpack.c.l.b16 %v75
  %v261 = vunpack.c.l.b16 %v76
  %v262 = vunpack.c.l.b16 %v77
  %v263 = vunpack.c.l.b16 %v78
  %v264 = vunpack.c.l.b16 %v79
  %v265 = vunpack.c.l.b16 %v80
  %v266 = vunpack.c.l.b16 %v81
  %v267 = vunpack.c.l.b16 %v82
  %v268 = vunpack.c.l.b16 %v83
  %v269 = vunpack.c.l.b16 %v84
  %v270 = vunpack.c.l.b16 %v85
  %v271 = vunpack.c.l.b16 %v86
  %v272 = vunpack.c.l.b16 %v87
  %v273 = vunpack.c.l.b16 %v88
  %v274 = vunpack.c.l.b16 %v89
  %v275 = vunpack.c.l.b16 %v90
  %v276 = vunpack.c.l.b16 %v91
  %v277 = vunpack.c.l.b16 %v92
  %v278 = vunpack.c.l.b16 %v93
  %v279 = vunpack.c.l.b16 %v94
  %v280 = vunpack.c.l.b16 %v95
  %v281 = vunpack.c.l.b16 %v96
  %v282 = vunpack.c.l.b16 %v97
  %v283 = vunpack.c.l.b16 %v98
  %v284 = vunpack.c.l.b16 %v99
  %v285 = vunpack.c.l.b16 %v100
  %v286 = vpack.c.b16 %v207, %v206
  %v287 = vpack.c.b16 %v209, %v208
  %v288 = vpack.c.b16 %v211, %v210
  %v289 = vpack.c.b16 %v213, %v212
  %v290 = vpack.c.b16 %v215, %v214
  %v291 = vpack.c.b16 %v217, %v216
  %v292 = vpack.c.b16 %v219, %v218
  %v293 = vpack.c.b16 %v221, %v220
  %v294 = vpack.c.b16 %v223, %v222
  %v295 = vpack.c.b16 %v225, %v224
  %v296 = vpack.c.b16 %v227, %v226
  %v297 = vpack.c.b16 %v229, %v228
  %v298 = vpack.c.b16 %v231, %v230
  %v299 = vpack.c.b16 %v233, %v232
  %v300 = vpack.c.b16 %v235, %v234
  %v301 = vpack.c.b16 %v237, %v236
  %v302 = vpack.c.b16 %v239, %v238
  %v303 = vpack.c.b16 %v241, %v240
  %v304 = vpack.c.b16 %v243, %v242
  %v305 = vpack.c.b16 %v245, %v244
  %v306 = vpack.c.b16 %v247, %v246
  %v307 = vpack.c.b16 %v249, %v248
  %v308 = vpack.c.b16 %v251, %v250
  %v309 = vpack.c.b16 %v253, %v252
  %v310 = vpack.c.b16 %v255, %v254
  %v311 = vpack.c.b16 %v257, %v256
  %v312 = vpack.c.b16 %v259, %v258
  %v313 = vpack.c.b16 %v261, %v260
  %v314 = vpack.c.b16 %v263, %v262
  %v315 = vpack.c.b16 %v265, %v264
  %v316 = vpack.c.b16 %v267, %v266
  %v317 = vpack.c.b16 %v269, %v268
  %v318 = vpack.c.b16 %v271, %v270
  %v319 = vpack.c.b16 %v273, %v272
  %v320 = vpack.c.b16 %v275, %v274
  %v321 = vpack.c.b16 %v277, %v276
  %v322 = vpack.c.b16 %v279, %v278
  %v323 = vpack.c.b16 %v281, %v280
  %v324 = vpack.c.b16 %v283, %v282
  %v325 = vpack.c.b16 %v285, %v284
  %366 = vmatprep.subr.bf16.mxu0 0
  %367 = vmatpush1.bf16.msra.mxu0 %v286
  %368 = vmatprep.subr.bf16.mxu0 0
  %369 = vmatpush1.bf16.msra.mxu0 %v287
  %370 = vmatprep.subr.bf16.mxu0 0
  %371 = vmatpush1.bf16.msra.mxu0 %v288
  %372 = vmatprep.subr.bf16.mxu0 0
  %373 = vmatpush1.bf16.msra.mxu0 %v289
  %374 = vmatprep.subr.bf16.mxu0 0
  %375 = vmatpush1.bf16.msra.mxu0 %v290
  %376 = vmatprep.subr.bf16.mxu0 0
  %377 = vmatpush1.bf16.msra.mxu0 %v291
  %378 = vmatprep.subr.bf16.mxu0 0
  %379 = vmatpush1.bf16.msra.mxu0 %v292
  %380 = vmatprep.subr.bf16.mxu0 0
  %381 = vmatpush1.bf16.msra.mxu0 %v293
  %382 = vmatprep.subr.bf16.mxu0 0
  %383 = vmatpush1.bf16.msra.mxu0 %v294
  %384 = vmatprep.subr.bf16.mxu0 0
  %385 = vmatpush1.bf16.msra.mxu0 %v295
  %386 = vmatprep.subr.bf16.mxu0 0
  %387 = vmatpush1.bf16.msra.mxu0 %v296
  %388 = vmatprep.subr.bf16.mxu0 0
  %389 = vmatpush1.bf16.msra.mxu0 %v297
  %390 = vmatprep.subr.bf16.mxu0 0
  %391 = vmatpush1.bf16.msra.mxu0 %v298
  %392 = vmatprep.subr.bf16.mxu0 0
  %393 = vmatpush1.bf16.msra.mxu0 %v299
  %394 = vmatprep.subr.bf16.mxu0 0
  %395 = vmatpush1.bf16.msra.mxu0 %v300
  %396 = vmatprep.subr.bf16.mxu0 0
  %397 = vmatpush1.bf16.msra.mxu0 %v301
  %398 = vmatprep.mubr.bf16.mxu0 %v117
  %399 = vmatmul.mubr.bf16.gmra.mrb[0].mxu0 %v116
  %v400 = vpop.f32.mrb[0].mxu0
  %v401 = vadd.f32 %v106, %v400
  %v402 = vpop.f32.mrb[0].mxu0
  %v403 = vpop.f32.mrb[0].mxu0
  %v404 = vpop.f32.mrb[0].mxu0
  %405 = vdwg.mxu0
  %406 = vmatprep.subr.bf16.mxu0 0
  %407 = vmatpush1.bf16.msra.mxu0 %v302
  %408 = vmatprep.subr.bf16.mxu0 0
  %409 = vmatpush1.bf16.msra.mxu0 %v303
  %410 = vmatprep.subr.bf16.mxu0 0
  %411 = vmatpush1.bf16.msra.mxu0 %v304
  %412 = vmatprep.subr.bf16.mxu0 0
  %413 = vmatpush1.bf16.msra.mxu0 %v305
  %414 = vmatprep.subr.bf16.mxu0 0
  %415 = vmatpush1.bf16.msra.mxu0 %v306
  %416 = vmatprep.subr.bf16.mxu0 0
  %417 = vmatpush1.bf16.msra.mxu0 %v307
  %418 = vmatprep.subr.bf16.mxu0 0
  %419 = vmatpush1.bf16.msra.mxu0 %v308
  %420 = vmatprep.subr.bf16.mxu0 0
  %421 = vmatpush1.bf16.msra.mxu0 %v309
  %422 = vmatprep.subr.bf16.mxu0 0
  %423 = vmatpush1.bf16.msra.mxu0 %v310
  %424 = vmatprep.subr.bf16.mxu0 0
  %425 = vmatpush1.bf16.msra.mxu0 %v311
  %426 = vmatprep.subr.bf16.mxu0 0
  %427 = vmatpush1.bf16.msra.mxu0 %v312
  %428 = vmatprep.subr.bf16.mxu0 0
  %429 = vmatpush1.bf16.msra.mxu0 %v313
  %430 = vmatprep.subr.bf16.mxu0 0
  %431 = vmatpush1.bf16.msra.mxu0 %v314
  %432 = vmatprep.subr.bf16.mxu0 0
  %433 = vmatpush1.bf16.msra.mxu0 %v315
  %434 = vmatprep.subr.bf16.mxu0 0
  %435 = vmatpush1.bf16.msra.mxu0 %v316
  %436 = vmatprep.subr.bf16.mxu0 0
  %437 = vmatpush1.bf16.msra.mxu0 %v317
  %438 = vmatprep.mubr.bf16.mxu0 %v119
  %439 = vmatmul.mubr.bf16.gmra.mrb[0].mxu0 %v118
  %v440 = vpop.f32.mrb[0].mxu0
  %v441 = vadd.f32 %v401, %v440
  %v442 = vpop.f32.mrb[0].mxu0
  %v443 = vpop.f32.mrb[0].mxu0
  %v444 = vpop.f32.mrb[0].mxu0
  %445 = vdwg.mxu0
  %446 = vmatprep.subr.bf16.mxu0 0
  %447 = vmatpush1.bf16.msra.mxu0 %v318
  %448 = vmatprep.subr.bf16.mxu0 0
  %449 = vmatpush1.bf16.msra.mxu0 %v319
  %450 = vmatprep.subr.bf16.mxu0 0
  %451 = vmatpush1.bf16.msra.mxu0 %v320
  %452 = vmatprep.subr.bf16.mxu0 0
  %453 = vmatpush1.bf16.msra.mxu0 %v321
  %454 = vmatprep.subr.bf16.mxu0 0
  %455 = vmatpush1.bf16.msra.mxu0 %v322
  %456 = vmatprep.subr.bf16.mxu0 0
  %457 = vmatpush1.bf16.msra.mxu0 %v323
  %458 = vmatprep.subr.bf16.mxu0 0
  %459 = vmatpush1.bf16.msra.mxu0 %v324
  %460 = vmatprep.subr.bf16.mxu0 0
  %461 = vmatpush1.bf16.msra.mxu0 %v325
  %462 = vmatprep.subr.bf16.mxu0 0
  %463 = vmatpush1.bf16.msra.mxu0 0
  %464 = vmatprep.subr.bf16.mxu0 0
  %465 = vmatpush1.bf16.msra.mxu0 0
  %466 = vmatprep.subr.bf16.mxu0 0
  %467 = vmatpush1.bf16.msra.mxu0 0
  %468 = vmatprep.subr.bf16.mxu0 0
  %469 = vmatpush1.bf16.msra.mxu0 0
  %470 = vmatprep.subr.bf16.mxu0 0
  %471 = vmatpush1.bf16.msra.mxu0 0
  %472 = vmatprep.subr.bf16.mxu0 0
  %473 = vmatpush1.bf16.msra.mxu0 0
  %474 = vmatprep.subr.bf16.mxu0 0
  %475 = vmatpush1.bf16.msra.mxu0 0
  %476 = vmatprep.subr.bf16.mxu0 0
  %477 = vmatpush1.bf16.msra.mxu0 0
  %478 = vmatprep.mubr.bf16.mxu0 0
  %479 = vmatmul.mubr.bf16.gmra.mrb[0].mxu0 %v120
  %v480 = vpop.f32.mrb[0].mxu0
  %v481 = vadd.f32 %v441, %v480
  %v482 = vpop.f32.mrb[0].mxu0
  %v483 = vpop.f32.mrb[0].mxu0
  %v484 = vpop.f32.mrb[0].mxu0
  %485 = vdwg.mxu0
  %v486 = vld [vmem:[%s3] sm:$0xf]
  %v487 = vunpack.c.l.bf16 %v486
  %v488 = vadd.f32 %v481, %v487
  %v489 = vmax.f32 %v488, 0.0
  %v490 = vpack.c.bf16 %v489, %v489
  %491 = vst [vmem:[%s4] sm:$0xf] %v490
  // Predicated region
  $region18: #{_lambda_.26} parent=0 // pred_check
    _
  $region19: #{_lambda_.26} parent=0 // pred_check_branch
    %493 = sbr.rel (0) target = $region21
  $region20: #{_lambda_.26} parent=0 // pred_region
    _
  $region21: #{_lambda_.26} parent=0 // pred_fallthru
    _
  // Predicated region
  $region22: #{_lambda_.26} parent=0 // pred_check
    _
  $region23: #{_lambda_.26} parent=0 // pred_check_branch
    %495 = sbr.rel (0) target = $region25
  $region24: #{_lambda_.26} parent=0 // pred_region
    _
  $region25: #{_lambda_.26} parent=0 // pred_fallthru
    _

// kernel: _lambda_.25
$region0: #{_lambda_.25}
  #allocation0 [shape = 'u32[]', space=smem, size = 0x4, offset = 0x4, fixed_abs, tag = 'smem constant byte address 0x4 - core index']
  #allocation1 [shape = 'u32[144,128]{1,0:T(1,128)}', space=vmem, size = 0x12000, scoped, tag = 'internal scratch']
  %s0 = inlined_call_operand.vmem [shape: bf16[8,128], index: 0, kind: input, shape index: {}]
  %s1 = inlined_call_operand.vmem [shape: bf16[128,128], index: 1, kind: input, shape index: {}]
  %s2 = inlined_call_operand.vmem [shape: f32[1,128], index: 2, kind: input, shape index: {}]
  %s3 = inlined_call_operand.vmem [shape: bf16[8,128], index: 3, kind: output, shape index: {}]
  %s4 = sld [smem:[#allocation0]]
  $region22: #{_lambda_.25} parent=0
    _
  %s6 = ssub.s32 1, %s4
  %s7 = scalar_select 0, %s6, %s4
  // Predicated region
  $region2: #{_lambda_.25} parent=0 // pred_check
    _
  $region3: #{_lambda_.25} parent=0 // pred_check_branch
    %9 = sbr.rel (0) target = $region5
  $region4: #{_lambda_.25} parent=0 // pred_region
    _
  $region5: #{_lambda_.25} parent=0 // pred_fallthru
    _
  // Predicated region
  $region6: #{_lambda_.25} parent=0 // pred_check
    _
  $region7: #{_lambda_.25} parent=0 // pred_check_branch
    %11 = sbr.rel (0) target = $region9
  $region8: #{_lambda_.25} parent=0 // pred_region
    _
  $region9: #{_lambda_.25} parent=0 // pred_fallthru
    _
  // Predicated region
  $region10: #{_lambda_.25} parent=0 // pred_check
    _
  $region11: #{_lambda_.25} parent=0 // pred_check_branch
    %13 = sbr.rel (0) target = $region13
  $region12: #{_lambda_.25} parent=0 // pred_region
    _
  $region13: #{_lambda_.25} parent=0 // pred_fallthru
    _
  %v15 = vld [vmem:[%s0] sm:$0xf]
  %v16 = vld [vmem:[%s1] sm:$0xf]
  %v17 = vld [vmem:[%s1 + $0x4] sm:$0xf]
  %v18 = vld [vmem:[%s1 + $0x8] sm:$0xf]
  %v19 = vld [vmem:[%s1 + $0xc] sm:$0xf]
  %v20 = vld [vmem:[%s1 + $0x10] sm:$0xf]
  %v21 = vld [vmem:[%s1 + $0x14] sm:$0xf]
  %v22 = vld [vmem:[%s1 + $0x18] sm:$0xf]
  %v23 = vld [vmem:[%s1 + $0x1c] sm:$0xf]
  %v24 = vld [vmem:[%s1 + $0x20] sm:$0xf]
  %v25 = vld [vmem:[%s1 + $0x24] sm:$0xf]
  %v26 = vld [vmem:[%s1 + $0x28] sm:$0xf]
  %v27 = vld [vmem:[%s1 + $0x2c] sm:$0xf]
  %v28 = vld [vmem:[%s1 + $0x30] sm:$0xf]
  %v29 = vld [vmem:[%s1 + $0x34] sm:$0xf]
  %v30 = vld [vmem:[%s1 + $0x38] sm:$0xf]
  %v31 = vld [vmem:[%s1 + $0x3c] sm:$0xf]
  %v32 = vld [vmem:[%s2] sm:$0x1]
  %v34 = vlaneseq
  %v35 = vshrl.u32 %v34, 7
  %v36 = vsub.s32 0, %v35
  %v37 = vrot.slane %v32, %v36
  %v55 = vunpack.c.l.b16 %v16
  %v56 = vunpack.c.l.b16 %v17
  %v57 = vunpack.c.l.b16 %v18
  %v58 = vunpack.c.l.b16 %v19
  %v59 = vunpack.c.l.b16 %v20
  %v60 = vunpack.c.l.b16 %v21
  %v61 = vunpack.c.l.b16 %v22
  %v62 = vunpack.c.l.b16 %v23
  %v63 = vunpack.c.l.b16 %v24
  %v64 = vunpack.c.l.b16 %v25
  %v65 = vunpack.c.l.b16 %v26
  %v66 = vunpack.c.l.b16 %v27
  %v67 = vunpack.c.l.b16 %v28
  %v68 = vunpack.c.l.b16 %v29
  %v69 = vunpack.c.l.b16 %v30
  %v70 = vunpack.c.l.b16 %v31
  %v71 = vpack.c.b16 %v56, %v55
  %v72 = vpack.c.b16 %v58, %v57
  %v73 = vpack.c.b16 %v60, %v59
  %v74 = vpack.c.b16 %v62, %v61
  %v75 = vpack.c.b16 %v64, %v63
  %v76 = vpack.c.b16 %v66, %v65
  %v77 = vpack.c.b16 %v68, %v67
  %v78 = vpack.c.b16 %v70, %v69
  %87 = vmatprep.subr.bf16.mxu0 0
  %88 = vmatpush1.bf16.msra.mxu0 %v71
  %89 = vmatprep.subr.bf16.mxu0 0
  %90 = vmatpush1.bf16.msra.mxu0 %v72
  %91 = vmatprep.subr.bf16.mxu0 0
  %92 = vmatpush1.bf16.msra.mxu0 %v73
  %93 = vmatprep.subr.bf16.mxu0 0
  %94 = vmatpush1.bf16.msra.mxu0 %v74
  %95 = vmatprep.subr.bf16.mxu0 0
  %96 = vmatpush1.bf16.msra.mxu0 %v75
  %97 = vmatprep.subr.bf16.mxu0 0
  %98 = vmatpush1.bf16.msra.mxu0 %v76
  %99 = vmatprep.subr.bf16.mxu0 0
  %100 = vmatpush1.bf16.msra.mxu0 %v77
  %101 = vmatprep.subr.bf16.mxu0 0
  %102 = vmatpush1.bf16.msra.mxu0 %v78
  %103 = vmatprep.subr.bf16.mxu0 0
  %104 = vmatpush1.bf16.msra.mxu0 0
  %105 = vmatprep.subr.bf16.mxu0 0
  %106 = vmatpush1.bf16.msra.mxu0 0
  %107 = vmatprep.subr.bf16.mxu0 0
  %108 = vmatpush1.bf16.msra.mxu0 0
  %109 = vmatprep.subr.bf16.mxu0 0
  %110 = vmatpush1.bf16.msra.mxu0 0
  %111 = vmatprep.subr.bf16.mxu0 0
  %112 = vmatpush1.bf16.msra.mxu0 0
  %113 = vmatprep.subr.bf16.mxu0 0
  %114 = vmatpush1.bf16.msra.mxu0 0
  %115 = vmatprep.subr.bf16.mxu0 0
  %116 = vmatpush1.bf16.msra.mxu0 0
  %117 = vmatprep.subr.bf16.mxu0 0
  %118 = vmatpush1.bf16.msra.mxu0 0
  %119 = vmatprep.mubr.bf16.mxu0 0
  %120 = vmatmul.mubr.bf16.gmra.mrb[0].mxu0 %v15
  %v121 = vpop.f32.mrb[0].mxu0
  %v122 = vadd.f32 %v37, %v121
  %v123 = vpop.f32.mrb[0].mxu0
  %v124 = vpop.f32.mrb[0].mxu0
  %v125 = vpop.f32.mrb[0].mxu0
  %126 = vdwg.mxu0
  %v127 = vpack.c.bf16 %v122, %v122
  %128 = vst [vmem:[%s3] sm:$0xf] %v127
  // Predicated region
  $region14: #{_lambda_.25} parent=0 // pred_check
    _
  $region15: #{_lambda_.25} parent=0 // pred_check_branch
    %130 = sbr.rel (0) target = $region17
  $region16: #{_lambda_.25} parent=0 // pred_region
    _
  $region17: #{_lambda_.25} parent=0 // pred_fallthru
    _
  // Predicated region
  $region18: #{_lambda_.25} parent=0 // pred_check
    _
  $region19: #{_lambda_.25} parent=0 // pred_check_branch
    %132 = sbr.rel (0) target = $region21
  $region20: #{_lambda_.25} parent=0 // pred_region
    _
  $region21: #{_lambda_.25} parent=0 // pred_fallthru
    _

// kernel: _lambda_.27
$region0: #{_lambda_.27}
  #allocation0 [shape = 'u32[]', space=smem, size = 0x4, offset = 0x4, fixed_abs, tag = 'smem constant byte address 0x4 - core index']
  #allocation1 [shape = 'u32[144,128]{1,0:T(1,128)}', space=vmem, size = 0x12000, scoped, tag = 'internal scratch']
  %s0 = inlined_call_operand.vmem [shape: bf16[8,640], index: 0, kind: input, shape index: {}]
  %s1 = inlined_call_operand.vmem [shape: bf16[640,128], index: 1, kind: input, shape index: {}]
  %s2 = inlined_call_operand.vmem [shape: f32[1,128], index: 2, kind: input, shape index: {}]
  %s3 = inlined_call_operand.vmem [shape: bf16[128,128], index: 3, kind: input, shape index: {}]
  %s4 = inlined_call_operand.vmem [shape: f32[1,128], index: 4, kind: input, shape index: {}]
  %s5 = inlined_call_operand.vmem [shape: bf16[8,128], index: 5, kind: output, shape index: {}]
  %s6 = sld [smem:[#allocation0]]
  $region30: #{_lambda_.27} parent=0
    _
  %s8 = ssub.s32 1, %s6
  %s9 = scalar_select 0, %s8, %s6
  // Predicated region
  $region2: #{_lambda_.27} parent=0 // pred_check
    _
  $region3: #{_lambda_.27} parent=0 // pred_check_branch
    %11 = sbr.rel (0) target = $region5
  $region4: #{_lambda_.27} parent=0 // pred_region
    _
  $region5: #{_lambda_.27} parent=0 // pred_fallthru
    _
  // Predicated region
  $region6: #{_lambda_.27} parent=0 // pred_check
    _
  $region7: #{_lambda_.27} parent=0 // pred_check_branch
    %13 = sbr.rel (0) target = $region9
  $region8: #{_lambda_.27} parent=0 // pred_region
    _
  $region9: #{_lambda_.27} parent=0 // pred_fallthru
    _
  // Predicated region
  $region10: #{_lambda_.27} parent=0 // pred_check
    _
  $region11: #{_lambda_.27} parent=0 // pred_check_branch
    %15 = sbr.rel (0) target = $region13
  $region12: #{_lambda_.27} parent=0 // pred_region
    _
  $region13: #{_lambda_.27} parent=0 // pred_fallthru
    _
  // Predicated region
  $region14: #{_lambda_.27} parent=0 // pred_check
    _
  $region15: #{_lambda_.27} parent=0 // pred_check_branch
    %17 = sbr.rel (0) target = $region17
  $region16: #{_lambda_.27} parent=0 // pred_region
    _
  $region17: #{_lambda_.27} parent=0 // pred_fallthru
    _
  // Predicated region
  $region18: #{_lambda_.27} parent=0 // pred_check
    _
  $region19: #{_lambda_.27} parent=0 // pred_check_branch
    %19 = sbr.rel (0) target = $region21
  $region20: #{_lambda_.27} parent=0 // pred_region
    _
  $region21: #{_lambda_.27} parent=0 // pred_fallthru
    _
  %v21 = vld [vmem:[%s0] sm:$0xff]
  %v22 = vld [vmem:[%s0 + $0x8] sm:$0xff]
  %v23 = vld [vmem:[%s0 + $0x10] sm:$0xf]
  %v24 = vld [vmem:[%s1] sm:$0xf]
  %v25 = vld [vmem:[%s1 + $0x4] sm:$0xf]
  %v26 = vld [vmem:[%s1 + $0x8] sm:$0xf]
  %v27 = vld [vmem:[%s1 + $0xc] sm:$0xf]
  %v28 = vld [vmem:[%s1 + $0x10] sm:$0xf]
  %v29 = vld [vmem:[%s1 + $0x14] sm:$0xf]
  %v30 = vld [vmem:[%s1 + $0x18] sm:$0xf]
  %v31 = vld [vmem:[%s1 + $0x1c] sm:$0xf]
  %v32 = vld [vmem:[%s1 + $0x20] sm:$0xf]
  %v33 = vld [vmem:[%s1 + $0x24] sm:$0xf]
  %v34 = vld [vmem:[%s1 + $0x28] sm:$0xf]
  %v35 = vld [vmem:[%s1 + $0x2c] sm:$0xf]
  %v36 = vld [vmem:[%s1 + $0x30] sm:$0xf]
  %v37 = vld [vmem:[%s1 + $0x34] sm:$0xf]
  %v38 = vld [vmem:[%s1 + $0x38] sm:$0xf]
  %v39 = vld [vmem:[%s1 + $0x3c] sm:$0xf]
  %v40 = vld [vmem:[%s1 + $0x40] sm:$0xf]
  %v41 = vld [vmem:[%s1 + $0x44] sm:$0xf]
  %v42 = vld [vmem:[%s1 + $0x48] sm:$0xf]
  %v43 = vld [vmem:[%s1 + $0x4c] sm:$0xf]
  %v44 = vld [vmem:[%s1 + $0x50] sm:$0xf]
  %v45 = vld [vmem:[%s1 + $0x54] sm:$0xf]
  %v46 = vld [vmem:[%s1 + $0x58] sm:$0xf]
  %v47 = vld [vmem:[%s1 + $0x5c] sm:$0xf]
  %v48 = vld [vmem:[%s1 + $0x60] sm:$0xf]
  %v49 = vld [vmem:[%s1 + $0x64] sm:$0xf]
  %v50 = vld [vmem:[%s1 + $0x68] sm:$0xf]
  %v51 = vld [vmem:[%s1 + $0x6c] sm:$0xf]
  %v52 = vld [vmem:[%s1 + $0x70] sm:$0xf]
  %v53 = vld [vmem:[%s1 + $0x74] sm:$0xf]
  %v54 = vld [vmem:[%s1 + $0x78] sm:$0xf]
  %v55 = vld [vmem:[%s1 + $0x7c] sm:$0xf]
  %v56 = vld [vmem:[%s1 + $0x80] sm:$0xf]
  %v57 = vld [vmem:[%s1 + $0x84] sm:$0xf]
  %v58 = vld [vmem:[%s1 + $0x88] sm:$0xf]
  %v59 = vld [vmem:[%s1 + $0x8c] sm:$0xf]
  %v60 = vld [vmem:[%s1 + $0x90] sm:$0xf]
  %v61 = vld [vmem:[%s1 + $0x94] sm:$0xf]
  %v62 = vld [vmem:[%s1 + $0x98] sm:$0xf]
  %v63 = vld [vmem:[%s1 + $0x9c] sm:$0xf]
  %v64 = vld [vmem:[%s1 + $0xa0] sm:$0xf]
  %v65 = vld [vmem:[%s1 + $0xa4] sm:$0xf]
  %v66 = vld [vmem:[%s1 + $0xa8] sm:$0xf]
  %v67 = vld [vmem:[%s1 + $0xac] sm:$0xf]
  %v68 = vld [vmem:[%s1 + $0xb0] sm:$0xf]
  %v69 = vld [vmem:[%s1 + $0xb4] sm:$0xf]
  %v70 = vld [vmem:[%s1 + $0xb8] sm:$0xf]
  %v71 = vld [vmem:[%s1 + $0xbc] sm:$0xf]
  %v72 = vld [vmem:[%s1 + $0xc0] sm:$0xf]
  %v73 = vld [vmem:[%s1 + $0xc4] sm:$0xf]
  %v74 = vld [vmem:[%s1 + $0xc8] sm:$0xf]
  %v75 = vld [vmem:[%s1 + $0xcc] sm:$0xf]
  %v76 = vld [vmem:[%s1 + $0xd0] sm:$0xf]
  %v77 = vld [vmem:[%s1 + $0xd4] sm:$0xf]
  %v78 = vld [vmem:[%s1 + $0xd8] sm:$0xf]
  %v79 = vld [vmem:[%s1 + $0xdc] sm:$0xf]
  %v80 = vld [vmem:[%s1 + $0xe0] sm:$0xf]
  %v81 = vld [vmem:[%s1 + $0xe4] sm:$0xf]
  %v82 = vld [vmem:[%s1 + $0xe8] sm:$0xf]
  %v83 = vld [vmem:[%s1 + $0xec] sm:$0xf]
  %v84 = vld [vmem:[%s1 + $0xf0] sm:$0xf]
  %v85 = vld [vmem:[%s1 + $0xf4] sm:$0xf]
  %v86 = vld [vmem:[%s1 + $0xf8] sm:$0xf]
  %v87 = vld [vmem:[%s1 + $0xfc] sm:$0xf]
  %v88 = vld [vmem:[%s1 + $0x100] sm:$0xf]
  %v89 = vld [vmem:[%s1 + $0x104] sm:$0xf]
  %v90 = vld [vmem:[%s1 + $0x108] sm:$0xf]
  %v91 = vld [vmem:[%s1 + $0x10c] sm:$0xf]
  %v92 = vld [vmem:[%s1 + $0x110] sm:$0xf]
  %v93 = vld [vmem:[%s1 + $0x114] sm:$0xf]
  %v94 = vld [vmem:[%s1 + $0x118] sm:$0xf]
  %v95 = vld [vmem:[%s1 + $0x11c] sm:$0xf]
  %v96 = vld [vmem:[%s1 + $0x120] sm:$0xf]
  %v97 = vld [vmem:[%s1 + $0x124] sm:$0xf]
  %v98 = vld [vmem:[%s1 + $0x128] sm:$0xf]
  %v99 = vld [vmem:[%s1 + $0x12c] sm:$0xf]
  %v100 = vld [vmem:[%s1 + $0x130] sm:$0xf]
  %v101 = vld [vmem:[%s1 + $0x134] sm:$0xf]
  %v102 = vld [vmem:[%s1 + $0x138] sm:$0xf]
  %v103 = vld [vmem:[%s1 + $0x13c] sm:$0xf]
  %v104 = vld [vmem:[%s2] sm:$0x1]
  %v106 = vlaneseq
  %v107 = vshrl.u32 %v106, 7
  %v108 = vsub.s32 0, %v107
  %v109 = vrot.slane %v104, %v108
  %v114 = vunpack.c.l.b16 %v21
  %v115 = vunpack.c.h.b16 %v21
  %v116 = vunpack.c.l.b16 %v22
  %v117 = vunpack.c.h.b16 %v22
  %v118 = vunpack.c.l.b16 %v23
  %v119 = vpack.c.b16 %v114, %v114
  %v120 = vpack.c.b16 %v115, %v115
  %v121 = vpack.c.b16 %v116, %v116
  %v122 = vpack.c.b16 %v117, %v117
  %v123 = vpack.c.b16 %v118, %v118
  %v209 = vunpack.c.l.b16 %v24
  %v210 = vunpack.c.l.b16 %v25
  %v211 = vunpack.c.l.b16 %v26
  %v212 = vunpack.c.l.b16 %v27
  %v213 = vunpack.c.l.b16 %v28
  %v214 = vunpack.c.l.b16 %v29
  %v215 = vunpack.c.l.b16 %v30
  %v216 = vunpack.c.l.b16 %v31
  %v217 = vunpack.c.l.b16 %v32
  %v218 = vunpack.c.l.b16 %v33
  %v219 = vunpack.c.l.b16 %v34
  %v220 = vunpack.c.l.b16 %v35
  %v221 = vunpack.c.l.b16 %v36
  %v222 = vunpack.c.l.b16 %v37
  %v223 = vunpack.c.l.b16 %v38
  %v224 = vunpack.c.l.b16 %v39
  %v225 = vunpack.c.l.b16 %v40
  %v226 = vunpack.c.l.b16 %v41
  %v227 = vunpack.c.l.b16 %v42
  %v228 = vunpack.c.l.b16 %v43
  %v229 = vunpack.c.l.b16 %v44
  %v230 = vunpack.c.l.b16 %v45
  %v231 = vunpack.c.l.b16 %v46
  %v232 = vunpack.c.l.b16 %v47
  %v233 = vunpack.c.l.b16 %v48
  %v234 = vunpack.c.l.b16 %v49
  %v235 = vunpack.c.l.b16 %v50
  %v236 = vunpack.c.l.b16 %v51
  %v237 = vunpack.c.l.b16 %v52
  %v238 = vunpack.c.l.b16 %v53
  %v239 = vunpack.c.l.b16 %v54
  %v240 = vunpack.c.l.b16 %v55
  %v241 = vunpack.c.l.b16 %v56
  %v242 = vunpack.c.l.b16 %v57
  %v243 = vunpack.c.l.b16 %v58
  %v244 = vunpack.c.l.b16 %v59
  %v245 = vunpack.c.l.b16 %v60
  %v246 = vunpack.c.l.b16 %v61
  %v247 = vunpack.c.l.b16 %v62
  %v248 = vunpack.c.l.b16 %v63
  %v249 = vunpack.c.l.b16 %v64
  %v250 = vunpack.c.l.b16 %v65
  %v251 = vunpack.c.l.b16 %v66
  %v252 = vunpack.c.l.b16 %v67
  %v253 = vunpack.c.l.b16 %v68
  %v254 = vunpack.c.l.b16 %v69
  %v255 = vunpack.c.l.b16 %v70
  %v256 = vunpack.c.l.b16 %v71
  %v257 = vunpack.c.l.b16 %v72
  %v258 = vunpack.c.l.b16 %v73
  %v259 = vunpack.c.l.b16 %v74
  %v260 = vunpack.c.l.b16 %v75
  %v261 = vunpack.c.l.b16 %v76
  %v262 = vunpack.c.l.b16 %v77
  %v263 = vunpack.c.l.b16 %v78
  %v264 = vunpack.c.l.b16 %v79
  %v265 = vunpack.c.l.b16 %v80
  %v266 = vunpack.c.l.b16 %v81
  %v267 = vunpack.c.l.b16 %v82
  %v268 = vunpack.c.l.b16 %v83
  %v269 = vunpack.c.l.b16 %v84
  %v270 = vunpack.c.l.b16 %v85
  %v271 = vunpack.c.l.b16 %v86
  %v272 = vunpack.c.l.b16 %v87
  %v273 = vunpack.c.l.b16 %v88
  %v274 = vunpack.c.l.b16 %v89
  %v275 = vunpack.c.l.b16 %v90
  %v276 = vunpack.c.l.b16 %v91
  %v277 = vunpack.c.l.b16 %v92
  %v278 = vunpack.c.l.b16 %v93
  %v279 = vunpack.c.l.b16 %v94
  %v280 = vunpack.c.l.b16 %v95
  %v281 = vunpack.c.l.b16 %v96
  %v282 = vunpack.c.l.b16 %v97
  %v283 = vunpack.c.l.b16 %v98
  %v284 = vunpack.c.l.b16 %v99
  %v285 = vunpack.c.l.b16 %v100
  %v286 = vunpack.c.l.b16 %v101
  %v287 = vunpack.c.l.b16 %v102
  %v288 = vunpack.c.l.b16 %v103
  %v289 = vpack.c.b16 %v210, %v209
  %v290 = vpack.c.b16 %v212, %v211
  %v291 = vpack.c.b16 %v214, %v213
  %v292 = vpack.c.b16 %v216, %v215
  %v293 = vpack.c.b16 %v218, %v217
  %v294 = vpack.c.b16 %v220, %v219
  %v295 = vpack.c.b16 %v222, %v221
  %v296 = vpack.c.b16 %v224, %v223
  %v297 = vpack.c.b16 %v226, %v225
  %v298 = vpack.c.b16 %v228, %v227
  %v299 = vpack.c.b16 %v230, %v229
  %v300 = vpack.c.b16 %v232, %v231
  %v301 = vpack.c.b16 %v234, %v233
  %v302 = vpack.c.b16 %v236, %v235
  %v303 = vpack.c.b16 %v238, %v237
  %v304 = vpack.c.b16 %v240, %v239
  %v305 = vpack.c.b16 %v242, %v241
  %v306 = vpack.c.b16 %v244, %v243
  %v307 = vpack.c.b16 %v246, %v245
  %v308 = vpack.c.b16 %v248, %v247
  %v309 = vpack.c.b16 %v250, %v249
  %v310 = vpack.c.b16 %v252, %v251
  %v311 = vpack.c.b16 %v254, %v253
  %v312 = vpack.c.b16 %v256, %v255
  %v313 = vpack.c.b16 %v258, %v257
  %v314 = vpack.c.b16 %v260, %v259
  %v315 = vpack.c.b16 %v262, %v261
  %v316 = vpack.c.b16 %v264, %v263
  %v317 = vpack.c.b16 %v266, %v265
  %v318 = vpack.c.b16 %v268, %v267
  %v319 = vpack.c.b16 %v270, %v269
  %v320 = vpack.c.b16 %v272, %v271
  %v321 = vpack.c.b16 %v274, %v273
  %v322 = vpack.c.b16 %v276, %v275
  %v323 = vpack.c.b16 %v278, %v277
  %v324 = vpack.c.b16 %v280, %v279
  %v325 = vpack.c.b16 %v282, %v281
  %v326 = vpack.c.b16 %v284, %v283
  %v327 = vpack.c.b16 %v286, %v285
  %v328 = vpack.c.b16 %v288, %v287
  %369 = vmatprep.subr.bf16.mxu0 0
  %370 = vmatpush1.bf16.msra.mxu0 %v289
  %371 = vmatprep.subr.bf16.mxu0 0
  %372 = vmatpush1.bf16.msra.mxu0 %v290
  %373 = vmatprep.subr.bf16.mxu0 0
  %374 = vmatpush1.bf16.msra.mxu0 %v291
  %375 = vmatprep.subr.bf16.mxu0 0
  %376 = vmatpush1.bf16.msra.mxu0 %v292
  %377 = vmatprep.subr.bf16.mxu0 0
  %378 = vmatpush1.bf16.msra.mxu0 %v293
  %379 = vmatprep.subr.bf16.mxu0 0
  %380 = vmatpush1.bf16.msra.mxu0 %v294
  %381 = vmatprep.subr.bf16.mxu0 0
  %382 = vmatpush1.bf16.msra.mxu0 %v295
  %383 = vmatprep.subr.bf16.mxu0 0
  %384 = vmatpush1.bf16.msra.mxu0 %v296
  %385 = vmatprep.subr.bf16.mxu0 0
  %386 = vmatpush1.bf16.msra.mxu0 %v297
  %387 = vmatprep.subr.bf16.mxu0 0
  %388 = vmatpush1.bf16.msra.mxu0 %v298
  %389 = vmatprep.subr.bf16.mxu0 0
  %390 = vmatpush1.bf16.msra.mxu0 %v299
  %391 = vmatprep.subr.bf16.mxu0 0
  %392 = vmatpush1.bf16.msra.mxu0 %v300
  %393 = vmatprep.subr.bf16.mxu0 0
  %394 = vmatpush1.bf16.msra.mxu0 %v301
  %395 = vmatprep.subr.bf16.mxu0 0
  %396 = vmatpush1.bf16.msra.mxu0 %v302
  %397 = vmatprep.subr.bf16.mxu0 0
  %398 = vmatpush1.bf16.msra.mxu0 %v303
  %399 = vmatprep.subr.bf16.mxu0 0
  %400 = vmatpush1.bf16.msra.mxu0 %v304
  %401 = vmatprep.mubr.bf16.mxu0 %v120
  %402 = vmatmul.mubr.bf16.gmra.mrb[0].mxu0 %v119
  %v403 = vpop.f32.mrb[0].mxu0
  %v404 = vadd.f32 %v109, %v403
  %v405 = vpop.f32.mrb[0].mxu0
  %v406 = vpop.f32.mrb[0].mxu0
  %v407 = vpop.f32.mrb[0].mxu0
  %408 = vdwg.mxu0
  %409 = vmatprep.subr.bf16.mxu0 0
  %410 = vmatpush1.bf16.msra.mxu0 %v305
  %411 = vmatprep.subr.bf16.mxu0 0
  %412 = vmatpush1.bf16.msra.mxu0 %v306
  %413 = vmatprep.subr.bf16.mxu0 0
  %414 = vmatpush1.bf16.msra.mxu0 %v307
  %415 = vmatprep.subr.bf16.mxu0 0
  %416 = vmatpush1.bf16.msra.mxu0 %v308
  %417 = vmatprep.subr.bf16.mxu0 0
  %418 = vmatpush1.bf16.msra.mxu0 %v309
  %419 = vmatprep.subr.bf16.mxu0 0
  %420 = vmatpush1.bf16.msra.mxu0 %v310
  %421 = vmatprep.subr.bf16.mxu0 0
  %422 = vmatpush1.bf16.msra.mxu0 %v311
  %423 = vmatprep.subr.bf16.mxu0 0
  %424 = vmatpush1.bf16.msra.mxu0 %v312
  %425 = vmatprep.subr.bf16.mxu0 0
  %426 = vmatpush1.bf16.msra.mxu0 %v313
  %427 = vmatprep.subr.bf16.mxu0 0
  %428 = vmatpush1.bf16.msra.mxu0 %v314
  %429 = vmatprep.subr.bf16.mxu0 0
  %430 = vmatpush1.bf16.msra.mxu0 %v315
  %431 = vmatprep.subr.bf16.mxu0 0
  %432 = vmatpush1.bf16.msra.mxu0 %v316
  %433 = vmatprep.subr.bf16.mxu0 0
  %434 = vmatpush1.bf16.msra.mxu0 %v317
  %435 = vmatprep.subr.bf16.mxu0 0
  %436 = vmatpush1.bf16.msra.mxu0 %v318
  %437 = vmatprep.subr.bf16.mxu0 0
  %438 = vmatpush1.bf16.msra.mxu0 %v319
  %439 = vmatprep.subr.bf16.mxu0 0
  %440 = vmatpush1.bf16.msra.mxu0 %v320
  %441 = vmatprep.mubr.bf16.mxu0 %v122
  %442 = vmatmul.mubr.bf16.gmra.mrb[0].mxu0 %v121
  %v443 = vpop.f32.mrb[0].mxu0
  %v444 = vadd.f32 %v404, %v443
  %v445 = vpop.f32.mrb[0].mxu0
  %v446 = vpop.f32.mrb[0].mxu0
  %v447 = vpop.f32.mrb[0].mxu0
  %448 = vdwg.mxu0
  %449 = vmatprep.subr.bf16.mxu0 0
  %450 = vmatpush1.bf16.msra.mxu0 %v321
  %451 = vmatprep.subr.bf16.mxu0 0
  %452 = vmatpush1.bf16.msra.mxu0 %v322
  %453 = vmatprep.subr.bf16.mxu0 0
  %454 = vmatpush1.bf16.msra.mxu0 %v323
  %455 = vmatprep.subr.bf16.mxu0 0
  %456 = vmatpush1.bf16.msra.mxu0 %v324
  %457 = vmatprep.subr.bf16.mxu0 0
  %458 = vmatpush1.bf16.msra.mxu0 %v325
  %459 = vmatprep.subr.bf16.mxu0 0
  %460 = vmatpush1.bf16.msra.mxu0 %v326
  %461 = vmatprep.subr.bf16.mxu0 0
  %462 = vmatpush1.bf16.msra.mxu0 %v327
  %463 = vmatprep.subr.bf16.mxu0 0
  %464 = vmatpush1.bf16.msra.mxu0 %v328
  %465 = vmatprep.subr.bf16.mxu0 0
  %466 = vmatpush1.bf16.msra.mxu0 0
  %467 = vmatprep.subr.bf16.mxu0 0
  %468 = vmatpush1.bf16.msra.mxu0 0
  %469 = vmatprep.subr.bf16.mxu0 0
  %470 = vmatpush1.bf16.msra.mxu0 0
  %471 = vmatprep.subr.bf16.mxu0 0
  %472 = vmatpush1.bf16.msra.mxu0 0
  %473 = vmatprep.subr.bf16.mxu0 0
  %474 = vmatpush1.bf16.msra.mxu0 0
  %475 = vmatprep.subr.bf16.mxu0 0
  %476 = vmatpush1.bf16.msra.mxu0 0
  %477 = vmatprep.subr.bf16.mxu0 0
  %478 = vmatpush1.bf16.msra.mxu0 0
  %479 = vmatprep.subr.bf16.mxu0 0
  %480 = vmatpush1.bf16.msra.mxu0 0
  %481 = vmatprep.mubr.bf16.mxu0 0
  %482 = vmatmul.mubr.bf16.gmra.mrb[0].mxu0 %v123
  %v483 = vpop.f32.mrb[0].mxu0
  %v484 = vadd.f32 %v444, %v483
  %v485 = vpop.f32.mrb[0].mxu0
  %v486 = vpop.f32.mrb[0].mxu0
  %v487 = vpop.f32.mrb[0].mxu0
  %488 = vdwg.mxu0
  %v489 = vmax.f32 %v484, 0.0
  %v490 = vpack.c.bf16 %v489, %v489
  %v491 = vld [vmem:[%s3] sm:$0xf]
  %v492 = vld [vmem:[%s3 + $0x4] sm:$0xf]
  %v493 = vld [vmem:[%s3 + $0x8] sm:$0xf]
  %v494 = vld [vmem:[%s3 + $0xc] sm:$0xf]
  %v495 = vld [vmem:[%s3 + $0x10] sm:$0xf]
  %v496 = vld [vmem:[%s3 + $0x14] sm:$0xf]
  %v497 = vld [vmem:[%s3 + $0x18] sm:$0xf]
  %v498 = vld [vmem:[%s3 + $0x1c] sm:$0xf]
  %v499 = vld [vmem:[%s3 + $0x20] sm:$0xf]
  %v500 = vld [vmem:[%s3 + $0x24] sm:$0xf]
  %v501 = vld [vmem:[%s3 + $0x28] sm:$0xf]
  %v502 = vld [vmem:[%s3 + $0x2c] sm:$0xf]
  %v503 = vld [vmem:[%s3 + $0x30] sm:$0xf]
  %v504 = vld [vmem:[%s3 + $0x34] sm:$0xf]
  %v505 = vld [vmem:[%s3 + $0x38] sm:$0xf]
  %v506 = vld [vmem:[%s3 + $0x3c] sm:$0xf]
  %v507 = vld [vmem:[%s4] sm:$0x1]
  %v509 = vlaneseq
  %v510 = vshrl.u32 %v509, 7
  %v511 = vsub.s32 0, %v510
  %v512 = vrot.slane %v507, %v511
  %v530 = vunpack.c.l.b16 %v491
  %v531 = vunpack.c.l.b16 %v492
  %v532 = vunpack.c.l.b16 %v493
  %v533 = vunpack.c.l.b16 %v494
  %v534 = vunpack.c.l.b16 %v495
  %v535 = vunpack.c.l.b16 %v496
  %v536 = vunpack.c.l.b16 %v497
  %v537 = vunpack.c.l.b16 %v498
  %v538 = vunpack.c.l.b16 %v499
  %v539 = vunpack.c.l.b16 %v500
  %v540 = vunpack.c.l.b16 %v501
  %v541 = vunpack.c.l.b16 %v502
  %v542 = vunpack.c.l.b16 %v503
  %v543 = vunpack.c.l.b16 %v504
  %v544 = vunpack.c.l.b16 %v505
  %v545 = vunpack.c.l.b16 %v506
  %v546 = vpack.c.b16 %v531, %v530
  %v547 = vpack.c.b16 %v533, %v532
  %v548 = vpack.c.b16 %v535, %v534
  %v549 = vpack.c.b16 %v537, %v536
  %v550 = vpack.c.b16 %v539, %v538
  %v551 = vpack.c.b16 %v541, %v540
  %v552 = vpack.c.b16 %v543, %v542
  %v553 = vpack.c.b16 %v545, %v544
  %562 = vmatprep.subr.bf16.mxu0 0
  %563 = vmatpush1.bf16.msra.mxu0 %v546
  %564 = vmatprep.subr.bf16.mxu0 0
  %565 = vmatpush1.bf16.msra.mxu0 %v547
  %566 = vmatprep.subr.bf16.mxu0 0
  %567 = vmatpush1.bf16.msra.mxu0 %v548
  %568 = vmatprep.subr.bf16.mxu0 0
  %569 = vmatpush1.bf16.msra.mxu0 %v549
  %570 = vmatprep.subr.bf16.mxu0 0
  %571 = vmatpush1.bf16.msra.mxu0 %v550
  %572 = vmatprep.subr.bf16.mxu0 0
  %573 = vmatpush1.bf16.msra.mxu0 %v551
  %574 = vmatprep.subr.bf16.mxu0 0
  %575 = vmatpush1.bf16.msra.mxu0 %v552
  %576 = vmatprep.subr.bf16.mxu0 0
  %577 = vmatpush1.bf16.msra.mxu0 %v553
  %578 = vmatprep.subr.bf16.mxu0 0
  %579 = vmatpush1.bf16.msra.mxu0 0
  %580 = vmatprep.subr.bf16.mxu0 0
  %581 = vmatpush1.bf16.msra.mxu0 0
  %582 = vmatprep.subr.bf16.mxu0 0
  %583 = vmatpush1.bf16.msra.mxu0 0
  %584 = vmatprep.subr.bf16.mxu0 0
  %585 = vmatpush1.bf16.msra.mxu0 0
  %586 = vmatprep.subr.bf16.mxu0 0
  %587 = vmatpush1.bf16.msra.mxu0 0
  %588 = vmatprep.subr.bf16.mxu0 0
  %589 = vmatpush1.bf16.msra.mxu0 0
  %590 = vmatprep.subr.bf16.mxu0 0
  %591 = vmatpush1.bf16.msra.mxu0 0
  %592 = vmatprep.subr.bf16.mxu0 0
  %593 = vmatpush1.bf16.msra.mxu0 0
  %594 = vmatprep.mubr.bf16.mxu0 0
  %595 = vmatmul.mubr.bf16.gmra.mrb[0].mxu0 %v490
  %v596 = vpop.f32.mrb[0].mxu0
  %v597 = vadd.f32 %v512, %v596
  %v598 = vpop.f32.mrb[0].mxu0
  %v599 = vpop.f32.mrb[0].mxu0
  %v600 = vpop.f32.mrb[0].mxu0
  %601 = vdwg.mxu0
  %v602 = vpack.c.bf16 %v597, %v597
  %603 = vst [vmem:[%s5] sm:$0xf] %v602
  // Predicated region
  $region22: #{_lambda_.27} parent=0 // pred_check
    _
  $region23: #{_lambda_.27} parent=0 // pred_check_branch
    %605 = sbr.rel (0) target = $region25
  $region24: #{_lambda_.27} parent=0 // pred_region
    _
  $region25: #{_lambda_.27} parent=0 // pred_fallthru
    _
  // Predicated region
  $region26: #{_lambda_.27} parent=0 // pred_check
    _
  $region27: #{_lambda_.27} parent=0 // pred_check_branch
    %607 = sbr.rel (0) target = $region29
  $region28: #{_lambda_.27} parent=0 // pred_region
    _
  $region29: #{_lambda_.27} parent=0 // pred_fallthru
    _

// kernel: _lambda_.28
$region0: #{_lambda_.28}
  #allocation0 [shape = 'u32[]', space=smem, size = 0x4, offset = 0x4, fixed_abs, tag = 'smem constant byte address 0x4 - core index']
  #allocation1 [shape = 'u32[144,128]{1,0:T(1,128)}', space=vmem, size = 0x12000, scoped, tag = 'internal scratch']
  %s0 = inlined_call_operand.vmem [shape: bf16[32,4], index: 0, kind: input, shape index: {}]
  %s1 = inlined_call_operand.vmem [shape: bf16[4,4096], index: 1, kind: input, shape index: {}]
  %s2 = inlined_call_operand.vmem [shape: f32[1,4096], index: 2, kind: input, shape index: {}]
  %s3 = inlined_call_operand.vmem [shape: f32[32,4096], index: 3, kind: output, shape index: {}]
  %s4 = sld [smem:[#allocation0]]
  $region64: #{_lambda_.28} parent=0
    _
  %s6 = ssub.s32 1, %s4
  %s7 = scalar_select 0, %s6, %s4
  $region1: #{_lambda_.28} parent=0
    #allocation2 [shape = 'u8[131072]{0}', space=vmem, size = 0x20000, scoped, tag = 'output window, operand 0']
    loop: start=0, step=1, limit=10
    $region2: #{_lambda_.28} parent=1 // loop_pre_header
      _
    $region3: #{_lambda_.28} parent=1 // loop_header
      %s9 = sphi 0, %s13
      %p10 = scmp.ge.s32.totalorder %s9, 10
      %s16 = sphi 0, %s28
      %s17 = sphi 0, %s24
      %s18 = sphi 0, %s16
      %s19 = sphi 0, %s17
      %s20 = sphi 0, %s18
      %s21 = sphi 0, %s19
      %s31 = sphi 0, %s33
      %s34 = sphi 0, %s31
      %s35 = sphi 0, %s34
      %s51 = sphi 0, %s35
      %s57 = sphi 0, %s59
      %s60 = sphi 0, %s57
      %s61 = sphi 0, %s60
      %s77 = sphi 0, %s61
      %s83 = sphi 0, %s85
      %s86 = sphi 0, %s83
      %s87 = sphi 0, %s86
      %s103 = sphi 0, %s87
      %s111 = sphi 0, %s113
      %s114 = sphi 0, %s111
      %s115 = sphi 0, %s114
      %s131 = sphi 0, %s115
    $region4: #{_lambda_.28} parent=1 // loop_header_branch
      %12 = sbr.rel (%p10) target = $region8
    $region5: #{_lambda_.28} parent=1 // loop_body
      %s14 = ssub.s32 %s9, 1
      %s15 = ssub.s32 %s9, 2
      %s22 = sadd.s32 1, %s17
      %p23 = scmp.ge.s32.totalorder %s22, 8
      %s24 = scalar_select %p23, 0, %s22
      %s25 = sadd.s32 1, %s16
      %s26 = scalar_select %p23, %s25, %s16
      %p27 = scmp.ge.s32.totalorder %s26, 1
      %s28 = scalar_select %p27, 0, %s26
      %s29 = ssub.s32 %s16, %s28
      %p30 = scmp.eq.s32.totalorder %s29, 0
      %s32 = sadd.s32 %s31, 1
      %s33 = scalar_select %p30, %s31, %s32
      %p36 = pneg %p30
      %p37 = scmp.eq.s32.totalorder %s9, 7
      %p38 = por %p36, %p37
      %p39 = scmp.ne.s32.totalorder %s31, %s34
      %p40 = scmp.eq.s32.totalorder %s9, 0
      %p41 = por %p39, %p40
      %p42 = scmp.ne.s32.totalorder %s31, %s34
      %p43 = scmp.eq.s32.totalorder %s14, 7
      %p44 = por %p42, %p43
      %p45 = scmp.ne.s32.totalorder %s34, %s35
      %p46 = scmp.eq.s32.totalorder %s14, 0
      %p47 = por %p45, %p46
      %p48 = scmp.ne.s32.totalorder %s34, %s35
      %p49 = scmp.eq.s32.totalorder %s15, 7
      %p50 = por %p48, %p49
      %p52 = scmp.ne.s32.totalorder %s35, %s51
      %p53 = scmp.eq.s32.totalorder %s15, 0
      %p54 = por %p52, %p53
      %s55 = ssub.s32 %s17, %s24
      %p56 = scmp.eq.s32.totalorder %s55, 0
      %s58 = sadd.s32 %s57, 1
      %s59 = scalar_select %p56, %s57, %s58
      %p62 = pneg %p56
      %p63 = scmp.eq.s32.totalorder %s9, 7
      %p64 = por %p62, %p63
      %p65 = scmp.ne.s32.totalorder %s57, %s60
      %p66 = scmp.eq.s32.totalorder %s9, 0
      %p67 = por %p65, %p66
      %p68 = scmp.ne.s32.totalorder %s57, %s60
      %p69 = scmp.eq.s32.totalorder %s14, 7
      %p70 = por %p68, %p69
      %p71 = scmp.ne.s32.totalorder %s60, %s61
      %p72 = scmp.eq.s32.totalorder %s14, 0
      %p73 = por %p71, %p72
      %p74 = scmp.ne.s32.totalorder %s60, %s61
      %p75 = scmp.eq.s32.totalorder %s15, 7
      %p76 = por %p74, %p75
      %p78 = scmp.ne.s32.totalorder %s61, %s77
      %p79 = scmp.eq.s32.totalorder %s15, 0
      %p80 = por %p78, %p79
      %s81 = ssub.s32 %s17, %s24
      %p82 = scmp.eq.s32.totalorder %s81, 0
      %s84 = sadd.s32 %s83, 1
      %s85 = scalar_select %p82, %s83, %s84
      %p88 = pneg %p82
      %p89 = scmp.eq.s32.totalorder %s9, 7
      %p90 = por %p88, %p89
      %p91 = scmp.ne.s32.totalorder %s83, %s86
      %p92 = scmp.eq.s32.totalorder %s9, 0
      %p93 = por %p91, %p92
      %p94 = scmp.ne.s32.totalorder %s83, %s86
      %p95 = scmp.eq.s32.totalorder %s14, 7
      %p96 = por %p94, %p95
      %p97 = scmp.ne.s32.totalorder %s86, %s87
      %p98 = scmp.eq.s32.totalorder %s14, 0
      %p99 = por %p97, %p98
      %p100 = scmp.ne.s32.totalorder %s86, %s87
      %p101 = scmp.eq.s32.totalorder %s15, 7
      %p102 = por %p100, %p101
      %p104 = scmp.ne.s32.totalorder %s87, %s103
      %p105 = scmp.eq.s32.totalorder %s15, 0
      %p106 = por %p104, %p105
      %s107 = ssub.s32 %s16, %s28
      %s108 = ssub.s32 %s17, %s24
      %s109 = sor.u32 %s107, %s108
      %p110 = scmp.eq.s32.totalorder %s109, 0
      %s112 = sadd.s32 %s111, 1
      %s113 = scalar_select %p110, %s111, %s112
      %p116 = pneg %p110
      %p117 = scmp.eq.s32.totalorder %s9, 7
      %p118 = por %p116, %p117
      %p119 = scmp.ne.s32.totalorder %s111, %s114
      %p120 = scmp.eq.s32.totalorder %s9, 0
      %p121 = por %p119, %p120
      %p122 = scmp.ne.s32.totalorder %s111, %s114
      %p123 = scmp.eq.s32.totalorder %s14, 7
      %p124 = por %p122, %p123
      %p125 = scmp.ne.s32.totalorder %s114, %s115
      %p126 = scmp.eq.s32.totalorder %s14, 0
      %p127 = por %p125, %p126
      %p128 = scmp.ne.s32.totalorder %s114, %s115
      %p129 = scmp.eq.s32.totalorder %s15, 7
      %p130 = por %p128, %p129
      %p132 = scmp.ne.s32.totalorder %s115, %s131
      %p133 = scmp.eq.s32.totalorder %s15, 0
      %p134 = por %p132, %p133
      %p135 = scmp.le.s32.totalorder 1, %s9
      %p136 = scmp.lt.s32.totalorder %s9, 9
      %p137 = pnand %p135, %p136
      %p138 = pneg %p137
      // Predicated region
      $region9: #{_lambda_.28} parent=5 // pred_check
        _
      $region10: #{_lambda_.28} parent=5 // pred_check_branch
        %140 = sbr.rel (%p137) target = $region12
      $region11: #{_lambda_.28} parent=5 // pred_region
        %s141 = ssub.s32 %s9, 1
        // Predicated region
        $region13: #{_lambda_.28} parent=11 // pred_check
          %p142 = pneg %p47
        $region14: #{_lambda_.28} parent=11 // pred_check_branch
          %144 = sbr.rel (%p142) target = $region16
        $region15: #{_lambda_.28} parent=11 // pred_region
          %s145 = smul.u32 4, %s18
          %p146 = scmp.lt.s32.totalorder %s145, 3
          %s147 = scalar_select %p146, %s145, 3
          %s148 = smul.addr %s147, 4
          %s149 = scalar_lea.vmem %s0, %s148
          %s150 = smul.u32 4, %s18
        $region16: #{_lambda_.28} parent=11 // pred_fallthru
          _
      $region12: #{_lambda_.28} parent=5 // pred_fallthru
        _
      %p151 = scmp.lt.s32.totalorder %s9, 8
      // Predicated region
      $region17: #{_lambda_.28} parent=5 // pred_check
        %p152 = pneg %p151
      $region18: #{_lambda_.28} parent=5 // pred_check_branch
        %154 = sbr.rel (%p152) target = $region20
      $region19: #{_lambda_.28} parent=5 // pred_region
        // Predicated region
        $region21: #{_lambda_.28} parent=19 // pred_check
          %p155 = pneg %p67
        $region22: #{_lambda_.28} parent=19 // pred_check_branch
          %157 = sbr.rel (%p155) target = $region24
        $region23: #{_lambda_.28} parent=19 // pred_region
          %s158 = smul.u32 4, %s17
          %p159 = scmp.lt.s32.totalorder %s158, 31
          %s160 = scalar_select %p159, %s158, 31
          %s161 = smul.addr %s160, 2
          %s162 = scalar_lea.vmem %s1, %s161
          %s163 = smul.u32 4, %s17
        $region24: #{_lambda_.28} parent=19 // pred_fallthru
          _
        // Predicated region
        $region25: #{_lambda_.28} parent=19 // pred_check
          %p164 = pneg %p93
        $region26: #{_lambda_.28} parent=19 // pred_check_branch
          %166 = sbr.rel (%p164) target = $region28
        $region27: #{_lambda_.28} parent=19 // pred_region
          %s167 = smul.u32 4, %s17
          %p168 = scmp.lt.s32.totalorder %s167, 31
          %s169 = scalar_select %p168, %s167, 31
          %s170 = scalar_lea.vmem %s2, %s169
          %s171 = smul.u32 4, %s17
        $region28: #{_lambda_.28} parent=19 // pred_fallthru
          _
      $region20: #{_lambda_.28} parent=5 // pred_fallthru
        _
      %p172 = scmp.le.s32.totalorder 1, %s9
      %p173 = scmp.lt.s32.totalorder %s9, 9
      %p174 = pnand %p172, %p173
      %p175 = pneg %p174
      // Predicated region
      $region29: #{_lambda_.28} parent=5 // pred_check
        _
      $region30: #{_lambda_.28} parent=5 // pred_check_branch
        %177 = sbr.rel (%p174) target = $region32
      $region31: #{_lambda_.28} parent=5 // pred_region
        %s178 = ssub.s32 %s9, 1
        %s179 = smul.u32 4, %s18
        %p180 = scmp.lt.s32.totalorder %s179, 3
        %s181 = scalar_select %p180, %s179, 3
        %s182 = smul.addr %s181, 4
        %s183 = scalar_lea.vmem %s0, %s182
        %p184 = pneg %p47
        %p185 = pneg %p44
        %s186 = smul.u32 4, %s19
        %p187 = scmp.lt.s32.totalorder %s186, 31
        %s188 = scalar_select %p187, %s186, 31
        %s189 = smul.addr %s188, 2
        %s190 = scalar_lea.vmem %s1, %s189
        %p191 = pneg %p73
        %p192 = pneg %p70
        %s193 = smul.u32 4, %s19
        %p194 = scmp.lt.s32.totalorder %s193, 31
        %s195 = scalar_select %p194, %s193, 31
        %s196 = scalar_lea.vmem %s2, %s195
        %p197 = pneg %p99
        %p198 = pneg %p96
        %p199 = pneg %p127
        %p200 = pneg %p124
        %s201 = sand.u32 %s114, 1
        %s202 = sand.u32 %s114, 1
        %s203 = smul.addr %s202, 128
        %s204 = scalar_lea.vmem [#allocation2], %s203
        %s205 = smul.u32 4, %s18
        %p206 = scmp.lt.s32.totalorder %s205, 3
        %s207 = scalar_select %p206, %s205, 3
        %s208 = smul.addr %s207, 4
        %s209 = scalar_lea.vmem %s0, %s208
        %s210 = smul.u32 4, %s18
        %s211 = smul.u32 4, %s19
        %p212 = scmp.lt.s32.totalorder %s211, 31
        %s213 = scalar_select %p212, %s211, 31
        %s214 = smul.addr %s213, 2
        %s215 = scalar_lea.vmem %s1, %s214
        %s216 = smul.u32 4, %s19
        %s217 = smul.u32 4, %s19
        %p218 = scmp.lt.s32.totalorder %s217, 31
        %s219 = scalar_select %p218, %s217, 31
        %s220 = scalar_lea.vmem %s2, %s219
        %s221 = smul.u32 4, %s19
        %s222 = smul.u32 4, %s18
        %s223 = smul.u32 4, %s19
        %v225 = vld [vmem:[%s209] sm:$0xf]
        %v226 = vld [vmem:[%s209 + $0x4] sm:$0xf]
        %v227 = vld [vmem:[%s209 + $0x8] sm:$0xf]
        %v228 = vld [vmem:[%s209 + $0xc] sm:$0xf]
        %v229 = vld [vmem:[%s215] sm:$0xff]
        %v230 = vld [vmem:[%s220] sm:$0xf]
        %v232 = vlaneseq
        %v233 = vshrl.u32 %v232, 7
        %v234 = vsub.s32 0, %v233
        %v235 = vrot.slane %v230, %v234
        %v236 = vlaneseq
        %v237 = vshrl.u32 %v236, 7
        %v238 = vsub.s32 1, %v237
        %v239 = vrot.slane %v230, %v238
        %v240 = vlaneseq
        %v241 = vshrl.u32 %v240, 7
        %v242 = vsub.s32 2, %v241
        %v243 = vrot.slane %v230, %v242
        %v244 = vlaneseq
        %v245 = vshrl.u32 %v244, 7
        %v246 = vsub.s32 3, %v245
        %v247 = vrot.slane %v230, %v246
        %v256 = vunpack.c.l.b16 %v225
        %v257 = vunpack.c.l.b16 %v226
        %v258 = vunpack.c.l.b16 %v227
        %v259 = vunpack.c.l.b16 %v228
        %v260 = vpack.c.b16 %v257, %v256
        %v261 = vpack.c.b16 %v259, %v258
        %v263 = vcombine.high %v229, %v229
        %v265 = vunpack.c.l.s4 1983009808
        %v266 = vunpack.c.0.s8 %v265
        %v267 = vlaneseq
        %v268 = vshrl.u32 %v267, 7
        %v269 = vsub.s32 %v266, %v268
        %v270 = vrot.slane %v229, %v269
        %v272 = vunpack.c.l.s4 1983009808
        %v273 = vunpack.c.0.s8 %v272
        %v274 = vlaneseq
        %v275 = vshrl.u32 %v274, 7
        %v276 = vsub.s32 %v273, %v275
        %v277 = vrot.slane %v263, %v276
        %v278 = vcombine.high %v270, %v270
        %v279 = vcombine.high %v277, %v277
        %vm280 = vcmask 31744
        %v282 = vsel %vm280, %v260, 0
        %v285 = vsel %vm280, %v261, 0
        %vm287 = vcmask 1041408
        %v289 = vsel %vm287, %v270, 0
        %v292 = vsel %vm287, %v278, 0
        %v295 = vsel %vm287, %v277, 0
        %v298 = vsel %vm287, %v279, 0
        %300 = vmatprep.subr.bf16.mxu0 %v292
        %301 = vmatpush1.bf16.msra.mxu0 %v289
        %302 = vmatprep.subr.bf16.mxu0 0
        %303 = vmatpush1.bf16.msra.mxu0 0
        %304 = vmatprep.subr.bf16.mxu0 0
        %305 = vmatpush1.bf16.msra.mxu0 0
        %306 = vmatprep.subr.bf16.mxu0 0
        %307 = vmatpush1.bf16.msra.mxu0 0
        %308 = vmatprep.subr.bf16.mxu0 0
        %309 = vmatpush1.bf16.msra.mxu0 0
        %310 = vmatprep.subr.bf16.mxu0 0
        %311 = vmatpush1.bf16.msra.mxu0 0
        %312 = vmatprep.subr.bf16.mxu0 0
        %313 = vmatpush1.bf16.msra.mxu0 0
        %314 = vmatprep.subr.bf16.mxu0 0
        %315 = vmatpush1.bf16.msra.mxu0 0
        %316 = vmatprep.subr.bf16.mxu0 0
        %317 = vmatpush1.bf16.msra.mxu0 0
        %318 = vmatprep.subr.bf16.mxu0 0
        %319 = vmatpush1.bf16.msra.mxu0 0
        %320 = vmatprep.subr.bf16.mxu0 0
        %321 = vmatpush1.bf16.msra.mxu0 0
        %322 = vmatprep.subr.bf16.mxu0 0
        %323 = vmatpush1.bf16.msra.mxu0 0
        %324 = vmatprep.subr.bf16.mxu0 0
        %325 = vmatpush1.bf16.msra.mxu0 0
        %326 = vmatprep.subr.bf16.mxu0 0
        %327 = vmatpush1.bf16.msra.mxu0 0
        %328 = vmatprep.subr.bf16.mxu0 0
        %329 = vmatpush1.bf16.msra.mxu0 0
        %330 = vmatprep.subr.bf16.mxu0 0
        %331 = vmatpush1.bf16.msra.mxu0 0
        %332 = vmatprep.mubr.bf16.mxu0 0
        %333 = vmatmul.mubr.bf16.gmra.mrb[0].mxu0 %v282
        %v334 = vpop.f32.mrb[0].mxu0
        %v335 = vadd.f32 %v235, %v334
        %v336 = vpop.f32.mrb[0].mxu0
        %v337 = vadd.f32 %v239, %v336
        %v338 = vpop.f32.mrb[0].mxu0
        %v339 = vadd.f32 %v235, %v338
        %v340 = vpop.f32.mrb[0].mxu0
        %v341 = vadd.f32 %v239, %v340
        %342 = vmatprep.mubr.bf16.mxu0 0
        %343 = vmatmul.mubr.bf16.gmra.mrb[0].mxu0 %v285
        %v344 = vpop.f32.mrb[0].mxu0
        %v345 = vadd.f32 %v235, %v344
        %v346 = vpop.f32.mrb[0].mxu0
        %v347 = vadd.f32 %v239, %v346
        %v348 = vpop.f32.mrb[0].mxu0
        %v349 = vadd.f32 %v235, %v348
        %v350 = vpop.f32.mrb[0].mxu0
        %v351 = vadd.f32 %v239, %v350
        %352 = vdwg.mxu0
        %353 = vmatprep.subr.bf16.mxu0 %v298
        %354 = vmatpush1.bf16.msra.mxu0 %v295
        %355 = vmatprep.subr.bf16.mxu0 0
        %356 = vmatpush1.bf16.msra.mxu0 0
        %357 = vmatprep.subr.bf16.mxu0 0
        %358 = vmatpush1.bf16.msra.mxu0 0
        %359 = vmatprep.subr.bf16.mxu0 0
        %360 = vmatpush1.bf16.msra.mxu0 0
        %361 = vmatprep.subr.bf16.mxu0 0
        %362 = vmatpush1.bf16.msra.mxu0 0
        %363 = vmatprep.subr.bf16.mxu0 0
        %364 = vmatpush1.bf16.msra.mxu0 0
        %365 = vmatprep.subr.bf16.mxu0 0
        %366 = vmatpush1.bf16.msra.mxu0 0
        %367 = vmatprep.subr.bf16.mxu0 0
        %368 = vmatpush1.bf16.msra.mxu0 0
        %369 = vmatprep.subr.bf16.mxu0 0
        %370 = vmatpush1.bf16.msra.mxu0 0
        %371 = vmatprep.subr.bf16.mxu0 0
        %372 = vmatpush1.bf16.msra.mxu0 0
        %373 = vmatprep.subr.bf16.mxu0 0
        %374 = vmatpush1.bf16.msra.mxu0 0
        %375 = vmatprep.subr.bf16.mxu0 0
        %376 = vmatpush1.bf16.msra.mxu0 0
        %377 = vmatprep.subr.bf16.mxu0 0
        %378 = vmatpush1.bf16.msra.mxu0 0
        %379 = vmatprep.subr.bf16.mxu0 0
        %380 = vmatpush1.bf16.msra.mxu0 0
        %381 = vmatprep.subr.bf16.mxu0 0
        %382 = vmatpush1.bf16.msra.mxu0 0
        %383 = vmatprep.subr.bf16.mxu0 0
        %384 = vmatpush1.bf16.msra.mxu0 0
        %385 = vmatprep.mubr.bf16.mxu0 0
        %386 = vmatmul.mubr.bf16.gmra.mrb[0].mxu0 %v282
        %v387 = vpop.f32.mrb[0].mxu0
        %v388 = vadd.f32 %v243, %v387
        %v389 = vpop.f32.mrb[0].mxu0
        %v390 = vadd.f32 %v247, %v389
        %v391 = vpop.f32.mrb[0].mxu0
        %v392 = vadd.f32 %v243, %v391
        %v393 = vpop.f32.mrb[0].mxu0
        %v394 = vadd.f32 %v247, %v393
        %395 = vmatprep.mubr.bf16.mxu0 0
        %396 = vmatmul.mubr.bf16.gmra.mrb[0].mxu0 %v285
        %v397 = vpop.f32.mrb[0].mxu0
        %v398 = vadd.f32 %v243, %v397
        %v399 = vpop.f32.mrb[0].mxu0
        %v400 = vadd.f32 %v247, %v399
        %v401 = vpop.f32.mrb[0].mxu0
        %v402 = vadd.f32 %v243, %v401
        %v403 = vpop.f32.mrb[0].mxu0
        %v404 = vadd.f32 %v247, %v403
        %405 = vdwg.mxu0
        %406 = vst [vmem:[%s204] sm:$0xff] %v335
        %407 = vst [vmem:[%s204 + $0x8] sm:$0xff] %v337
        %408 = vst [vmem:[%s204 + $0x10] sm:$0xff] %v388
        %409 = vst [vmem:[%s204 + $0x18] sm:$0xff] %v390
        %410 = vst [vmem:[%s204 + $0x20] sm:$0xff] %v339
        %411 = vst [vmem:[%s204 + $0x28] sm:$0xff] %v341
        %412 = vst [vmem:[%s204 + $0x30] sm:$0xff] %v392
        %413 = vst [vmem:[%s204 + $0x38] sm:$0xff] %v394
        %414 = vst [vmem:[%s204 + $0x40] sm:$0xff] %v345
        %415 = vst [vmem:[%s204 + $0x48] sm:$0xff] %v347
        %416 = vst [vmem:[%s204 + $0x50] sm:$0xff] %v398
        %417 = vst [vmem:[%s204 + $0x58] sm:$0xff] %v400
        %418 = vst [vmem:[%s204 + $0x60] sm:$0xff] %v349
        %419 = vst [vmem:[%s204 + $0x68] sm:$0xff] %v351
        %420 = vst [vmem:[%s204 + $0x70] sm:$0xff] %v402
        %421 = vst [vmem:[%s204 + $0x78] sm:$0xff] %v404
        %s422 = sand.u32 %s114, 1
        %s423 = sand.u32 %s114, 1
        %s424 = smul.addr %s423, 128
        %s425 = scalar_lea.vmem [#allocation2], %s424
        // Predicated region
        $region33: #{_lambda_.28} parent=31 // pred_check
          %p426 = pneg %p124
        $region34: #{_lambda_.28} parent=31 // pred_check_branch
          %428 = sbr.rel (%p426) target = $region36
        $region35: #{_lambda_.28} parent=31 // pred_region
          %s429 = smul.u32 4, %s18
          %s430 = smul.u32 4, %s19
          %s431 = smul.addr %s429, 32
          %s432 = sadd.s32 %s430, %s431
          %s433 = smul.addr %s432, 8
          %s434 = scalar_lea.vmem %s3, %s433
          // Predicated region
          $region37: #{_lambda_.28} parent=35 // pred_check
            _
          $region38: #{_lambda_.28} parent=35 // pred_check_branch
            %436 = sbr.rel (0) target = $region40
          $region39: #{_lambda_.28} parent=35 // pred_region
            // Predicated region
            $region41: #{_lambda_.28} parent=39 // pred_check
              _
            $region42: #{_lambda_.28} parent=39 // pred_check_branch
              %438 = sbr.rel (0) target = $region44
            $region43: #{_lambda_.28} parent=39 // pred_region
              loop: start=0, step=1, limit=1
              $region45: #{_lambda_.28} parent=43 // loop_pre_header
                _
              $region46: #{_lambda_.28} parent=43 // loop_header
                %s440 = sphi 0, %s444
                %p441 = scmp.ge.s32.totalorder %s440, 1
                %s445 = sphi %s425, %s425
                %s446 = sphi %s434, %s434
              $region47: #{_lambda_.28} parent=43 // loop_header_branch
                %443 = sbr.rel (%p441) target = $region51
              $region48: #{_lambda_.28} parent=43 // loop_body
                %v447 = vld [vmem:[%s445] sm:$0xff]
                %448 = vst [vmem:[%s446] sm:$0xff] %v447
                %v449 = vld [vmem:[%s445 + $0x8] sm:$0xff]
                %450 = vst [vmem:[%s446 + $0x8] sm:$0xff] %v449
                %v451 = vld [vmem:[%s445 + $0x10] sm:$0xff]
                %452 = vst [vmem:[%s446 + $0x10] sm:$0xff] %v451
                %v453 = vld [vmem:[%s445 + $0x18] sm:$0xff]
                %454 = vst [vmem:[%s446 + $0x18] sm:$0xff] %v453
                %v455 = vld [vmem:[%s445 + $0x20] sm:$0xff]
                %456 = vst [vmem:[%s446 + $0x100] sm:$0xff] %v455
                %v457 = vld [vmem:[%s445 + $0x28] sm:$0xff]
                %458 = vst [vmem:[%s446 + $0x108] sm:$0xff] %v457
                %v459 = vld [vmem:[%s445 + $0x30] sm:$0xff]
                %460 = vst [vmem:[%s446 + $0x110] sm:$0xff] %v459
                %v461 = vld [vmem:[%s445 + $0x38] sm:$0xff]
                %462 = vst [vmem:[%s446 + $0x118] sm:$0xff] %v461
                %v463 = vld [vmem:[%s445 + $0x40] sm:$0xff]
                %464 = vst [vmem:[%s446 + $0x200] sm:$0xff] %v463
                %v465 = vld [vmem:[%s445 + $0x48] sm:$0xff]
                %466 = vst [vmem:[%s446 + $0x208] sm:$0xff] %v465
                %v467 = vld [vmem:[%s445 + $0x50] sm:$0xff]
                %468 = vst [vmem:[%s446 + $0x210] sm:$0xff] %v467
                %v469 = vld [vmem:[%s445 + $0x58] sm:$0xff]
                %470 = vst [vmem:[%s446 + $0x218] sm:$0xff] %v469
                %v471 = vld [vmem:[%s445 + $0x60] sm:$0xff]
                %472 = vst [vmem:[%s446 + $0x300] sm:$0xff] %v471
                %v473 = vld [vmem:[%s445 + $0x68] sm:$0xff]
                %474 = vst [vmem:[%s446 + $0x308] sm:$0xff] %v473
                %v475 = vld [vmem:[%s445 + $0x70] sm:$0xff]
                %476 = vst [vmem:[%s446 + $0x310] sm:$0xff] %v475
                %v477 = vld [vmem:[%s445 + $0x78] sm:$0xff]
                %478 = vst [vmem:[%s446 + $0x318] sm:$0xff] %v477
              $region49: #{_lambda_.28} parent=43 // loop_footer
                %s444 = sadd.s32 1, %s440
              $region50: #{_lambda_.28} parent=43 // loop_footer_branch
                %439 = sbr.rel target = $region46
              $region51: #{_lambda_.28} parent=43 // loop_exit
                _
            $region44: #{_lambda_.28} parent=39 // pred_fallthru
              _
            // Predicated region
            $region52: #{_lambda_.28} parent=39 // pred_check
              _
            $region53: #{_lambda_.28} parent=39 // pred_check_branch
              %480 = sbr.rel target = $region55
            $region54: #{_lambda_.28} parent=39 // pred_region
              _
            $region55: #{_lambda_.28} parent=39 // pred_fallthru
              _
          $region40: #{_lambda_.28} parent=35 // pred_fallthru
            _
          %481 = vnop
        $region36: #{_lambda_.28} parent=31 // pred_fallthru
          _
      $region32: #{_lambda_.28} parent=5 // pred_fallthru
        _
      %p482 = scmp.le.s32.totalorder 2, %s9
      // Predicated region
      $region56: #{_lambda_.28} parent=5 // pred_check
        %p483 = pneg %p482
      $region57: #{_lambda_.28} parent=5 // pred_check_branch
        %485 = sbr.rel (%p483) target = $region59
      $region58: #{_lambda_.28} parent=5 // pred_region
        %s486 = ssub.s32 %s9, 2
        // Predicated region
        $region60: #{_lambda_.28} parent=58 // pred_check
          %p487 = pneg %p130
        $region61: #{_lambda_.28} parent=58 // pred_check_branch
          %489 = sbr.rel (%p487) target = $region63
        $region62: #{_lambda_.28} parent=58 // pred_region
          %s490 = sand.u32 %s115, 1
          %s491 = sand.u32 %s115, 1
          %s492 = smul.addr %s491, 128
          %s493 = scalar_lea.vmem [#allocation2], %s492
        $region63: #{_lambda_.28} parent=58 // pred_fallthru
          _
      $region59: #{_lambda_.28} parent=5 // pred_fallthru
        _
    $region6: #{_lambda_.28} parent=1 // loop_footer
      %s13 = sadd.s32 1, %s9
    $region7: #{_lambda_.28} parent=1 // loop_footer_branch
      %8 = sbr.rel target = $region3
    $region8: #{_lambda_.28} parent=1 // loop_exit
      _

// kernel: _lambda_.29
$region0: #{_lambda_.29}
  #allocation0 [shape = 'u32[]', space=smem, size = 0x4, offset = 0x4, fixed_abs, tag = 'smem constant byte address 0x4 - core index']
  #allocation1 [shape = 'u32[144,128]{1,0:T(1,128)}', space=vmem, size = 0x12000, scoped, tag = 'internal scratch']
  %s0 = inlined_call_operand.vmem [shape: bf16[8,512], index: 0, kind: input, shape index: {}]
  %s1 = inlined_call_operand.vmem [shape: bf16[512,512], index: 1, kind: input, shape index: {}]
  %s2 = inlined_call_operand.vmem [shape: f32[1,512], index: 2, kind: input, shape index: {}]
  %s3 = inlined_call_operand.vmem [shape: bf16[512,256], index: 3, kind: input, shape index: {}]
  %s4 = inlined_call_operand.vmem [shape: f32[1,256], index: 4, kind: input, shape index: {}]
  %s5 = inlined_call_operand.vmem [shape: bf16[256,128], index: 5, kind: input, shape index: {}]
  %s6 = inlined_call_operand.vmem [shape: f32[1,128], index: 6, kind: input, shape index: {}]
  %s7 = inlined_call_operand.vmem [shape: f32[8,128], index: 7, kind: output, shape index: {}]
  %s8 = sld [smem:[#allocation0]]
  $region38: #{_lambda_.29} parent=0
    _
  %s10 = ssub.s32 1, %s8
  %s11 = scalar_select 0, %s10, %s8
  // Predicated region
  $region2: #{_lambda_.29} parent=0 // pred_check
    _
  $region3: #{_lambda_.29} parent=0 // pred_check_branch
    %13 = sbr.rel (0) target = $region5
  $region4: #{_lambda_.29} parent=0 // pred_region
    _
  $region5: #{_lambda_.29} parent=0 // pred_fallthru
    _
  // Predicated region
  $region6: #{_lambda_.29} parent=0 // pred_check
    _
  $region7: #{_lambda_.29} parent=0 // pred_check_branch
    %15 = sbr.rel (0) target = $region9
  $region8: #{_lambda_.29} parent=0 // pred_region
    _
  $region9: #{_lambda_.29} parent=0 // pred_fallthru
    _
  // Predicated region
  $region10: #{_lambda_.29} parent=0 // pred_check
    _
  $region11: #{_lambda_.29} parent=0 // pred_check_branch
    %17 = sbr.rel (0) target = $region13
  $region12: #{_lambda_.29} parent=0 // pred_region
    _
  $region13: #{_lambda_.29} parent=0 // pred_fallthru
    _
  // Predicated region
  $region14: #{_lambda_.29} parent=0 // pred_check
    _
  $region15: #{_lambda_.29} parent=0 // pred_check_branch
    %19 = sbr.rel (0) target = $region17
  $region16: #{_lambda_.29} parent=0 // pred_region
    _
  $region17: #{_lambda_.29} parent=0 // pred_fallthru
    _
  // Predicated region
  $region18: #{_lambda_.29} parent=0 // pred_check
    _
  $region19: #{_lambda_.29} parent=0 // pred_check_branch
    %21 = sbr.rel (0) target = $region21
  $region20: #{_lambda_.29} parent=0 // pred_region
    _
  $region21: #{_lambda_.29} parent=0 // pred_fallthru
    _
  // Predicated region
  $region22: #{_lambda_.29} parent=0 // pred_check
    _
  $region23: #{_lambda_.29} parent=0 // pred_check_branch
    %23 = sbr.rel (0) target = $region25
  $region24: #{_lambda_.29} parent=0 // pred_region
    _
  $region25: #{_lambda_.29} parent=0 // pred_fallthru
    _
  // Predicated region
  $region26: #{_lambda_.29} parent=0 // pred_check
    _
  $region27: #{_lambda_.29} parent=0 // pred_check_branch
    %25 = sbr.rel (0) target = $region29
  $region28: #{_lambda_.29} parent=0 // pred_region
    _
  $region29: #{_lambda_.29} parent=0 // pred_fallthru
    _
  %v27 = vld [vmem:[%s0] sm:$0xff]
  %v28 = vld [vmem:[%s0 + $0x8] sm:$0xff]
  %v29 = vld [vmem:[%s1] sm:$0xff]
  %v30 = vld [vmem:[%s1 + $0x8] sm:$0xff]
  %v31 = vld [vmem:[%s1 + $0x10] sm:$0xff]
  %v32 = vld [vmem:[%s1 + $0x18] sm:$0xff]
  %v33 = vld [vmem:[%s1 + $0x20] sm:$0xff]
  %v34 = vld [vmem:[%s1 + $0x28] sm:$0xff]
  %v35 = vld [vmem:[%s1 + $0x30] sm:$0xff]
  %v36 = vld [vmem:[%s1 + $0x38] sm:$0xff]
  %v37 = vld [vmem:[%s1 + $0x40] sm:$0xff]
  %v38 = vld [vmem:[%s1 + $0x48] sm:$0xff]
  %v39 = vld [vmem:[%s1 + $0x50] sm:$0xff]
  %v40 = vld [vmem:[%s1 + $0x58] sm:$0xff]
  %v41 = vld [vmem:[%s1 + $0x60] sm:$0xff]
  %v42 = vld [vmem:[%s1 + $0x68] sm:$0xff]
  %v43 = vld [vmem:[%s1 + $0x70] sm:$0xff]
  %v44 = vld [vmem:[%s1 + $0x78] sm:$0xff]
  %v45 = vld [vmem:[%s1 + $0x80] sm:$0xff]
  %v46 = vld [vmem:[%s1 + $0x88] sm:$0xff]
  %v47 = vld [vmem:[%s1 + $0x90] sm:$0xff]
  %v48 = vld [vmem:[%s1 + $0x98] sm:$0xff]
  %v49 = vld [vmem:[%s1 + $0xa0] sm:$0xff]
  %v50 = vld [vmem:[%s1 + $0xa8] sm:$0xff]
  %v51 = vld [vmem:[%s1 + $0xb0] sm:$0xff]
  %v52 = vld [vmem:[%s1 + $0xb8] sm:$0xff]
  %v53 = vld [vmem:[%s1 + $0xc0] sm:$0xff]
  %v54 = vld [vmem:[%s1 + $0xc8] sm:$0xff]
  %v55 = vld [vmem:[%s1 + $0xd0] sm:$0xff]
  %v56 = vld [vmem:[%s1 + $0xd8] sm:$0xff]
  %v57 = vld [vmem:[%s1 + $0xe0] sm:$0xff]
  %v58 = vld [vmem:[%s1 + $0xe8] sm:$0xff]
  %v59 = vld [vmem:[%s1 + $0xf0] sm:$0xff]
  %v60 = vld [vmem:[%s1 + $0xf8] sm:$0xff]
  %v61 = vld [vmem:[%s1 + $0x100] sm:$0xff]
  %v62 = vld [vmem:[%s1 + $0x108] sm:$0xff]
  %v63 = vld [vmem:[%s1 + $0x110] sm:$0xff]
  %v64 = vld [vmem:[%s1 + $0x118] sm:$0xff]
  %v65 = vld [vmem:[%s1 + $0x120] sm:$0xff]
  %v66 = vld [vmem:[%s1 + $0x128] sm:$0xff]
  %v67 = vld [vmem:[%s1 + $0x130] sm:$0xff]
  %v68 = vld [vmem:[%s1 + $0x138] sm:$0xff]
  %v69 = vld [vmem:[%s1 + $0x140] sm:$0xff]
  %v70 = vld [vmem:[%s1 + $0x148] sm:$0xff]
  %v71 = vld [vmem:[%s1 + $0x150] sm:$0xff]
  %v72 = vld [vmem:[%s1 + $0x158] sm:$0xff]
  %v73 = vld [vmem:[%s1 + $0x160] sm:$0xff]
  %v74 = vld [vmem:[%s1 + $0x168] sm:$0xff]
  %v75 = vld [vmem:[%s1 + $0x170] sm:$0xff]
  %v76 = vld [vmem:[%s1 + $0x178] sm:$0xff]
  %v77 = vld [vmem:[%s1 + $0x180] sm:$0xff]
  %v78 = vld [vmem:[%s1 + $0x188] sm:$0xff]
  %v79 = vld [vmem:[%s1 + $0x190] sm:$0xff]
  %v80 = vld [vmem:[%s1 + $0x198] sm:$0xff]
  %v81 = vld [vmem:[%s1 + $0x1a0] sm:$0xff]
  %v82 = vld [vmem:[%s1 + $0x1a8] sm:$0xff]
  %v83 = vld [vmem:[%s1 + $0x1b0] sm:$0xff]
  %v84 = vld [vmem:[%s1 + $0x1b8] sm:$0xff]
  %v85 = vld [vmem:[%s1 + $0x1c0] sm:$0xff]
  %v86 = vld [vmem:[%s1 + $0x1c8] sm:$0xff]
  %v87 = vld [vmem:[%s1 + $0x1d0] sm:$0xff]
  %v88 = vld [vmem:[%s1 + $0x1d8] sm:$0xff]
  %v89 = vld [vmem:[%s1 + $0x1e0] sm:$0xff]
  %v90 = vld [vmem:[%s1 + $0x1e8] sm:$0xff]
  %v91 = vld [vmem:[%s1 + $0x1f0] sm:$0xff]
  %v92 = vld [vmem:[%s1 + $0x1f8] sm:$0xff]
  %v93 = vld [vmem:[%s1 + $0x200] sm:$0xff]
  %v94 = vld [vmem:[%s1 + $0x208] sm:$0xff]
  %v95 = vld [vmem:[%s1 + $0x210] sm:$0xff]
  %v96 = vld [vmem:[%s1 + $0x218] sm:$0xff]
  %v97 = vld [vmem:[%s1 + $0x220] sm:$0xff]
  %v98 = vld [vmem:[%s1 + $0x228] sm:$0xff]
  %v99 = vld [vmem:[%s1 + $0x230] sm:$0xff]
  %v100 = vld [vmem:[%s1 + $0x238] sm:$0xff]
  %v101 = vld [vmem:[%s1 + $0x240] sm:$0xff]
  %v102 = vld [vmem:[%s1 + $0x248] sm:$0xff]
  %v103 = vld [vmem:[%s1 + $0x250] sm:$0xff]
  %v104 = vld [vmem:[%s1 + $0x258] sm:$0xff]
  %v105 = vld [vmem:[%s1 + $0x260] sm:$0xff]
  %v106 = vld [vmem:[%s1 + $0x268] sm:$0xff]
  %v107 = vld [vmem:[%s1 + $0x270] sm:$0xff]
  %v108 = vld [vmem:[%s1 + $0x278] sm:$0xff]
  %v109 = vld [vmem:[%s1 + $0x280] sm:$0xff]
  %v110 = vld [vmem:[%s1 + $0x288] sm:$0xff]
  %v111 = vld [vmem:[%s1 + $0x290] sm:$0xff]
  %v112 = vld [vmem:[%s1 + $0x298] sm:$0xff]
  %v113 = vld [vmem:[%s1 + $0x2a0] sm:$0xff]
  %v114 = vld [vmem:[%s1 + $0x2a8] sm:$0xff]
  %v115 = vld [vmem:[%s1 + $0x2b0] sm:$0xff]
  %v116 = vld [vmem:[%s1 + $0x2b8] sm:$0xff]
  %v117 = vld [vmem:[%s1 + $0x2c0] sm:$0xff]
  %v118 = vld [vmem:[%s1 + $0x2c8] sm:$0xff]
  %v119 = vld [vmem:[%s1 + $0x2d0] sm:$0xff]
  %v120 = vld [vmem:[%s1 + $0x2d8] sm:$0xff]
  %v121 = vld [vmem:[%s1 + $0x2e0] sm:$0xff]
  %v122 = vld [vmem:[%s1 + $0x2e8] sm:$0xff]
  %v123 = vld [vmem:[%s1 + $0x2f0] sm:$0xff]
  %v124 = vld [vmem:[%s1 + $0x2f8] sm:$0xff]
  %v125 = vld [vmem:[%s1 + $0x300] sm:$0xff]
  %v126 = vld [vmem:[%s1 + $0x308] sm:$0xff]
  %v127 = vld [vmem:[%s1 + $0x310] sm:$0xff]
  %v128 = vld [vmem:[%s1 + $0x318] sm:$0xff]
  %v129 = vld [vmem:[%s1 + $0x320] sm:$0xff]
  %v130 = vld [vmem:[%s1 + $0x328] sm:$0xff]
  %v131 = vld [vmem:[%s1 + $0x330] sm:$0xff]
  %v132 = vld [vmem:[%s1 + $0x338] sm:$0xff]
  %v133 = vld [vmem:[%s1 + $0x340] sm:$0xff]
  %v134 = vld [vmem:[%s1 + $0x348] sm:$0xff]
  %v135 = vld [vmem:[%s1 + $0x350] sm:$0xff]
  %v136 = vld [vmem:[%s1 + $0x358] sm:$0xff]
  %v137 = vld [vmem:[%s1 + $0x360] sm:$0xff]
  %v138 = vld [vmem:[%s1 + $0x368] sm:$0xff]
  %v139 = vld [vmem:[%s1 + $0x370] sm:$0xff]
  %v140 = vld [vmem:[%s1 + $0x378] sm:$0xff]
  %v141 = vld [vmem:[%s1 + $0x380] sm:$0xff]
  %v142 = vld [vmem:[%s1 + $0x388] sm:$0xff]
  %v143 = vld [vmem:[%s1 + $0x390] sm:$0xff]
  %v144 = vld [vmem:[%s1 + $0x398] sm:$0xff]
  %v145 = vld [vmem:[%s1 + $0x3a0] sm:$0xff]
  %v146 = vld [vmem:[%s1 + $0x3a8] sm:$0xff]
  %v147 = vld [vmem:[%s1 + $0x3b0] sm:$0xff]
  %v148 = vld [vmem:[%s1 + $0x3b8] sm:$0xff]
  %v149 = vld [vmem:[%s1 + $0x3c0] sm:$0xff]
  %v150 = vld [vmem:[%s1 + $0x3c8] sm:$0xff]
  %v151 = vld [vmem:[%s1 + $0x3d0] sm:$0xff]
  %v152 = vld [vmem:[%s1 + $0x3d8] sm:$0xff]
  %v153 = vld [vmem:[%s1 + $0x3e0] sm:$0xff]
  %v154 = vld [vmem:[%s1 + $0x3e8] sm:$0xff]
  %v155 = vld [vmem:[%s1 + $0x3f0] sm:$0xff]
  %v156 = vld [vmem:[%s1 + $0x3f8] sm:$0xff]
  %v157 = vld [vmem:[%s2] sm:$0xf]
  %v159 = vlaneseq
  %v160 = vshrl.u32 %v159, 7
  %v161 = vsub.s32 0, %v160
  %v162 = vrot.slane %v157, %v161
  %v163 = vlaneseq
  %v164 = vshrl.u32 %v163, 7
  %v165 = vsub.s32 1, %v164
  %v166 = vrot.slane %v157, %v165
  %v167 = vlaneseq
  %v168 = vshrl.u32 %v167, 7
  %v169 = vsub.s32 2, %v168
  %v170 = vrot.slane %v157, %v169
  %v171 = vlaneseq
  %v172 = vshrl.u32 %v171, 7
  %v173 = vsub.s32 3, %v172
  %v174 = vrot.slane %v157, %v173
  %v181 = vunpack.c.l.b16 %v27
  %v182 = vunpack.c.h.b16 %v27
  %v183 = vunpack.c.l.b16 %v28
  %v184 = vunpack.c.h.b16 %v28
  %v185 = vpack.c.b16 %v181, %v181
  %v186 = vpack.c.b16 %v182, %v182
  %v187 = vpack.c.b16 %v183, %v183
  %v188 = vpack.c.b16 %v184, %v184
  %v321 = vunpack.c.l.b16 %v29
  %v322 = vunpack.c.h.b16 %v29
  %v323 = vunpack.c.l.b16 %v30
  %v324 = vunpack.c.h.b16 %v30
  %v325 = vunpack.c.l.b16 %v31
  %v326 = vunpack.c.h.b16 %v31
  %v327 = vunpack.c.l.b16 %v32
  %v328 = vunpack.c.h.b16 %v32
  %v329 = vunpack.c.l.b16 %v33
  %v330 = vunpack.c.h.b16 %v33
  %v331 = vunpack.c.l.b16 %v34
  %v332 = vunpack.c.h.b16 %v34
  %v333 = vunpack.c.l.b16 %v35
  %v334 = vunpack.c.h.b16 %v35
  %v335 = vunpack.c.l.b16 %v36
  %v336 = vunpack.c.h.b16 %v36
  %v337 = vunpack.c.l.b16 %v37
  %v338 = vunpack.c.h.b16 %v37
  %v339 = vunpack.c.l.b16 %v38
  %v340 = vunpack.c.h.b16 %v38
  %v341 = vunpack.c.l.b16 %v39
  %v342 = vunpack.c.h.b16 %v39
  %v343 = vunpack.c.l.b16 %v40
  %v344 = vunpack.c.h.b16 %v40
  %v345 = vunpack.c.l.b16 %v41
  %v346 = vunpack.c.h.b16 %v41
  %v347 = vunpack.c.l.b16 %v42
  %v348 = vunpack.c.h.b16 %v42
  %v349 = vunpack.c.l.b16 %v43
  %v350 = vunpack.c.h.b16 %v43
  %v351 = vunpack.c.l.b16 %v44
  %v352 = vunpack.c.h.b16 %v44
  %v353 = vunpack.c.l.b16 %v45
  %v354 = vunpack.c.h.b16 %v45
  %v355 = vunpack.c.l.b16 %v46
  %v356 = vunpack.c.h.b16 %v46
  %v357 = vunpack.c.l.b16 %v47
  %v358 = vunpack.c.h.b16 %v47
  %v359 = vunpack.c.l.b16 %v48
  %v360 = vunpack.c.h.b16 %v48
  %v361 = vunpack.c.l.b16 %v49
  %v362 = vunpack.c.h.b16 %v49
  %v363 = vunpack.c.l.b16 %v50
  %v364 = vunpack.c.h.b16 %v50
  %v365 = vunpack.c.l.b16 %v51
  %v366 = vunpack.c.h.b16 %v51
  %v367 = vunpack.c.l.b16 %v52
  %v368 = vunpack.c.h.b16 %v52
  %v369 = vunpack.c.l.b16 %v53
  %v370 = vunpack.c.h.b16 %v53
  %v371 = vunpack.c.l.b16 %v54
  %v372 = vunpack.c.h.b16 %v54
  %v373 = vunpack.c.l.b16 %v55
  %v374 = vunpack.c.h.b16 %v55
  %v375 = vunpack.c.l.b16 %v56
  %v376 = vunpack.c.h.b16 %v56
  %v377 = vunpack.c.l.b16 %v57
  %v378 = vunpack.c.h.b16 %v57
  %v379 = vunpack.c.l.b16 %v58
  %v380 = vunpack.c.h.b16 %v58
  %v381 = vunpack.c.l.b16 %v59
  %v382 = vunpack.c.h.b16 %v59
  %v383 = vunpack.c.l.b16 %v60
  %v384 = vunpack.c.h.b16 %v60
  %v385 = vunpack.c.l.b16 %v61
  %v386 = vunpack.c.h.b16 %v61
  %v387 = vunpack.c.l.b16 %v62
  %v388 = vunpack.c.h.b16 %v62
  %v389 = vunpack.c.l.b16 %v63
  %v390 = vunpack.c.h.b16 %v63
  %v391 = vunpack.c.l.b16 %v64
  %v392 = vunpack.c.h.b16 %v64
  %v393 = vunpack.c.l.b16 %v65
  %v394 = vunpack.c.h.b16 %v65
  %v395 = vunpack.c.l.b16 %v66
  %v396 = vunpack.c.h.b16 %v66
  %v397 = vunpack.c.l.b16 %v67
  %v398 = vunpack.c.h.b16 %v67
  %v399 = vunpack.c.l.b16 %v68
  %v400 = vunpack.c.h.b16 %v68
  %v401 = vunpack.c.l.b16 %v69
  %v402 = vunpack.c.h.b16 %v69
  %v403 = vunpack.c.l.b16 %v70
  %v404 = vunpack.c.h.b16 %v70
  %v405 = vunpack.c.l.b16 %v71
  %v406 = vunpack.c.h.b16 %v71
  %v407 = vunpack.c.l.b16 %v72
  %v408 = vunpack.c.h.b16 %v72
  %v409 = vunpack.c.l.b16 %v73
  %v410 = vunpack.c.h.b16 %v73
  %v411 = vunpack.c.l.b16 %v74
  %v412 = vunpack.c.h.b16 %v74
  %v413 = vunpack.c.l.b16 %v75
  %v414 = vunpack.c.h.b16 %v75
  %v415 = vunpack.c.l.b16 %v76
  %v416 = vunpack.c.h.b16 %v76
  %v417 = vunpack.c.l.b16 %v77
  %v418 = vunpack.c.h.b16 %v77
  %v419 = vunpack.c.l.b16 %v78
  %v420 = vunpack.c.h.b16 %v78
  %v421 = vunpack.c.l.b16 %v79
  %v422 = vunpack.c.h.b16 %v79
  %v423 = vunpack.c.l.b16 %v80
  %v424 = vunpack.c.h.b16 %v80
  %v425 = vunpack.c.l.b16 %v81
  %v426 = vunpack.c.h.b16 %v81
  %v427 = vunpack.c.l.b16 %v82
  %v428 = vunpack.c.h.b16 %v82
  %v429 = vunpack.c.l.b16 %v83
  %v430 = vunpack.c.h.b16 %v83
  %v431 = vunpack.c.l.b16 %v84
  %v432 = vunpack.c.h.b16 %v84
  %v433 = vunpack.c.l.b16 %v85
  %v434 = vunpack.c.h.b16 %v85
  %v435 = vunpack.c.l.b16 %v86
  %v436 = vunpack.c.h.b16 %v86
  %v437 = vunpack.c.l.b16 %v87
  %v438 = vunpack.c.h.b16 %v87
  %v439 = vunpack.c.l.b16 %v88
  %v440 = vunpack.c.h.b16 %v88
  %v441 = vunpack.c.l.b16 %v89
  %v442 = vunpack.c.h.b16 %v89
  %v443 = vunpack.c.l.b16 %v90
  %v444 = vunpack.c.h.b16 %v90
  %v445 = vunpack.c.l.b16 %v91
  %v446 = vunpack.c.h.b16 %v91
  %v447 = vunpack.c.l.b16 %v92
  %v448 = vunpack.c.h.b16 %v92
  %v449 = vunpack.c.l.b16 %v93
  %v450 = vunpack.c.h.b16 %v93
  %v451 = vunpack.c.l.b16 %v94
  %v452 = vunpack.c.h.b16 %v94
  %v453 = vunpack.c.l.b16 %v95
  %v454 = vunpack.c.h.b16 %v95
  %v455 = vunpack.c.l.b16 %v96
  %v456 = vunpack.c.h.b16 %v96
  %v457 = vunpack.c.l.b16 %v97
  %v458 = vunpack.c.h.b16 %v97
  %v459 = vunpack.c.l.b16 %v98
  %v460 = vunpack.c.h.b16 %v98
  %v461 = vunpack.c.l.b16 %v99
  %v462 = vunpack.c.h.b16 %v99
  %v463 = vunpack.c.l.b16 %v100
  %v464 = vunpack.c.h.b16 %v100
  %v465 = vunpack.c.l.b16 %v101
  %v466 = vunpack.c.h.b16 %v101
  %v467 = vunpack.c.l.b16 %v102
  %v468 = vunpack.c.h.b16 %v102
  %v469 = vunpack.c.l.b16 %v103
  %v470 = vunpack.c.h.b16 %v103
  %v471 = vunpack.c.l.b16 %v104
  %v472 = vunpack.c.h.b16 %v104
  %v473 = vunpack.c.l.b16 %v105
  %v474 = vunpack.c.h.b16 %v105
  %v475 = vunpack.c.l.b16 %v106
  %v476 = vunpack.c.h.b16 %v106
  %v477 = vunpack.c.l.b16 %v107
  %v478 = vunpack.c.h.b16 %v107
  %v479 = vunpack.c.l.b16 %v108
  %v480 = vunpack.c.h.b16 %v108
  %v481 = vunpack.c.l.b16 %v109
  %v482 = vunpack.c.h.b16 %v109
  %v483 = vunpack.c.l.b16 %v110
  %v484 = vunpack.c.h.b16 %v110
  %v485 = vunpack.c.l.b16 %v111
  %v486 = vunpack.c.h.b16 %v111
  %v487 = vunpack.c.l.b16 %v112
  %v488 = vunpack.c.h.b16 %v112
  %v489 = vunpack.c.l.b16 %v113
  %v490 = vunpack.c.h.b16 %v113
  %v491 = vunpack.c.l.b16 %v114
  %v492 = vunpack.c.h.b16 %v114
  %v493 = vunpack.c.l.b16 %v115
  %v494 = vunpack.c.h.b16 %v115
  %v495 = vunpack.c.l.b16 %v116
  %v496 = vunpack.c.h.b16 %v116
  %v497 = vunpack.c.l.b16 %v117
  %v498 = vunpack.c.h.b16 %v117
  %v499 = vunpack.c.l.b16 %v118
  %v500 = vunpack.c.h.b16 %v118
  %v501 = vunpack.c.l.b16 %v119
  %v502 = vunpack.c.h.b16 %v119
  %v503 = vunpack.c.l.b16 %v120
  %v504 = vunpack.c.h.b16 %v120
  %v505 = vunpack.c.l.b16 %v121
  %v506 = vunpack.c.h.b16 %v121
  %v507 = vunpack.c.l.b16 %v122
  %v508 = vunpack.c.h.b16 %v122
  %v509 = vunpack.c.l.b16 %v123
  %v510 = vunpack.c.h.b16 %v123
  %v511 = vunpack.c.l.b16 %v124
  %v512 = vunpack.c.h.b16 %v124
  %v513 = vunpack.c.l.b16 %v125
  %v514 = vunpack.c.h.b16 %v125
  %v515 = vunpack.c.l.b16 %v126
  %v516 = vunpack.c.h.b16 %v126
  %v517 = vunpack.c.l.b16 %v127
  %v518 = vunpack.c.h.b16 %v127
  %v519 = vunpack.c.l.b16 %v128
  %v520 = vunpack.c.h.b16 %v128
  %v521 = vunpack.c.l.b16 %v129
  %v522 = vunpack.c.h.b16 %v129
  %v523 = vunpack.c.l.b16 %v130
  %v524 = vunpack.c.h.b16 %v130
  %v525 = vunpack.c.l.b16 %v131
  %v526 = vunpack.c.h.b16 %v131
  %v527 = vunpack.c.l.b16 %v132
  %v528 = vunpack.c.h.b16 %v132
  %v529 = vunpack.c.l.b16 %v133
  %v530 = vunpack.c.h.b16 %v133
  %v531 = vunpack.c.l.b16 %v134
  %v532 = vunpack.c.h.b16 %v134
  %v533 = vunpack.c.l.b16 %v135
  %v534 = vunpack.c.h.b16 %v135
  %v535 = vunpack.c.l.b16 %v136
  %v536 = vunpack.c.h.b16 %v136
  %v537 = vunpack.c.l.b16 %v137
  %v538 = vunpack.c.h.b16 %v137
  %v539 = vunpack.c.l.b16 %v138
  %v540 = vunpack.c.h.b16 %v138
  %v541 = vunpack.c.l.b16 %v139
  %v542 = vunpack.c.h.b16 %v139
  %v543 = vunpack.c.l.b16 %v140
  %v544 = vunpack.c.h.b16 %v140
  %v545 = vunpack.c.l.b16 %v141
  %v546 = vunpack.c.h.b16 %v141
  %v547 = vunpack.c.l.b16 %v142
  %v548 = vunpack.c.h.b16 %v142
  %v549 = vunpack.c.l.b16 %v143
  %v550 = vunpack.c.h.b16 %v143
  %v551 = vunpack.c.l.b16 %v144
  %v552 = vunpack.c.h.b16 %v144
  %v553 = vunpack.c.l.b16 %v145
  %v554 = vunpack.c.h.b16 %v145
  %v555 = vunpack.c.l.b16 %v146
  %v556 = vunpack.c.h.b16 %v146
  %v557 = vunpack.c.l.b16 %v147
  %v558 = vunpack.c.h.b16 %v147
  %v559 = vunpack.c.l.b16 %v148
  %v560 = vunpack.c.h.b16 %v148
  %v561 = vunpack.c.l.b16 %v149
  %v562 = vunpack.c.h.b16 %v149
  %v563 = vunpack.c.l.b16 %v150
  %v564 = vunpack.c.h.b16 %v150
  %v565 = vunpack.c.l.b16 %v151
  %v566 = vunpack.c.h.b16 %v151
  %v567 = vunpack.c.l.b16 %v152
  %v568 = vunpack.c.h.b16 %v152
  %v569 = vunpack.c.l.b16 %v153
  %v570 = vunpack.c.h.b16 %v153
  %v571 = vunpack.c.l.b16 %v154
  %v572 = vunpack.c.h.b16 %v154
  %v573 = vunpack.c.l.b16 %v155
  %v574 = vunpack.c.h.b16 %v155
  %v575 = vunpack.c.l.b16 %v156
  %v576 = vunpack.c.h.b16 %v156
  %v577 = vpack.c.b16 %v325, %v321
  %v578 = vpack.c.b16 %v326, %v322
  %v579 = vpack.c.b16 %v327, %v323
  %v580 = vpack.c.b16 %v328, %v324
  %v581 = vpack.c.b16 %v333, %v329
  %v582 = vpack.c.b16 %v334, %v330
  %v583 = vpack.c.b16 %v335, %v331
  %v584 = vpack.c.b16 %v336, %v332
  %v585 = vpack.c.b16 %v341, %v337
  %v586 = vpack.c.b16 %v342, %v338
  %v587 = vpack.c.b16 %v343, %v339
  %v588 = vpack.c.b16 %v344, %v340
  %v589 = vpack.c.b16 %v349, %v345
  %v590 = vpack.c.b16 %v350, %v346
  %v591 = vpack.c.b16 %v351, %v347
  %v592 = vpack.c.b16 %v352, %v348
  %v593 = vpack.c.b16 %v357, %v353
  %v594 = vpack.c.b16 %v358, %v354
  %v595 = vpack.c.b16 %v359, %v355
  %v596 = vpack.c.b16 %v360, %v356
  %v597 = vpack.c.b16 %v365, %v361
  %v598 = vpack.c.b16 %v366, %v362
  %v599 = vpack.c.b16 %v367, %v363
  %v600 = vpack.c.b16 %v368, %v364
  %v601 = vpack.c.b16 %v373, %v369
  %v602 = vpack.c.b16 %v374, %v370
  %v603 = vpack.c.b16 %v375, %v371
  %v604 = vpack.c.b16 %v376, %v372
  %v605 = vpack.c.b16 %v381, %v377
  %v606 = vpack.c.b16 %v382, %v378
  %v607 = vpack.c.b16 %v383, %v379
  %v608 = vpack.c.b16 %v384, %v380
  %v609 = vpack.c.b16 %v389, %v385
  %v610 = vpack.c.b16 %v390, %v386
  %v611 = vpack.c.b16 %v391, %v387
  %v612 = vpack.c.b16 %v392, %v388
  %v613 = vpack.c.b16 %v397, %v393
  %v614 = vpack.c.b16 %v398, %v394
  %v615 = vpack.c.b16 %v399, %v395
  %v616 = vpack.c.b16 %v400, %v396
  %v617 = vpack.c.b16 %v405, %v401
  %v618 = vpack.c.b16 %v406, %v402
  %v619 = vpack.c.b16 %v407, %v403
  %v620 = vpack.c.b16 %v408, %v404
  %v621 = vpack.c.b16 %v413, %v409
  %v622 = vpack.c.b16 %v414, %v410
  %v623 = vpack.c.b16 %v415, %v411
  %v624 = vpack.c.b16 %v416, %v412
  %v625 = vpack.c.b16 %v421, %v417
  %v626 = vpack.c.b16 %v422, %v418
  %v627 = vpack.c.b16 %v423, %v419
  %v628 = vpack.c.b16 %v424, %v420
  %v629 = vpack.c.b16 %v429, %v425
  %v630 = vpack.c.b16 %v430, %v426
  %v631 = vpack.c.b16 %v431, %v427
  %v632 = vpack.c.b16 %v432, %v428
  %v633 = vpack.c.b16 %v437, %v433
  %v634 = vpack.c.b16 %v438, %v434
  %v635 = vpack.c.b16 %v439, %v435
  %v636 = vpack.c.b16 %v440, %v436
  %v637 = vpack.c.b16 %v445, %v441
  %v638 = vpack.c.b16 %v446, %v442
  %v639 = vpack.c.b16 %v447, %v443
  %v640 = vpack.c.b16 %v448, %v444
  %v641 = vpack.c.b16 %v453, %v449
  %v642 = vpack.c.b16 %v454, %v450
  %v643 = vpack.c.b16 %v455, %v451
  %v644 = vpack.c.b16 %v456, %v452
  %v645 = vpack.c.b16 %v461, %v457
  %v646 = vpack.c.b16 %v462, %v458
  %v647 = vpack.c.b16 %v463, %v459
  %v648 = vpack.c.b16 %v464, %v460
  %v649 = vpack.c.b16 %v469, %v465
  %v650 = vpack.c.b16 %v470, %v466
  %v651 = vpack.c.b16 %v471, %v467
  %v652 = vpack.c.b16 %v472, %v468
  %v653 = vpack.c.b16 %v477, %v473
  %v654 = vpack.c.b16 %v478, %v474
  %v655 = vpack.c.b16 %v479, %v475
  %v656 = vpack.c.b16 %v480, %v476
  %v657 = vpack.c.b16 %v485, %v481
  %v658 = vpack.c.b16 %v486, %v482
  %v659 = vpack.c.b16 %v487, %v483
  %v660 = vpack.c.b16 %v488, %v484
  %v661 = vpack.c.b16 %v493, %v489
  %v662 = vpack.c.b16 %v494, %v490
  %v663 = vpack.c.b16 %v495, %v491
  %v664 = vpack.c.b16 %v496, %v492
  %v665 = vpack.c.b16 %v501, %v497
  %v666 = vpack.c.b16 %v502, %v498
  %v667 = vpack.c.b16 %v503, %v499
  %v668 = vpack.c.b16 %v504, %v500
  %v669 = vpack.c.b16 %v509, %v505
  %v670 = vpack.c.b16 %v510, %v506
  %v671 = vpack.c.b16 %v511, %v507
  %v672 = vpack.c.b16 %v512, %v508
  %v673 = vpack.c.b16 %v517, %v513
  %v674 = vpack.c.b16 %v518, %v514
  %v675 = vpack.c.b16 %v519, %v515
  %v676 = vpack.c.b16 %v520, %v516
  %v677 = vpack.c.b16 %v525, %v521
  %v678 = vpack.c.b16 %v526, %v522
  %v679 = vpack.c.b16 %v527, %v523
  %v680 = vpack.c.b16 %v528, %v524
  %v681 = vpack.c.b16 %v533, %v529
  %v682 = vpack.c.b16 %v534, %v530
  %v683 = vpack.c.b16 %v535, %v531
  %v684 = vpack.c.b16 %v536, %v532
  %v685 = vpack.c.b16 %v541, %v537
  %v686 = vpack.c.b16 %v542, %v538
  %v687 = vpack.c.b16 %v543, %v539
  %v688 = vpack.c.b16 %v544, %v540
  %v689 = vpack.c.b16 %v549, %v545
  %v690 = vpack.c.b16 %v550, %v546
  %v691 = vpack.c.b16 %v551, %v547
  %v692 = vpack.c.b16 %v552, %v548
  %v693 = vpack.c.b16 %v557, %v553
  %v694 = vpack.c.b16 %v558, %v554
  %v695 = vpack.c.b16 %v559, %v555
  %v696 = vpack.c.b16 %v560, %v556
  %v697 = vpack.c.b16 %v565, %v561
  %v698 = vpack.c.b16 %v566, %v562
  %v699 = vpack.c.b16 %v567, %v563
  %v700 = vpack.c.b16 %v568, %v564
  %v701 = vpack.c.b16 %v573, %v569
  %v702 = vpack.c.b16 %v574, %v570
  %v703 = vpack.c.b16 %v575, %v571
  %v704 = vpack.c.b16 %v576, %v572
  %833 = vmatprep.subr.bf16.mxu0 %v578
  %834 = vmatpush1.bf16.msra.mxu0 %v577
  %835 = vmatprep.subr.bf16.mxu0 %v582
  %836 = vmatpush1.bf16.msra.mxu0 %v581
  %837 = vmatprep.subr.bf16.mxu0 %v586
  %838 = vmatpush1.bf16.msra.mxu0 %v585
  %839 = vmatprep.subr.bf16.mxu0 %v590
  %840 = vmatpush1.bf16.msra.mxu0 %v589
  %841 = vmatprep.subr.bf16.mxu0 %v594
  %842 = vmatpush1.bf16.msra.mxu0 %v593
  %843 = vmatprep.subr.bf16.mxu0 %v598
  %844 = vmatpush1.bf16.msra.mxu0 %v597
  %845 = vmatprep.subr.bf16.mxu0 %v602
  %846 = vmatpush1.bf16.msra.mxu0 %v601
  %847 = vmatprep.subr.bf16.mxu0 %v606
  %848 = vmatpush1.bf16.msra.mxu0 %v605
  %849 = vmatprep.subr.bf16.mxu0 %v610
  %850 = vmatpush1.bf16.msra.mxu0 %v609
  %851 = vmatprep.subr.bf16.mxu0 %v614
  %852 = vmatpush1.bf16.msra.mxu0 %v613
  %853 = vmatprep.subr.bf16.mxu0 %v618
  %854 = vmatpush1.bf16.msra.mxu0 %v617
  %855 = vmatprep.subr.bf16.mxu0 %v622
  %856 = vmatpush1.bf16.msra.mxu0 %v621
  %857 = vmatprep.subr.bf16.mxu0 %v626
  %858 = vmatpush1.bf16.msra.mxu0 %v625
  %859 = vmatprep.subr.bf16.mxu0 %v630
  %860 = vmatpush1.bf16.msra.mxu0 %v629
  %861 = vmatprep.subr.bf16.mxu0 %v634
  %862 = vmatpush1.bf16.msra.mxu0 %v633
  %863 = vmatprep.subr.bf16.mxu0 %v638
  %864 = vmatpush1.bf16.msra.mxu0 %v637
  %865 = vmatprep.mubr.bf16.mxu0 %v186
  %866 = vmatmul.mubr.bf16.gmra.mrb[0].mxu0 %v185
  %v867 = vpop.f32.mrb[0].mxu0
  %v868 = vadd.f32 %v162, %v867
  %v869 = vpop.f32.mrb[0].mxu0
  %v870 = vadd.f32 %v166, %v869
  %v871 = vpop.f32.mrb[0].mxu0
  %v872 = vpop.f32.mrb[0].mxu0
  %873 = vdwg.mxu0
  %874 = vmatprep.subr.bf16.mxu0 %v642
  %875 = vmatpush1.bf16.msra.mxu0 %v641
  %876 = vmatprep.subr.bf16.mxu0 %v646
  %877 = vmatpush1.bf16.msra.mxu0 %v645
  %878 = vmatprep.subr.bf16.mxu0 %v650
  %879 = vmatpush1.bf16.msra.mxu0 %v649
  %880 = vmatprep.subr.bf16.mxu0 %v654
  %881 = vmatpush1.bf16.msra.mxu0 %v653
  %882 = vmatprep.subr.bf16.mxu0 %v658
  %883 = vmatpush1.bf16.msra.mxu0 %v657
  %884 = vmatprep.subr.bf16.mxu0 %v662
  %885 = vmatpush1.bf16.msra.mxu0 %v661
  %886 = vmatprep.subr.bf16.mxu0 %v666
  %887 = vmatpush1.bf16.msra.mxu0 %v665
  %888 = vmatprep.subr.bf16.mxu0 %v670
  %889 = vmatpush1.bf16.msra.mxu0 %v669
  %890 = vmatprep.subr.bf16.mxu0 %v674
  %891 = vmatpush1.bf16.msra.mxu0 %v673
  %892 = vmatprep.subr.bf16.mxu0 %v678
  %893 = vmatpush1.bf16.msra.mxu0 %v677
  %894 = vmatprep.subr.bf16.mxu0 %v682
  %895 = vmatpush1.bf16.msra.mxu0 %v681
  %896 = vmatprep.subr.bf16.mxu0 %v686
  %897 = vmatpush1.bf16.msra.mxu0 %v685
  %898 = vmatprep.subr.bf16.mxu0 %v690
  %899 = vmatpush1.bf16.msra.mxu0 %v689
  %900 = vmatprep.subr.bf16.mxu0 %v694
  %901 = vmatpush1.bf16.msra.mxu0 %v693
  %902 = vmatprep.subr.bf16.mxu0 %v698
  %903 = vmatpush1.bf16.msra.mxu0 %v697
  %904 = vmatprep.subr.bf16.mxu0 %v702
  %905 = vmatpush1.bf16.msra.mxu0 %v701
  %906 = vmatprep.mubr.bf16.mxu0 %v188
  %907 = vmatmul.mubr.bf16.gmra.mrb[0].mxu0 %v187
  %v908 = vpop.f32.mrb[0].mxu0
  %v909 = vadd.f32 %v868, %v908
  %v910 = vpop.f32.mrb[0].mxu0
  %v911 = vadd.f32 %v870, %v910
  %v912 = vpop.f32.mrb[0].mxu0
  %v913 = vpop.f32.mrb[0].mxu0
  %914 = vdwg.mxu0
  %915 = vmatprep.subr.bf16.mxu0 %v580
  %916 = vmatpush1.bf16.msra.mxu0 %v579
  %917 = vmatprep.subr.bf16.mxu0 %v584
  %918 = vmatpush1.bf16.msra.mxu0 %v583
  %919 = vmatprep.subr.bf16.mxu0 %v588
  %920 = vmatpush1.bf16.msra.mxu0 %v587
  %921 = vmatprep.subr.bf16.mxu0 %v592
  %922 = vmatpush1.bf16.msra.mxu0 %v591
  %923 = vmatprep.subr.bf16.mxu0 %v596
  %924 = vmatpush1.bf16.msra.mxu0 %v595
  %925 = vmatprep.subr.bf16.mxu0 %v600
  %926 = vmatpush1.bf16.msra.mxu0 %v599
  %927 = vmatprep.subr.bf16.mxu0 %v604
  %928 = vmatpush1.bf16.msra.mxu0 %v603
  %929 = vmatprep.subr.bf16.mxu0 %v608
  %930 = vmatpush1.bf16.msra.mxu0 %v607
  %931 = vmatprep.subr.bf16.mxu0 %v612
  %932 = vmatpush1.bf16.msra.mxu0 %v611
  %933 = vmatprep.subr.bf16.mxu0 %v616
  %934 = vmatpush1.bf16.msra.mxu0 %v615
  %935 = vmatprep.subr.bf16.mxu0 %v620
  %936 = vmatpush1.bf16.msra.mxu0 %v619
  %937 = vmatprep.subr.bf16.mxu0 %v624
  %938 = vmatpush1.bf16.msra.mxu0 %v623
  %939 = vmatprep.subr.bf16.mxu0 %v628
  %940 = vmatpush1.bf16.msra.mxu0 %v627
  %941 = vmatprep.subr.bf16.mxu0 %v632
  %942 = vmatpush1.bf16.msra.mxu0 %v631
  %943 = vmatprep.subr.bf16.mxu0 %v636
  %944 = vmatpush1.bf16.msra.mxu0 %v635
  %945 = vmatprep.subr.bf16.mxu0 %v640
  %946 = vmatpush1.bf16.msra.mxu0 %v639
  %947 = vmatprep.mubr.bf16.mxu0 %v186
  %948 = vmatmul.mubr.bf16.gmra.mrb[0].mxu0 %v185
  %v949 = vpop.f32.mrb[0].mxu0
  %v950 = vadd.f32 %v170, %v949
  %v951 = vpop.f32.mrb[0].mxu0
  %v952 = vadd.f32 %v174, %v951
  %v953 = vpop.f32.mrb[0].mxu0
  %v954 = vpop.f32.mrb[0].mxu0
  %955 = vdwg.mxu0
  %956 = vmatprep.subr.bf16.mxu0 %v644
  %957 = vmatpush1.bf16.msra.mxu0 %v643
  %958 = vmatprep.subr.bf16.mxu0 %v648
  %959 = vmatpush1.bf16.msra.mxu0 %v647
  %960 = vmatprep.subr.bf16.mxu0 %v652
  %961 = vmatpush1.bf16.msra.mxu0 %v651
  %962 = vmatprep.subr.bf16.mxu0 %v656
  %963 = vmatpush1.bf16.msra.mxu0 %v655
  %964 = vmatprep.subr.bf16.mxu0 %v660
  %965 = vmatpush1.bf16.msra.mxu0 %v659
  %966 = vmatprep.subr.bf16.mxu0 %v664
  %967 = vmatpush1.bf16.msra.mxu0 %v663
  %968 = vmatprep.subr.bf16.mxu0 %v668
  %969 = vmatpush1.bf16.msra.mxu0 %v667
  %970 = vmatprep.subr.bf16.mxu0 %v672
  %971 = vmatpush1.bf16.msra.mxu0 %v671
  %972 = vmatprep.subr.bf16.mxu0 %v676
  %973 = vmatpush1.bf16.msra.mxu0 %v675
  %974 = vmatprep.subr.bf16.mxu0 %v680
  %975 = vmatpush1.bf16.msra.mxu0 %v679
  %976 = vmatprep.subr.bf16.mxu0 %v684
  %977 = vmatpush1.bf16.msra.mxu0 %v683
  %978 = vmatprep.subr.bf16.mxu0 %v688
  %979 = vmatpush1.bf16.msra.mxu0 %v687
  %980 = vmatprep.subr.bf16.mxu0 %v692
  %981 = vmatpush1.bf16.msra.mxu0 %v691
  %982 = vmatprep.subr.bf16.mxu0 %v696
  %983 = vmatpush1.bf16.msra.mxu0 %v695
  %984 = vmatprep.subr.bf16.mxu0 %v700
  %985 = vmatpush1.bf16.msra.mxu0 %v699
  %986 = vmatprep.subr.bf16.mxu0 %v704
  %987 = vmatpush1.bf16.msra.mxu0 %v703
  %988 = vmatprep.mubr.bf16.mxu0 %v188
  %989 = vmatmul.mubr.bf16.gmra.mrb[0].mxu0 %v187
  %v990 = vpop.f32.mrb[0].mxu0
  %v991 = vadd.f32 %v950, %v990
  %v992 = vpop.f32.mrb[0].mxu0
  %v993 = vadd.f32 %v952, %v992
  %v994 = vpop.f32.mrb[0].mxu0
  %v995 = vpop.f32.mrb[0].mxu0
  %996 = vdwg.mxu0
  %v997 = vmax.f32 %v909, 0.0
  %v998 = vmax.f32 %v911, 0.0
  %v999 = vmax.f32 %v991, 0.0
  %v1000 = vmax.f32 %v993, 0.0
  %v1001 = vpack.c.bf16 %v997, %v997
  %v1002 = vpack.c.bf16 %v998, %v998
  %v1003 = vpack.c.bf16 %v999, %v999
  %v1004 = vpack.c.bf16 %v1000, %v1000
  %v1005 = vld [vmem:[%s3] sm:$0xff]
  %v1006 = vld [vmem:[%s3 + $0x8] sm:$0xff]
  %v1007 = vld [vmem:[%s3 + $0x10] sm:$0xff]
  %v1008 = vld [vmem:[%s3 + $0x18] sm:$0xff]
  %v1009 = vld [vmem:[%s3 + $0x20] sm:$0xff]
  %v1010 = vld [vmem:[%s3 + $0x28] sm:$0xff]
  %v1011 = vld [vmem:[%s3 + $0x30] sm:$0xff]
  %v1012 = vld [vmem:[%s3 + $0x38] sm:$0xff]
  %v1013 = vld [vmem:[%s3 + $0x40] sm:$0xff]
  %v1014 = vld [vmem:[%s3 + $0x48] sm:$0xff]
  %v1015 = vld [vmem:[%s3 + $0x50] sm:$0xff]
  %v1016 = vld [vmem:[%s3 + $0x58] sm:$0xff]
  %v1017 = vld [vmem:[%s3 + $0x60] sm:$0xff]
  %v1018 = vld [vmem:[%s3 + $0x68] sm:$0xff]
  %v1019 = vld [vmem:[%s3 + $0x70] sm:$0xff]
  %v1020 = vld [vmem:[%s3 + $0x78] sm:$0xff]
  %v1021 = vld [vmem:[%s3 + $0x80] sm:$0xff]
  %v1022 = vld [vmem:[%s3 + $0x88] sm:$0xff]
  %v1023 = vld [vmem:[%s3 + $0x90] sm:$0xff]
  %v1024 = vld [vmem:[%s3 + $0x98] sm:$0xff]
  %v1025 = vld [vmem:[%s3 + $0xa0] sm:$0xff]
  %v1026 = vld [vmem:[%s3 + $0xa8] sm:$0xff]
  %v1027 = vld [vmem:[%s3 + $0xb0] sm:$0xff]
  %v1028 = vld [vmem:[%s3 + $0xb8] sm:$0xff]
  %v1029 = vld [vmem:[%s3 + $0xc0] sm:$0xff]
  %v1030 = vld [vmem:[%s3 + $0xc8] sm:$0xff]
  %v1031 = vld [vmem:[%s3 + $0xd0] sm:$0xff]
  %v1032 = vld [vmem:[%s3 + $0xd8] sm:$0xff]
  %v1033 = vld [vmem:[%s3 + $0xe0] sm:$0xff]
  %v1034 = vld [vmem:[%s3 + $0xe8] sm:$0xff]
  %v1035 = vld [vmem:[%s3 + $0xf0] sm:$0xff]
  %v1036 = vld [vmem:[%s3 + $0xf8] sm:$0xff]
  %v1037 = vld [vmem:[%s3 + $0x100] sm:$0xff]
  %v1038 = vld [vmem:[%s3 + $0x108] sm:$0xff]
  %v1039 = vld [vmem:[%s3 + $0x110] sm:$0xff]
  %v1040 = vld [vmem:[%s3 + $0x118] sm:$0xff]
  %v1041 = vld [vmem:[%s3 + $0x120] sm:$0xff]
  %v1042 = vld [vmem:[%s3 + $0x128] sm:$0xff]
  %v1043 = vld [vmem:[%s3 + $0x130] sm:$0xff]
  %v1044 = vld [vmem:[%s3 + $0x138] sm:$0xff]
  %v1045 = vld [vmem:[%s3 + $0x140] sm:$0xff]
  %v1046 = vld [vmem:[%s3 + $0x148] sm:$0xff]
  %v1047 = vld [vmem:[%s3 + $0x150] sm:$0xff]
  %v1048 = vld [vmem:[%s3 + $0x158] sm:$0xff]
  %v1049 = vld [vmem:[%s3 + $0x160] sm:$0xff]
  %v1050 = vld [vmem:[%s3 + $0x168] sm:$0xff]
  %v1051 = vld [vmem:[%s3 + $0x170] sm:$0xff]
  %v1052 = vld [vmem:[%s3 + $0x178] sm:$0xff]
  %v1053 = vld [vmem:[%s3 + $0x180] sm:$0xff]
  %v1054 = vld [vmem:[%s3 + $0x188] sm:$0xff]
  %v1055 = vld [vmem:[%s3 + $0x190] sm:$0xff]
  %v1056 = vld [vmem:[%s3 + $0x198] sm:$0xff]
  %v1057 = vld [vmem:[%s3 + $0x1a0] sm:$0xff]
  %v1058 = vld [vmem:[%s3 + $0x1a8] sm:$0xff]
  %v1059 = vld [vmem:[%s3 + $0x1b0] sm:$0xff]
  %v1060 = vld [vmem:[%s3 + $0x1b8] sm:$0xff]
  %v1061 = vld [vmem:[%s3 + $0x1c0] sm:$0xff]
  %v1062 = vld [vmem:[%s3 + $0x1c8] sm:$0xff]
  %v1063 = vld [vmem:[%s3 + $0x1d0] sm:$0xff]
  %v1064 = vld [vmem:[%s3 + $0x1d8] sm:$0xff]
  %v1065 = vld [vmem:[%s3 + $0x1e0] sm:$0xff]
  %v1066 = vld [vmem:[%s3 + $0x1e8] sm:$0xff]
  %v1067 = vld [vmem:[%s3 + $0x1f0] sm:$0xff]
  %v1068 = vld [vmem:[%s3 + $0x1f8] sm:$0xff]
  %v1069 = vld [vmem:[%s4] sm:$0x3]
  %v1071 = vlaneseq
  %v1072 = vshrl.u32 %v1071, 7
  %v1073 = vsub.s32 0, %v1072
  %v1074 = vrot.slane %v1069, %v1073
  %v1075 = vlaneseq
  %v1076 = vshrl.u32 %v1075, 7
  %v1077 = vsub.s32 1, %v1076
  %v1078 = vrot.slane %v1069, %v1077
  %v1145 = vunpack.c.l.b16 %v1005
  %v1146 = vunpack.c.h.b16 %v1005
  %v1147 = vunpack.c.l.b16 %v1006
  %v1148 = vunpack.c.h.b16 %v1006
  %v1149 = vunpack.c.l.b16 %v1007
  %v1150 = vunpack.c.h.b16 %v1007
  %v1151 = vunpack.c.l.b16 %v1008
  %v1152 = vunpack.c.h.b16 %v1008
  %v1153 = vunpack.c.l.b16 %v1009
  %v1154 = vunpack.c.h.b16 %v1009
  %v1155 = vunpack.c.l.b16 %v1010
  %v1156 = vunpack.c.h.b16 %v1010
  %v1157 = vunpack.c.l.b16 %v1011
  %v1158 = vunpack.c.h.b16 %v1011
  %v1159 = vunpack.c.l.b16 %v1012
  %v1160 = vunpack.c.h.b16 %v1012
  %v1161 = vunpack.c.l.b16 %v1013
  %v1162 = vunpack.c.h.b16 %v1013
  %v1163 = vunpack.c.l.b16 %v1014
  %v1164 = vunpack.c.h.b16 %v1014
  %v1165 = vunpack.c.l.b16 %v1015
  %v1166 = vunpack.c.h.b16 %v1015
  %v1167 = vunpack.c.l.b16 %v1016
  %v1168 = vunpack.c.h.b16 %v1016
  %v1169 = vunpack.c.l.b16 %v1017
  %v1170 = vunpack.c.h.b16 %v1017
  %v1171 = vunpack.c.l.b16 %v1018
  %v1172 = vunpack.c.h.b16 %v1018
  %v1173 = vunpack.c.l.b16 %v1019
  %v1174 = vunpack.c.h.b16 %v1019
  %v1175 = vunpack.c.l.b16 %v1020
  %v1176 = vunpack.c.h.b16 %v1020
  %v1177 = vunpack.c.l.b16 %v1021
  %v1178 = vunpack.c.h.b16 %v1021
  %v1179 = vunpack.c.l.b16 %v1022
  %v1180 = vunpack.c.h.b16 %v1022
  %v1181 = vunpack.c.l.b16 %v1023
  %v1182 = vunpack.c.h.b16 %v1023
  %v1183 = vunpack.c.l.b16 %v1024
  %v1184 = vunpack.c.h.b16 %v1024
  %v1185 = vunpack.c.l.b16 %v1025
  %v1186 = vunpack.c.h.b16 %v1025
  %v1187 = vunpack.c.l.b16 %v1026
  %v1188 = vunpack.c.h.b16 %v1026
  %v1189 = vunpack.c.l.b16 %v1027
  %v1190 = vunpack.c.h.b16 %v1027
  %v1191 = vunpack.c.l.b16 %v1028
  %v1192 = vunpack.c.h.b16 %v1028
  %v1193 = vunpack.c.l.b16 %v1029
  %v1194 = vunpack.c.h.b16 %v1029
  %v1195 = vunpack.c.l.b16 %v1030
  %v1196 = vunpack.c.h.b16 %v1030
  %v1197 = vunpack.c.l.b16 %v1031
  %v1198 = vunpack.c.h.b16 %v1031
  %v1199 = vunpack.c.l.b16 %v1032
  %v1200 = vunpack.c.h.b16 %v1032
  %v1201 = vunpack.c.l.b16 %v1033
  %v1202 = vunpack.c.h.b16 %v1033
  %v1203 = vunpack.c.l.b16 %v1034
  %v1204 = vunpack.c.h.b16 %v1034
  %v1205 = vunpack.c.l.b16 %v1035
  %v1206 = vunpack.c.h.b16 %v1035
  %v1207 = vunpack.c.l.b16 %v1036
  %v1208 = vunpack.c.h.b16 %v1036
  %v1209 = vunpack.c.l.b16 %v1037
  %v1210 = vunpack.c.h.b16 %v1037
  %v1211 = vunpack.c.l.b16 %v1038
  %v1212 = vunpack.c.h.b16 %v1038
  %v1213 = vunpack.c.l.b16 %v1039
  %v1214 = vunpack.c.h.b16 %v1039
  %v1215 = vunpack.c.l.b16 %v1040
  %v1216 = vunpack.c.h.b16 %v1040
  %v1217 = vunpack.c.l.b16 %v1041
  %v1218 = vunpack.c.h.b16 %v1041
  %v1219 = vunpack.c.l.b16 %v1042
  %v1220 = vunpack.c.h.b16 %v1042
  %v1221 = vunpack.c.l.b16 %v1043
  %v1222 = vunpack.c.h.b16 %v1043
  %v1223 = vunpack.c.l.b16 %v1044
  %v1224 = vunpack.c.h.b16 %v1044
  %v1225 = vunpack.c.l.b16 %v1045
  %v1226 = vunpack.c.h.b16 %v1045
  %v1227 = vunpack.c.l.b16 %v1046
  %v1228 = vunpack.c.h.b16 %v1046
  %v1229 = vunpack.c.l.b16 %v1047
  %v1230 = vunpack.c.h.b16 %v1047
  %v1231 = vunpack.c.l.b16 %v1048
  %v1232 = vunpack.c.h.b16 %v1048
  %v1233 = vunpack.c.l.b16 %v1049
  %v1234 = vunpack.c.h.b16 %v1049
  %v1235 = vunpack.c.l.b16 %v1050
  %v1236 = vunpack.c.h.b16 %v1050
  %v1237 = vunpack.c.l.b16 %v1051
  %v1238 = vunpack.c.h.b16 %v1051
  %v1239 = vunpack.c.l.b16 %v1052
  %v1240 = vunpack.c.h.b16 %v1052
  %v1241 = vunpack.c.l.b16 %v1053
  %v1242 = vunpack.c.h.b16 %v1053
  %v1243 = vunpack.c.l.b16 %v1054
  %v1244 = vunpack.c.h.b16 %v1054
  %v1245 = vunpack.c.l.b16 %v1055
  %v1246 = vunpack.c.h.b16 %v1055
  %v1247 = vunpack.c.l.b16 %v1056
  %v1248 = vunpack.c.h.b16 %v1056
  %v1249 = vunpack.c.l.b16 %v1057
  %v1250 = vunpack.c.h.b16 %v1057
  %v1251 = vunpack.c.l.b16 %v1058
  %v1252 = vunpack.c.h.b16 %v1058
  %v1253 = vunpack.c.l.b16 %v1059
  %v1254 = vunpack.c.h.b16 %v1059
  %v1255 = vunpack.c.l.b16 %v1060
  %v1256 = vunpack.c.h.b16 %v1060
  %v1257 = vunpack.c.l.b16 %v1061
  %v1258 = vunpack.c.h.b16 %v1061
  %v1259 = vunpack.c.l.b16 %v1062
  %v1260 = vunpack.c.h.b16 %v1062
  %v1261 = vunpack.c.l.b16 %v1063
  %v1262 = vunpack.c.h.b16 %v1063
  %v1263 = vunpack.c.l.b16 %v1064
  %v1264 = vunpack.c.h.b16 %v1064
  %v1265 = vunpack.c.l.b16 %v1065
  %v1266 = vunpack.c.h.b16 %v1065
  %v1267 = vunpack.c.l.b16 %v1066
  %v1268 = vunpack.c.h.b16 %v1066
  %v1269 = vunpack.c.l.b16 %v1067
  %v1270 = vunpack.c.h.b16 %v1067
  %v1271 = vunpack.c.l.b16 %v1068
  %v1272 = vunpack.c.h.b16 %v1068
  %v1273 = vpack.c.b16 %v1147, %v1145
  %v1274 = vpack.c.b16 %v1148, %v1146
  %v1275 = vpack.c.b16 %v1151, %v1149
  %v1276 = vpack.c.b16 %v1152, %v1150
  %v1277 = vpack.c.b16 %v1155, %v1153
  %v1278 = vpack.c.b16 %v1156, %v1154
  %v1279 = vpack.c.b16 %v1159, %v1157
  %v1280 = vpack.c.b16 %v1160, %v1158
  %v1281 = vpack.c.b16 %v1163, %v1161
  %v1282 = vpack.c.b16 %v1164, %v1162
  %v1283 = vpack.c.b16 %v1167, %v1165
  %v1284 = vpack.c.b16 %v1168, %v1166
  %v1285 = vpack.c.b16 %v1171, %v1169
  %v1286 = vpack.c.b16 %v1172, %v1170
  %v1287 = vpack.c.b16 %v1175, %v1173
  %v1288 = vpack.c.b16 %v1176, %v1174
  %v1289 = vpack.c.b16 %v1179, %v1177
  %v1290 = vpack.c.b16 %v1180, %v1178
  %v1291 = vpack.c.b16 %v1183, %v1181
  %v1292 = vpack.c.b16 %v1184, %v1182
  %v1293 = vpack.c.b16 %v1187, %v1185
  %v1294 = vpack.c.b16 %v1188, %v1186
  %v1295 = vpack.c.b16 %v1191, %v1189
  %v1296 = vpack.c.b16 %v1192, %v1190
  %v1297 = vpack.c.b16 %v1195, %v1193
  %v1298 = vpack.c.b16 %v1196, %v1194
  %v1299 = vpack.c.b16 %v1199, %v1197
  %v1300 = vpack.c.b16 %v1200, %v1198
  %v1301 = vpack.c.b16 %v1203, %v1201
  %v1302 = vpack.c.b16 %v1204, %v1202
  %v1303 = vpack.c.b16 %v1207, %v1205
  %v1304 = vpack.c.b16 %v1208, %v1206
  %v1305 = vpack.c.b16 %v1211, %v1209
  %v1306 = vpack.c.b16 %v1212, %v1210
  %v1307 = vpack.c.b16 %v1215, %v1213
  %v1308 = vpack.c.b16 %v1216, %v1214
  %v1309 = vpack.c.b16 %v1219, %v1217
  %v1310 = vpack.c.b16 %v1220, %v1218
  %v1311 = vpack.c.b16 %v1223, %v1221
  %v1312 = vpack.c.b16 %v1224, %v1222
  %v1313 = vpack.c.b16 %v1227, %v1225
  %v1314 = vpack.c.b16 %v1228, %v1226
  %v1315 = vpack.c.b16 %v1231, %v1229
  %v1316 = vpack.c.b16 %v1232, %v1230
  %v1317 = vpack.c.b16 %v1235, %v1233
  %v1318 = vpack.c.b16 %v1236, %v1234
  %v1319 = vpack.c.b16 %v1239, %v1237
  %v1320 = vpack.c.b16 %v1240, %v1238
  %v1321 = vpack.c.b16 %v1243, %v1241
  %v1322 = vpack.c.b16 %v1244, %v1242
  %v1323 = vpack.c.b16 %v1247, %v1245
  %v1324 = vpack.c.b16 %v1248, %v1246
  %v1325 = vpack.c.b16 %v1251, %v1249
  %v1326 = vpack.c.b16 %v1252, %v1250
  %v1327 = vpack.c.b16 %v1255, %v1253
  %v1328 = vpack.c.b16 %v1256, %v1254
  %v1329 = vpack.c.b16 %v1259, %v1257
  %v1330 = vpack.c.b16 %v1260, %v1258
  %v1331 = vpack.c.b16 %v1263, %v1261
  %v1332 = vpack.c.b16 %v1264, %v1262
  %v1333 = vpack.c.b16 %v1267, %v1265
  %v1334 = vpack.c.b16 %v1268, %v1266
  %v1335 = vpack.c.b16 %v1271, %v1269
  %v1336 = vpack.c.b16 %v1272, %v1270
  %1401 = vmatprep.subr.bf16.mxu0 %v1274
  %1402 = vmatpush1.bf16.msra.mxu0 %v1273
  %1403 = vmatprep.subr.bf16.mxu0 %v1276
  %1404 = vmatpush1.bf16.msra.mxu0 %v1275
  %1405 = vmatprep.subr.bf16.mxu0 %v1278
  %1406 = vmatpush1.bf16.msra.mxu0 %v1277
  %1407 = vmatprep.subr.bf16.mxu0 %v1280
  %1408 = vmatpush1.bf16.msra.mxu0 %v1279
  %1409 = vmatprep.subr.bf16.mxu0 %v1282
  %1410 = vmatpush1.bf16.msra.mxu0 %v1281
  %1411 = vmatprep.subr.bf16.mxu0 %v1284
  %1412 = vmatpush1.bf16.msra.mxu0 %v1283
  %1413 = vmatprep.subr.bf16.mxu0 %v1286
  %1414 = vmatpush1.bf16.msra.mxu0 %v1285
  %1415 = vmatprep.subr.bf16.mxu0 %v1288
  %1416 = vmatpush1.bf16.msra.mxu0 %v1287
  %1417 = vmatprep.subr.bf16.mxu0 %v1290
  %1418 = vmatpush1.bf16.msra.mxu0 %v1289
  %1419 = vmatprep.subr.bf16.mxu0 %v1292
  %1420 = vmatpush1.bf16.msra.mxu0 %v1291
  %1421 = vmatprep.subr.bf16.mxu0 %v1294
  %1422 = vmatpush1.bf16.msra.mxu0 %v1293
  %1423 = vmatprep.subr.bf16.mxu0 %v1296
  %1424 = vmatpush1.bf16.msra.mxu0 %v1295
  %1425 = vmatprep.subr.bf16.mxu0 %v1298
  %1426 = vmatpush1.bf16.msra.mxu0 %v1297
  %1427 = vmatprep.subr.bf16.mxu0 %v1300
  %1428 = vmatpush1.bf16.msra.mxu0 %v1299
  %1429 = vmatprep.subr.bf16.mxu0 %v1302
  %1430 = vmatpush1.bf16.msra.mxu0 %v1301
  %1431 = vmatprep.subr.bf16.mxu0 %v1304
  %1432 = vmatpush1.bf16.msra.mxu0 %v1303
  %1433 = vmatprep.mubr.bf16.mxu0 %v1002
  %1434 = vmatmul.mubr.bf16.gmra.mrb[0].mxu0 %v1001
  %v1435 = vpop.f32.mrb[0].mxu0
  %v1436 = vadd.f32 %v1074, %v1435
  %v1437 = vpop.f32.mrb[0].mxu0
  %v1438 = vadd.f32 %v1078, %v1437
  %v1439 = vpop.f32.mrb[0].mxu0
  %v1440 = vpop.f32.mrb[0].mxu0
  %1441 = vdwg.mxu0
  %1442 = vmatprep.subr.bf16.mxu0 %v1306
  %1443 = vmatpush1.bf16.msra.mxu0 %v1305
  %1444 = vmatprep.subr.bf16.mxu0 %v1308
  %1445 = vmatpush1.bf16.msra.mxu0 %v1307
  %1446 = vmatprep.subr.bf16.mxu0 %v1310
  %1447 = vmatpush1.bf16.msra.mxu0 %v1309
  %1448 = vmatprep.subr.bf16.mxu0 %v1312
  %1449 = vmatpush1.bf16.msra.mxu0 %v1311
  %1450 = vmatprep.subr.bf16.mxu0 %v1314
  %1451 = vmatpush1.bf16.msra.mxu0 %v1313
  %1452 = vmatprep.subr.bf16.mxu0 %v1316
  %1453 = vmatpush1.bf16.msra.mxu0 %v1315
  %1454 = vmatprep.subr.bf16.mxu0 %v1318
  %1455 = vmatpush1.bf16.msra.mxu0 %v1317
  %1456 = vmatprep.subr.bf16.mxu0 %v1320
  %1457 = vmatpush1.bf16.msra.mxu0 %v1319
  %1458 = vmatprep.subr.bf16.mxu0 %v1322
  %1459 = vmatpush1.bf16.msra.mxu0 %v1321
  %1460 = vmatprep.subr.bf16.mxu0 %v1324
  %1461 = vmatpush1.bf16.msra.mxu0 %v1323
  %1462 = vmatprep.subr.bf16.mxu0 %v1326
  %1463 = vmatpush1.bf16.msra.mxu0 %v1325
  %1464 = vmatprep.subr.bf16.mxu0 %v1328
  %1465 = vmatpush1.bf16.msra.mxu0 %v1327
  %1466 = vmatprep.subr.bf16.mxu0 %v1330
  %1467 = vmatpush1.bf16.msra.mxu0 %v1329
  %1468 = vmatprep.subr.bf16.mxu0 %v1332
  %1469 = vmatpush1.bf16.msra.mxu0 %v1331
  %1470 = vmatprep.subr.bf16.mxu0 %v1334
  %1471 = vmatpush1.bf16.msra.mxu0 %v1333
  %1472 = vmatprep.subr.bf16.mxu0 %v1336
  %1473 = vmatpush1.bf16.msra.mxu0 %v1335
  %1474 = vmatprep.mubr.bf16.mxu0 %v1004
  %1475 = vmatmul.mubr.bf16.gmra.mrb[0].mxu0 %v1003
  %v1476 = vpop.f32.mrb[0].mxu0
  %v1477 = vadd.f32 %v1436, %v1476
  %v1478 = vpop.f32.mrb[0].mxu0
  %v1479 = vadd.f32 %v1438, %v1478
  %v1480 = vpop.f32.mrb[0].mxu0
  %v1481 = vpop.f32.mrb[0].mxu0
  %1482 = vdwg.mxu0
  %v1483 = vmax.f32 %v1477, 0.0
  %v1484 = vmax.f32 %v1479, 0.0
  %v1485 = vpack.c.bf16 %v1483, %v1483
  %v1486 = vpack.c.bf16 %v1484, %v1484
  %v1487 = vld [vmem:[%s5] sm:$0xf]
  %v1488 = vld [vmem:[%s5 + $0x4] sm:$0xf]
  %v1489 = vld [vmem:[%s5 + $0x8] sm:$0xf]
  %v1490 = vld [vmem:[%s5 + $0xc] sm:$0xf]
  %v1491 = vld [vmem:[%s5 + $0x10] sm:$0xf]
  %v1492 = vld [vmem:[%s5 + $0x14] sm:$0xf]
  %v1493 = vld [vmem:[%s5 + $0x18] sm:$0xf]
  %v1494 = vld [vmem:[%s5 + $0x1c] sm:$0xf]
  %v1495 = vld [vmem:[%s5 + $0x20] sm:$0xf]
  %v1496 = vld [vmem:[%s5 + $0x24] sm:$0xf]
  %v1497 = vld [vmem:[%s5 + $0x28] sm:$0xf]
  %v1498 = vld [vmem:[%s5 + $0x2c] sm:$0xf]
  %v1499 = vld [vmem:[%s5 + $0x30] sm:$0xf]
  %v1500 = vld [vmem:[%s5 + $0x34] sm:$0xf]
  %v1501 = vld [vmem:[%s5 + $0x38] sm:$0xf]
  %v1502 = vld [vmem:[%s5 + $0x3c] sm:$0xf]
  %v1503 = vld [vmem:[%s5 + $0x40] sm:$0xf]
  %v1504 = vld [vmem:[%s5 + $0x44] sm:$0xf]
  %v1505 = vld [vmem:[%s5 + $0x48] sm:$0xf]
  %v1506 = vld [vmem:[%s5 + $0x4c] sm:$0xf]
  %v1507 = vld [vmem:[%s5 + $0x50] sm:$0xf]
  %v1508 = vld [vmem:[%s5 + $0x54] sm:$0xf]
  %v1509 = vld [vmem:[%s5 + $0x58] sm:$0xf]
  %v1510 = vld [vmem:[%s5 + $0x5c] sm:$0xf]
  %v1511 = vld [vmem:[%s5 + $0x60] sm:$0xf]
  %v1512 = vld [vmem:[%s5 + $0x64] sm:$0xf]
  %v1513 = vld [vmem:[%s5 + $0x68] sm:$0xf]
  %v1514 = vld [vmem:[%s5 + $0x6c] sm:$0xf]
  %v1515 = vld [vmem:[%s5 + $0x70] sm:$0xf]
  %v1516 = vld [vmem:[%s5 + $0x74] sm:$0xf]
  %v1517 = vld [vmem:[%s5 + $0x78] sm:$0xf]
  %v1518 = vld [vmem:[%s5 + $0x7c] sm:$0xf]
  %v1519 = vld [vmem:[%s6] sm:$0x1]
  %v1521 = vlaneseq
  %v1522 = vshrl.u32 %v1521, 7
  %v1523 = vsub.s32 0, %v1522
  %v1524 = vrot.slane %v1519, %v1523
  %v1558 = vunpack.c.l.b16 %v1487
  %v1559 = vunpack.c.l.b16 %v1488
  %v1560 = vunpack.c.l.b16 %v1489
  %v1561 = vunpack.c.l.b16 %v1490
  %v1562 = vunpack.c.l.b16 %v1491
  %v1563 = vunpack.c.l.b16 %v1492
  %v1564 = vunpack.c.l.b16 %v1493
  %v1565 = vunpack.c.l.b16 %v1494
  %v1566 = vunpack.c.l.b16 %v1495
  %v1567 = vunpack.c.l.b16 %v1496
  %v1568 = vunpack.c.l.b16 %v1497
  %v1569 = vunpack.c.l.b16 %v1498
  %v1570 = vunpack.c.l.b16 %v1499
  %v1571 = vunpack.c.l.b16 %v1500
  %v1572 = vunpack.c.l.b16 %v1501
  %v1573 = vunpack.c.l.b16 %v1502
  %v1574 = vunpack.c.l.b16 %v1503
  %v1575 = vunpack.c.l.b16 %v1504
  %v1576 = vunpack.c.l.b16 %v1505
  %v1577 = vunpack.c.l.b16 %v1506
  %v1578 = vunpack.c.l.b16 %v1507
  %v1579 = vunpack.c.l.b16 %v1508
  %v1580 = vunpack.c.l.b16 %v1509
  %v1581 = vunpack.c.l.b16 %v1510
  %v1582 = vunpack.c.l.b16 %v1511
  %v1583 = vunpack.c.l.b16 %v1512
  %v1584 = vunpack.c.l.b16 %v1513
  %v1585 = vunpack.c.l.b16 %v1514
  %v1586 = vunpack.c.l.b16 %v1515
  %v1587 = vunpack.c.l.b16 %v1516
  %v1588 = vunpack.c.l.b16 %v1517
  %v1589 = vunpack.c.l.b16 %v1518
  %v1590 = vpack.c.b16 %v1559, %v1558
  %v1591 = vpack.c.b16 %v1561, %v1560
  %v1592 = vpack.c.b16 %v1563, %v1562
  %v1593 = vpack.c.b16 %v1565, %v1564
  %v1594 = vpack.c.b16 %v1567, %v1566
  %v1595 = vpack.c.b16 %v1569, %v1568
  %v1596 = vpack.c.b16 %v1571, %v1570
  %v1597 = vpack.c.b16 %v1573, %v1572
  %v1598 = vpack.c.b16 %v1575, %v1574
  %v1599 = vpack.c.b16 %v1577, %v1576
  %v1600 = vpack.c.b16 %v1579, %v1578
  %v1601 = vpack.c.b16 %v1581, %v1580
  %v1602 = vpack.c.b16 %v1583, %v1582
  %v1603 = vpack.c.b16 %v1585, %v1584
  %v1604 = vpack.c.b16 %v1587, %v1586
  %v1605 = vpack.c.b16 %v1589, %v1588
  %1622 = vmatprep.subr.bf16.mxu0 0
  %1623 = vmatpush1.bf16.msra.mxu0 %v1590
  %1624 = vmatprep.subr.bf16.mxu0 0
  %1625 = vmatpush1.bf16.msra.mxu0 %v1591
  %1626 = vmatprep.subr.bf16.mxu0 0
  %1627 = vmatpush1.bf16.msra.mxu0 %v1592
  %1628 = vmatprep.subr.bf16.mxu0 0
  %1629 = vmatpush1.bf16.msra.mxu0 %v1593
  %1630 = vmatprep.subr.bf16.mxu0 0
  %1631 = vmatpush1.bf16.msra.mxu0 %v1594
  %1632 = vmatprep.subr.bf16.mxu0 0
  %1633 = vmatpush1.bf16.msra.mxu0 %v1595
  %1634 = vmatprep.subr.bf16.mxu0 0
  %1635 = vmatpush1.bf16.msra.mxu0 %v1596
  %1636 = vmatprep.subr.bf16.mxu0 0
  %1637 = vmatpush1.bf16.msra.mxu0 %v1597
  %1638 = vmatprep.subr.bf16.mxu0 0
  %1639 = vmatpush1.bf16.msra.mxu0 %v1598
  %1640 = vmatprep.subr.bf16.mxu0 0
  %1641 = vmatpush1.bf16.msra.mxu0 %v1599
  %1642 = vmatprep.subr.bf16.mxu0 0
  %1643 = vmatpush1.bf16.msra.mxu0 %v1600
  %1644 = vmatprep.subr.bf16.mxu0 0
  %1645 = vmatpush1.bf16.msra.mxu0 %v1601
  %1646 = vmatprep.subr.bf16.mxu0 0
  %1647 = vmatpush1.bf16.msra.mxu0 %v1602
  %1648 = vmatprep.subr.bf16.mxu0 0
  %1649 = vmatpush1.bf16.msra.mxu0 %v1603
  %1650 = vmatprep.subr.bf16.mxu0 0
  %1651 = vmatpush1.bf16.msra.mxu0 %v1604
  %1652 = vmatprep.subr.bf16.mxu0 0
  %1653 = vmatpush1.bf16.msra.mxu0 %v1605
  %1654 = vmatprep.mubr.bf16.mxu0 %v1486
  %1655 = vmatmul.mubr.bf16.gmra.mrb[0].mxu0 %v1485
  %v1656 = vpop.f32.mrb[0].mxu0
  %v1657 = vadd.f32 %v1524, %v1656
  %v1658 = vpop.f32.mrb[0].mxu0
  %v1659 = vpop.f32.mrb[0].mxu0
  %v1660 = vpop.f32.mrb[0].mxu0
  %1661 = vdwg.mxu0
  %1662 = vst [vmem:[%s7] sm:$0xff] %v1657
  // Predicated region
  $region30: #{_lambda_.29} parent=0 // pred_check
    _
  $region31: #{_lambda_.29} parent=0 // pred_check_branch
    %1664 = sbr.rel (0) target = $region33
  $region32: #{_lambda_.29} parent=0 // pred_region
    _
  $region33: #{_lambda_.29} parent=0 // pred_fallthru
    _
  // Predicated region
  $region34: #{_lambda_.29} parent=0 // pred_check
    _
  $region35: #{_lambda_.29} parent=0 // pred_check_branch
    %1666 = sbr.rel (0) target = $region37
  $region36: #{_lambda_.29} parent=0 // pred_region
    _
  $region37: #{_lambda_.29} parent=0 // pred_fallthru
    _

</llo_original>
